<compile_context>
chip_gen: v5e
topology: v5e:2x2
jax: 0.10.0
libtpu: 0.0.40
codegen_flags: <defaults>
</compile_context>

<pallas_src>
import functools
import math

import jax
import jax.numpy as jnp
from jax.experimental import pallas as pl
from jax.experimental.pallas import tpu as pltpu

LN2_INV = 1.0 / math.log(2.0)
C_LAT = 192
_VMEM_LIMIT = 32 * 1024 * 1024  # safe on v5e/v6e (128 MiB) and v7x (64 MiB)


# ---------------------------------------------------------------------------
# Kernels
# ---------------------------------------------------------------------------
def _enc_stage_kernel(x_ref, w_ref, b_ref, g_ref, beta_ref, o_ref):
    """Fused patchify-conv (as matmul) + bias + GDN.  One encoder stage."""
    z = jnp.dot(x_ref[...].astype(jnp.bfloat16), w_ref[...],
                preferred_element_type=jnp.float32) + b_ref[...]
    den = jnp.dot((z * z).astype(jnp.bfloat16), g_ref[...],
                  preferred_element_type=jnp.float32) + beta_ref[...]
    o_ref[...] = (z * jax.lax.rsqrt(den)).astype(o_ref.dtype)


def _dec_stage_kernel(x_ref, g_ref, beta_ref, w_ref, b_ref, o_ref):
    """Fused IGDN + 'deconv' (as matmul) + bias.  One decoder stage."""
    x = x_ref[...].astype(jnp.float32)
    den = jnp.dot((x * x).astype(jnp.bfloat16), g_ref[...],
                  preferred_element_type=jnp.float32) + beta_ref[...]
    xn = x * jnp.sqrt(den)                                       # IGDN
    z = jnp.dot(xn.astype(jnp.bfloat16), w_ref[...],
                preferred_element_type=jnp.float32) + b_ref[...]
    o_ref[...] = z.astype(o_ref.dtype)


def _latent_kernel(h_ref, noise_ref, we_ref, be_ref, wd_ref, bd_ref,
                   sph_ref, bb_ref, ta_ref, bits_ref, d0_ref):
    """Encoder stage 3 + noise quantization + factorized bits + decoder mm0."""
    y = jnp.dot(h_ref[...].astype(jnp.bfloat16), we_ref[...],
                preferred_element_type=jnp.float32) + be_ref[...]
    y_hat = y + noise_ref[...]                                   # train-path quantize

    sph = sph_ref[...]            # softplus(H)  [5, C]  (precomputed)
    bb = bb_ref[...]              # B            [5, C]
    ta = ta_ref[...]              # tanh(A)      [4, C]  (precomputed)

    def cdf(v):
        for k in range(5):
            v = v * sph[k:k + 1, :] + bb[k:k + 1, :]
            if k < 4:
                v = v + ta[k:k + 1, :] * jnp.tanh(v)
        return jax.nn.sigmoid(v)

    p = cdf(y_hat + 0.5) - cdf(y_hat - 0.5)
    bits = -jnp.log(jnp.clip(p, 1e-10, 1.0)) * LN2_INV
    bits_ref[...] = jnp.sum(bits, keepdims=True)

    d0 = jnp.dot(y_hat.astype(jnp.bfloat16), wd_ref[...],
                 preferred_element_type=jnp.float32) + bd_ref[...]
    d0_ref[...] = d0.astype(d0_ref.dtype)


def _tail_kernel(x12_ref, h_ref, g_ref, beta_ref, wd_ref, bd_ref,
                 kfwd_ref, kinv_ref, rec_ref, sse_ref):
    """IGDN + final deconv + clamp + INN inverse + both SSE partial sums."""
    @pl.when(pl.program_id(0) == 0)
    def _init():
        sse_ref[...] = jnp.zeros_like(sse_ref)

    x = h_ref[...].astype(jnp.float32)
    den = jnp.dot((x * x).astype(jnp.bfloat16), g_ref[...],
                  preferred_element_type=jnp.float32) + beta_ref[...]
    xn = x * jnp.sqrt(den)                                       # IGDN
    rec_before = jnp.dot(xn.astype(jnp.bfloat16), wd_ref[...],
                         preferred_element_type=jnp.float32) + bd_ref[...]
    rec_before = jnp.clip(rec_before, 0.0, 2.0)                  # clamp(dec, 0, 2)
    rec_after = jnp.dot(rec_before, kinv_ref[...],               # INN inverse
                        preferred_element_type=jnp.float32)

    x12 = x12_ref[...]
    after_inn = jnp.dot(x12, kfwd_ref[...],                      # INN forward (for MSE_inn)
                        preferred_element_type=jnp.float32)

    rec_ref[...] = rec_after.astype(rec_ref.dtype)

    d_img = x12 - rec_after
    d_inn = after_inn - rec_before
    sse_ref[0:1, :] = sse_ref[0:1, :] + jnp.sum(d_img * d_img, axis=0, keepdims=True)
    sse_ref[1:2, :] = sse_ref[1:2, :] + jnp.sum(d_inn * d_inn, axis=0, keepdims=True)


# ---------------------------------------------------------------------------
# Pallas wrappers
# ---------------------------------------------------------------------------
def _tile_m(m, cap=512):
    # Full-array block when small (block dims equal full dims are always legal);
    # cap the tile for larger images so BlockSpec double-buffering stays well
    # inside the scoped-VMEM budget on every generation (incl. v7x 64 MiB).
    if m <= cap or m % cap != 0:
        return m
    return cap


def _cparams(sem):
    return pltpu.CompilerParams(dimension_semantics=sem,
                                vmem_limit_bytes=_VMEM_LIMIT)


def _enc_stage(x, w, b, g, beta):
    m, k = x.shape
    n = w.shape[1]
    tm = _tile_m(m)
    return pl.pallas_call(
        _enc_stage_kernel,
        out_shape=jax.ShapeDtypeStruct((m, n), jnp.bfloat16),
        grid=(m // tm,),
        in_specs=[
            pl.BlockSpec((tm, k), lambda i: (i, 0)),
            pl.BlockSpec((k, n), lambda i: (0, 0)),
            pl.BlockSpec((1, n), lambda i: (0, 0)),
            pl.BlockSpec((n, n), lambda i: (0, 0)),
            pl.BlockSpec((1, n), lambda i: (0, 0)),
        ],
        out_specs=pl.BlockSpec((tm, n), lambda i: (i, 0)),
        compiler_params=_cparams(("parallel",)),
    )(x, w, b, g, beta)


def _dec_stage(x, g, beta, w, b):
    m, c = x.shape
    n = w.shape[1]
    tm = _tile_m(m)
    return pl.pallas_call(
        _dec_stage_kernel,
        out_shape=jax.ShapeDtypeStruct((m, n), jnp.bfloat16),
        grid=(m // tm,),
        in_specs=[
            pl.BlockSpec((tm, c), lambda i: (i, 0)),
            pl.BlockSpec((c, c), lambda i: (0, 0)),
            pl.BlockSpec((1, c), lambda i: (0, 0)),
            pl.BlockSpec((c, n), lambda i: (0, 0)),
            pl.BlockSpec((1, n), lambda i: (0, 0)),
        ],
        out_specs=pl.BlockSpec((tm, n), lambda i: (i, 0)),
        compiler_params=_cparams(("parallel",)),
    )(x, g, beta, w, b)


def _latent(h, noise, p):
    m, k = h.shape
    c = noise.shape[1]
    n = p["Wd0"].shape[1]
    bits, d0 = pl.pallas_call(
        _latent_kernel,
        out_shape=(jax.ShapeDtypeStruct((1, 1), jnp.float32),
                   jax.ShapeDtypeStruct((m, n), jnp.bfloat16)),
        grid=(1,),
        in_specs=[
            pl.BlockSpec((m, k), lambda i: (0, 0)),
            pl.BlockSpec((m, c), lambda i: (0, 0)),
            pl.BlockSpec((k, c), lambda i: (0, 0)),    # We3
            pl.BlockSpec((1, c), lambda i: (0, 0)),    # be3
            pl.BlockSpec((c, n), lambda i: (0, 0)),    # Wd0
            pl.BlockSpec((1, n), lambda i: (0, 0)),    # bd0
            pl.BlockSpec((5, c), lambda i: (0, 0)),    # softplus(H)
            pl.BlockSpec((5, c), lambda i: (0, 0)),    # B
            pl.BlockSpec((4, c), lambda i: (0, 0)),    # tanh(A)
        ],
        out_specs=(pl.BlockSpec((1, 1), lambda i: (0, 0)),
                   pl.BlockSpec((m, n), lambda i: (0, 0))),
        compiler_params=_cparams(("arbitrary",)),
    )(h, noise, p["We3"], p["be3"], p["Wd0"], p["bd0"],
      p["sp_h"], p["b_be"], p["tanh_a"])
    return bits[0, 0], d0


def _tail(x12, h, p):
    m, c12 = x12.shape
    c = h.shape[1]
    tm = _tile_m(m)
    rec, sse = pl.pallas_call(
        _tail_kernel,
        out_shape=(jax.ShapeDtypeStruct((m, c12), jnp.float32),
                   jax.ShapeDtypeStruct((2, c12), jnp.float32)),
        grid=(m // tm,),
        in_specs=[
            pl.BlockSpec((tm, c12), lambda i: (i, 0)),   # x (nested layout)
            pl.BlockSpec((tm, c), lambda i: (i, 0)),     # decoder activation
            pl.BlockSpec((c, c), lambda i: (0, 0)),      # g_dec2
            pl.BlockSpec((1, c), lambda i: (0, 0)),      # beta_dec2
            pl.BlockSpec((c, c12), lambda i: (0, 0)),    # Wd3
            pl.BlockSpec((1, c12), lambda i: (0, 0)),    # bd3
            pl.BlockSpec((c12, c12), lambda i: (0, 0)),  # kron(I4, W_inn)
            pl.BlockSpec((c12, c12), lambda i: (0, 0)),  # kron(I4, W_inn.T)
        ],
        out_specs=(pl.BlockSpec((tm, c12), lambda i: (i, 0)),
                   pl.BlockSpec((2, c12), lambda i: (0, 0))),
        compiler_params=_cparams(("arbitrary",)),
    )(x12, h, p["g_dec2"], p["beta_dec2"], p["Wd3"], p["bd3"],
      p["K_fwd"], p["K_inv"])
    return rec, sse


# ---------------------------------------------------------------------------
# XLA-side layout helpers (tiny, image-boundary only)
# ---------------------------------------------------------------------------
def _space_to_depth(x):  # [N,H,W,C] -> [N,H/2,W/2,4C]
    n, h, w, c = x.shape
    x = x.reshape(n, h // 2, 2, w // 2, 2, c)
    x = jnp.transpose(x, (0, 1, 3, 2, 4, 5))
    return x.reshape(n, h // 2, w // 2, 4 * c)


def _depth_to_space(x):  # [N,H,W,4C] -> [N,2H,2W,C]
    n, h, w, c4 = x.shape
    c = c4 // 4
    x = x.reshape(n, h, w, 2, 2, c)
    x = jnp.transpose(x, (0, 1, 3, 2, 4, 5))
    return x.reshape(n, 2 * h, 2 * w, c)


# ---------------------------------------------------------------------------
# Parameters (synthetic, deterministic).  INN is folded into We0 here, and the
# per-channel softplus/tanh of the bits estimator are precomputed once.
# ---------------------------------------------------------------------------
def init_params(key, c_img=3, c_lat=C_LAT):
    ks = jax.random.split(key, 16)
    f32, bf16 = jnp.float32, jnp.bfloat16
    p = {}

    # INN: orthogonal per-pixel channel mix (exactly invertible).
    q, _ = jnp.linalg.qr(jax.random.normal(ks[0], (c_img, c_img), f32))
    p["K_fwd"] = jnp.kron(jnp.eye(4, dtype=f32), q)       # [12,12]
    p["K_inv"] = jnp.kron(jnp.eye(4, dtype=f32), q.T)     # exact inverse

    # Encoder (Analysis_net(192)): 4 stride-2 patchify convs + GDN.
    enc_in = [4 * c_img, 4 * c_lat, 4 * c_lat, 4 * c_lat]
    for i in range(4):
        fan = enc_in[i]
        w = jax.random.normal(ks[1 + i], (fan, c_lat), f32) / jnp.sqrt(float(fan))
        if i == 0:
            w = p["K_fwd"] @ w                             # fold INN forward
        p[f"We{i}"] = w.astype(bf16)
        p[f"be{i}"] = jnp.zeros((1, c_lat), f32)

    # Decoder (Synthesis_net(192)): 4 pixel-shuffle deconvs + IGDN.
    dec_out = [4 * c_lat, 4 * c_lat, 4 * c_lat, 4 * c_img]
    for i in range(4):
        w = jax.random.normal(ks[5 + i], (c_lat, dec_out[i]), f32) / jnp.sqrt(float(c_lat))
        p[f"Wd{i}"] = w.astype(bf16)
        p[f"bd{i}"] = jnp.zeros((1, dec_out[i]), f32)

    g = (0.1 * jnp.eye(c_lat, dtype=f32) + 1e-3).astype(bf16)
    for i in range(3):
        p[f"g_enc{i}"] = g
        p[f"beta_enc{i}"] = jnp.ones((1, c_lat), f32)
        p[f"g_dec{i}"] = g
        p[f"beta_dec{i}"] = jnp.ones((1, c_lat), f32)

    # BitsEstimator (K=5): factorized per-channel CDF; transcendentals of the
    # parameters hoisted out of the kernel.
    h_be = 0.5 * jnp.ones((5, c_lat), f32)
    a_be = jnp.zeros((4, c_lat), f32)
    p["sp_h"] = jax.nn.softplus(h_be)
    p["b_be"] = 0.1 * jax.random.normal(ks[10], (5, c_lat), f32)
    p["tanh_a"] = jnp.tanh(a_be)
    return p


# ---------------------------------------------------------------------------
# Forward pass (matches InvertibleFactorizedCompressor.forward, training path)
# ---------------------------------------------------------------------------
def forward(params, inputs_nchw, noise_key, Lambda=0.0067, c_lat=C_LAT):
    n, c, hh, ww = inputs_nchw.shape
    assert c == 3 and hh % 16 == 0 and ww % 16 == 0

    # NCHW -> NHWC -> fully nested row order: all later space<->depth shuffles
    # between conv stages become free row-major reshapes.
    x = jnp.transpose(inputs_nchw, (0, 2, 3, 1)).astype(jnp.float32)
    for _ in range(4):
        x = _space_to_depth(x)                              # [N, H/16, W/16, 768]
    ht, wt = hh // 16, ww // 16
    x12 = x.reshape(n * ht * wt * 64, 4 * c)                # [N*H*W/4, 12]

    # --- encoder stages 0..2 (fused conv+bias+GDN; INN folded into We0) ---
    h = _enc_stage(x12, params["We0"], params["be0"],
                   params["g_enc0"], params["beta_enc0"])
    h = _enc_stage(h.reshape(-1, 4 * c_lat), params["We1"], params["be1"],
                   params["g_enc1"], params["beta_enc1"])
    h = _enc_stage(h.reshape(-1, 4 * c_lat), params["We2"], params["be2"],
                   params["g_enc2"], params["beta_enc2"])
    h = h.reshape(-1, 4 * c_lat)                            # [N*H*W/256, 768]

    # --- latent: enc stage 3 + noise quantization + bits + dec stage-0 mm ---
    m_lat = h.shape[0]
    noise = jax.random.uniform(noise_key, (m_lat, c_lat), jnp.float32, -0.5, 0.5)
    total_bits, d0 = _latent(h, noise, params)

    # --- decoder stages 1..2 (fused IGDN + deconv) ---
    d = _dec_stage(d0.reshape(-1, c_lat), params["g_dec0"], params["beta_dec0"],
                   params["Wd1"], params["bd1"])
    d = _dec_stage(d.reshape(-1, c_lat), params["g_dec1"], params["beta_dec1"],
                   params["Wd2"], params["bd2"])

    # --- tail: IGDN + final deconv + clamp + INN inverse + both SSEs ---
    rec12, sse = _tail(x12, d.reshape(-1, c_lat), params)

    n_pix = n * hh * ww
    n_el = float(n_pix * c)
    bpp = total_bits / float(n_pix)
    distortion = jnp.sum(sse[0]) / n_el
    distortion_inn = jnp.sum(sse[1]) / n_el
    loss = bpp + Lambda * (255.0 ** 2) * (distortion + distortion_inn)

    # un-nest reconstruction -> NHWC -> NCHW
    rec = rec12.reshape(n, ht, wt, 64 * 4 * c)
    for _ in range(4):
        rec = _depth_to_space(rec)
    rec_images = jnp.transpose(rec, (0, 3, 1, 2))

    return {"Loss": loss, "Bpp": bpp, "Distortion": distortion,
            "Distortion_inn": distortion_inn, "Rec_images": rec_images}


# ---------------------------------------------------------------------------
if __name__ == "__main__":
    key = jax.random.PRNGKey(0)
    k_in, k_noise, k_par = jax.random.split(key, 3)

    inputs = jax.random.uniform(k_in, (2, 3, 16, 16), jnp.float32)  # NCHW, [0,1]
    params = init_params(k_par)

    fwd = jax.jit(functools.partial(forward, Lambda=0.0067))
    out = fwd(params, inputs, k_noise)
    jax.block_until_ready(out)

    assert out["Rec_images"].shape == inputs.shape
    assert out["Loss"].shape == ()
    assert bool(jnp.isfinite(out["Loss"]))
    print("KERNEL_OK")
</pallas_src>

<mosaic_0001>
module attributes {stable_mosaic.version = 11 : i64} {
  func.func @_enc_stage_kernel(%arg0: i32, %arg1: memref<128x12xf32, #tpu.memory_space<vmem>>, %arg2: memref<12x192xbf16, #tpu.memory_space<vmem>>, %arg3: memref<1x192xf32, #tpu.memory_space<vmem>>, %arg4: memref<192x192xbf16, #tpu.memory_space<vmem>>, %arg5: memref<1x192xf32, #tpu.memory_space<vmem>>, %arg6: memref<128x192xbf16, #tpu.memory_space<vmem>>) attributes {dimension_semantics = [#tpu.dimension_semantics<parallel>], iteration_bounds = array<i64: 1>, scalar_prefetch = 0 : i64, scratch_operands = 0 : i64, tpu.core_type = #tpu.core_type<tc>, window_params = [{transform_indices = @transform_0, window_bounds = array<i64: 128, 12>}, {pipeline_mode = #tpu.pipeline_mode<synchronous>, transform_indices = @transform_1, window_bounds = array<i64: 12, 192>}, {pipeline_mode = #tpu.pipeline_mode<synchronous>, transform_indices = @transform_2, window_bounds = array<i64: 1, 192>}, {pipeline_mode = #tpu.pipeline_mode<synchronous>, transform_indices = @transform_3, window_bounds = array<i64: 192, 192>}, {pipeline_mode = #tpu.pipeline_mode<synchronous>, transform_indices = @transform_4, window_bounds = array<i64: 1, 192>}, {transform_indices = @transform_5, window_bounds = array<i64: 128, 192>}]} {
    %c0 = arith.constant 0 : index
    %c0_0 = arith.constant 0 : index
    %0 = vector.load %arg1[%c0, %c0_0] : memref<128x12xf32, #tpu.memory_space<vmem>>, vector<128x12xf32>
    %1 = arith.truncf %0 : vector<128x12xf32> to vector<128x12xbf16>
    %c0_1 = arith.constant 0 : index
    %c0_2 = arith.constant 0 : index
    %2 = vector.load %arg2[%c0_1, %c0_2] : memref<12x192xbf16, #tpu.memory_space<vmem>>, vector<12x192xbf16>
    %cst = arith.constant dense<0.000000e+00> : vector<128x192xf32>
    %3 = tpu.matmul %1, %2, %cst {dimension_numbers = #tpu.dot_dimension_numbers<[1], [0], [0], [1], [0, 0, 1, 1], [], []>} : vector<128x12xbf16>, vector<12x192xbf16>, vector<128x192xf32> -> vector<128x192xf32>
    %c0_3 = arith.constant 0 : index
    %c0_4 = arith.constant 0 : index
    %4 = vector.load %arg3[%c0_3, %c0_4] : memref<1x192xf32, #tpu.memory_space<vmem>>, vector<1x192xf32>
    %5 = vector.broadcast %4 : vector<1x192xf32> to vector<128x192xf32>
    %6 = arith.addf %3, %5 : vector<128x192xf32>
    %7 = arith.mulf %6, %6 : vector<128x192xf32>
    %8 = arith.truncf %7 : vector<128x192xf32> to vector<128x192xbf16>
    %c0_5 = arith.constant 0 : index
    %c0_6 = arith.constant 0 : index
    %9 = vector.load %arg4[%c0_5, %c0_6] : memref<192x192xbf16, #tpu.memory_space<vmem>>, vector<192x192xbf16>
    %cst_7 = arith.constant dense<0.000000e+00> : vector<128x192xf32>
    %10 = tpu.matmul %8, %9, %cst_7 {dimension_numbers = #tpu.dot_dimension_numbers<[1], [0], [0], [1], [0, 0, 1, 1], [], []>} : vector<128x192xbf16>, vector<192x192xbf16>, vector<128x192xf32> -> vector<128x192xf32>
    %c0_8 = arith.constant 0 : index
    %c0_9 = arith.constant 0 : index
    %11 = vector.load %arg5[%c0_8, %c0_9] : memref<1x192xf32, #tpu.memory_space<vmem>>, vector<1x192xf32>
    %12 = vector.broadcast %11 : vector<1x192xf32> to vector<128x192xf32>
    %13 = arith.addf %10, %12 : vector<128x192xf32>
    %14 = math.rsqrt %13 : vector<128x192xf32>
    %15 = arith.mulf %6, %14 : vector<128x192xf32>
    %16 = arith.truncf %15 : vector<128x192xf32> to vector<128x192xbf16>
    %c0_10 = arith.constant 0 : index
    %c0_11 = arith.constant 0 : index
    %17 = vector.load %arg6[%c0_10, %c0_11] : memref<128x192xbf16, #tpu.memory_space<vmem>>, vector<128x192xbf16>
    tpu.vector_store %arg6[%c0_10, %c0_11], %16 {strides = array<i32>} : memref<128x192xbf16, #tpu.memory_space<vmem>>, vector<128x192xbf16>,
    return
  }
  func.func @transform_0(%arg0: i32) -> (i32, i32) {
    %c0_i32 = arith.constant 0 : i32
    %c0_i32_0 = arith.constant 0 : i32
    return %arg0, %c0_i32 : i32, i32
  }
  func.func @transform_1(%arg0: i32) -> (i32, i32) {
    %c0_i32 = arith.constant 0 : i32
    %c0_i32_0 = arith.constant 0 : i32
    %c0_i32_1 = arith.constant 0 : i32
    return %c0_i32, %c0_i32_0 : i32, i32
  }
  func.func @transform_2(%arg0: i32) -> (i32, i32) {
    %c0_i32 = arith.constant 0 : i32
    %c0_i32_0 = arith.constant 0 : i32
    %c0_i32_1 = arith.constant 0 : i32
    return %c0_i32, %c0_i32_0 : i32, i32
  }
  func.func @transform_3(%arg0: i32) -> (i32, i32) {
    %c0_i32 = arith.constant 0 : i32
    %c0_i32_0 = arith.constant 0 : i32
    %c0_i32_1 = arith.constant 0 : i32
    return %c0_i32, %c0_i32_0 : i32, i32
  }
  func.func @transform_4(%arg0: i32) -> (i32, i32) {
    %c0_i32 = arith.constant 0 : i32
    %c0_i32_0 = arith.constant 0 : i32
    %c0_i32_1 = arith.constant 0 : i32
    return %c0_i32, %c0_i32_0 : i32, i32
  }
  func.func @transform_5(%arg0: i32) -> (i32, i32) {
    %c0_i32 = arith.constant 0 : i32
    %c0_i32_0 = arith.constant 0 : i32
    return %arg0, %c0_i32 : i32, i32
  }
}

module attributes {stable_mosaic.version = 11 : i64} {
  func.func @_enc_stage_kernel(%arg0: i32, %arg1: memref<32x768xbf16, #tpu.memory_space<vmem>>, %arg2: memref<768x192xbf16, #tpu.memory_space<vmem>>, %arg3: memref<1x192xf32, #tpu.memory_space<vmem>>, %arg4: memref<192x192xbf16, #tpu.memory_space<vmem>>, %arg5: memref<1x192xf32, #tpu.memory_space<vmem>>, %arg6: memref<32x192xbf16, #tpu.memory_space<vmem>>) attributes {dimension_semantics = [#tpu.dimension_semantics<parallel>], iteration_bounds = array<i64: 1>, scalar_prefetch = 0 : i64, scratch_operands = 0 : i64, tpu.core_type = #tpu.core_type<tc>, window_params = [{transform_indices = @transform_0, window_bounds = array<i64: 32, 768>}, {pipeline_mode = #tpu.pipeline_mode<synchronous>, transform_indices = @transform_1, window_bounds = array<i64: 768, 192>}, {pipeline_mode = #tpu.pipeline_mode<synchronous>, transform_indices = @transform_2, window_bounds = array<i64: 1, 192>}, {pipeline_mode = #tpu.pipeline_mode<synchronous>, transform_indices = @transform_3, window_bounds = array<i64: 192, 192>}, {pipeline_mode = #tpu.pipeline_mode<synchronous>, transform_indices = @transform_4, window_bounds = array<i64: 1, 192>}, {transform_indices = @transform_5, window_bounds = array<i64: 32, 192>}]} {
    %c0 = arith.constant 0 : index
    %c0_0 = arith.constant 0 : index
    %0 = vector.load %arg1[%c0, %c0_0] : memref<32x768xbf16, #tpu.memory_space<vmem>>, vector<32x768xbf16>
    %c0_1 = arith.constant 0 : index
    %c0_2 = arith.constant 0 : index
    %1 = vector.load %arg2[%c0_1, %c0_2] : memref<768x192xbf16, #tpu.memory_space<vmem>>, vector<768x192xbf16>
    %cst = arith.constant dense<0.000000e+00> : vector<32x192xf32>
    %2 = tpu.matmul %0, %1, %cst {dimension_numbers = #tpu.dot_dimension_numbers<[1], [0], [0], [1], [0, 0, 1, 1], [], []>} : vector<32x768xbf16>, vector<768x192xbf16>, vector<32x192xf32> -> vector<32x192xf32>
    %c0_3 = arith.constant 0 : index
    %c0_4 = arith.constant 0 : index
    %3 = vector.load %arg3[%c0_3, %c0_4] : memref<1x192xf32, #tpu.memory_space<vmem>>, vector<1x192xf32>
    %4 = vector.broadcast %3 : vector<1x192xf32> to vector<32x192xf32>
    %5 = arith.addf %2, %4 : vector<32x192xf32>
    %6 = arith.mulf %5, %5 : vector<32x192xf32>
    %7 = arith.truncf %6 : vector<32x192xf32> to vector<32x192xbf16>
    %c0_5 = arith.constant 0 : index
    %c0_6 = arith.constant 0 : index
    %8 = vector.load %arg4[%c0_5, %c0_6] : memref<192x192xbf16, #tpu.memory_space<vmem>>, vector<192x192xbf16>
    %cst_7 = arith.constant dense<0.000000e+00> : vector<32x192xf32>
    %9 = tpu.matmul %7, %8, %cst_7 {dimension_numbers = #tpu.dot_dimension_numbers<[1], [0], [0], [1], [0, 0, 1, 1], [], []>} : vector<32x192xbf16>, vector<192x192xbf16>, vector<32x192xf32> -> vector<32x192xf32>
    %c0_8 = arith.constant 0 : index
    %c0_9 = arith.constant 0 : index
    %10 = vector.load %arg5[%c0_8, %c0_9] : memref<1x192xf32, #tpu.memory_space<vmem>>, vector<1x192xf32>
    %11 = vector.broadcast %10 : vector<1x192xf32> to vector<32x192xf32>
    %12 = arith.addf %9, %11 : vector<32x192xf32>
    %13 = math.rsqrt %12 : vector<32x192xf32>
    %14 = arith.mulf %5, %13 : vector<32x192xf32>
    %15 = arith.truncf %14 : vector<32x192xf32> to vector<32x192xbf16>
    %c0_10 = arith.constant 0 : index
    %c0_11 = arith.constant 0 : index
    %16 = vector.load %arg6[%c0_10, %c0_11] : memref<32x192xbf16, #tpu.memory_space<vmem>>, vector<32x192xbf16>
    tpu.vector_store %arg6[%c0_10, %c0_11], %15 {strides = array<i32>} : memref<32x192xbf16, #tpu.memory_space<vmem>>, vector<32x192xbf16>,
    return
  }
  func.func @transform_0(%arg0: i32) -> (i32, i32) {
    %c0_i32 = arith.constant 0 : i32
    %c0_i32_0 = arith.constant 0 : i32
    return %arg0, %c0_i32 : i32, i32
  }
  func.func @transform_1(%arg0: i32) -> (i32, i32) {
    %c0_i32 = arith.constant 0 : i32
    %c0_i32_0 = arith.constant 0 : i32
    %c0_i32_1 = arith.constant 0 : i32
    return %c0_i32, %c0_i32_0 : i32, i32
  }
  func.func @transform_2(%arg0: i32) -> (i32, i32) {
    %c0_i32 = arith.constant 0 : i32
    %c0_i32_0 = arith.constant 0 : i32
    %c0_i32_1 = arith.constant 0 : i32
    return %c0_i32, %c0_i32_0 : i32, i32
  }
  func.func @transform_3(%arg0: i32) -> (i32, i32) {
    %c0_i32 = arith.constant 0 : i32
    %c0_i32_0 = arith.constant 0 : i32
    %c0_i32_1 = arith.constant 0 : i32
    return %c0_i32, %c0_i32_0 : i32, i32
  }
  func.func @transform_4(%arg0: i32) -> (i32, i32) {
    %c0_i32 = arith.constant 0 : i32
    %c0_i32_0 = arith.constant 0 : i32
    %c0_i32_1 = arith.constant 0 : i32
    return %c0_i32, %c0_i32_0 : i32, i32
  }
  func.func @transform_5(%arg0: i32) -> (i32, i32) {
    %c0_i32 = arith.constant 0 : i32
    %c0_i32_0 = arith.constant 0 : i32
    return %arg0, %c0_i32 : i32, i32
  }
}

module attributes {stable_mosaic.version = 11 : i64} {
  func.func @_enc_stage_kernel(%arg0: i32, %arg1: memref<8x768xbf16, #tpu.memory_space<vmem>>, %arg2: memref<768x192xbf16, #tpu.memory_space<vmem>>, %arg3: memref<1x192xf32, #tpu.memory_space<vmem>>, %arg4: memref<192x192xbf16, #tpu.memory_space<vmem>>, %arg5: memref<1x192xf32, #tpu.memory_space<vmem>>, %arg6: memref<8x192xbf16, #tpu.memory_space<vmem>>) attributes {dimension_semantics = [#tpu.dimension_semantics<parallel>], iteration_bounds = array<i64: 1>, scalar_prefetch = 0 : i64, scratch_operands = 0 : i64, tpu.core_type = #tpu.core_type<tc>, window_params = [{transform_indices = @transform_0, window_bounds = array<i64: 8, 768>}, {pipeline_mode = #tpu.pipeline_mode<synchronous>, transform_indices = @transform_1, window_bounds = array<i64: 768, 192>}, {pipeline_mode = #tpu.pipeline_mode<synchronous>, transform_indices = @transform_2, window_bounds = array<i64: 1, 192>}, {pipeline_mode = #tpu.pipeline_mode<synchronous>, transform_indices = @transform_3, window_bounds = array<i64: 192, 192>}, {pipeline_mode = #tpu.pipeline_mode<synchronous>, transform_indices = @transform_4, window_bounds = array<i64: 1, 192>}, {transform_indices = @transform_5, window_bounds = array<i64: 8, 192>}]} {
    %c0 = arith.constant 0 : index
    %c0_0 = arith.constant 0 : index
    %0 = vector.load %arg1[%c0, %c0_0] : memref<8x768xbf16, #tpu.memory_space<vmem>>, vector<8x768xbf16>
    %c0_1 = arith.constant 0 : index
    %c0_2 = arith.constant 0 : index
    %1 = vector.load %arg2[%c0_1, %c0_2] : memref<768x192xbf16, #tpu.memory_space<vmem>>, vector<768x192xbf16>
    %cst = arith.constant dense<0.000000e+00> : vector<8x192xf32>
    %2 = tpu.matmul %0, %1, %cst {dimension_numbers = #tpu.dot_dimension_numbers<[1], [0], [0], [1], [0, 0, 1, 1], [], []>} : vector<8x768xbf16>, vector<768x192xbf16>, vector<8x192xf32> -> vector<8x192xf32>
    %c0_3 = arith.constant 0 : index
    %c0_4 = arith.constant 0 : index
    %3 = vector.load %arg3[%c0_3, %c0_4] : memref<1x192xf32, #tpu.memory_space<vmem>>, vector<1x192xf32>
    %4 = vector.broadcast %3 : vector<1x192xf32> to vector<8x192xf32>
    %5 = arith.addf %2, %4 : vector<8x192xf32>
    %6 = arith.mulf %5, %5 : vector<8x192xf32>
    %7 = arith.truncf %6 : vector<8x192xf32> to vector<8x192xbf16>
    %c0_5 = arith.constant 0 : index
    %c0_6 = arith.constant 0 : index
    %8 = vector.load %arg4[%c0_5, %c0_6] : memref<192x192xbf16, #tpu.memory_space<vmem>>, vector<192x192xbf16>
    %cst_7 = arith.constant dense<0.000000e+00> : vector<8x192xf32>
    %9 = tpu.matmul %7, %8, %cst_7 {dimension_numbers = #tpu.dot_dimension_numbers<[1], [0], [0], [1], [0, 0, 1, 1], [], []>} : vector<8x192xbf16>, vector<192x192xbf16>, vector<8x192xf32> -> vector<8x192xf32>
    %c0_8 = arith.constant 0 : index
    %c0_9 = arith.constant 0 : index
    %10 = vector.load %arg5[%c0_8, %c0_9] : memref<1x192xf32, #tpu.memory_space<vmem>>, vector<1x192xf32>
    %11 = vector.broadcast %10 : vector<1x192xf32> to vector<8x192xf32>
    %12 = arith.addf %9, %11 : vector<8x192xf32>
    %13 = math.rsqrt %12 : vector<8x192xf32>
    %14 = arith.mulf %5, %13 : vector<8x192xf32>
    %15 = arith.truncf %14 : vector<8x192xf32> to vector<8x192xbf16>
    %c0_10 = arith.constant 0 : index
    %c0_11 = arith.constant 0 : index
    %16 = vector.load %arg6[%c0_10, %c0_11] : memref<8x192xbf16, #tpu.memory_space<vmem>>, vector<8x192xbf16>
    tpu.vector_store %arg6[%c0_10, %c0_11], %15 {strides = array<i32>} : memref<8x192xbf16, #tpu.memory_space<vmem>>, vector<8x192xbf16>,
    return
  }
  func.func @transform_0(%arg0: i32) -> (i32, i32) {
    %c0_i32 = arith.constant 0 : i32
    %c0_i32_0 = arith.constant 0 : i32
    return %arg0, %c0_i32 : i32, i32
  }
  func.func @transform_1(%arg0: i32) -> (i32, i32) {
    %c0_i32 = arith.constant 0 : i32
    %c0_i32_0 = arith.constant 0 : i32
    %c0_i32_1 = arith.constant 0 : i32
    return %c0_i32, %c0_i32_0 : i32, i32
  }
  func.func @transform_2(%arg0: i32) -> (i32, i32) {
    %c0_i32 = arith.constant 0 : i32
    %c0_i32_0 = arith.constant 0 : i32
    %c0_i32_1 = arith.constant 0 : i32
    return %c0_i32, %c0_i32_0 : i32, i32
  }
  func.func @transform_3(%arg0: i32) -> (i32, i32) {
    %c0_i32 = arith.constant 0 : i32
    %c0_i32_0 = arith.constant 0 : i32
    %c0_i32_1 = arith.constant 0 : i32
    return %c0_i32, %c0_i32_0 : i32, i32
  }
  func.func @transform_4(%arg0: i32) -> (i32, i32) {
    %c0_i32 = arith.constant 0 : i32
    %c0_i32_0 = arith.constant 0 : i32
    %c0_i32_1 = arith.constant 0 : i32
    return %c0_i32, %c0_i32_0 : i32, i32
  }
  func.func @transform_5(%arg0: i32) -> (i32, i32) {
    %c0_i32 = arith.constant 0 : i32
    %c0_i32_0 = arith.constant 0 : i32
    return %arg0, %c0_i32 : i32, i32
  }
}

module attributes {stable_mosaic.version = 11 : i64} {
  func.func @_latent_kernel(%arg0: i32, %arg1: memref<2x768xbf16, #tpu.memory_space<vmem>>, %arg2: memref<2x192xf32, #tpu.memory_space<vmem>>, %arg3: memref<768x192xbf16, #tpu.memory_space<vmem>>, %arg4: memref<1x192xf32, #tpu.memory_space<vmem>>, %arg5: memref<192x768xbf16, #tpu.memory_space<vmem>>, %arg6: memref<1x768xf32, #tpu.memory_space<vmem>>, %arg7: memref<5x192xf32, #tpu.memory_space<vmem>>, %arg8: memref<5x192xf32, #tpu.memory_space<vmem>>, %arg9: memref<4x192xf32, #tpu.memory_space<vmem>>, %arg10: memref<1x1xf32, #tpu.memory_space<vmem>>, %arg11: memref<2x768xbf16, #tpu.memory_space<vmem>>) attributes {dimension_semantics = [#tpu.dimension_semantics<arbitrary>], iteration_bounds = array<i64: 1>, scalar_prefetch = 0 : i64, scratch_operands = 0 : i64, tpu.core_type = #tpu.core_type<tc>, window_params = [{pipeline_mode = #tpu.pipeline_mode<synchronous>, transform_indices = @transform_0, window_bounds = array<i64: 2, 768>}, {pipeline_mode = #tpu.pipeline_mode<synchronous>, transform_indices = @transform_1, window_bounds = array<i64: 2, 192>}, {pipeline_mode = #tpu.pipeline_mode<synchronous>, transform_indices = @transform_2, window_bounds = array<i64: 768, 192>}, {pipeline_mode = #tpu.pipeline_mode<synchronous>, transform_indices = @transform_3, window_bounds = array<i64: 1, 192>}, {pipeline_mode = #tpu.pipeline_mode<synchronous>, transform_indices = @transform_4, window_bounds = array<i64: 192, 768>}, {pipeline_mode = #tpu.pipeline_mode<synchronous>, transform_indices = @transform_5, window_bounds = array<i64: 1, 768>}, {pipeline_mode = #tpu.pipeline_mode<synchronous>, transform_indices = @transform_6, window_bounds = array<i64: 5, 192>}, {pipeline_mode = #tpu.pipeline_mode<synchronous>, transform_indices = @transform_7, window_bounds = array<i64: 5, 192>}, {pipeline_mode = #tpu.pipeline_mode<synchronous>, transform_indices = @transform_8, window_bounds = array<i64: 4, 192>}, {pipeline_mode = #tpu.pipeline_mode<synchronous>, transform_indices = @transform_9, window_bounds = array<i64: 1, 1>}, {pipeline_mode = #tpu.pipeline_mode<synchronous>, transform_indices = @transform_10, window_bounds = array<i64: 2, 768>}]} {
    %c0 = arith.constant 0 : index
    %c0_0 = arith.constant 0 : index
    %0 = vector.load %arg1[%c0, %c0_0] : memref<2x768xbf16, #tpu.memory_space<vmem>>, vector<2x768xbf16>
    %c0_1 = arith.constant 0 : index
    %c0_2 = arith.constant 0 : index
    %1 = vector.load %arg3[%c0_1, %c0_2] : memref<768x192xbf16, #tpu.memory_space<vmem>>, vector<768x192xbf16>
    %cst = arith.constant dense<0.000000e+00> : vector<2x192xf32>
    %2 = tpu.matmul %0, %1, %cst {dimension_numbers = #tpu.dot_dimension_numbers<[1], [0], [0], [1], [0, 0, 1, 1], [], []>} : vector<2x768xbf16>, vector<768x192xbf16>, vector<2x192xf32> -> vector<2x192xf32>
    %c0_3 = arith.constant 0 : index
    %c0_4 = arith.constant 0 : index
    %3 = vector.load %arg4[%c0_3, %c0_4] : memref<1x192xf32, #tpu.memory_space<vmem>>, vector<1x192xf32>
    %4 = vector.broadcast %3 : vector<1x192xf32> to vector<2x192xf32>
    %5 = arith.addf %2, %4 : vector<2x192xf32>
    %c0_5 = arith.constant 0 : index
    %c0_6 = arith.constant 0 : index
    %6 = vector.load %arg2[%c0_5, %c0_6] : memref<2x192xf32, #tpu.memory_space<vmem>>, vector<2x192xf32>
    %7 = arith.addf %5, %6 : vector<2x192xf32>
    %c0_7 = arith.constant 0 : index
    %c0_8 = arith.constant 0 : index
    %8 = vector.load %arg7[%c0_7, %c0_8] : memref<5x192xf32, #tpu.memory_space<vmem>>, vector<5x192xf32>
    %c0_9 = arith.constant 0 : index
    %c0_10 = arith.constant 0 : index
    %9 = vector.load %arg8[%c0_9, %c0_10] : memref<5x192xf32, #tpu.memory_space<vmem>>, vector<5x192xf32>
    %c0_11 = arith.constant 0 : index
    %c0_12 = arith.constant 0 : index
    %10 = vector.load %arg9[%c0_11, %c0_12] : memref<4x192xf32, #tpu.memory_space<vmem>>, vector<4x192xf32>
    %cst_13 = arith.constant 5.000000e-01 : f32
    %11 = vector.broadcast %cst_13 : f32 to vector<2x192xf32>
    %12 = arith.addf %7, %11 : vector<2x192xf32>
    %13 = vector.extract_strided_slice %8 {offsets = [0, 0], sizes = [1, 192], strides = [1, 1]} : vector<5x192xf32> to vector<1x192xf32>
    %14 = vector.broadcast %13 : vector<1x192xf32> to vector<2x192xf32>
    %15 = arith.mulf %12, %14 : vector<2x192xf32>
    %16 = vector.extract_strided_slice %9 {offsets = [0, 0], sizes = [1, 192], strides = [1, 1]} : vector<5x192xf32> to vector<1x192xf32>
    %17 = vector.broadcast %16 : vector<1x192xf32> to vector<2x192xf32>
    %18 = arith.addf %15, %17 : vector<2x192xf32>
    %19 = vector.extract_strided_slice %10 {offsets = [0, 0], sizes = [1, 192], strides = [1, 1]} : vector<4x192xf32> to vector<1x192xf32>
    %20 = math.tanh %18 : vector<2x192xf32>
    %21 = vector.broadcast %19 : vector<1x192xf32> to vector<2x192xf32>
    %22 = arith.mulf %21, %20 : vector<2x192xf32>
    %23 = arith.addf %18, %22 : vector<2x192xf32>
    %24 = vector.extract_strided_slice %8 {offsets = [1, 0], sizes = [1, 192], strides = [1, 1]} : vector<5x192xf32> to vector<1x192xf32>
    %25 = vector.broadcast %24 : vector<1x192xf32> to vector<2x192xf32>
    %26 = arith.mulf %23, %25 : vector<2x192xf32>
    %27 = vector.extract_strided_slice %9 {offsets = [1, 0], sizes = [1, 192], strides = [1, 1]} : vector<5x192xf32> to vector<1x192xf32>
    %28 = vector.broadcast %27 : vector<1x192xf32> to vector<2x192xf32>
    %29 = arith.addf %26, %28 : vector<2x192xf32>
    %30 = vector.extract_strided_slice %10 {offsets = [1, 0], sizes = [1, 192], strides = [1, 1]} : vector<4x192xf32> to vector<1x192xf32>
    %31 = math.tanh %29 : vector<2x192xf32>
    %32 = vector.broadcast %30 : vector<1x192xf32> to vector<2x192xf32>
    %33 = arith.mulf %32, %31 : vector<2x192xf32>
    %34 = arith.addf %29, %33 : vector<2x192xf32>
    %35 = vector.extract_strided_slice %8 {offsets = [2, 0], sizes = [1, 192], strides = [1, 1]} : vector<5x192xf32> to vector<1x192xf32>
    %36 = vector.broadcast %35 : vector<1x192xf32> to vector<2x192xf32>
    %37 = arith.mulf %34, %36 : vector<2x192xf32>
    %38 = vector.extract_strided_slice %9 {offsets = [2, 0], sizes = [1, 192], strides = [1, 1]} : vector<5x192xf32> to vector<1x192xf32>
    %39 = vector.broadcast %38 : vector<1x192xf32> to vector<2x192xf32>
    %40 = arith.addf %37, %39 : vector<2x192xf32>
    %41 = vector.extract_strided_slice %10 {offsets = [2, 0], sizes = [1, 192], strides = [1, 1]} : vector<4x192xf32> to vector<1x192xf32>
    %42 = math.tanh %40 : vector<2x192xf32>
    %43 = vector.broadcast %41 : vector<1x192xf32> to vector<2x192xf32>
    %44 = arith.mulf %43, %42 : vector<2x192xf32>
    %45 = arith.addf %40, %44 : vector<2x192xf32>
    %46 = vector.extract_strided_slice %8 {offsets = [3, 0], sizes = [1, 192], strides = [1, 1]} : vector<5x192xf32> to vector<1x192xf32>
    %47 = vector.broadcast %46 : vector<1x192xf32> to vector<2x192xf32>
    %48 = arith.mulf %45, %47 : vector<2x192xf32>
    %49 = vector.extract_strided_slice %9 {offsets = [3, 0], sizes = [1, 192], strides = [1, 1]} : vector<5x192xf32> to vector<1x192xf32>
    %50 = vector.broadcast %49 : vector<1x192xf32> to vector<2x192xf32>
    %51 = arith.addf %48, %50 : vector<2x192xf32>
    %52 = vector.extract_strided_slice %10 {offsets = [3, 0], sizes = [1, 192], strides = [1, 1]} : vector<4x192xf32> to vector<1x192xf32>
    %53 = math.tanh %51 : vector<2x192xf32>
    %54 = vector.broadcast %52 : vector<1x192xf32> to vector<2x192xf32>
    %55 = arith.mulf %54, %53 : vector<2x192xf32>
    %56 = arith.addf %51, %55 : vector<2x192xf32>
    %57 = vector.extract_strided_slice %8 {offsets = [4, 0], sizes = [1, 192], strides = [1, 1]} : vector<5x192xf32> to vector<1x192xf32>
    %58 = vector.broadcast %57 : vector<1x192xf32> to vector<2x192xf32>
    %59 = arith.mulf %56, %58 : vector<2x192xf32>
    %60 = vector.extract_strided_slice %9 {offsets = [4, 0], sizes = [1, 192], strides = [1, 1]} : vector<5x192xf32> to vector<1x192xf32>
    %61 = vector.broadcast %60 : vector<1x192xf32> to vector<2x192xf32>
    %62 = arith.addf %59, %61 : vector<2x192xf32>
    %63 = arith.negf %62 : vector<2x192xf32>
    %64 = math.exp %63 : vector<2x192xf32>
    %cst_14 = arith.constant 1.000000e+00 : f32
    %65 = vector.broadcast %cst_14 : f32 to vector<2x192xf32>
    %66 = arith.addf %65, %64 : vector<2x192xf32>
    %67 = arith.divf %65, %66 : vector<2x192xf32>
    %cst_15 = arith.constant 5.000000e-01 : f32
    %68 = vector.broadcast %cst_15 : f32 to vector<2x192xf32>
    %69 = arith.subf %7, %68 : vector<2x192xf32>
    %70 = vector.extract_strided_slice %8 {offsets = [0, 0], sizes = [1, 192], strides = [1, 1]} : vector<5x192xf32> to vector<1x192xf32>
    %71 = vector.broadcast %70 : vector<1x192xf32> to vector<2x192xf32>
    %72 = arith.mulf %69, %71 : vector<2x192xf32>
    %73 = vector.extract_strided_slice %9 {offsets = [0, 0], sizes = [1, 192], strides = [1, 1]} : vector<5x192xf32> to vector<1x192xf32>
    %74 = vector.broadcast %73 : vector<1x192xf32> to vector<2x192xf32>
    %75 = arith.addf %72, %74 : vector<2x192xf32>
    %76 = vector.extract_strided_slice %10 {offsets = [0, 0], sizes = [1, 192], strides = [1, 1]} : vector<4x192xf32> to vector<1x192xf32>
    %77 = math.tanh %75 : vector<2x192xf32>
    %78 = vector.broadcast %76 : vector<1x192xf32> to vector<2x192xf32>
    %79 = arith.mulf %78, %77 : vector<2x192xf32>
    %80 = arith.addf %75, %79 : vector<2x192xf32>
    %81 = vector.extract_strided_slice %8 {offsets = [1, 0], sizes = [1, 192], strides = [1, 1]} : vector<5x192xf32> to vector<1x192xf32>
    %82 = vector.broadcast %81 : vector<1x192xf32> to vector<2x192xf32>
    %83 = arith.mulf %80, %82 : vector<2x192xf32>
    %84 = vector.extract_strided_slice %9 {offsets = [1, 0], sizes = [1, 192], strides = [1, 1]} : vector<5x192xf32> to vector<1x192xf32>
    %85 = vector.broadcast %84 : vector<1x192xf32> to vector<2x192xf32>
    %86 = arith.addf %83, %85 : vector<2x192xf32>
    %87 = vector.extract_strided_slice %10 {offsets = [1, 0], sizes = [1, 192], strides = [1, 1]} : vector<4x192xf32> to vector<1x192xf32>
    %88 = math.tanh %86 : vector<2x192xf32>
    %89 = vector.broadcast %87 : vector<1x192xf32> to vector<2x192xf32>
    %90 = arith.mulf %89, %88 : vector<2x192xf32>
    %91 = arith.addf %86, %90 : vector<2x192xf32>
    %92 = vector.extract_strided_slice %8 {offsets = [2, 0], sizes = [1, 192], strides = [1, 1]} : vector<5x192xf32> to vector<1x192xf32>
    %93 = vector.broadcast %92 : vector<1x192xf32> to vector<2x192xf32>
    %94 = arith.mulf %91, %93 : vector<2x192xf32>
    %95 = vector.extract_strided_slice %9 {offsets = [2, 0], sizes = [1, 192], strides = [1, 1]} : vector<5x192xf32> to vector<1x192xf32>
    %96 = vector.broadcast %95 : vector<1x192xf32> to vector<2x192xf32>
    %97 = arith.addf %94, %96 : vector<2x192xf32>
    %98 = vector.extract_strided_slice %10 {offsets = [2, 0], sizes = [1, 192], strides = [1, 1]} : vector<4x192xf32> to vector<1x192xf32>
    %99 = math.tanh %97 : vector<2x192xf32>
    %100 = vector.broadcast %98 : vector<1x192xf32> to vector<2x192xf32>
    %101 = arith.mulf %100, %99 : vector<2x192xf32>
    %102 = arith.addf %97, %101 : vector<2x192xf32>
    %103 = vector.extract_strided_slice %8 {offsets = [3, 0], sizes = [1, 192], strides = [1, 1]} : vector<5x192xf32> to vector<1x192xf32>
    %104 = vector.broadcast %103 : vector<1x192xf32> to vector<2x192xf32>
    %105 = arith.mulf %102, %104 : vector<2x192xf32>
    %106 = vector.extract_strided_slice %9 {offsets = [3, 0], sizes = [1, 192], strides = [1, 1]} : vector<5x192xf32> to vector<1x192xf32>
    %107 = vector.broadcast %106 : vector<1x192xf32> to vector<2x192xf32>
    %108 = arith.addf %105, %107 : vector<2x192xf32>
    %109 = vector.extract_strided_slice %10 {offsets = [3, 0], sizes = [1, 192], strides = [1, 1]} : vector<4x192xf32> to vector<1x192xf32>
    %110 = math.tanh %108 : vector<2x192xf32>
    %111 = vector.broadcast %109 : vector<1x192xf32> to vector<2x192xf32>
    %112 = arith.mulf %111, %110 : vector<2x192xf32>
    %113 = arith.addf %108, %112 : vector<2x192xf32>
    %114 = vector.extract_strided_slice %8 {offsets = [4, 0], sizes = [1, 192], strides = [1, 1]} : vector<5x192xf32> to vector<1x192xf32>
    %115 = vector.broadcast %114 : vector<1x192xf32> to vector<2x192xf32>
    %116 = arith.mulf %113, %115 : vector<2x192xf32>
    %117 = vector.extract_strided_slice %9 {offsets = [4, 0], sizes = [1, 192], strides = [1, 1]} : vector<5x192xf32> to vector<1x192xf32>
    %118 = vector.broadcast %117 : vector<1x192xf32> to vector<2x192xf32>
    %119 = arith.addf %116, %118 : vector<2x192xf32>
    %120 = arith.negf %119 : vector<2x192xf32>
    %121 = math.exp %120 : vector<2x192xf32>
    %cst_16 = arith.constant 1.000000e+00 : f32
    %122 = vector.broadcast %cst_16 : f32 to vector<2x192xf32>
    %123 = arith.addf %122, %121 : vector<2x192xf32>
    %124 = arith.divf %122, %123 : vector<2x192xf32>
    %125 = arith.subf %67, %124 : vector<2x192xf32>
    %cst_17 = arith.constant 1.000000e-10 : f32
    %cst_18 = arith.constant 1.000000e+00 : f32
    %126 = vector.broadcast %cst_17 : f32 to vector<2x192xf32>
    %127 = arith.maximumf %126, %125 : vector<2x192xf32>
    %128 = vector.broadcast %cst_18 : f32 to vector<2x192xf32>
    %129 = arith.minimumf %128, %127 : vector<2x192xf32>
    %130 = math.log %129 : vector<2x192xf32>
    %cst_19 = arith.constant 0.000000e+00 : f32
    %131 = vector.broadcast %cst_19 : f32 to vector<2x192xf32>
    %132 = arith.subf %131, %130 : vector<2x192xf32>
    %cst_20 = arith.constant 1.44269502 : f32
    %133 = vector.broadcast %cst_20 : f32 to vector<2x192xf32>
    %134 = arith.mulf %132, %133 : vector<2x192xf32>
    %135 = vector.shape_cast %134 : vector<2x192xf32> to vector<1x2x192xf32>
    %cst_21 = arith.constant dense<0.000000e+00> : vector<1xf32>
    %136 = vector.multi_reduction <add>, %135, %cst_21 [1, 2] : vector<1x2x192xf32> to vector<1xf32>
    %137 = vector.shape_cast %136 : vector<1xf32> to vector<1x1x1xf32>
    %138 = vector.extract %137[0, 0, 0] : f32 from vector<1x1x1xf32>
    %139 = vector.broadcast %138 : f32 to vector<1x1xf32>
    %c0_22 = arith.constant 0 : index
    %c0_23 = arith.constant 0 : index
    %140 = vector.load %arg10[%c0_22, %c0_23] : memref<1x1xf32, #tpu.memory_space<vmem>>, vector<1x1xf32>
    tpu.vector_store %arg10[%c0_22, %c0_23], %139 {strides = array<i32>} : memref<1x1xf32, #tpu.memory_space<vmem>>, vector<1x1xf32>,
    %141 = arith.truncf %7 : vector<2x192xf32> to vector<2x192xbf16>
    %c0_24 = arith.constant 0 : index
    %c0_25 = arith.constant 0 : index
    %142 = vector.load %arg5[%c0_24, %c0_25] : memref<192x768xbf16, #tpu.memory_space<vmem>>, vector<192x768xbf16>
    %cst_26 = arith.constant dense<0.000000e+00> : vector<2x768xf32>
    %143 = tpu.matmul %141, %142, %cst_26 {dimension_numbers = #tpu.dot_dimension_numbers<[1], [0], [0], [1], [0, 0, 1, 1], [], []>} : vector<2x192xbf16>, vector<192x768xbf16>, vector<2x768xf32> -> vector<2x768xf32>
    %c0_27 = arith.constant 0 : index
    %c0_28 = arith.constant 0 : index
    %144 = vector.load %arg6[%c0_27, %c0_28] : memref<1x768xf32, #tpu.memory_space<vmem>>, vector<1x768xf32>
    %145 = vector.broadcast %144 : vector<1x768xf32> to vector<2x768xf32>
    %146 = arith.addf %143, %145 : vector<2x768xf32>
    %147 = arith.truncf %146 : vector<2x768xf32> to vector<2x768xbf16>
    %c0_29 = arith.constant 0 : index
    %c0_30 = arith.constant 0 : index
    %148 = vector.load %arg11[%c0_29, %c0_30] : memref<2x768xbf16, #tpu.memory_space<vmem>>, vector<2x768xbf16>
    tpu.vector_store %arg11[%c0_29, %c0_30], %147 {strides = array<i32>} : memref<2x768xbf16, #tpu.memory_space<vmem>>, vector<2x768xbf16>,
    return
  }
  func.func @transform_0(%arg0: i32) -> (i32, i32) {
    %c0_i32 = arith.constant 0 : i32
    %c0_i32_0 = arith.constant 0 : i32
    %c0_i32_1 = arith.constant 0 : i32
    return %c0_i32, %c0_i32_0 : i32, i32
  }
  func.func @transform_1(%arg0: i32) -> (i32, i32) {
    %c0_i32 = arith.constant 0 : i32
    %c0_i32_0 = arith.constant 0 : i32
    %c0_i32_1 = arith.constant 0 : i32
    return %c0_i32, %c0_i32_0 : i32, i32
  }
  func.func @transform_2(%arg0: i32) -> (i32, i32) {
    %c0_i32 = arith.constant 0 : i32
    %c0_i32_0 = arith.constant 0 : i32
    %c0_i32_1 = arith.constant 0 : i32
    return %c0_i32, %c0_i32_0 : i32, i32
  }
  func.func @transform_3(%arg0: i32) -> (i32, i32) {
    %c0_i32 = arith.constant 0 : i32
    %c0_i32_0 = arith.constant 0 : i32
    %c0_i32_1 = arith.constant 0 : i32
    return %c0_i32, %c0_i32_0 : i32, i32
  }
  func.func @transform_4(%arg0: i32) -> (i32, i32) {
    %c0_i32 = arith.constant 0 : i32
    %c0_i32_0 = arith.constant 0 : i32
    %c0_i32_1 = arith.constant 0 : i32
    return %c0_i32, %c0_i32_0 : i32, i32
  }
  func.func @transform_5(%arg0: i32) -> (i32, i32) {
    %c0_i32 = arith.constant 0 : i32
    %c0_i32_0 = arith.constant 0 : i32
    %c0_i32_1 = arith.constant 0 : i32
    return %c0_i32, %c0_i32_0 : i32, i32
  }
  func.func @transform_6(%arg0: i32) -> (i32, i32) {
    %c0_i32 = arith.constant 0 : i32
    %c0_i32_0 = arith.constant 0 : i32
    %c0_i32_1 = arith.constant 0 : i32
    return %c0_i32, %c0_i32_0 : i32, i32
  }
  func.func @transform_7(%arg0: i32) -> (i32, i32) {
    %c0_i32 = arith.constant 0 : i32
    %c0_i32_0 = arith.constant 0 : i32
    %c0_i32_1 = arith.constant 0 : i32
    return %c0_i32, %c0_i32_0 : i32, i32
  }
  func.func @transform_8(%arg0: i32) -> (i32, i32) {
    %c0_i32 = arith.constant 0 : i32
    %c0_i32_0 = arith.constant 0 : i32
    %c0_i32_1 = arith.constant 0 : i32
    return %c0_i32, %c0_i32_0 : i32, i32
  }
  func.func @transform_9(%arg0: i32) -> (i32, i32) {
    %c0_i32 = arith.constant 0 : i32
    %c0_i32_0 = arith.constant 0 : i32
    %c0_i32_1 = arith.constant 0 : i32
    return %c0_i32, %c0_i32_0 : i32, i32
  }
  func.func @transform_10(%arg0: i32) -> (i32, i32) {
    %c0_i32 = arith.constant 0 : i32
    %c0_i32_0 = arith.constant 0 : i32
    %c0_i32_1 = arith.constant 0 : i32
    return %c0_i32, %c0_i32_0 : i32, i32
  }
}

module attributes {stable_mosaic.version = 11 : i64} {
  func.func @_dec_stage_kernel(%arg0: i32, %arg1: memref<8x192xbf16, #tpu.memory_space<vmem>>, %arg2: memref<192x192xbf16, #tpu.memory_space<vmem>>, %arg3: memref<1x192xf32, #tpu.memory_space<vmem>>, %arg4: memref<192x768xbf16, #tpu.memory_space<vmem>>, %arg5: memref<1x768xf32, #tpu.memory_space<vmem>>, %arg6: memref<8x768xbf16, #tpu.memory_space<vmem>>) attributes {dimension_semantics = [#tpu.dimension_semantics<parallel>], iteration_bounds = array<i64: 1>, scalar_prefetch = 0 : i64, scratch_operands = 0 : i64, tpu.core_type = #tpu.core_type<tc>, window_params = [{transform_indices = @transform_0, window_bounds = array<i64: 8, 192>}, {pipeline_mode = #tpu.pipeline_mode<synchronous>, transform_indices = @transform_1, window_bounds = array<i64: 192, 192>}, {pipeline_mode = #tpu.pipeline_mode<synchronous>, transform_indices = @transform_2, window_bounds = array<i64: 1, 192>}, {pipeline_mode = #tpu.pipeline_mode<synchronous>, transform_indices = @transform_3, window_bounds = array<i64: 192, 768>}, {pipeline_mode = #tpu.pipeline_mode<synchronous>, transform_indices = @transform_4, window_bounds = array<i64: 1, 768>}, {transform_indices = @transform_5, window_bounds = array<i64: 8, 768>}]} {
    %c0 = arith.constant 0 : index
    %c0_0 = arith.constant 0 : index
    %0 = vector.load %arg1[%c0, %c0_0] : memref<8x192xbf16, #tpu.memory_space<vmem>>, vector<8x192xbf16>
    %1 = arith.extf %0 : vector<8x192xbf16> to vector<8x192xf32>
    %2 = arith.mulf %1, %1 : vector<8x192xf32>
    %3 = arith.truncf %2 : vector<8x192xf32> to vector<8x192xbf16>
    %c0_1 = arith.constant 0 : index
    %c0_2 = arith.constant 0 : index
    %4 = vector.load %arg2[%c0_1, %c0_2] : memref<192x192xbf16, #tpu.memory_space<vmem>>, vector<192x192xbf16>
    %cst = arith.constant dense<0.000000e+00> : vector<8x192xf32>
    %5 = tpu.matmul %3, %4, %cst {dimension_numbers = #tpu.dot_dimension_numbers<[1], [0], [0], [1], [0, 0, 1, 1], [], []>} : vector<8x192xbf16>, vector<192x192xbf16>, vector<8x192xf32> -> vector<8x192xf32>
    %c0_3 = arith.constant 0 : index
    %c0_4 = arith.constant 0 : index
    %6 = vector.load %arg3[%c0_3, %c0_4] : memref<1x192xf32, #tpu.memory_space<vmem>>, vector<1x192xf32>
    %7 = vector.broadcast %6 : vector<1x192xf32> to vector<8x192xf32>
    %8 = arith.addf %5, %7 : vector<8x192xf32>
    %9 = math.sqrt %8 : vector<8x192xf32>
    %10 = arith.mulf %1, %9 : vector<8x192xf32>
    %11 = arith.truncf %10 : vector<8x192xf32> to vector<8x192xbf16>
    %c0_5 = arith.constant 0 : index
    %c0_6 = arith.constant 0 : index
    %12 = vector.load %arg4[%c0_5, %c0_6] : memref<192x768xbf16, #tpu.memory_space<vmem>>, vector<192x768xbf16>
    %cst_7 = arith.constant dense<0.000000e+00> : vector<8x768xf32>
    %13 = tpu.matmul %11, %12, %cst_7 {dimension_numbers = #tpu.dot_dimension_numbers<[1], [0], [0], [1], [0, 0, 1, 1], [], []>} : vector<8x192xbf16>, vector<192x768xbf16>, vector<8x768xf32> -> vector<8x768xf32>
    %c0_8 = arith.constant 0 : index
    %c0_9 = arith.constant 0 : index
    %14 = vector.load %arg5[%c0_8, %c0_9] : memref<1x768xf32, #tpu.memory_space<vmem>>, vector<1x768xf32>
    %15 = vector.broadcast %14 : vector<1x768xf32> to vector<8x768xf32>
    %16 = arith.addf %13, %15 : vector<8x768xf32>
    %17 = arith.truncf %16 : vector<8x768xf32> to vector<8x768xbf16>
    %c0_10 = arith.constant 0 : index
    %c0_11 = arith.constant 0 : index
    %18 = vector.load %arg6[%c0_10, %c0_11] : memref<8x768xbf16, #tpu.memory_space<vmem>>, vector<8x768xbf16>
    tpu.vector_store %arg6[%c0_10, %c0_11], %17 {strides = array<i32>} : memref<8x768xbf16, #tpu.memory_space<vmem>>, vector<8x768xbf16>,
    return
  }
  func.func @transform_0(%arg0: i32) -> (i32, i32) {
    %c0_i32 = arith.constant 0 : i32
    %c0_i32_0 = arith.constant 0 : i32
    return %arg0, %c0_i32 : i32, i32
  }
  func.func @transform_1(%arg0: i32) -> (i32, i32) {
    %c0_i32 = arith.constant 0 : i32
    %c0_i32_0 = arith.constant 0 : i32
    %c0_i32_1 = arith.constant 0 : i32
    return %c0_i32, %c0_i32_0 : i32, i32
  }
  func.func @transform_2(%arg0: i32) -> (i32, i32) {
    %c0_i32 = arith.constant 0 : i32
    %c0_i32_0 = arith.constant 0 : i32
    %c0_i32_1 = arith.constant 0 : i32
    return %c0_i32, %c0_i32_0 : i32, i32
  }
  func.func @transform_3(%arg0: i32) -> (i32, i32) {
    %c0_i32 = arith.constant 0 : i32
    %c0_i32_0 = arith.constant 0 : i32
    %c0_i32_1 = arith.constant 0 : i32
    return %c0_i32, %c0_i32_0 : i32, i32
  }
  func.func @transform_4(%arg0: i32) -> (i32, i32) {
    %c0_i32 = arith.constant 0 : i32
    %c0_i32_0 = arith.constant 0 : i32
    %c0_i32_1 = arith.constant 0 : i32
    return %c0_i32, %c0_i32_0 : i32, i32
  }
  func.func @transform_5(%arg0: i32) -> (i32, i32) {
    %c0_i32 = arith.constant 0 : i32
    %c0_i32_0 = arith.constant 0 : i32
    return %arg0, %c0_i32 : i32, i32
  }
}

module attributes {stable_mosaic.version = 11 : i64} {
  func.func @_dec_stage_kernel(%arg0: i32, %arg1: memref<32x192xbf16, #tpu.memory_space<vmem>>, %arg2: memref<192x192xbf16, #tpu.memory_space<vmem>>, %arg3: memref<1x192xf32, #tpu.memory_space<vmem>>, %arg4: memref<192x768xbf16, #tpu.memory_space<vmem>>, %arg5: memref<1x768xf32, #tpu.memory_space<vmem>>, %arg6: memref<32x768xbf16, #tpu.memory_space<vmem>>) attributes {dimension_semantics = [#tpu.dimension_semantics<parallel>], iteration_bounds = array<i64: 1>, scalar_prefetch = 0 : i64, scratch_operands = 0 : i64, tpu.core_type = #tpu.core_type<tc>, window_params = [{transform_indices = @transform_0, window_bounds = array<i64: 32, 192>}, {pipeline_mode = #tpu.pipeline_mode<synchronous>, transform_indices = @transform_1, window_bounds = array<i64: 192, 192>}, {pipeline_mode = #tpu.pipeline_mode<synchronous>, transform_indices = @transform_2, window_bounds = array<i64: 1, 192>}, {pipeline_mode = #tpu.pipeline_mode<synchronous>, transform_indices = @transform_3, window_bounds = array<i64: 192, 768>}, {pipeline_mode = #tpu.pipeline_mode<synchronous>, transform_indices = @transform_4, window_bounds = array<i64: 1, 768>}, {transform_indices = @transform_5, window_bounds = array<i64: 32, 768>}]} {
    %c0 = arith.constant 0 : index
    %c0_0 = arith.constant 0 : index
    %0 = vector.load %arg1[%c0, %c0_0] : memref<32x192xbf16, #tpu.memory_space<vmem>>, vector<32x192xbf16>
    %1 = arith.extf %0 : vector<32x192xbf16> to vector<32x192xf32>
    %2 = arith.mulf %1, %1 : vector<32x192xf32>
    %3 = arith.truncf %2 : vector<32x192xf32> to vector<32x192xbf16>
    %c0_1 = arith.constant 0 : index
    %c0_2 = arith.constant 0 : index
    %4 = vector.load %arg2[%c0_1, %c0_2] : memref<192x192xbf16, #tpu.memory_space<vmem>>, vector<192x192xbf16>
    %cst = arith.constant dense<0.000000e+00> : vector<32x192xf32>
    %5 = tpu.matmul %3, %4, %cst {dimension_numbers = #tpu.dot_dimension_numbers<[1], [0], [0], [1], [0, 0, 1, 1], [], []>} : vector<32x192xbf16>, vector<192x192xbf16>, vector<32x192xf32> -> vector<32x192xf32>
    %c0_3 = arith.constant 0 : index
    %c0_4 = arith.constant 0 : index
    %6 = vector.load %arg3[%c0_3, %c0_4] : memref<1x192xf32, #tpu.memory_space<vmem>>, vector<1x192xf32>
    %7 = vector.broadcast %6 : vector<1x192xf32> to vector<32x192xf32>
    %8 = arith.addf %5, %7 : vector<32x192xf32>
    %9 = math.sqrt %8 : vector<32x192xf32>
    %10 = arith.mulf %1, %9 : vector<32x192xf32>
    %11 = arith.truncf %10 : vector<32x192xf32> to vector<32x192xbf16>
    %c0_5 = arith.constant 0 : index
    %c0_6 = arith.constant 0 : index
    %12 = vector.load %arg4[%c0_5, %c0_6] : memref<192x768xbf16, #tpu.memory_space<vmem>>, vector<192x768xbf16>
    %cst_7 = arith.constant dense<0.000000e+00> : vector<32x768xf32>
    %13 = tpu.matmul %11, %12, %cst_7 {dimension_numbers = #tpu.dot_dimension_numbers<[1], [0], [0], [1], [0, 0, 1, 1], [], []>} : vector<32x192xbf16>, vector<192x768xbf16>, vector<32x768xf32> -> vector<32x768xf32>
    %c0_8 = arith.constant 0 : index
    %c0_9 = arith.constant 0 : index
    %14 = vector.load %arg5[%c0_8, %c0_9] : memref<1x768xf32, #tpu.memory_space<vmem>>, vector<1x768xf32>
    %15 = vector.broadcast %14 : vector<1x768xf32> to vector<32x768xf32>
    %16 = arith.addf %13, %15 : vector<32x768xf32>
    %17 = arith.truncf %16 : vector<32x768xf32> to vector<32x768xbf16>
    %c0_10 = arith.constant 0 : index
    %c0_11 = arith.constant 0 : index
    %18 = vector.load %arg6[%c0_10, %c0_11] : memref<32x768xbf16, #tpu.memory_space<vmem>>, vector<32x768xbf16>
    tpu.vector_store %arg6[%c0_10, %c0_11], %17 {strides = array<i32>} : memref<32x768xbf16, #tpu.memory_space<vmem>>, vector<32x768xbf16>,
    return
  }
  func.func @transform_0(%arg0: i32) -> (i32, i32) {
    %c0_i32 = arith.constant 0 : i32
    %c0_i32_0 = arith.constant 0 : i32
    return %arg0, %c0_i32 : i32, i32
  }
  func.func @transform_1(%arg0: i32) -> (i32, i32) {
    %c0_i32 = arith.constant 0 : i32
    %c0_i32_0 = arith.constant 0 : i32
    %c0_i32_1 = arith.constant 0 : i32
    return %c0_i32, %c0_i32_0 : i32, i32
  }
  func.func @transform_2(%arg0: i32) -> (i32, i32) {
    %c0_i32 = arith.constant 0 : i32
    %c0_i32_0 = arith.constant 0 : i32
    %c0_i32_1 = arith.constant 0 : i32
    return %c0_i32, %c0_i32_0 : i32, i32
  }
  func.func @transform_3(%arg0: i32) -> (i32, i32) {
    %c0_i32 = arith.constant 0 : i32
    %c0_i32_0 = arith.constant 0 : i32
    %c0_i32_1 = arith.constant 0 : i32
    return %c0_i32, %c0_i32_0 : i32, i32
  }
  func.func @transform_4(%arg0: i32) -> (i32, i32) {
    %c0_i32 = arith.constant 0 : i32
    %c0_i32_0 = arith.constant 0 : i32
    %c0_i32_1 = arith.constant 0 : i32
    return %c0_i32, %c0_i32_0 : i32, i32
  }
  func.func @transform_5(%arg0: i32) -> (i32, i32) {
    %c0_i32 = arith.constant 0 : i32
    %c0_i32_0 = arith.constant 0 : i32
    return %arg0, %c0_i32 : i32, i32
  }
}

module attributes {stable_mosaic.version = 11 : i64} {
  func.func @_tail_kernel(%arg0: i32, %arg1: memref<128x12xf32, #tpu.memory_space<vmem>>, %arg2: memref<128x192xbf16, #tpu.memory_space<vmem>>, %arg3: memref<192x192xbf16, #tpu.memory_space<vmem>>, %arg4: memref<1x192xf32, #tpu.memory_space<vmem>>, %arg5: memref<192x12xbf16, #tpu.memory_space<vmem>>, %arg6: memref<1x12xf32, #tpu.memory_space<vmem>>, %arg7: memref<12x12xf32, #tpu.memory_space<vmem>>, %arg8: memref<12x12xf32, #tpu.memory_space<vmem>>, %arg9: memref<128x12xf32, #tpu.memory_space<vmem>>, %arg10: memref<2x12xf32, #tpu.memory_space<vmem>>) attributes {dimension_semantics = [#tpu.dimension_semantics<arbitrary>], iteration_bounds = array<i64: 1>, scalar_prefetch = 0 : i64, scratch_operands = 0 : i64, tpu.core_type = #tpu.core_type<tc>, window_params = [{transform_indices = @transform_0, window_bounds = array<i64: 128, 12>}, {transform_indices = @transform_1, window_bounds = array<i64: 128, 192>}, {pipeline_mode = #tpu.pipeline_mode<synchronous>, transform_indices = @transform_2, window_bounds = array<i64: 192, 192>}, {pipeline_mode = #tpu.pipeline_mode<synchronous>, transform_indices = @transform_3, window_bounds = array<i64: 1, 192>}, {pipeline_mode = #tpu.pipeline_mode<synchronous>, transform_indices = @transform_4, window_bounds = array<i64: 192, 12>}, {pipeline_mode = #tpu.pipeline_mode<synchronous>, transform_indices = @transform_5, window_bounds = array<i64: 1, 12>}, {pipeline_mode = #tpu.pipeline_mode<synchronous>, transform_indices = @transform_6, window_bounds = array<i64: 12, 12>}, {pipeline_mode = #tpu.pipeline_mode<synchronous>, transform_indices = @transform_7, window_bounds = array<i64: 12, 12>}, {transform_indices = @transform_8, window_bounds = array<i64: 128, 12>}, {pipeline_mode = #tpu.pipeline_mode<synchronous>, transform_indices = @transform_9, window_bounds = array<i64: 2, 12>}]} {
    %c0_i32 = arith.constant 0 : i32
    %0 = arith.cmpi eq, %arg0, %c0_i32 : i32
    %1 = arith.extui %0 : i1 to i32
    %c0_i32_0 = arith.constant 0 : i32
    %2 = arith.cmpi ne, %1, %c0_i32_0 : i32
    scf.if %2 {
      %cst_32 = arith.constant 0.000000e+00 : f32
      %44 = vector.broadcast %cst_32 : f32 to vector<2x12xf32>
      %c0_33 = arith.constant 0 : index
      %c0_34 = arith.constant 0 : index
      %45 = vector.load %arg10[%c0_33, %c0_34] : memref<2x12xf32, #tpu.memory_space<vmem>>, vector<2x12xf32>
      tpu.vector_store %arg10[%c0_33, %c0_34], %44 {strides = array<i32>} : memref<2x12xf32, #tpu.memory_space<vmem>>, vector<2x12xf32>,
    } else {
    }
    %c0 = arith.constant 0 : index
    %c0_1 = arith.constant 0 : index
    %3 = vector.load %arg2[%c0, %c0_1] : memref<128x192xbf16, #tpu.memory_space<vmem>>, vector<128x192xbf16>
    %4 = arith.extf %3 : vector<128x192xbf16> to vector<128x192xf32>
    %5 = arith.mulf %4, %4 : vector<128x192xf32>
    %6 = arith.truncf %5 : vector<128x192xf32> to vector<128x192xbf16>
    %c0_2 = arith.constant 0 : index
    %c0_3 = arith.constant 0 : index
    %7 = vector.load %arg3[%c0_2, %c0_3] : memref<192x192xbf16, #tpu.memory_space<vmem>>, vector<192x192xbf16>
    %cst = arith.constant dense<0.000000e+00> : vector<128x192xf32>
    %8 = tpu.matmul %6, %7, %cst {dimension_numbers = #tpu.dot_dimension_numbers<[1], [0], [0], [1], [0, 0, 1, 1], [], []>} : vector<128x192xbf16>, vector<192x192xbf16>, vector<128x192xf32> -> vector<128x192xf32>
    %c0_4 = arith.constant 0 : index
    %c0_5 = arith.constant 0 : index
    %9 = vector.load %arg4[%c0_4, %c0_5] : memref<1x192xf32, #tpu.memory_space<vmem>>, vector<1x192xf32>
    %10 = vector.broadcast %9 : vector<1x192xf32> to vector<128x192xf32>
    %11 = arith.addf %8, %10 : vector<128x192xf32>
    %12 = math.sqrt %11 : vector<128x192xf32>
    %13 = arith.mulf %4, %12 : vector<128x192xf32>
    %14 = arith.truncf %13 : vector<128x192xf32> to vector<128x192xbf16>
    %c0_6 = arith.constant 0 : index
    %c0_7 = arith.constant 0 : index
    %15 = vector.load %arg5[%c0_6, %c0_7] : memref<192x12xbf16, #tpu.memory_space<vmem>>, vector<192x12xbf16>
    %cst_8 = arith.constant dense<0.000000e+00> : vector<128x12xf32>
    %16 = tpu.matmul %14, %15, %cst_8 {dimension_numbers = #tpu.dot_dimension_numbers<[1], [0], [0], [1], [0, 0, 1, 1], [], []>} : vector<128x192xbf16>, vector<192x12xbf16>, vector<128x12xf32> -> vector<128x12xf32>
    %c0_9 = arith.constant 0 : index
    %c0_10 = arith.constant 0 : index
    %17 = vector.load %arg6[%c0_9, %c0_10] : memref<1x12xf32, #tpu.memory_space<vmem>>, vector<1x12xf32>
    %18 = vector.broadcast %17 : vector<1x12xf32> to vector<128x12xf32>
    %19 = arith.addf %16, %18 : vector<128x12xf32>
    %cst_11 = arith.constant 0.000000e+00 : f32
    %cst_12 = arith.constant 2.000000e+00 : f32
    %20 = vector.broadcast %cst_11 : f32 to vector<128x12xf32>
    %21 = arith.maximumf %20, %19 : vector<128x12xf32>
    %22 = vector.broadcast %cst_12 : f32 to vector<128x12xf32>
    %23 = arith.minimumf %22, %21 : vector<128x12xf32>
    %c0_13 = arith.constant 0 : index
    %c0_14 = arith.constant 0 : index
    %24 = vector.load %arg8[%c0_13, %c0_14] : memref<12x12xf32, #tpu.memory_space<vmem>>, vector<12x12xf32>
    %cst_15 = arith.constant dense<0.000000e+00> : vector<128x12xf32>
    %25 = tpu.matmul %23, %24, %cst_15 {dimension_numbers = #tpu.dot_dimension_numbers<[1], [0], [0], [1], [0, 0, 1, 1], [], []>} : vector<128x12xf32>, vector<12x12xf32>, vector<128x12xf32> -> vector<128x12xf32>
    %c0_16 = arith.constant 0 : index
    %c0_17 = arith.constant 0 : index
    %26 = vector.load %arg1[%c0_16, %c0_17] : memref<128x12xf32, #tpu.memory_space<vmem>>, vector<128x12xf32>
    %c0_18 = arith.constant 0 : index
    %c0_19 = arith.constant 0 : index
    %27 = vector.load %arg7[%c0_18, %c0_19] : memref<12x12xf32, #tpu.memory_space<vmem>>, vector<12x12xf32>
    %cst_20 = arith.constant dense<0.000000e+00> : vector<128x12xf32>
    %28 = tpu.matmul %26, %27, %cst_20 {dimension_numbers = #tpu.dot_dimension_numbers<[1], [0], [0], [1], [0, 0, 1, 1], [], []>} : vector<128x12xf32>, vector<12x12xf32>, vector<128x12xf32> -> vector<128x12xf32>
    %c0_21 = arith.constant 0 : index
    %c0_22 = arith.constant 0 : index
    %29 = vector.load %arg9[%c0_21, %c0_22] : memref<128x12xf32, #tpu.memory_space<vmem>>, vector<128x12xf32>
    tpu.vector_store %arg9[%c0_21, %c0_22], %25 {strides = array<i32>} : memref<128x12xf32, #tpu.memory_space<vmem>>, vector<128x12xf32>,
    %30 = arith.subf %26, %25 : vector<128x12xf32>
    %31 = arith.subf %28, %23 : vector<128x12xf32>
    %c0_23 = arith.constant 0 : index
    %c0_24 = arith.constant 0 : index
    %32 = vector.load %arg10[%c0_23, %c0_24] : memref<2x12xf32, #tpu.memory_space<vmem>>, vector<1x12xf32>
    %33 = arith.mulf %30, %30 : vector<128x12xf32>
    %cst_25 = arith.constant dense<0.000000e+00> : vector<12xf32>
    %34 = vector.multi_reduction <add>, %33, %cst_25 [0] : vector<128x12xf32> to vector<12xf32>
    %35 = vector.shape_cast %34 : vector<12xf32> to vector<1x12xf32>
    %36 = arith.addf %32, %35 : vector<1x12xf32>
    %c0_26 = arith.constant 0 : index
    %c0_27 = arith.constant 0 : index
    %37 = vector.load %arg10[%c0_26, %c0_27] : memref<2x12xf32, #tpu.memory_space<vmem>>, vector<1x12xf32>
    tpu.vector_store %arg10[%c0_26, %c0_27], %36 {strides = array<i32>} : memref<2x12xf32, #tpu.memory_space<vmem>>, vector<1x12xf32>,
    %c1 = arith.constant 1 : index
    %c0_28 = arith.constant 0 : index
    %38 = vector.load %arg10[%c1, %c0_28] : memref<2x12xf32, #tpu.memory_space<vmem>>, vector<1x12xf32>
    %39 = arith.mulf %31, %31 : vector<128x12xf32>
    %cst_29 = arith.constant dense<0.000000e+00> : vector<12xf32>
    %40 = vector.multi_reduction <add>, %39, %cst_29 [0] : vector<128x12xf32> to vector<12xf32>
    %41 = vector.shape_cast %40 : vector<12xf32> to vector<1x12xf32>
    %42 = arith.addf %38, %41 : vector<1x12xf32>
    %c1_30 = arith.constant 1 : index
    %c0_31 = arith.constant 0 : index
    %43 = vector.load %arg10[%c1_30, %c0_31] : memref<2x12xf32, #tpu.memory_space<vmem>>, vector<1x12xf32>
    tpu.vector_store %arg10[%c1_30, %c0_31], %42 {strides = array<i32>} : memref<2x12xf32, #tpu.memory_space<vmem>>, vector<1x12xf32>,
    return
  }
  func.func @transform_0(%arg0: i32) -> (i32, i32) {
    %c0_i32 = arith.constant 0 : i32
    %c0_i32_0 = arith.constant 0 : i32
    return %arg0, %c0_i32 : i32, i32
  }
  func.func @transform_1(%arg0: i32) -> (i32, i32) {
    %c0_i32 = arith.constant 0 : i32
    %c0_i32_0 = arith.constant 0 : i32
    return %arg0, %c0_i32 : i32, i32
  }
  func.func @transform_2(%arg0: i32) -> (i32, i32) {
    %c0_i32 = arith.constant 0 : i32
    %c0_i32_0 = arith.constant 0 : i32
    %c0_i32_1 = arith.constant 0 : i32
    return %c0_i32, %c0_i32_0 : i32, i32
  }
  func.func @transform_3(%arg0: i32) -> (i32, i32) {
    %c0_i32 = arith.constant 0 : i32
    %c0_i32_0 = arith.constant 0 : i32
    %c0_i32_1 = arith.constant 0 : i32
    return %c0_i32, %c0_i32_0 : i32, i32
  }
  func.func @transform_4(%arg0: i32) -> (i32, i32) {
    %c0_i32 = arith.constant 0 : i32
    %c0_i32_0 = arith.constant 0 : i32
    %c0_i32_1 = arith.constant 0 : i32
    return %c0_i32, %c0_i32_0 : i32, i32
  }
  func.func @transform_5(%arg0: i32) -> (i32, i32) {
    %c0_i32 = arith.constant 0 : i32
    %c0_i32_0 = arith.constant 0 : i32
    %c0_i32_1 = arith.constant 0 : i32
    return %c0_i32, %c0_i32_0 : i32, i32
  }
  func.func @transform_6(%arg0: i32) -> (i32, i32) {
    %c0_i32 = arith.constant 0 : i32
    %c0_i32_0 = arith.constant 0 : i32
    %c0_i32_1 = arith.constant 0 : i32
    return %c0_i32, %c0_i32_0 : i32, i32
  }
  func.func @transform_7(%arg0: i32) -> (i32, i32) {
    %c0_i32 = arith.constant 0 : i32
    %c0_i32_0 = arith.constant 0 : i32
    %c0_i32_1 = arith.constant 0 : i32
    return %c0_i32, %c0_i32_0 : i32, i32
  }
  func.func @transform_8(%arg0: i32) -> (i32, i32) {
    %c0_i32 = arith.constant 0 : i32
    %c0_i32_0 = arith.constant 0 : i32
    return %arg0, %c0_i32 : i32, i32
  }
  func.func @transform_9(%arg0: i32) -> (i32, i32) {
    %c0_i32 = arith.constant 0 : i32
    %c0_i32_0 = arith.constant 0 : i32
    %c0_i32_1 = arith.constant 0 : i32
    return %c0_i32, %c0_i32_0 : i32, i32
  }
}

</mosaic_0001>

<llo_original>
// kernel: forward.7
$region0: #{forward.7}
  #allocation0 [shape = 'u32[]', space=smem, size = 0x4, offset = 0x4, fixed_abs, tag = 'smem constant byte address 0x4 - core index']
  #allocation1 [shape = 'u32[72,128]{1,0:T(1,128)}', space=vmem, size = 0x9000, scoped, tag = 'internal scratch']
  %s0 = inlined_call_operand.vmem [shape: f32[128,12], index: 0, kind: input, shape index: {}]
  %s1 = inlined_call_operand.vmem [shape: bf16[12,192], index: 1, kind: input, shape index: {}]
  %s2 = inlined_call_operand.vmem [shape: f32[1,192], index: 2, kind: input, shape index: {}]
  %s3 = inlined_call_operand.vmem [shape: bf16[192,192], index: 3, kind: input, shape index: {}]
  %s4 = inlined_call_operand.vmem [shape: f32[1,192], index: 4, kind: input, shape index: {}]
  %s5 = inlined_call_operand.vmem [shape: bf16[128,192], index: 5, kind: output, shape index: {}]
  %s6 = sld [smem:[#allocation0]]
  $region30: #{forward.7} parent=0
    _
  %s8 = ssub.s32 1, %s6
  %s9 = scalar_select 0, %s8, %s6
  // Predicated region
  $region2: #{forward.7} parent=0 // pred_check
    _
  $region3: #{forward.7} parent=0 // pred_check_branch
    %11 = sbr.rel (0) target = $region5
  $region4: #{forward.7} parent=0 // pred_region
    _
  $region5: #{forward.7} parent=0 // pred_fallthru
    _
  // Predicated region
  $region6: #{forward.7} parent=0 // pred_check
    _
  $region7: #{forward.7} parent=0 // pred_check_branch
    %13 = sbr.rel (0) target = $region9
  $region8: #{forward.7} parent=0 // pred_region
    _
  $region9: #{forward.7} parent=0 // pred_fallthru
    _
  // Predicated region
  $region10: #{forward.7} parent=0 // pred_check
    _
  $region11: #{forward.7} parent=0 // pred_check_branch
    %15 = sbr.rel (0) target = $region13
  $region12: #{forward.7} parent=0 // pred_region
    _
  $region13: #{forward.7} parent=0 // pred_fallthru
    _
  // Predicated region
  $region14: #{forward.7} parent=0 // pred_check
    _
  $region15: #{forward.7} parent=0 // pred_check_branch
    %17 = sbr.rel (0) target = $region17
  $region16: #{forward.7} parent=0 // pred_region
    _
  $region17: #{forward.7} parent=0 // pred_fallthru
    _
  // Predicated region
  $region18: #{forward.7} parent=0 // pred_check
    _
  $region19: #{forward.7} parent=0 // pred_check_branch
    %19 = sbr.rel (0) target = $region21
  $region20: #{forward.7} parent=0 // pred_region
    _
  $region21: #{forward.7} parent=0 // pred_fallthru
    _
  %v21 = vld [vmem:[%s0] sm:$0xff]
  %v22 = vld [vmem:[%s0 + $0x8] sm:$0xff]
  %v23 = vld [vmem:[%s0 + $0x10] sm:$0xff]
  %v24 = vld [vmem:[%s0 + $0x18] sm:$0xff]
  %v25 = vld [vmem:[%s0 + $0x20] sm:$0xff]
  %v26 = vld [vmem:[%s0 + $0x28] sm:$0xff]
  %v27 = vld [vmem:[%s0 + $0x30] sm:$0xff]
  %v28 = vld [vmem:[%s0 + $0x38] sm:$0xff]
  %v29 = vld [vmem:[%s0 + $0x40] sm:$0xff]
  %v30 = vld [vmem:[%s0 + $0x48] sm:$0xff]
  %v31 = vld [vmem:[%s0 + $0x50] sm:$0xff]
  %v32 = vld [vmem:[%s0 + $0x58] sm:$0xff]
  %v33 = vld [vmem:[%s0 + $0x60] sm:$0xff]
  %v34 = vld [vmem:[%s0 + $0x68] sm:$0xff]
  %v35 = vld [vmem:[%s0 + $0x70] sm:$0xff]
  %v36 = vld [vmem:[%s0 + $0x78] sm:$0xff]
  %v37 = vpack.c.bf16 %v22, %v21
  %v38 = vpack.c.bf16 %v24, %v23
  %v39 = vpack.c.bf16 %v26, %v25
  %v40 = vpack.c.bf16 %v28, %v27
  %v41 = vpack.c.bf16 %v30, %v29
  %v42 = vpack.c.bf16 %v32, %v31
  %v43 = vpack.c.bf16 %v34, %v33
  %v44 = vpack.c.bf16 %v36, %v35
  %v45 = vld [vmem:[%s1] sm:$0xff]
  %v46 = vld [vmem:[%s1 + $0x8] sm:$0x33]
  %v47 = vld [vmem:[%s2] sm:$0x3]
  %v49 = vperm.slane %v47, 0
  %v50 = vperm.slane %v47, 1
  %v55 = vunpack.c.l.b16 %v45
  %v56 = vunpack.c.h.b16 %v45
  %v57 = vunpack.c.l.b16 %v46
  %v58 = vunpack.c.h.b16 %v46
  %v59 = vpack.c.b16 %v57, %v55
  %v60 = vpack.c.b16 %v58, %v56
  %vm61 = vcmask 97280
  %v63 = vsel %vm61, %v37, 0
  %v66 = vsel %vm61, %v38, 0
  %v69 = vsel %vm61, %v39, 0
  %v72 = vsel %vm61, %v40, 0
  %v75 = vsel %vm61, %v41, 0
  %v78 = vsel %vm61, %v42, 0
  %v81 = vsel %vm61, %v43, 0
  %v84 = vsel %vm61, %v44, 0
  %vm86 = vcmask 1045504
  %v88 = vsel %vm86, %v59, 0
  %v91 = vsel %vm86, %v60, 0
  %93 = vmatpush.bf16.msra.mxu0 0
  %94 = vmatpush.bf16.msra.mxu0 0
  %95 = vmatpush.bf16.msra.mxu0 0
  %96 = vmatpush.bf16.msra.mxu0 0
  %97 = vmatpush.bf16.msra.mxu0 0
  %98 = vmatpush.bf16.msra.mxu0 0
  %99 = vmatpush.bf16.msra.mxu0 0
  %100 = vmatpush.bf16.msra.mxu0 %v88
  %101 = vmatmul.bf16.gmra.mxu0 %v63
  %v102 = vpop.f32.mrf.mxu0
  %v103 = vadd.f32 %v49, %v102
  %v104 = vpop.f32.mrf.mxu0
  %v105 = vadd.f32 %v49, %v104
  %106 = vmatmul.bf16.gmra.mxu0 %v66
  %v107 = vpop.f32.mrf.mxu0
  %v108 = vadd.f32 %v49, %v107
  %v109 = vpop.f32.mrf.mxu0
  %v110 = vadd.f32 %v49, %v109
  %111 = vmatmul.bf16.gmra.mxu0 %v69
  %v112 = vpop.f32.mrf.mxu0
  %v113 = vadd.f32 %v49, %v112
  %v114 = vpop.f32.mrf.mxu0
  %v115 = vadd.f32 %v49, %v114
  %116 = vmatmul.bf16.gmra.mxu0 %v72
  %v117 = vpop.f32.mrf.mxu0
  %v118 = vadd.f32 %v49, %v117
  %v119 = vpop.f32.mrf.mxu0
  %v120 = vadd.f32 %v49, %v119
  %121 = vmatmul.bf16.gmra.mxu0 %v75
  %v122 = vpop.f32.mrf.mxu0
  %v123 = vadd.f32 %v49, %v122
  %v124 = vpop.f32.mrf.mxu0
  %v125 = vadd.f32 %v49, %v124
  %126 = vmatmul.bf16.gmra.mxu0 %v78
  %v127 = vpop.f32.mrf.mxu0
  %v128 = vadd.f32 %v49, %v127
  %v129 = vpop.f32.mrf.mxu0
  %v130 = vadd.f32 %v49, %v129
  %131 = vmatmul.bf16.gmra.mxu0 %v81
  %v132 = vpop.f32.mrf.mxu0
  %v133 = vadd.f32 %v49, %v132
  %v134 = vpop.f32.mrf.mxu0
  %v135 = vadd.f32 %v49, %v134
  %136 = vmatmul.bf16.gmra.mxu0 %v84
  %v137 = vpop.f32.mrf.mxu0
  %v138 = vadd.f32 %v49, %v137
  %v139 = vpop.f32.mrf.mxu0
  %v140 = vadd.f32 %v49, %v139
  %141 = vdwg.mxu0
  %142 = vmatpush.bf16.msra.mxu0 0
  %143 = vmatpush.bf16.msra.mxu0 0
  %144 = vmatpush.bf16.msra.mxu0 0
  %145 = vmatpush.bf16.msra.mxu0 0
  %146 = vmatpush.bf16.msra.mxu0 0
  %147 = vmatpush.bf16.msra.mxu0 0
  %148 = vmatpush.bf16.msra.mxu0 0
  %149 = vmatpush.bf16.msra.mxu0 %v91
  %150 = vmatmul.bf16.gmra.mxu0 %v63
  %v151 = vpop.f32.mrf.mxu0
  %v152 = vadd.f32 %v50, %v151
  %v153 = vpop.f32.mrf.mxu0
  %v154 = vadd.f32 %v50, %v153
  %155 = vmatmul.bf16.gmra.mxu0 %v66
  %v156 = vpop.f32.mrf.mxu0
  %v157 = vadd.f32 %v50, %v156
  %v158 = vpop.f32.mrf.mxu0
  %v159 = vadd.f32 %v50, %v158
  %160 = vmatmul.bf16.gmra.mxu0 %v69
  %v161 = vpop.f32.mrf.mxu0
  %v162 = vadd.f32 %v50, %v161
  %v163 = vpop.f32.mrf.mxu0
  %v164 = vadd.f32 %v50, %v163
  %165 = vmatmul.bf16.gmra.mxu0 %v72
  %v166 = vpop.f32.mrf.mxu0
  %v167 = vadd.f32 %v50, %v166
  %v168 = vpop.f32.mrf.mxu0
  %v169 = vadd.f32 %v50, %v168
  %170 = vmatmul.bf16.gmra.mxu0 %v75
  %v171 = vpop.f32.mrf.mxu0
  %v172 = vadd.f32 %v50, %v171
  %v173 = vpop.f32.mrf.mxu0
  %v174 = vadd.f32 %v50, %v173
  %175 = vmatmul.bf16.gmra.mxu0 %v78
  %v176 = vpop.f32.mrf.mxu0
  %v177 = vadd.f32 %v50, %v176
  %v178 = vpop.f32.mrf.mxu0
  %v179 = vadd.f32 %v50, %v178
  %180 = vmatmul.bf16.gmra.mxu0 %v81
  %v181 = vpop.f32.mrf.mxu0
  %v182 = vadd.f32 %v50, %v181
  %v183 = vpop.f32.mrf.mxu0
  %v184 = vadd.f32 %v50, %v183
  %185 = vmatmul.bf16.gmra.mxu0 %v84
  %v186 = vpop.f32.mrf.mxu0
  %v187 = vadd.f32 %v50, %v186
  %v188 = vpop.f32.mrf.mxu0
  %v189 = vadd.f32 %v50, %v188
  %190 = vdwg.mxu0
  %v191 = vmul.f32 %v103, %v103
  %v192 = vmul.f32 %v152, %v152
  %v193 = vmul.f32 %v105, %v105
  %v194 = vmul.f32 %v154, %v154
  %v195 = vmul.f32 %v108, %v108
  %v196 = vmul.f32 %v157, %v157
  %v197 = vmul.f32 %v110, %v110
  %v198 = vmul.f32 %v159, %v159
  %v199 = vmul.f32 %v113, %v113
  %v200 = vmul.f32 %v162, %v162
  %v201 = vmul.f32 %v115, %v115
  %v202 = vmul.f32 %v164, %v164
  %v203 = vmul.f32 %v118, %v118
  %v204 = vmul.f32 %v167, %v167
  %v205 = vmul.f32 %v120, %v120
  %v206 = vmul.f32 %v169, %v169
  %v207 = vmul.f32 %v123, %v123
  %v208 = vmul.f32 %v172, %v172
  %v209 = vmul.f32 %v125, %v125
  %v210 = vmul.f32 %v174, %v174
  %v211 = vmul.f32 %v128, %v128
  %v212 = vmul.f32 %v177, %v177
  %v213 = vmul.f32 %v130, %v130
  %v214 = vmul.f32 %v179, %v179
  %v215 = vmul.f32 %v133, %v133
  %v216 = vmul.f32 %v182, %v182
  %v217 = vmul.f32 %v135, %v135
  %v218 = vmul.f32 %v184, %v184
  %v219 = vmul.f32 %v138, %v138
  %v220 = vmul.f32 %v187, %v187
  %v221 = vmul.f32 %v140, %v140
  %v222 = vmul.f32 %v189, %v189
  %v223 = vpack.c.bf16 %v193, %v191
  %v224 = vpack.c.bf16 %v194, %v192
  %v225 = vpack.c.bf16 %v197, %v195
  %v226 = vpack.c.bf16 %v198, %v196
  %v227 = vpack.c.bf16 %v201, %v199
  %v228 = vpack.c.bf16 %v202, %v200
  %v229 = vpack.c.bf16 %v205, %v203
  %v230 = vpack.c.bf16 %v206, %v204
  %v231 = vpack.c.bf16 %v209, %v207
  %v232 = vpack.c.bf16 %v210, %v208
  %v233 = vpack.c.bf16 %v213, %v211
  %v234 = vpack.c.bf16 %v214, %v212
  %v235 = vpack.c.bf16 %v217, %v215
  %v236 = vpack.c.bf16 %v218, %v216
  %v237 = vpack.c.bf16 %v221, %v219
  %v238 = vpack.c.bf16 %v222, %v220
  %v239 = vld [vmem:[%s3] sm:$0xff]
  %v240 = vld [vmem:[%s3 + $0x8] sm:$0xff]
  %v241 = vld [vmem:[%s3 + $0x10] sm:$0xff]
  %v242 = vld [vmem:[%s3 + $0x18] sm:$0xff]
  %v243 = vld [vmem:[%s3 + $0x20] sm:$0xff]
  %v244 = vld [vmem:[%s3 + $0x28] sm:$0xff]
  %v245 = vld [vmem:[%s3 + $0x30] sm:$0xff]
  %v246 = vld [vmem:[%s3 + $0x38] sm:$0xff]
  %v247 = vld [vmem:[%s3 + $0x40] sm:$0xff]
  %v248 = vld [vmem:[%s3 + $0x48] sm:$0xff]
  %v249 = vld [vmem:[%s3 + $0x50] sm:$0xff]
  %v250 = vld [vmem:[%s3 + $0x58] sm:$0xff]
  %v251 = vld [vmem:[%s3 + $0x60] sm:$0xff]
  %v252 = vld [vmem:[%s3 + $0x68] sm:$0xff]
  %v253 = vld [vmem:[%s3 + $0x70] sm:$0xff]
  %v254 = vld [vmem:[%s3 + $0x78] sm:$0xff]
  %v255 = vld [vmem:[%s3 + $0x80] sm:$0xff]
  %v256 = vld [vmem:[%s3 + $0x88] sm:$0xff]
  %v257 = vld [vmem:[%s3 + $0x90] sm:$0xff]
  %v258 = vld [vmem:[%s3 + $0x98] sm:$0xff]
  %v259 = vld [vmem:[%s3 + $0xa0] sm:$0xff]
  %v260 = vld [vmem:[%s3 + $0xa8] sm:$0xff]
  %v261 = vld [vmem:[%s3 + $0xb0] sm:$0xff]
  %v262 = vld [vmem:[%s3 + $0xb8] sm:$0xff]
  %v263 = vld [vmem:[%s4] sm:$0x3]
  %v265 = vperm.slane %v263, 0
  %v266 = vperm.slane %v263, 1
  %v293 = vunpack.c.l.b16 %v239
  %v294 = vunpack.c.h.b16 %v239
  %v295 = vunpack.c.l.b16 %v240
  %v296 = vunpack.c.h.b16 %v240
  %v297 = vunpack.c.l.b16 %v241
  %v298 = vunpack.c.h.b16 %v241
  %v299 = vunpack.c.l.b16 %v242
  %v300 = vunpack.c.h.b16 %v242
  %v301 = vunpack.c.l.b16 %v243
  %v302 = vunpack.c.h.b16 %v243
  %v303 = vunpack.c.l.b16 %v244
  %v304 = vunpack.c.h.b16 %v244
  %v305 = vunpack.c.l.b16 %v245
  %v306 = vunpack.c.h.b16 %v245
  %v307 = vunpack.c.l.b16 %v246
  %v308 = vunpack.c.h.b16 %v246
  %v309 = vunpack.c.l.b16 %v247
  %v310 = vunpack.c.h.b16 %v247
  %v311 = vunpack.c.l.b16 %v248
  %v312 = vunpack.c.h.b16 %v248
  %v313 = vunpack.c.l.b16 %v249
  %v314 = vunpack.c.h.b16 %v249
  %v315 = vunpack.c.l.b16 %v250
  %v316 = vunpack.c.h.b16 %v250
  %v317 = vunpack.c.l.b16 %v251
  %v318 = vunpack.c.h.b16 %v251
  %v319 = vunpack.c.l.b16 %v252
  %v320 = vunpack.c.h.b16 %v252
  %v321 = vunpack.c.l.b16 %v253
  %v322 = vunpack.c.h.b16 %v253
  %v323 = vunpack.c.l.b16 %v254
  %v324 = vunpack.c.h.b16 %v254
  %v325 = vunpack.c.l.b16 %v255
  %v326 = vunpack.c.h.b16 %v255
  %v327 = vunpack.c.l.b16 %v256
  %v328 = vunpack.c.h.b16 %v256
  %v329 = vunpack.c.l.b16 %v257
  %v330 = vunpack.c.h.b16 %v257
  %v331 = vunpack.c.l.b16 %v258
  %v332 = vunpack.c.h.b16 %v258
  %v333 = vunpack.c.l.b16 %v259
  %v334 = vunpack.c.h.b16 %v259
  %v335 = vunpack.c.l.b16 %v260
  %v336 = vunpack.c.h.b16 %v260
  %v337 = vunpack.c.l.b16 %v261
  %v338 = vunpack.c.h.b16 %v261
  %v339 = vunpack.c.l.b16 %v262
  %v340 = vunpack.c.h.b16 %v262
  %v341 = vpack.c.b16 %v295, %v293
  %v342 = vpack.c.b16 %v296, %v294
  %v343 = vpack.c.b16 %v299, %v297
  %v344 = vpack.c.b16 %v300, %v298
  %v345 = vpack.c.b16 %v303, %v301
  %v346 = vpack.c.b16 %v304, %v302
  %v347 = vpack.c.b16 %v307, %v305
  %v348 = vpack.c.b16 %v308, %v306
  %v349 = vpack.c.b16 %v311, %v309
  %v350 = vpack.c.b16 %v312, %v310
  %v351 = vpack.c.b16 %v315, %v313
  %v352 = vpack.c.b16 %v316, %v314
  %v353 = vpack.c.b16 %v319, %v317
  %v354 = vpack.c.b16 %v320, %v318
  %v355 = vpack.c.b16 %v323, %v321
  %v356 = vpack.c.b16 %v324, %v322
  %v357 = vpack.c.b16 %v327, %v325
  %v358 = vpack.c.b16 %v328, %v326
  %v359 = vpack.c.b16 %v331, %v329
  %v360 = vpack.c.b16 %v332, %v330
  %v361 = vpack.c.b16 %v335, %v333
  %v362 = vpack.c.b16 %v336, %v334
  %v363 = vpack.c.b16 %v339, %v337
  %v364 = vpack.c.b16 %v340, %v338
  %vm389 = vcmask 523264
  %v391 = vsel %vm389, %v224, 0
  %v394 = vsel %vm389, %v226, 0
  %v397 = vsel %vm389, %v228, 0
  %v400 = vsel %vm389, %v230, 0
  %v403 = vsel %vm389, %v232, 0
  %v406 = vsel %vm389, %v234, 0
  %v409 = vsel %vm389, %v236, 0
  %v412 = vsel %vm389, %v238, 0
  %414 = vmatpush.bf16.msra.mxu0 %v355
  %415 = vmatpush.bf16.msra.mxu0 %v353
  %416 = vmatpush.bf16.msra.mxu0 %v351
  %417 = vmatpush.bf16.msra.mxu0 %v349
  %418 = vmatpush.bf16.msra.mxu0 %v347
  %419 = vmatpush.bf16.msra.mxu0 %v345
  %420 = vmatpush.bf16.msra.mxu0 %v343
  %421 = vmatpush.bf16.msra.mxu0 %v341
  %422 = vmatmul.bf16.gmra.mxu0 %v223
  %v423 = vpop.f32.mrf.mxu0
  %v424 = vadd.f32 %v265, %v423
  %v425 = vpop.f32.mrf.mxu0
  %v426 = vadd.f32 %v265, %v425
  %427 = vmatmul.bf16.gmra.mxu0 %v225
  %v428 = vpop.f32.mrf.mxu0
  %v429 = vadd.f32 %v265, %v428
  %v430 = vpop.f32.mrf.mxu0
  %v431 = vadd.f32 %v265, %v430
  %432 = vmatmul.bf16.gmra.mxu0 %v227
  %v433 = vpop.f32.mrf.mxu0
  %v434 = vadd.f32 %v265, %v433
  %v435 = vpop.f32.mrf.mxu0
  %v436 = vadd.f32 %v265, %v435
  %437 = vmatmul.bf16.gmra.mxu0 %v229
  %v438 = vpop.f32.mrf.mxu0
  %v439 = vadd.f32 %v265, %v438
  %v440 = vpop.f32.mrf.mxu0
  %v441 = vadd.f32 %v265, %v440
  %442 = vmatmul.bf16.gmra.mxu0 %v231
  %v443 = vpop.f32.mrf.mxu0
  %v444 = vadd.f32 %v265, %v443
  %v445 = vpop.f32.mrf.mxu0
  %v446 = vadd.f32 %v265, %v445
  %447 = vmatmul.bf16.gmra.mxu0 %v233
  %v448 = vpop.f32.mrf.mxu0
  %v449 = vadd.f32 %v265, %v448
  %v450 = vpop.f32.mrf.mxu0
  %v451 = vadd.f32 %v265, %v450
  %452 = vmatmul.bf16.gmra.mxu0 %v235
  %v453 = vpop.f32.mrf.mxu0
  %v454 = vadd.f32 %v265, %v453
  %v455 = vpop.f32.mrf.mxu0
  %v456 = vadd.f32 %v265, %v455
  %457 = vmatmul.bf16.gmra.mxu0 %v237
  %v458 = vpop.f32.mrf.mxu0
  %v459 = vadd.f32 %v265, %v458
  %v460 = vpop.f32.mrf.mxu0
  %v461 = vadd.f32 %v265, %v460
  %462 = vdwg.mxu0
  %463 = vmatpush.bf16.msra.mxu0 0
  %464 = vmatpush.bf16.msra.mxu0 0
  %465 = vmatpush.bf16.msra.mxu0 0
  %466 = vmatpush.bf16.msra.mxu0 0
  %467 = vmatpush.bf16.msra.mxu0 %v363
  %468 = vmatpush.bf16.msra.mxu0 %v361
  %469 = vmatpush.bf16.msra.mxu0 %v359
  %470 = vmatpush.bf16.msra.mxu0 %v357
  %471 = vmatmul.bf16.gmra.mxu0 %v391
  %v472 = vpop.f32.mrf.mxu0
  %v473 = vadd.f32 %v424, %v472
  %v474 = vpop.f32.mrf.mxu0
  %v475 = vadd.f32 %v426, %v474
  %476 = vmatmul.bf16.gmra.mxu0 %v394
  %v477 = vpop.f32.mrf.mxu0
  %v478 = vadd.f32 %v429, %v477
  %v479 = vpop.f32.mrf.mxu0
  %v480 = vadd.f32 %v431, %v479
  %481 = vmatmul.bf16.gmra.mxu0 %v397
  %v482 = vpop.f32.mrf.mxu0
  %v483 = vadd.f32 %v434, %v482
  %v484 = vpop.f32.mrf.mxu0
  %v485 = vadd.f32 %v436, %v484
  %486 = vmatmul.bf16.gmra.mxu0 %v400
  %v487 = vpop.f32.mrf.mxu0
  %v488 = vadd.f32 %v439, %v487
  %v489 = vpop.f32.mrf.mxu0
  %v490 = vadd.f32 %v441, %v489
  %491 = vmatmul.bf16.gmra.mxu0 %v403
  %v492 = vpop.f32.mrf.mxu0
  %v493 = vadd.f32 %v444, %v492
  %v494 = vpop.f32.mrf.mxu0
  %v495 = vadd.f32 %v446, %v494
  %496 = vmatmul.bf16.gmra.mxu0 %v406
  %v497 = vpop.f32.mrf.mxu0
  %v498 = vadd.f32 %v449, %v497
  %v499 = vpop.f32.mrf.mxu0
  %v500 = vadd.f32 %v451, %v499
  %501 = vmatmul.bf16.gmra.mxu0 %v409
  %v502 = vpop.f32.mrf.mxu0
  %v503 = vadd.f32 %v454, %v502
  %v504 = vpop.f32.mrf.mxu0
  %v505 = vadd.f32 %v456, %v504
  %506 = vmatmul.bf16.gmra.mxu0 %v412
  %v507 = vpop.f32.mrf.mxu0
  %v508 = vadd.f32 %v459, %v507
  %v509 = vpop.f32.mrf.mxu0
  %v510 = vadd.f32 %v461, %v509
  %511 = vdwg.mxu0
  %512 = vmatpush.bf16.msra.mxu0 %v356
  %513 = vmatpush.bf16.msra.mxu0 %v354
  %514 = vmatpush.bf16.msra.mxu0 %v352
  %515 = vmatpush.bf16.msra.mxu0 %v350
  %516 = vmatpush.bf16.msra.mxu0 %v348
  %517 = vmatpush.bf16.msra.mxu0 %v346
  %518 = vmatpush.bf16.msra.mxu0 %v344
  %519 = vmatpush.bf16.msra.mxu0 %v342
  %520 = vmatmul.bf16.gmra.mxu0 %v223
  %v521 = vpop.f32.mrf.mxu0
  %v522 = vadd.f32 %v266, %v521
  %v523 = vpop.f32.mrf.mxu0
  %v524 = vadd.f32 %v266, %v523
  %525 = vmatmul.bf16.gmra.mxu0 %v225
  %v526 = vpop.f32.mrf.mxu0
  %v527 = vadd.f32 %v266, %v526
  %v528 = vpop.f32.mrf.mxu0
  %v529 = vadd.f32 %v266, %v528
  %530 = vmatmul.bf16.gmra.mxu0 %v227
  %v531 = vpop.f32.mrf.mxu0
  %v532 = vadd.f32 %v266, %v531
  %v533 = vpop.f32.mrf.mxu0
  %v534 = vadd.f32 %v266, %v533
  %535 = vmatmul.bf16.gmra.mxu0 %v229
  %v536 = vpop.f32.mrf.mxu0
  %v537 = vadd.f32 %v266, %v536
  %v538 = vpop.f32.mrf.mxu0
  %v539 = vadd.f32 %v266, %v538
  %540 = vmatmul.bf16.gmra.mxu0 %v231
  %v541 = vpop.f32.mrf.mxu0
  %v542 = vadd.f32 %v266, %v541
  %v543 = vpop.f32.mrf.mxu0
  %v544 = vadd.f32 %v266, %v543
  %545 = vmatmul.bf16.gmra.mxu0 %v233
  %v546 = vpop.f32.mrf.mxu0
  %v547 = vadd.f32 %v266, %v546
  %v548 = vpop.f32.mrf.mxu0
  %v549 = vadd.f32 %v266, %v548
  %550 = vmatmul.bf16.gmra.mxu0 %v235
  %v551 = vpop.f32.mrf.mxu0
  %v552 = vadd.f32 %v266, %v551
  %v553 = vpop.f32.mrf.mxu0
  %v554 = vadd.f32 %v266, %v553
  %555 = vmatmul.bf16.gmra.mxu0 %v237
  %v556 = vpop.f32.mrf.mxu0
  %v557 = vadd.f32 %v266, %v556
  %v558 = vpop.f32.mrf.mxu0
  %v559 = vadd.f32 %v266, %v558
  %560 = vdwg.mxu0
  %561 = vmatpush.bf16.msra.mxu0 0
  %562 = vmatpush.bf16.msra.mxu0 0
  %563 = vmatpush.bf16.msra.mxu0 0
  %564 = vmatpush.bf16.msra.mxu0 0
  %565 = vmatpush.bf16.msra.mxu0 %v364
  %566 = vmatpush.bf16.msra.mxu0 %v362
  %567 = vmatpush.bf16.msra.mxu0 %v360
  %568 = vmatpush.bf16.msra.mxu0 %v358
  %569 = vmatmul.bf16.gmra.mxu0 %v391
  %v570 = vpop.f32.mrf.mxu0
  %v571 = vadd.f32 %v522, %v570
  %v572 = vpop.f32.mrf.mxu0
  %v573 = vadd.f32 %v524, %v572
  %574 = vmatmul.bf16.gmra.mxu0 %v394
  %v575 = vpop.f32.mrf.mxu0
  %v576 = vadd.f32 %v527, %v575
  %v577 = vpop.f32.mrf.mxu0
  %v578 = vadd.f32 %v529, %v577
  %579 = vmatmul.bf16.gmra.mxu0 %v397
  %v580 = vpop.f32.mrf.mxu0
  %v581 = vadd.f32 %v532, %v580
  %v582 = vpop.f32.mrf.mxu0
  %v583 = vadd.f32 %v534, %v582
  %584 = vmatmul.bf16.gmra.mxu0 %v400
  %v585 = vpop.f32.mrf.mxu0
  %v586 = vadd.f32 %v537, %v585
  %v587 = vpop.f32.mrf.mxu0
  %v588 = vadd.f32 %v539, %v587
  %589 = vmatmul.bf16.gmra.mxu0 %v403
  %v590 = vpop.f32.mrf.mxu0
  %v591 = vadd.f32 %v542, %v590
  %v592 = vpop.f32.mrf.mxu0
  %v593 = vadd.f32 %v544, %v592
  %594 = vmatmul.bf16.gmra.mxu0 %v406
  %v595 = vpop.f32.mrf.mxu0
  %v596 = vadd.f32 %v547, %v595
  %v597 = vpop.f32.mrf.mxu0
  %v598 = vadd.f32 %v549, %v597
  %599 = vmatmul.bf16.gmra.mxu0 %v409
  %v600 = vpop.f32.mrf.mxu0
  %v601 = vadd.f32 %v552, %v600
  %v602 = vpop.f32.mrf.mxu0
  %v603 = vadd.f32 %v554, %v602
  %604 = vmatmul.bf16.gmra.mxu0 %v412
  %v605 = vpop.f32.mrf.mxu0
  %v606 = vadd.f32 %v557, %v605
  %v607 = vpop.f32.mrf.mxu0
  %v608 = vadd.f32 %v559, %v607
  %609 = vdwg.mxu0
  %v610 = vrsqrt.pop %v473
  %v611 = vmul.f32 %v610, %v473
  %v612 = vmul.f32 %v611, %v610
  %v613 = vmul.f32 0.5, %v612
  %v614 = vsub.f32 1.5, %v613
  %v615 = vmul.f32 %v610, %v614
  %vm616 = vweird.f32 %v473
  %vm617 = vweird.f32 %v610
  %vm618 = vmor %vm616, %vm617
  %v619 = vsel %vm618, %v610, %v615
  %v620 = vrsqrt.pop %v571
  %v621 = vmul.f32 %v620, %v571
  %v622 = vmul.f32 %v621, %v620
  %v623 = vmul.f32 0.5, %v622
  %v624 = vsub.f32 1.5, %v623
  %v625 = vmul.f32 %v620, %v624
  %vm626 = vweird.f32 %v571
  %vm627 = vweird.f32 %v620
  %vm628 = vmor %vm626, %vm627
  %v629 = vsel %vm628, %v620, %v625
  %v630 = vrsqrt.pop %v475
  %v631 = vmul.f32 %v630, %v475
  %v632 = vmul.f32 %v631, %v630
  %v633 = vmul.f32 0.5, %v632
  %v634 = vsub.f32 1.5, %v633
  %v635 = vmul.f32 %v630, %v634
  %vm636 = vweird.f32 %v475
  %vm637 = vweird.f32 %v630
  %vm638 = vmor %vm636, %vm637
  %v639 = vsel %vm638, %v630, %v635
  %v640 = vrsqrt.pop %v573
  %v641 = vmul.f32 %v640, %v573
  %v642 = vmul.f32 %v641, %v640
  %v643 = vmul.f32 0.5, %v642
  %v644 = vsub.f32 1.5, %v643
  %v645 = vmul.f32 %v640, %v644
  %vm646 = vweird.f32 %v573
  %vm647 = vweird.f32 %v640
  %vm648 = vmor %vm646, %vm647
  %v649 = vsel %vm648, %v640, %v645
  %v650 = vrsqrt.pop %v478
  %v651 = vmul.f32 %v650, %v478
  %v652 = vmul.f32 %v651, %v650
  %v653 = vmul.f32 0.5, %v652
  %v654 = vsub.f32 1.5, %v653
  %v655 = vmul.f32 %v650, %v654
  %vm656 = vweird.f32 %v478
  %vm657 = vweird.f32 %v650
  %vm658 = vmor %vm656, %vm657
  %v659 = vsel %vm658, %v650, %v655
  %v660 = vrsqrt.pop %v576
  %v661 = vmul.f32 %v660, %v576
  %v662 = vmul.f32 %v661, %v660
  %v663 = vmul.f32 0.5, %v662
  %v664 = vsub.f32 1.5, %v663
  %v665 = vmul.f32 %v660, %v664
  %vm666 = vweird.f32 %v576
  %vm667 = vweird.f32 %v660
  %vm668 = vmor %vm666, %vm667
  %v669 = vsel %vm668, %v660, %v665
  %v670 = vrsqrt.pop %v480
  %v671 = vmul.f32 %v670, %v480
  %v672 = vmul.f32 %v671, %v670
  %v673 = vmul.f32 0.5, %v672
  %v674 = vsub.f32 1.5, %v673
  %v675 = vmul.f32 %v670, %v674
  %vm676 = vweird.f32 %v480
  %vm677 = vweird.f32 %v670
  %vm678 = vmor %vm676, %vm677
  %v679 = vsel %vm678, %v670, %v675
  %v680 = vrsqrt.pop %v578
  %v681 = vmul.f32 %v680, %v578
  %v682 = vmul.f32 %v681, %v680
  %v683 = vmul.f32 0.5, %v682
  %v684 = vsub.f32 1.5, %v683
  %v685 = vmul.f32 %v680, %v684
  %vm686 = vweird.f32 %v578
  %vm687 = vweird.f32 %v680
  %vm688 = vmor %vm686, %vm687
  %v689 = vsel %vm688, %v680, %v685
  %v690 = vrsqrt.pop %v483
  %v691 = vmul.f32 %v690, %v483
  %v692 = vmul.f32 %v691, %v690
  %v693 = vmul.f32 0.5, %v692
  %v694 = vsub.f32 1.5, %v693
  %v695 = vmul.f32 %v690, %v694
  %vm696 = vweird.f32 %v483
  %vm697 = vweird.f32 %v690
  %vm698 = vmor %vm696, %vm697
  %v699 = vsel %vm698, %v690, %v695
  %v700 = vrsqrt.pop %v581
  %v701 = vmul.f32 %v700, %v581
  %v702 = vmul.f32 %v701, %v700
  %v703 = vmul.f32 0.5, %v702
  %v704 = vsub.f32 1.5, %v703
  %v705 = vmul.f32 %v700, %v704
  %vm706 = vweird.f32 %v581
  %vm707 = vweird.f32 %v700
  %vm708 = vmor %vm706, %vm707
  %v709 = vsel %vm708, %v700, %v705
  %v710 = vrsqrt.pop %v485
  %v711 = vmul.f32 %v710, %v485
  %v712 = vmul.f32 %v711, %v710
  %v713 = vmul.f32 0.5, %v712
  %v714 = vsub.f32 1.5, %v713
  %v715 = vmul.f32 %v710, %v714
  %vm716 = vweird.f32 %v485
  %vm717 = vweird.f32 %v710
  %vm718 = vmor %vm716, %vm717
  %v719 = vsel %vm718, %v710, %v715
  %v720 = vrsqrt.pop %v583
  %v721 = vmul.f32 %v720, %v583
  %v722 = vmul.f32 %v721, %v720
  %v723 = vmul.f32 0.5, %v722
  %v724 = vsub.f32 1.5, %v723
  %v725 = vmul.f32 %v720, %v724
  %vm726 = vweird.f32 %v583
  %vm727 = vweird.f32 %v720
  %vm728 = vmor %vm726, %vm727
  %v729 = vsel %vm728, %v720, %v725
  %v730 = vrsqrt.pop %v488
  %v731 = vmul.f32 %v730, %v488
  %v732 = vmul.f32 %v731, %v730
  %v733 = vmul.f32 0.5, %v732
  %v734 = vsub.f32 1.5, %v733
  %v735 = vmul.f32 %v730, %v734
  %vm736 = vweird.f32 %v488
  %vm737 = vweird.f32 %v730
  %vm738 = vmor %vm736, %vm737
  %v739 = vsel %vm738, %v730, %v735
  %v740 = vrsqrt.pop %v586
  %v741 = vmul.f32 %v740, %v586
  %v742 = vmul.f32 %v741, %v740
  %v743 = vmul.f32 0.5, %v742
  %v744 = vsub.f32 1.5, %v743
  %v745 = vmul.f32 %v740, %v744
  %vm746 = vweird.f32 %v586
  %vm747 = vweird.f32 %v740
  %vm748 = vmor %vm746, %vm747
  %v749 = vsel %vm748, %v740, %v745
  %v750 = vrsqrt.pop %v490
  %v751 = vmul.f32 %v750, %v490
  %v752 = vmul.f32 %v751, %v750
  %v753 = vmul.f32 0.5, %v752
  %v754 = vsub.f32 1.5, %v753
  %v755 = vmul.f32 %v750, %v754
  %vm756 = vweird.f32 %v490
  %vm757 = vweird.f32 %v750
  %vm758 = vmor %vm756, %vm757
  %v759 = vsel %vm758, %v750, %v755
  %v760 = vrsqrt.pop %v588
  %v761 = vmul.f32 %v760, %v588
  %v762 = vmul.f32 %v761, %v760
  %v763 = vmul.f32 0.5, %v762
  %v764 = vsub.f32 1.5, %v763
  %v765 = vmul.f32 %v760, %v764
  %vm766 = vweird.f32 %v588
  %vm767 = vweird.f32 %v760
  %vm768 = vmor %vm766, %vm767
  %v769 = vsel %vm768, %v760, %v765
  %v770 = vrsqrt.pop %v493
  %v771 = vmul.f32 %v770, %v493
  %v772 = vmul.f32 %v771, %v770
  %v773 = vmul.f32 0.5, %v772
  %v774 = vsub.f32 1.5, %v773
  %v775 = vmul.f32 %v770, %v774
  %vm776 = vweird.f32 %v493
  %vm777 = vweird.f32 %v770
  %vm778 = vmor %vm776, %vm777
  %v779 = vsel %vm778, %v770, %v775
  %v780 = vrsqrt.pop %v591
  %v781 = vmul.f32 %v780, %v591
  %v782 = vmul.f32 %v781, %v780
  %v783 = vmul.f32 0.5, %v782
  %v784 = vsub.f32 1.5, %v783
  %v785 = vmul.f32 %v780, %v784
  %vm786 = vweird.f32 %v591
  %vm787 = vweird.f32 %v780
  %vm788 = vmor %vm786, %vm787
  %v789 = vsel %vm788, %v780, %v785
  %v790 = vrsqrt.pop %v495
  %v791 = vmul.f32 %v790, %v495
  %v792 = vmul.f32 %v791, %v790
  %v793 = vmul.f32 0.5, %v792
  %v794 = vsub.f32 1.5, %v793
  %v795 = vmul.f32 %v790, %v794
  %vm796 = vweird.f32 %v495
  %vm797 = vweird.f32 %v790
  %vm798 = vmor %vm796, %vm797
  %v799 = vsel %vm798, %v790, %v795
  %v800 = vrsqrt.pop %v593
  %v801 = vmul.f32 %v800, %v593
  %v802 = vmul.f32 %v801, %v800
  %v803 = vmul.f32 0.5, %v802
  %v804 = vsub.f32 1.5, %v803
  %v805 = vmul.f32 %v800, %v804
  %vm806 = vweird.f32 %v593
  %vm807 = vweird.f32 %v800
  %vm808 = vmor %vm806, %vm807
  %v809 = vsel %vm808, %v800, %v805
  %v810 = vrsqrt.pop %v498
  %v811 = vmul.f32 %v810, %v498
  %v812 = vmul.f32 %v811, %v810
  %v813 = vmul.f32 0.5, %v812
  %v814 = vsub.f32 1.5, %v813
  %v815 = vmul.f32 %v810, %v814
  %vm816 = vweird.f32 %v498
  %vm817 = vweird.f32 %v810
  %vm818 = vmor %vm816, %vm817
  %v819 = vsel %vm818, %v810, %v815
  %v820 = vrsqrt.pop %v596
  %v821 = vmul.f32 %v820, %v596
  %v822 = vmul.f32 %v821, %v820
  %v823 = vmul.f32 0.5, %v822
  %v824 = vsub.f32 1.5, %v823
  %v825 = vmul.f32 %v820, %v824
  %vm826 = vweird.f32 %v596
  %vm827 = vweird.f32 %v820
  %vm828 = vmor %vm826, %vm827
  %v829 = vsel %vm828, %v820, %v825
  %v830 = vrsqrt.pop %v500
  %v831 = vmul.f32 %v830, %v500
  %v832 = vmul.f32 %v831, %v830
  %v833 = vmul.f32 0.5, %v832
  %v834 = vsub.f32 1.5, %v833
  %v835 = vmul.f32 %v830, %v834
  %vm836 = vweird.f32 %v500
  %vm837 = vweird.f32 %v830
  %vm838 = vmor %vm836, %vm837
  %v839 = vsel %vm838, %v830, %v835
  %v840 = vrsqrt.pop %v598
  %v841 = vmul.f32 %v840, %v598
  %v842 = vmul.f32 %v841, %v840
  %v843 = vmul.f32 0.5, %v842
  %v844 = vsub.f32 1.5, %v843
  %v845 = vmul.f32 %v840, %v844
  %vm846 = vweird.f32 %v598
  %vm847 = vweird.f32 %v840
  %vm848 = vmor %vm846, %vm847
  %v849 = vsel %vm848, %v840, %v845
  %v850 = vrsqrt.pop %v503
  %v851 = vmul.f32 %v850, %v503
  %v852 = vmul.f32 %v851, %v850
  %v853 = vmul.f32 0.5, %v852
  %v854 = vsub.f32 1.5, %v853
  %v855 = vmul.f32 %v850, %v854
  %vm856 = vweird.f32 %v503
  %vm857 = vweird.f32 %v850
  %vm858 = vmor %vm856, %vm857
  %v859 = vsel %vm858, %v850, %v855
  %v860 = vrsqrt.pop %v601
  %v861 = vmul.f32 %v860, %v601
  %v862 = vmul.f32 %v861, %v860
  %v863 = vmul.f32 0.5, %v862
  %v864 = vsub.f32 1.5, %v863
  %v865 = vmul.f32 %v860, %v864
  %vm866 = vweird.f32 %v601
  %vm867 = vweird.f32 %v860
  %vm868 = vmor %vm866, %vm867
  %v869 = vsel %vm868, %v860, %v865
  %v870 = vrsqrt.pop %v505
  %v871 = vmul.f32 %v870, %v505
  %v872 = vmul.f32 %v871, %v870
  %v873 = vmul.f32 0.5, %v872
  %v874 = vsub.f32 1.5, %v873
  %v875 = vmul.f32 %v870, %v874
  %vm876 = vweird.f32 %v505
  %vm877 = vweird.f32 %v870
  %vm878 = vmor %vm876, %vm877
  %v879 = vsel %vm878, %v870, %v875
  %v880 = vrsqrt.pop %v603
  %v881 = vmul.f32 %v880, %v603
  %v882 = vmul.f32 %v881, %v880
  %v883 = vmul.f32 0.5, %v882
  %v884 = vsub.f32 1.5, %v883
  %v885 = vmul.f32 %v880, %v884
  %vm886 = vweird.f32 %v603
  %vm887 = vweird.f32 %v880
  %vm888 = vmor %vm886, %vm887
  %v889 = vsel %vm888, %v880, %v885
  %v890 = vrsqrt.pop %v508
  %v891 = vmul.f32 %v890, %v508
  %v892 = vmul.f32 %v891, %v890
  %v893 = vmul.f32 0.5, %v892
  %v894 = vsub.f32 1.5, %v893
  %v895 = vmul.f32 %v890, %v894
  %vm896 = vweird.f32 %v508
  %vm897 = vweird.f32 %v890
  %vm898 = vmor %vm896, %vm897
  %v899 = vsel %vm898, %v890, %v895
  %v900 = vrsqrt.pop %v606
  %v901 = vmul.f32 %v900, %v606
  %v902 = vmul.f32 %v901, %v900
  %v903 = vmul.f32 0.5, %v902
  %v904 = vsub.f32 1.5, %v903
  %v905 = vmul.f32 %v900, %v904
  %vm906 = vweird.f32 %v606
  %vm907 = vweird.f32 %v900
  %vm908 = vmor %vm906, %vm907
  %v909 = vsel %vm908, %v900, %v905
  %v910 = vrsqrt.pop %v510
  %v911 = vmul.f32 %v910, %v510
  %v912 = vmul.f32 %v911, %v910
  %v913 = vmul.f32 0.5, %v912
  %v914 = vsub.f32 1.5, %v913
  %v915 = vmul.f32 %v910, %v914
  %vm916 = vweird.f32 %v510
  %vm917 = vweird.f32 %v910
  %vm918 = vmor %vm916, %vm917
  %v919 = vsel %vm918, %v910, %v915
  %v920 = vrsqrt.pop %v608
  %v921 = vmul.f32 %v920, %v608
  %v922 = vmul.f32 %v921, %v920
  %v923 = vmul.f32 0.5, %v922
  %v924 = vsub.f32 1.5, %v923
  %v925 = vmul.f32 %v920, %v924
  %vm926 = vweird.f32 %v608
  %vm927 = vweird.f32 %v920
  %vm928 = vmor %vm926, %vm927
  %v929 = vsel %vm928, %v920, %v925
  %v930 = vmul.f32 %v103, %v619
  %v931 = vmul.f32 %v152, %v629
  %v932 = vmul.f32 %v105, %v639
  %v933 = vmul.f32 %v154, %v649
  %v934 = vmul.f32 %v108, %v659
  %v935 = vmul.f32 %v157, %v669
  %v936 = vmul.f32 %v110, %v679
  %v937 = vmul.f32 %v159, %v689
  %v938 = vmul.f32 %v113, %v699
  %v939 = vmul.f32 %v162, %v709
  %v940 = vmul.f32 %v115, %v719
  %v941 = vmul.f32 %v164, %v729
  %v942 = vmul.f32 %v118, %v739
  %v943 = vmul.f32 %v167, %v749
  %v944 = vmul.f32 %v120, %v759
  %v945 = vmul.f32 %v169, %v769
  %v946 = vmul.f32 %v123, %v779
  %v947 = vmul.f32 %v172, %v789
  %v948 = vmul.f32 %v125, %v799
  %v949 = vmul.f32 %v174, %v809
  %v950 = vmul.f32 %v128, %v819
  %v951 = vmul.f32 %v177, %v829
  %v952 = vmul.f32 %v130, %v839
  %v953 = vmul.f32 %v179, %v849
  %v954 = vmul.f32 %v133, %v859
  %v955 = vmul.f32 %v182, %v869
  %v956 = vmul.f32 %v135, %v879
  %v957 = vmul.f32 %v184, %v889
  %v958 = vmul.f32 %v138, %v899
  %v959 = vmul.f32 %v187, %v909
  %v960 = vmul.f32 %v140, %v919
  %v961 = vmul.f32 %v189, %v929
  %v962 = vpack.c.bf16 %v931, %v930
  %v963 = vpack.c.bf16 %v933, %v932
  %v964 = vpack.c.bf16 %v935, %v934
  %v965 = vpack.c.bf16 %v937, %v936
  %v966 = vpack.c.bf16 %v939, %v938
  %v967 = vpack.c.bf16 %v941, %v940
  %v968 = vpack.c.bf16 %v943, %v942
  %v969 = vpack.c.bf16 %v945, %v944
  %v970 = vpack.c.bf16 %v947, %v946
  %v971 = vpack.c.bf16 %v949, %v948
  %v972 = vpack.c.bf16 %v951, %v950
  %v973 = vpack.c.bf16 %v953, %v952
  %v974 = vpack.c.bf16 %v955, %v954
  %v975 = vpack.c.bf16 %v957, %v956
  %v976 = vpack.c.bf16 %v959, %v958
  %v977 = vpack.c.bf16 %v961, %v960
  %vm978 = vcmask 1043456
  %vm979 = vcmask 523268
  %vm980 = vmor %vm979, %vm978
  %981 = vst.msk [vmem:[%s5] sm:$0xff] %vm980, %v962
  %982 = vst.msk [vmem:[%s5 + $0x8] sm:$0xff] %vm980, %v963
  %983 = vst.msk [vmem:[%s5 + $0x10] sm:$0xff] %vm980, %v964
  %984 = vst.msk [vmem:[%s5 + $0x18] sm:$0xff] %vm980, %v965
  %985 = vst.msk [vmem:[%s5 + $0x20] sm:$0xff] %vm980, %v966
  %986 = vst.msk [vmem:[%s5 + $0x28] sm:$0xff] %vm980, %v967
  %987 = vst.msk [vmem:[%s5 + $0x30] sm:$0xff] %vm980, %v968
  %988 = vst.msk [vmem:[%s5 + $0x38] sm:$0xff] %vm980, %v969
  %989 = vst.msk [vmem:[%s5 + $0x40] sm:$0xff] %vm980, %v970
  %990 = vst.msk [vmem:[%s5 + $0x48] sm:$0xff] %vm980, %v971
  %991 = vst.msk [vmem:[%s5 + $0x50] sm:$0xff] %vm980, %v972
  %992 = vst.msk [vmem:[%s5 + $0x58] sm:$0xff] %vm980, %v973
  %993 = vst.msk [vmem:[%s5 + $0x60] sm:$0xff] %vm980, %v974
  %994 = vst.msk [vmem:[%s5 + $0x68] sm:$0xff] %vm980, %v975
  %995 = vst.msk [vmem:[%s5 + $0x70] sm:$0xff] %vm980, %v976
  %996 = vst.msk [vmem:[%s5 + $0x78] sm:$0xff] %vm980, %v977
  // Predicated region
  $region22: #{forward.7} parent=0 // pred_check
    _
  $region23: #{forward.7} parent=0 // pred_check_branch
    %998 = sbr.rel (0) target = $region25
  $region24: #{forward.7} parent=0 // pred_region
    _
  $region25: #{forward.7} parent=0 // pred_fallthru
    _
  // Predicated region
  $region26: #{forward.7} parent=0 // pred_check
    _
  $region27: #{forward.7} parent=0 // pred_check_branch
    %1000 = sbr.rel (0) target = $region29
  $region28: #{forward.7} parent=0 // pred_region
    _
  $region29: #{forward.7} parent=0 // pred_fallthru
    _

// kernel: forward.8
$region0: #{forward.8}
  #allocation0 [shape = 'u32[]', space=smem, size = 0x4, offset = 0x4, fixed_abs, tag = 'smem constant byte address 0x4 - core index']
  #allocation1 [shape = 'u32[72,128]{1,0:T(1,128)}', space=vmem, size = 0x9000, scoped, tag = 'internal scratch']
  %s0 = inlined_call_operand.vmem [shape: bf16[32,768], index: 0, kind: input, shape index: {}]
  %s1 = inlined_call_operand.vmem [shape: bf16[768,192], index: 1, kind: input, shape index: {}]
  %s2 = inlined_call_operand.vmem [shape: f32[1,192], index: 2, kind: input, shape index: {}]
  %s3 = inlined_call_operand.vmem [shape: bf16[192,192], index: 3, kind: input, shape index: {}]
  %s4 = inlined_call_operand.vmem [shape: f32[1,192], index: 4, kind: input, shape index: {}]
  %s5 = inlined_call_operand.vmem [shape: bf16[32,192], index: 5, kind: output, shape index: {}]
  %s6 = sld [smem:[#allocation0]]
  $region30: #{forward.8} parent=0
    _
  %s8 = ssub.s32 1, %s6
  %s9 = scalar_select 0, %s8, %s6
  // Predicated region
  $region2: #{forward.8} parent=0 // pred_check
    _
  $region3: #{forward.8} parent=0 // pred_check_branch
    %11 = sbr.rel (0) target = $region5
  $region4: #{forward.8} parent=0 // pred_region
    _
  $region5: #{forward.8} parent=0 // pred_fallthru
    _
  // Predicated region
  $region6: #{forward.8} parent=0 // pred_check
    _
  $region7: #{forward.8} parent=0 // pred_check_branch
    %13 = sbr.rel (0) target = $region9
  $region8: #{forward.8} parent=0 // pred_region
    _
  $region9: #{forward.8} parent=0 // pred_fallthru
    _
  // Predicated region
  $region10: #{forward.8} parent=0 // pred_check
    _
  $region11: #{forward.8} parent=0 // pred_check_branch
    %15 = sbr.rel (0) target = $region13
  $region12: #{forward.8} parent=0 // pred_region
    _
  $region13: #{forward.8} parent=0 // pred_fallthru
    _
  // Predicated region
  $region14: #{forward.8} parent=0 // pred_check
    _
  $region15: #{forward.8} parent=0 // pred_check_branch
    %17 = sbr.rel (0) target = $region17
  $region16: #{forward.8} parent=0 // pred_region
    _
  $region17: #{forward.8} parent=0 // pred_fallthru
    _
  // Predicated region
  $region18: #{forward.8} parent=0 // pred_check
    _
  $region19: #{forward.8} parent=0 // pred_check_branch
    %19 = sbr.rel (0) target = $region21
  $region20: #{forward.8} parent=0 // pred_region
    _
  $region21: #{forward.8} parent=0 // pred_fallthru
    _
  %v21 = vld [vmem:[%s0] sm:$0xff]
  %v22 = vld [vmem:[%s0 + $0x8] sm:$0xff]
  %v23 = vld [vmem:[%s0 + $0x10] sm:$0xff]
  %v24 = vld [vmem:[%s0 + $0x18] sm:$0xff]
  %v25 = vld [vmem:[%s0 + $0x20] sm:$0xff]
  %v26 = vld [vmem:[%s0 + $0x28] sm:$0xff]
  %v27 = vld [vmem:[%s0 + $0x30] sm:$0xff]
  %v28 = vld [vmem:[%s0 + $0x38] sm:$0xff]
  %v29 = vld [vmem:[%s0 + $0x40] sm:$0xff]
  %v30 = vld [vmem:[%s0 + $0x48] sm:$0xff]
  %v31 = vld [vmem:[%s0 + $0x50] sm:$0xff]
  %v32 = vld [vmem:[%s0 + $0x58] sm:$0xff]
  %v33 = vld [vmem:[%s1] sm:$0xff]
  %v34 = vld [vmem:[%s1 + $0x8] sm:$0xff]
  %v35 = vld [vmem:[%s1 + $0x10] sm:$0xff]
  %v36 = vld [vmem:[%s1 + $0x18] sm:$0xff]
  %v37 = vld [vmem:[%s1 + $0x20] sm:$0xff]
  %v38 = vld [vmem:[%s1 + $0x28] sm:$0xff]
  %v39 = vld [vmem:[%s1 + $0x30] sm:$0xff]
  %v40 = vld [vmem:[%s1 + $0x38] sm:$0xff]
  %v41 = vld [vmem:[%s1 + $0x40] sm:$0xff]
  %v42 = vld [vmem:[%s1 + $0x48] sm:$0xff]
  %v43 = vld [vmem:[%s1 + $0x50] sm:$0xff]
  %v44 = vld [vmem:[%s1 + $0x58] sm:$0xff]
  %v45 = vld [vmem:[%s1 + $0x60] sm:$0xff]
  %v46 = vld [vmem:[%s1 + $0x68] sm:$0xff]
  %v47 = vld [vmem:[%s1 + $0x70] sm:$0xff]
  %v48 = vld [vmem:[%s1 + $0x78] sm:$0xff]
  %v49 = vld [vmem:[%s1 + $0x80] sm:$0xff]
  %v50 = vld [vmem:[%s1 + $0x88] sm:$0xff]
  %v51 = vld [vmem:[%s1 + $0x90] sm:$0xff]
  %v52 = vld [vmem:[%s1 + $0x98] sm:$0xff]
  %v53 = vld [vmem:[%s1 + $0xa0] sm:$0xff]
  %v54 = vld [vmem:[%s1 + $0xa8] sm:$0xff]
  %v55 = vld [vmem:[%s1 + $0xb0] sm:$0xff]
  %v56 = vld [vmem:[%s1 + $0xb8] sm:$0xff]
  %v57 = vld [vmem:[%s1 + $0xc0] sm:$0xff]
  %v58 = vld [vmem:[%s1 + $0xc8] sm:$0xff]
  %v59 = vld [vmem:[%s1 + $0xd0] sm:$0xff]
  %v60 = vld [vmem:[%s1 + $0xd8] sm:$0xff]
  %v61 = vld [vmem:[%s1 + $0xe0] sm:$0xff]
  %v62 = vld [vmem:[%s1 + $0xe8] sm:$0xff]
  %v63 = vld [vmem:[%s1 + $0xf0] sm:$0xff]
  %v64 = vld [vmem:[%s1 + $0xf8] sm:$0xff]
  %v65 = vld [vmem:[%s1 + $0x100] sm:$0xff]
  %v66 = vld [vmem:[%s1 + $0x108] sm:$0xff]
  %v67 = vld [vmem:[%s1 + $0x110] sm:$0xff]
  %v68 = vld [vmem:[%s1 + $0x118] sm:$0xff]
  %v69 = vld [vmem:[%s1 + $0x120] sm:$0xff]
  %v70 = vld [vmem:[%s1 + $0x128] sm:$0xff]
  %v71 = vld [vmem:[%s1 + $0x130] sm:$0xff]
  %v72 = vld [vmem:[%s1 + $0x138] sm:$0xff]
  %v73 = vld [vmem:[%s1 + $0x140] sm:$0xff]
  %v74 = vld [vmem:[%s1 + $0x148] sm:$0xff]
  %v75 = vld [vmem:[%s1 + $0x150] sm:$0xff]
  %v76 = vld [vmem:[%s1 + $0x158] sm:$0xff]
  %v77 = vld [vmem:[%s1 + $0x160] sm:$0xff]
  %v78 = vld [vmem:[%s1 + $0x168] sm:$0xff]
  %v79 = vld [vmem:[%s1 + $0x170] sm:$0xff]
  %v80 = vld [vmem:[%s1 + $0x178] sm:$0xff]
  %v81 = vld [vmem:[%s1 + $0x180] sm:$0xff]
  %v82 = vld [vmem:[%s1 + $0x188] sm:$0xff]
  %v83 = vld [vmem:[%s1 + $0x190] sm:$0xff]
  %v84 = vld [vmem:[%s1 + $0x198] sm:$0xff]
  %v85 = vld [vmem:[%s1 + $0x1a0] sm:$0xff]
  %v86 = vld [vmem:[%s1 + $0x1a8] sm:$0xff]
  %v87 = vld [vmem:[%s1 + $0x1b0] sm:$0xff]
  %v88 = vld [vmem:[%s1 + $0x1b8] sm:$0xff]
  %v89 = vld [vmem:[%s1 + $0x1c0] sm:$0xff]
  %v90 = vld [vmem:[%s1 + $0x1c8] sm:$0xff]
  %v91 = vld [vmem:[%s1 + $0x1d0] sm:$0xff]
  %v92 = vld [vmem:[%s1 + $0x1d8] sm:$0xff]
  %v93 = vld [vmem:[%s1 + $0x1e0] sm:$0xff]
  %v94 = vld [vmem:[%s1 + $0x1e8] sm:$0xff]
  %v95 = vld [vmem:[%s1 + $0x1f0] sm:$0xff]
  %v96 = vld [vmem:[%s1 + $0x1f8] sm:$0xff]
  %v97 = vld [vmem:[%s1 + $0x200] sm:$0xff]
  %v98 = vld [vmem:[%s1 + $0x208] sm:$0xff]
  %v99 = vld [vmem:[%s1 + $0x210] sm:$0xff]
  %v100 = vld [vmem:[%s1 + $0x218] sm:$0xff]
  %v101 = vld [vmem:[%s1 + $0x220] sm:$0xff]
  %v102 = vld [vmem:[%s1 + $0x228] sm:$0xff]
  %v103 = vld [vmem:[%s1 + $0x230] sm:$0xff]
  %v104 = vld [vmem:[%s1 + $0x238] sm:$0xff]
  %v105 = vld [vmem:[%s1 + $0x240] sm:$0xff]
  %v106 = vld [vmem:[%s1 + $0x248] sm:$0xff]
  %v107 = vld [vmem:[%s1 + $0x250] sm:$0xff]
  %v108 = vld [vmem:[%s1 + $0x258] sm:$0xff]
  %v109 = vld [vmem:[%s1 + $0x260] sm:$0xff]
  %v110 = vld [vmem:[%s1 + $0x268] sm:$0xff]
  %v111 = vld [vmem:[%s1 + $0x270] sm:$0xff]
  %v112 = vld [vmem:[%s1 + $0x278] sm:$0xff]
  %v113 = vld [vmem:[%s1 + $0x280] sm:$0xff]
  %v114 = vld [vmem:[%s1 + $0x288] sm:$0xff]
  %v115 = vld [vmem:[%s1 + $0x290] sm:$0xff]
  %v116 = vld [vmem:[%s1 + $0x298] sm:$0xff]
  %v117 = vld [vmem:[%s1 + $0x2a0] sm:$0xff]
  %v118 = vld [vmem:[%s1 + $0x2a8] sm:$0xff]
  %v119 = vld [vmem:[%s1 + $0x2b0] sm:$0xff]
  %v120 = vld [vmem:[%s1 + $0x2b8] sm:$0xff]
  %v121 = vld [vmem:[%s1 + $0x2c0] sm:$0xff]
  %v122 = vld [vmem:[%s1 + $0x2c8] sm:$0xff]
  %v123 = vld [vmem:[%s1 + $0x2d0] sm:$0xff]
  %v124 = vld [vmem:[%s1 + $0x2d8] sm:$0xff]
  %v125 = vld [vmem:[%s1 + $0x2e0] sm:$0xff]
  %v126 = vld [vmem:[%s1 + $0x2e8] sm:$0xff]
  %v127 = vld [vmem:[%s1 + $0x2f0] sm:$0xff]
  %v128 = vld [vmem:[%s1 + $0x2f8] sm:$0xff]
  %v129 = vld [vmem:[%s2] sm:$0x3]
  %v131 = vperm.slane %v129, 0
  %v132 = vperm.slane %v129, 1
  %v147 = vunpack.c.l.b16 %v21
  %v148 = vunpack.c.h.b16 %v21
  %v149 = vunpack.c.l.b16 %v22
  %v150 = vunpack.c.h.b16 %v22
  %v151 = vunpack.c.l.b16 %v23
  %v152 = vunpack.c.h.b16 %v23
  %v153 = vunpack.c.l.b16 %v24
  %v154 = vunpack.c.h.b16 %v24
  %v155 = vunpack.c.l.b16 %v25
  %v156 = vunpack.c.h.b16 %v25
  %v157 = vunpack.c.l.b16 %v26
  %v158 = vunpack.c.h.b16 %v26
  %v159 = vunpack.c.l.b16 %v27
  %v160 = vunpack.c.h.b16 %v27
  %v161 = vunpack.c.l.b16 %v28
  %v162 = vunpack.c.h.b16 %v28
  %v163 = vunpack.c.l.b16 %v29
  %v164 = vunpack.c.h.b16 %v29
  %v165 = vunpack.c.l.b16 %v30
  %v166 = vunpack.c.h.b16 %v30
  %v167 = vunpack.c.l.b16 %v31
  %v168 = vunpack.c.h.b16 %v31
  %v169 = vunpack.c.l.b16 %v32
  %v170 = vunpack.c.h.b16 %v32
  %v171 = vpack.c.b16 %v153, %v147
  %v172 = vpack.c.b16 %v154, %v148
  %v173 = vpack.c.b16 %v155, %v149
  %v174 = vpack.c.b16 %v156, %v150
  %v175 = vpack.c.b16 %v157, %v151
  %v176 = vpack.c.b16 %v158, %v152
  %v177 = vpack.c.b16 %v165, %v159
  %v178 = vpack.c.b16 %v166, %v160
  %v179 = vpack.c.b16 %v167, %v161
  %v180 = vpack.c.b16 %v168, %v162
  %v181 = vpack.c.b16 %v169, %v163
  %v182 = vpack.c.b16 %v170, %v164
  %v291 = vunpack.c.l.b16 %v33
  %v292 = vunpack.c.h.b16 %v33
  %v293 = vunpack.c.l.b16 %v34
  %v294 = vunpack.c.h.b16 %v34
  %v295 = vunpack.c.l.b16 %v35
  %v296 = vunpack.c.h.b16 %v35
  %v297 = vunpack.c.l.b16 %v36
  %v298 = vunpack.c.h.b16 %v36
  %v299 = vunpack.c.l.b16 %v37
  %v300 = vunpack.c.h.b16 %v37
  %v301 = vunpack.c.l.b16 %v38
  %v302 = vunpack.c.h.b16 %v38
  %v303 = vunpack.c.l.b16 %v39
  %v304 = vunpack.c.h.b16 %v39
  %v305 = vunpack.c.l.b16 %v40
  %v306 = vunpack.c.h.b16 %v40
  %v307 = vunpack.c.l.b16 %v41
  %v308 = vunpack.c.h.b16 %v41
  %v309 = vunpack.c.l.b16 %v42
  %v310 = vunpack.c.h.b16 %v42
  %v311 = vunpack.c.l.b16 %v43
  %v312 = vunpack.c.h.b16 %v43
  %v313 = vunpack.c.l.b16 %v44
  %v314 = vunpack.c.h.b16 %v44
  %v315 = vunpack.c.l.b16 %v45
  %v316 = vunpack.c.h.b16 %v45
  %v317 = vunpack.c.l.b16 %v46
  %v318 = vunpack.c.h.b16 %v46
  %v319 = vunpack.c.l.b16 %v47
  %v320 = vunpack.c.h.b16 %v47
  %v321 = vunpack.c.l.b16 %v48
  %v322 = vunpack.c.h.b16 %v48
  %v323 = vunpack.c.l.b16 %v49
  %v324 = vunpack.c.h.b16 %v49
  %v325 = vunpack.c.l.b16 %v50
  %v326 = vunpack.c.h.b16 %v50
  %v327 = vunpack.c.l.b16 %v51
  %v328 = vunpack.c.h.b16 %v51
  %v329 = vunpack.c.l.b16 %v52
  %v330 = vunpack.c.h.b16 %v52
  %v331 = vunpack.c.l.b16 %v53
  %v332 = vunpack.c.h.b16 %v53
  %v333 = vunpack.c.l.b16 %v54
  %v334 = vunpack.c.h.b16 %v54
  %v335 = vunpack.c.l.b16 %v55
  %v336 = vunpack.c.h.b16 %v55
  %v337 = vunpack.c.l.b16 %v56
  %v338 = vunpack.c.h.b16 %v56
  %v339 = vunpack.c.l.b16 %v57
  %v340 = vunpack.c.h.b16 %v57
  %v341 = vunpack.c.l.b16 %v58
  %v342 = vunpack.c.h.b16 %v58
  %v343 = vunpack.c.l.b16 %v59
  %v344 = vunpack.c.h.b16 %v59
  %v345 = vunpack.c.l.b16 %v60
  %v346 = vunpack.c.h.b16 %v60
  %v347 = vunpack.c.l.b16 %v61
  %v348 = vunpack.c.h.b16 %v61
  %v349 = vunpack.c.l.b16 %v62
  %v350 = vunpack.c.h.b16 %v62
  %v351 = vunpack.c.l.b16 %v63
  %v352 = vunpack.c.h.b16 %v63
  %v353 = vunpack.c.l.b16 %v64
  %v354 = vunpack.c.h.b16 %v64
  %v355 = vunpack.c.l.b16 %v65
  %v356 = vunpack.c.h.b16 %v65
  %v357 = vunpack.c.l.b16 %v66
  %v358 = vunpack.c.h.b16 %v66
  %v359 = vunpack.c.l.b16 %v67
  %v360 = vunpack.c.h.b16 %v67
  %v361 = vunpack.c.l.b16 %v68
  %v362 = vunpack.c.h.b16 %v68
  %v363 = vunpack.c.l.b16 %v69
  %v364 = vunpack.c.h.b16 %v69
  %v365 = vunpack.c.l.b16 %v70
  %v366 = vunpack.c.h.b16 %v70
  %v367 = vunpack.c.l.b16 %v71
  %v368 = vunpack.c.h.b16 %v71
  %v369 = vunpack.c.l.b16 %v72
  %v370 = vunpack.c.h.b16 %v72
  %v371 = vunpack.c.l.b16 %v73
  %v372 = vunpack.c.h.b16 %v73
  %v373 = vunpack.c.l.b16 %v74
  %v374 = vunpack.c.h.b16 %v74
  %v375 = vunpack.c.l.b16 %v75
  %v376 = vunpack.c.h.b16 %v75
  %v377 = vunpack.c.l.b16 %v76
  %v378 = vunpack.c.h.b16 %v76
  %v379 = vunpack.c.l.b16 %v77
  %v380 = vunpack.c.h.b16 %v77
  %v381 = vunpack.c.l.b16 %v78
  %v382 = vunpack.c.h.b16 %v78
  %v383 = vunpack.c.l.b16 %v79
  %v384 = vunpack.c.h.b16 %v79
  %v385 = vunpack.c.l.b16 %v80
  %v386 = vunpack.c.h.b16 %v80
  %v387 = vunpack.c.l.b16 %v81
  %v388 = vunpack.c.h.b16 %v81
  %v389 = vunpack.c.l.b16 %v82
  %v390 = vunpack.c.h.b16 %v82
  %v391 = vunpack.c.l.b16 %v83
  %v392 = vunpack.c.h.b16 %v83
  %v393 = vunpack.c.l.b16 %v84
  %v394 = vunpack.c.h.b16 %v84
  %v395 = vunpack.c.l.b16 %v85
  %v396 = vunpack.c.h.b16 %v85
  %v397 = vunpack.c.l.b16 %v86
  %v398 = vunpack.c.h.b16 %v86
  %v399 = vunpack.c.l.b16 %v87
  %v400 = vunpack.c.h.b16 %v87
  %v401 = vunpack.c.l.b16 %v88
  %v402 = vunpack.c.h.b16 %v88
  %v403 = vunpack.c.l.b16 %v89
  %v404 = vunpack.c.h.b16 %v89
  %v405 = vunpack.c.l.b16 %v90
  %v406 = vunpack.c.h.b16 %v90
  %v407 = vunpack.c.l.b16 %v91
  %v408 = vunpack.c.h.b16 %v91
  %v409 = vunpack.c.l.b16 %v92
  %v410 = vunpack.c.h.b16 %v92
  %v411 = vunpack.c.l.b16 %v93
  %v412 = vunpack.c.h.b16 %v93
  %v413 = vunpack.c.l.b16 %v94
  %v414 = vunpack.c.h.b16 %v94
  %v415 = vunpack.c.l.b16 %v95
  %v416 = vunpack.c.h.b16 %v95
  %v417 = vunpack.c.l.b16 %v96
  %v418 = vunpack.c.h.b16 %v96
  %v419 = vunpack.c.l.b16 %v97
  %v420 = vunpack.c.h.b16 %v97
  %v421 = vunpack.c.l.b16 %v98
  %v422 = vunpack.c.h.b16 %v98
  %v423 = vunpack.c.l.b16 %v99
  %v424 = vunpack.c.h.b16 %v99
  %v425 = vunpack.c.l.b16 %v100
  %v426 = vunpack.c.h.b16 %v100
  %v427 = vunpack.c.l.b16 %v101
  %v428 = vunpack.c.h.b16 %v101
  %v429 = vunpack.c.l.b16 %v102
  %v430 = vunpack.c.h.b16 %v102
  %v431 = vunpack.c.l.b16 %v103
  %v432 = vunpack.c.h.b16 %v103
  %v433 = vunpack.c.l.b16 %v104
  %v434 = vunpack.c.h.b16 %v104
  %v435 = vunpack.c.l.b16 %v105
  %v436 = vunpack.c.h.b16 %v105
  %v437 = vunpack.c.l.b16 %v106
  %v438 = vunpack.c.h.b16 %v106
  %v439 = vunpack.c.l.b16 %v107
  %v440 = vunpack.c.h.b16 %v107
  %v441 = vunpack.c.l.b16 %v108
  %v442 = vunpack.c.h.b16 %v108
  %v443 = vunpack.c.l.b16 %v109
  %v444 = vunpack.c.h.b16 %v109
  %v445 = vunpack.c.l.b16 %v110
  %v446 = vunpack.c.h.b16 %v110
  %v447 = vunpack.c.l.b16 %v111
  %v448 = vunpack.c.h.b16 %v111
  %v449 = vunpack.c.l.b16 %v112
  %v450 = vunpack.c.h.b16 %v112
  %v451 = vunpack.c.l.b16 %v113
  %v452 = vunpack.c.h.b16 %v113
  %v453 = vunpack.c.l.b16 %v114
  %v454 = vunpack.c.h.b16 %v114
  %v455 = vunpack.c.l.b16 %v115
  %v456 = vunpack.c.h.b16 %v115
  %v457 = vunpack.c.l.b16 %v116
  %v458 = vunpack.c.h.b16 %v116
  %v459 = vunpack.c.l.b16 %v117
  %v460 = vunpack.c.h.b16 %v117
  %v461 = vunpack.c.l.b16 %v118
  %v462 = vunpack.c.h.b16 %v118
  %v463 = vunpack.c.l.b16 %v119
  %v464 = vunpack.c.h.b16 %v119
  %v465 = vunpack.c.l.b16 %v120
  %v466 = vunpack.c.h.b16 %v120
  %v467 = vunpack.c.l.b16 %v121
  %v468 = vunpack.c.h.b16 %v121
  %v469 = vunpack.c.l.b16 %v122
  %v470 = vunpack.c.h.b16 %v122
  %v471 = vunpack.c.l.b16 %v123
  %v472 = vunpack.c.h.b16 %v123
  %v473 = vunpack.c.l.b16 %v124
  %v474 = vunpack.c.h.b16 %v124
  %v475 = vunpack.c.l.b16 %v125
  %v476 = vunpack.c.h.b16 %v125
  %v477 = vunpack.c.l.b16 %v126
  %v478 = vunpack.c.h.b16 %v126
  %v479 = vunpack.c.l.b16 %v127
  %v480 = vunpack.c.h.b16 %v127
  %v481 = vunpack.c.l.b16 %v128
  %v482 = vunpack.c.h.b16 %v128
  %v483 = vpack.c.b16 %v293, %v291
  %v484 = vpack.c.b16 %v294, %v292
  %v485 = vpack.c.b16 %v297, %v295
  %v486 = vpack.c.b16 %v298, %v296
  %v487 = vpack.c.b16 %v301, %v299
  %v488 = vpack.c.b16 %v302, %v300
  %v489 = vpack.c.b16 %v305, %v303
  %v490 = vpack.c.b16 %v306, %v304
  %v491 = vpack.c.b16 %v309, %v307
  %v492 = vpack.c.b16 %v310, %v308
  %v493 = vpack.c.b16 %v313, %v311
  %v494 = vpack.c.b16 %v314, %v312
  %v495 = vpack.c.b16 %v317, %v315
  %v496 = vpack.c.b16 %v318, %v316
  %v497 = vpack.c.b16 %v321, %v319
  %v498 = vpack.c.b16 %v322, %v320
  %v499 = vpack.c.b16 %v325, %v323
  %v500 = vpack.c.b16 %v326, %v324
  %v501 = vpack.c.b16 %v329, %v327
  %v502 = vpack.c.b16 %v330, %v328
  %v503 = vpack.c.b16 %v333, %v331
  %v504 = vpack.c.b16 %v334, %v332
  %v505 = vpack.c.b16 %v337, %v335
  %v506 = vpack.c.b16 %v338, %v336
  %v507 = vpack.c.b16 %v341, %v339
  %v508 = vpack.c.b16 %v342, %v340
  %v509 = vpack.c.b16 %v345, %v343
  %v510 = vpack.c.b16 %v346, %v344
  %v511 = vpack.c.b16 %v349, %v347
  %v512 = vpack.c.b16 %v350, %v348
  %v513 = vpack.c.b16 %v353, %v351
  %v514 = vpack.c.b16 %v354, %v352
  %v515 = vpack.c.b16 %v357, %v355
  %v516 = vpack.c.b16 %v358, %v356
  %v517 = vpack.c.b16 %v361, %v359
  %v518 = vpack.c.b16 %v362, %v360
  %v519 = vpack.c.b16 %v365, %v363
  %v520 = vpack.c.b16 %v366, %v364
  %v521 = vpack.c.b16 %v369, %v367
  %v522 = vpack.c.b16 %v370, %v368
  %v523 = vpack.c.b16 %v373, %v371
  %v524 = vpack.c.b16 %v374, %v372
  %v525 = vpack.c.b16 %v377, %v375
  %v526 = vpack.c.b16 %v378, %v376
  %v527 = vpack.c.b16 %v381, %v379
  %v528 = vpack.c.b16 %v382, %v380
  %v529 = vpack.c.b16 %v385, %v383
  %v530 = vpack.c.b16 %v386, %v384
  %v531 = vpack.c.b16 %v389, %v387
  %v532 = vpack.c.b16 %v390, %v388
  %v533 = vpack.c.b16 %v393, %v391
  %v534 = vpack.c.b16 %v394, %v392
  %v535 = vpack.c.b16 %v397, %v395
  %v536 = vpack.c.b16 %v398, %v396
  %v537 = vpack.c.b16 %v401, %v399
  %v538 = vpack.c.b16 %v402, %v400
  %v539 = vpack.c.b16 %v405, %v403
  %v540 = vpack.c.b16 %v406, %v404
  %v541 = vpack.c.b16 %v409, %v407
  %v542 = vpack.c.b16 %v410, %v408
  %v543 = vpack.c.b16 %v413, %v411
  %v544 = vpack.c.b16 %v414, %v412
  %v545 = vpack.c.b16 %v417, %v415
  %v546 = vpack.c.b16 %v418, %v416
  %v547 = vpack.c.b16 %v421, %v419
  %v548 = vpack.c.b16 %v422, %v420
  %v549 = vpack.c.b16 %v425, %v423
  %v550 = vpack.c.b16 %v426, %v424
  %v551 = vpack.c.b16 %v429, %v427
  %v552 = vpack.c.b16 %v430, %v428
  %v553 = vpack.c.b16 %v433, %v431
  %v554 = vpack.c.b16 %v434, %v432
  %v555 = vpack.c.b16 %v437, %v435
  %v556 = vpack.c.b16 %v438, %v436
  %v557 = vpack.c.b16 %v441, %v439
  %v558 = vpack.c.b16 %v442, %v440
  %v559 = vpack.c.b16 %v445, %v443
  %v560 = vpack.c.b16 %v446, %v444
  %v561 = vpack.c.b16 %v449, %v447
  %v562 = vpack.c.b16 %v450, %v448
  %v563 = vpack.c.b16 %v453, %v451
  %v564 = vpack.c.b16 %v454, %v452
  %v565 = vpack.c.b16 %v457, %v455
  %v566 = vpack.c.b16 %v458, %v456
  %v567 = vpack.c.b16 %v461, %v459
  %v568 = vpack.c.b16 %v462, %v460
  %v569 = vpack.c.b16 %v465, %v463
  %v570 = vpack.c.b16 %v466, %v464
  %v571 = vpack.c.b16 %v469, %v467
  %v572 = vpack.c.b16 %v470, %v468
  %v573 = vpack.c.b16 %v473, %v471
  %v574 = vpack.c.b16 %v474, %v472
  %v575 = vpack.c.b16 %v477, %v475
  %v576 = vpack.c.b16 %v478, %v476
  %v577 = vpack.c.b16 %v481, %v479
  %v578 = vpack.c.b16 %v482, %v480
  %675 = vmatpush.bf16.msra.mxu0 %v497
  %676 = vmatpush.bf16.msra.mxu0 %v495
  %677 = vmatpush.bf16.msra.mxu0 %v493
  %678 = vmatpush.bf16.msra.mxu0 %v491
  %679 = vmatpush.bf16.msra.mxu0 %v489
  %680 = vmatpush.bf16.msra.mxu0 %v487
  %681 = vmatpush.bf16.msra.mxu0 %v485
  %682 = vmatpush.bf16.msra.mxu0 %v483
  %683 = vmatmul.bf16.gmra.mxu0 %v171
  %v684 = vpop.f32.mrf.mxu0
  %v685 = vadd.f32 %v131, %v684
  %v686 = vpop.f32.mrf.mxu0
  %v687 = vadd.f32 %v131, %v686
  %688 = vmatmul.bf16.gmra.mxu0 %v177
  %v689 = vpop.f32.mrf.mxu0
  %v690 = vadd.f32 %v131, %v689
  %v691 = vpop.f32.mrf.mxu0
  %v692 = vadd.f32 %v131, %v691
  %693 = vdwg.mxu0
  %694 = vmatpush.bf16.msra.mxu0 %v513
  %695 = vmatpush.bf16.msra.mxu0 %v511
  %696 = vmatpush.bf16.msra.mxu0 %v509
  %697 = vmatpush.bf16.msra.mxu0 %v507
  %698 = vmatpush.bf16.msra.mxu0 %v505
  %699 = vmatpush.bf16.msra.mxu0 %v503
  %700 = vmatpush.bf16.msra.mxu0 %v501
  %701 = vmatpush.bf16.msra.mxu0 %v499
  %702 = vmatmul.bf16.gmra.mxu0 %v172
  %v703 = vpop.f32.mrf.mxu0
  %v704 = vadd.f32 %v685, %v703
  %v705 = vpop.f32.mrf.mxu0
  %v706 = vadd.f32 %v687, %v705
  %707 = vmatmul.bf16.gmra.mxu0 %v178
  %v708 = vpop.f32.mrf.mxu0
  %v709 = vadd.f32 %v690, %v708
  %v710 = vpop.f32.mrf.mxu0
  %v711 = vadd.f32 %v692, %v710
  %712 = vdwg.mxu0
  %713 = vmatpush.bf16.msra.mxu0 %v529
  %714 = vmatpush.bf16.msra.mxu0 %v527
  %715 = vmatpush.bf16.msra.mxu0 %v525
  %716 = vmatpush.bf16.msra.mxu0 %v523
  %717 = vmatpush.bf16.msra.mxu0 %v521
  %718 = vmatpush.bf16.msra.mxu0 %v519
  %719 = vmatpush.bf16.msra.mxu0 %v517
  %720 = vmatpush.bf16.msra.mxu0 %v515
  %721 = vmatmul.bf16.gmra.mxu0 %v173
  %v722 = vpop.f32.mrf.mxu0
  %v723 = vadd.f32 %v704, %v722
  %v724 = vpop.f32.mrf.mxu0
  %v725 = vadd.f32 %v706, %v724
  %726 = vmatmul.bf16.gmra.mxu0 %v179
  %v727 = vpop.f32.mrf.mxu0
  %v728 = vadd.f32 %v709, %v727
  %v729 = vpop.f32.mrf.mxu0
  %v730 = vadd.f32 %v711, %v729
  %731 = vdwg.mxu0
  %732 = vmatpush.bf16.msra.mxu0 %v545
  %733 = vmatpush.bf16.msra.mxu0 %v543
  %734 = vmatpush.bf16.msra.mxu0 %v541
  %735 = vmatpush.bf16.msra.mxu0 %v539
  %736 = vmatpush.bf16.msra.mxu0 %v537
  %737 = vmatpush.bf16.msra.mxu0 %v535
  %738 = vmatpush.bf16.msra.mxu0 %v533
  %739 = vmatpush.bf16.msra.mxu0 %v531
  %740 = vmatmul.bf16.gmra.mxu0 %v174
  %v741 = vpop.f32.mrf.mxu0
  %v742 = vadd.f32 %v723, %v741
  %v743 = vpop.f32.mrf.mxu0
  %v744 = vadd.f32 %v725, %v743
  %745 = vmatmul.bf16.gmra.mxu0 %v180
  %v746 = vpop.f32.mrf.mxu0
  %v747 = vadd.f32 %v728, %v746
  %v748 = vpop.f32.mrf.mxu0
  %v749 = vadd.f32 %v730, %v748
  %750 = vdwg.mxu0
  %751 = vmatpush.bf16.msra.mxu0 %v561
  %752 = vmatpush.bf16.msra.mxu0 %v559
  %753 = vmatpush.bf16.msra.mxu0 %v557
  %754 = vmatpush.bf16.msra.mxu0 %v555
  %755 = vmatpush.bf16.msra.mxu0 %v553
  %756 = vmatpush.bf16.msra.mxu0 %v551
  %757 = vmatpush.bf16.msra.mxu0 %v549
  %758 = vmatpush.bf16.msra.mxu0 %v547
  %759 = vmatmul.bf16.gmra.mxu0 %v175
  %v760 = vpop.f32.mrf.mxu0
  %v761 = vadd.f32 %v742, %v760
  %v762 = vpop.f32.mrf.mxu0
  %v763 = vadd.f32 %v744, %v762
  %764 = vmatmul.bf16.gmra.mxu0 %v181
  %v765 = vpop.f32.mrf.mxu0
  %v766 = vadd.f32 %v747, %v765
  %v767 = vpop.f32.mrf.mxu0
  %v768 = vadd.f32 %v749, %v767
  %769 = vdwg.mxu0
  %770 = vmatpush.bf16.msra.mxu0 %v577
  %771 = vmatpush.bf16.msra.mxu0 %v575
  %772 = vmatpush.bf16.msra.mxu0 %v573
  %773 = vmatpush.bf16.msra.mxu0 %v571
  %774 = vmatpush.bf16.msra.mxu0 %v569
  %775 = vmatpush.bf16.msra.mxu0 %v567
  %776 = vmatpush.bf16.msra.mxu0 %v565
  %777 = vmatpush.bf16.msra.mxu0 %v563
  %778 = vmatmul.bf16.gmra.mxu0 %v176
  %v779 = vpop.f32.mrf.mxu0
  %v780 = vadd.f32 %v761, %v779
  %v781 = vpop.f32.mrf.mxu0
  %v782 = vadd.f32 %v763, %v781
  %783 = vmatmul.bf16.gmra.mxu0 %v182
  %v784 = vpop.f32.mrf.mxu0
  %v785 = vadd.f32 %v766, %v784
  %v786 = vpop.f32.mrf.mxu0
  %v787 = vadd.f32 %v768, %v786
  %788 = vdwg.mxu0
  %789 = vmatpush.bf16.msra.mxu0 %v498
  %790 = vmatpush.bf16.msra.mxu0 %v496
  %791 = vmatpush.bf16.msra.mxu0 %v494
  %792 = vmatpush.bf16.msra.mxu0 %v492
  %793 = vmatpush.bf16.msra.mxu0 %v490
  %794 = vmatpush.bf16.msra.mxu0 %v488
  %795 = vmatpush.bf16.msra.mxu0 %v486
  %796 = vmatpush.bf16.msra.mxu0 %v484
  %797 = vmatmul.bf16.gmra.mxu0 %v171
  %v798 = vpop.f32.mrf.mxu0
  %v799 = vadd.f32 %v132, %v798
  %v800 = vpop.f32.mrf.mxu0
  %v801 = vadd.f32 %v132, %v800
  %802 = vmatmul.bf16.gmra.mxu0 %v177
  %v803 = vpop.f32.mrf.mxu0
  %v804 = vadd.f32 %v132, %v803
  %v805 = vpop.f32.mrf.mxu0
  %v806 = vadd.f32 %v132, %v805
  %807 = vdwg.mxu0
  %808 = vmatpush.bf16.msra.mxu0 %v514
  %809 = vmatpush.bf16.msra.mxu0 %v512
  %810 = vmatpush.bf16.msra.mxu0 %v510
  %811 = vmatpush.bf16.msra.mxu0 %v508
  %812 = vmatpush.bf16.msra.mxu0 %v506
  %813 = vmatpush.bf16.msra.mxu0 %v504
  %814 = vmatpush.bf16.msra.mxu0 %v502
  %815 = vmatpush.bf16.msra.mxu0 %v500
  %816 = vmatmul.bf16.gmra.mxu0 %v172
  %v817 = vpop.f32.mrf.mxu0
  %v818 = vadd.f32 %v799, %v817
  %v819 = vpop.f32.mrf.mxu0
  %v820 = vadd.f32 %v801, %v819
  %821 = vmatmul.bf16.gmra.mxu0 %v178
  %v822 = vpop.f32.mrf.mxu0
  %v823 = vadd.f32 %v804, %v822
  %v824 = vpop.f32.mrf.mxu0
  %v825 = vadd.f32 %v806, %v824
  %826 = vdwg.mxu0
  %827 = vmatpush.bf16.msra.mxu0 %v530
  %828 = vmatpush.bf16.msra.mxu0 %v528
  %829 = vmatpush.bf16.msra.mxu0 %v526
  %830 = vmatpush.bf16.msra.mxu0 %v524
  %831 = vmatpush.bf16.msra.mxu0 %v522
  %832 = vmatpush.bf16.msra.mxu0 %v520
  %833 = vmatpush.bf16.msra.mxu0 %v518
  %834 = vmatpush.bf16.msra.mxu0 %v516
  %835 = vmatmul.bf16.gmra.mxu0 %v173
  %v836 = vpop.f32.mrf.mxu0
  %v837 = vadd.f32 %v818, %v836
  %v838 = vpop.f32.mrf.mxu0
  %v839 = vadd.f32 %v820, %v838
  %840 = vmatmul.bf16.gmra.mxu0 %v179
  %v841 = vpop.f32.mrf.mxu0
  %v842 = vadd.f32 %v823, %v841
  %v843 = vpop.f32.mrf.mxu0
  %v844 = vadd.f32 %v825, %v843
  %845 = vdwg.mxu0
  %846 = vmatpush.bf16.msra.mxu0 %v546
  %847 = vmatpush.bf16.msra.mxu0 %v544
  %848 = vmatpush.bf16.msra.mxu0 %v542
  %849 = vmatpush.bf16.msra.mxu0 %v540
  %850 = vmatpush.bf16.msra.mxu0 %v538
  %851 = vmatpush.bf16.msra.mxu0 %v536
  %852 = vmatpush.bf16.msra.mxu0 %v534
  %853 = vmatpush.bf16.msra.mxu0 %v532
  %854 = vmatmul.bf16.gmra.mxu0 %v174
  %v855 = vpop.f32.mrf.mxu0
  %v856 = vadd.f32 %v837, %v855
  %v857 = vpop.f32.mrf.mxu0
  %v858 = vadd.f32 %v839, %v857
  %859 = vmatmul.bf16.gmra.mxu0 %v180
  %v860 = vpop.f32.mrf.mxu0
  %v861 = vadd.f32 %v842, %v860
  %v862 = vpop.f32.mrf.mxu0
  %v863 = vadd.f32 %v844, %v862
  %864 = vdwg.mxu0
  %865 = vmatpush.bf16.msra.mxu0 %v562
  %866 = vmatpush.bf16.msra.mxu0 %v560
  %867 = vmatpush.bf16.msra.mxu0 %v558
  %868 = vmatpush.bf16.msra.mxu0 %v556
  %869 = vmatpush.bf16.msra.mxu0 %v554
  %870 = vmatpush.bf16.msra.mxu0 %v552
  %871 = vmatpush.bf16.msra.mxu0 %v550
  %872 = vmatpush.bf16.msra.mxu0 %v548
  %873 = vmatmul.bf16.gmra.mxu0 %v175
  %v874 = vpop.f32.mrf.mxu0
  %v875 = vadd.f32 %v856, %v874
  %v876 = vpop.f32.mrf.mxu0
  %v877 = vadd.f32 %v858, %v876
  %878 = vmatmul.bf16.gmra.mxu0 %v181
  %v879 = vpop.f32.mrf.mxu0
  %v880 = vadd.f32 %v861, %v879
  %v881 = vpop.f32.mrf.mxu0
  %v882 = vadd.f32 %v863, %v881
  %883 = vdwg.mxu0
  %884 = vmatpush.bf16.msra.mxu0 %v578
  %885 = vmatpush.bf16.msra.mxu0 %v576
  %886 = vmatpush.bf16.msra.mxu0 %v574
  %887 = vmatpush.bf16.msra.mxu0 %v572
  %888 = vmatpush.bf16.msra.mxu0 %v570
  %889 = vmatpush.bf16.msra.mxu0 %v568
  %890 = vmatpush.bf16.msra.mxu0 %v566
  %891 = vmatpush.bf16.msra.mxu0 %v564
  %892 = vmatmul.bf16.gmra.mxu0 %v176
  %v893 = vpop.f32.mrf.mxu0
  %v894 = vadd.f32 %v875, %v893
  %v895 = vpop.f32.mrf.mxu0
  %v896 = vadd.f32 %v877, %v895
  %897 = vmatmul.bf16.gmra.mxu0 %v182
  %v898 = vpop.f32.mrf.mxu0
  %v899 = vadd.f32 %v880, %v898
  %v900 = vpop.f32.mrf.mxu0
  %v901 = vadd.f32 %v882, %v900
  %902 = vdwg.mxu0
  %v903 = vmul.f32 %v780, %v780
  %v904 = vmul.f32 %v894, %v894
  %v905 = vmul.f32 %v782, %v782
  %v906 = vmul.f32 %v896, %v896
  %v907 = vmul.f32 %v785, %v785
  %v908 = vmul.f32 %v899, %v899
  %v909 = vmul.f32 %v787, %v787
  %v910 = vmul.f32 %v901, %v901
  %v911 = vpack.c.bf16 %v905, %v903
  %v912 = vpack.c.bf16 %v906, %v904
  %v913 = vpack.c.bf16 %v909, %v907
  %v914 = vpack.c.bf16 %v910, %v908
  %v915 = vld [vmem:[%s3] sm:$0xff]
  %v916 = vld [vmem:[%s3 + $0x8] sm:$0xff]
  %v917 = vld [vmem:[%s3 + $0x10] sm:$0xff]
  %v918 = vld [vmem:[%s3 + $0x18] sm:$0xff]
  %v919 = vld [vmem:[%s3 + $0x20] sm:$0xff]
  %v920 = vld [vmem:[%s3 + $0x28] sm:$0xff]
  %v921 = vld [vmem:[%s3 + $0x30] sm:$0xff]
  %v922 = vld [vmem:[%s3 + $0x38] sm:$0xff]
  %v923 = vld [vmem:[%s3 + $0x40] sm:$0xff]
  %v924 = vld [vmem:[%s3 + $0x48] sm:$0xff]
  %v925 = vld [vmem:[%s3 + $0x50] sm:$0xff]
  %v926 = vld [vmem:[%s3 + $0x58] sm:$0xff]
  %v927 = vld [vmem:[%s3 + $0x60] sm:$0xff]
  %v928 = vld [vmem:[%s3 + $0x68] sm:$0xff]
  %v929 = vld [vmem:[%s3 + $0x70] sm:$0xff]
  %v930 = vld [vmem:[%s3 + $0x78] sm:$0xff]
  %v931 = vld [vmem:[%s3 + $0x80] sm:$0xff]
  %v932 = vld [vmem:[%s3 + $0x88] sm:$0xff]
  %v933 = vld [vmem:[%s3 + $0x90] sm:$0xff]
  %v934 = vld [vmem:[%s3 + $0x98] sm:$0xff]
  %v935 = vld [vmem:[%s3 + $0xa0] sm:$0xff]
  %v936 = vld [vmem:[%s3 + $0xa8] sm:$0xff]
  %v937 = vld [vmem:[%s3 + $0xb0] sm:$0xff]
  %v938 = vld [vmem:[%s3 + $0xb8] sm:$0xff]
  %v939 = vld [vmem:[%s4] sm:$0x3]
  %v941 = vperm.slane %v939, 0
  %v942 = vperm.slane %v939, 1
  %v969 = vunpack.c.l.b16 %v915
  %v970 = vunpack.c.h.b16 %v915
  %v971 = vunpack.c.l.b16 %v916
  %v972 = vunpack.c.h.b16 %v916
  %v973 = vunpack.c.l.b16 %v917
  %v974 = vunpack.c.h.b16 %v917
  %v975 = vunpack.c.l.b16 %v918
  %v976 = vunpack.c.h.b16 %v918
  %v977 = vunpack.c.l.b16 %v919
  %v978 = vunpack.c.h.b16 %v919
  %v979 = vunpack.c.l.b16 %v920
  %v980 = vunpack.c.h.b16 %v920
  %v981 = vunpack.c.l.b16 %v921
  %v982 = vunpack.c.h.b16 %v921
  %v983 = vunpack.c.l.b16 %v922
  %v984 = vunpack.c.h.b16 %v922
  %v985 = vunpack.c.l.b16 %v923
  %v986 = vunpack.c.h.b16 %v923
  %v987 = vunpack.c.l.b16 %v924
  %v988 = vunpack.c.h.b16 %v924
  %v989 = vunpack.c.l.b16 %v925
  %v990 = vunpack.c.h.b16 %v925
  %v991 = vunpack.c.l.b16 %v926
  %v992 = vunpack.c.h.b16 %v926
  %v993 = vunpack.c.l.b16 %v927
  %v994 = vunpack.c.h.b16 %v927
  %v995 = vunpack.c.l.b16 %v928
  %v996 = vunpack.c.h.b16 %v928
  %v997 = vunpack.c.l.b16 %v929
  %v998 = vunpack.c.h.b16 %v929
  %v999 = vunpack.c.l.b16 %v930
  %v1000 = vunpack.c.h.b16 %v930
  %v1001 = vunpack.c.l.b16 %v931
  %v1002 = vunpack.c.h.b16 %v931
  %v1003 = vunpack.c.l.b16 %v932
  %v1004 = vunpack.c.h.b16 %v932
  %v1005 = vunpack.c.l.b16 %v933
  %v1006 = vunpack.c.h.b16 %v933
  %v1007 = vunpack.c.l.b16 %v934
  %v1008 = vunpack.c.h.b16 %v934
  %v1009 = vunpack.c.l.b16 %v935
  %v1010 = vunpack.c.h.b16 %v935
  %v1011 = vunpack.c.l.b16 %v936
  %v1012 = vunpack.c.h.b16 %v936
  %v1013 = vunpack.c.l.b16 %v937
  %v1014 = vunpack.c.h.b16 %v937
  %v1015 = vunpack.c.l.b16 %v938
  %v1016 = vunpack.c.h.b16 %v938
  %v1017 = vpack.c.b16 %v971, %v969
  %v1018 = vpack.c.b16 %v972, %v970
  %v1019 = vpack.c.b16 %v975, %v973
  %v1020 = vpack.c.b16 %v976, %v974
  %v1021 = vpack.c.b16 %v979, %v977
  %v1022 = vpack.c.b16 %v980, %v978
  %v1023 = vpack.c.b16 %v983, %v981
  %v1024 = vpack.c.b16 %v984, %v982
  %v1025 = vpack.c.b16 %v987, %v985
  %v1026 = vpack.c.b16 %v988, %v986
  %v1027 = vpack.c.b16 %v991, %v989
  %v1028 = vpack.c.b16 %v992, %v990
  %v1029 = vpack.c.b16 %v995, %v993
  %v1030 = vpack.c.b16 %v996, %v994
  %v1031 = vpack.c.b16 %v999, %v997
  %v1032 = vpack.c.b16 %v1000, %v998
  %v1033 = vpack.c.b16 %v1003, %v1001
  %v1034 = vpack.c.b16 %v1004, %v1002
  %v1035 = vpack.c.b16 %v1007, %v1005
  %v1036 = vpack.c.b16 %v1008, %v1006
  %v1037 = vpack.c.b16 %v1011, %v1009
  %v1038 = vpack.c.b16 %v1012, %v1010
  %v1039 = vpack.c.b16 %v1015, %v1013
  %v1040 = vpack.c.b16 %v1016, %v1014
  %vm1065 = vcmask 523264
  %v1067 = vsel %vm1065, %v912, 0
  %v1070 = vsel %vm1065, %v914, 0
  %1072 = vmatpush.bf16.msra.mxu0 %v1031
  %1073 = vmatpush.bf16.msra.mxu0 %v1029
  %1074 = vmatpush.bf16.msra.mxu0 %v1027
  %1075 = vmatpush.bf16.msra.mxu0 %v1025
  %1076 = vmatpush.bf16.msra.mxu0 %v1023
  %1077 = vmatpush.bf16.msra.mxu0 %v1021
  %1078 = vmatpush.bf16.msra.mxu0 %v1019
  %1079 = vmatpush.bf16.msra.mxu0 %v1017
  %1080 = vmatmul.bf16.gmra.mxu0 %v911
  %v1081 = vpop.f32.mrf.mxu0
  %v1082 = vadd.f32 %v941, %v1081
  %v1083 = vpop.f32.mrf.mxu0
  %v1084 = vadd.f32 %v941, %v1083
  %1085 = vmatmul.bf16.gmra.mxu0 %v913
  %v1086 = vpop.f32.mrf.mxu0
  %v1087 = vadd.f32 %v941, %v1086
  %v1088 = vpop.f32.mrf.mxu0
  %v1089 = vadd.f32 %v941, %v1088
  %1090 = vdwg.mxu0
  %1091 = vmatpush.bf16.msra.mxu0 0
  %1092 = vmatpush.bf16.msra.mxu0 0
  %1093 = vmatpush.bf16.msra.mxu0 0
  %1094 = vmatpush.bf16.msra.mxu0 0
  %1095 = vmatpush.bf16.msra.mxu0 %v1039
  %1096 = vmatpush.bf16.msra.mxu0 %v1037
  %1097 = vmatpush.bf16.msra.mxu0 %v1035
  %1098 = vmatpush.bf16.msra.mxu0 %v1033
  %1099 = vmatmul.bf16.gmra.mxu0 %v1067
  %v1100 = vpop.f32.mrf.mxu0
  %v1101 = vadd.f32 %v1082, %v1100
  %v1102 = vpop.f32.mrf.mxu0
  %v1103 = vadd.f32 %v1084, %v1102
  %1104 = vmatmul.bf16.gmra.mxu0 %v1070
  %v1105 = vpop.f32.mrf.mxu0
  %v1106 = vadd.f32 %v1087, %v1105
  %v1107 = vpop.f32.mrf.mxu0
  %v1108 = vadd.f32 %v1089, %v1107
  %1109 = vdwg.mxu0
  %1110 = vmatpush.bf16.msra.mxu0 %v1032
  %1111 = vmatpush.bf16.msra.mxu0 %v1030
  %1112 = vmatpush.bf16.msra.mxu0 %v1028
  %1113 = vmatpush.bf16.msra.mxu0 %v1026
  %1114 = vmatpush.bf16.msra.mxu0 %v1024
  %1115 = vmatpush.bf16.msra.mxu0 %v1022
  %1116 = vmatpush.bf16.msra.mxu0 %v1020
  %1117 = vmatpush.bf16.msra.mxu0 %v1018
  %1118 = vmatmul.bf16.gmra.mxu0 %v911
  %v1119 = vpop.f32.mrf.mxu0
  %v1120 = vadd.f32 %v942, %v1119
  %v1121 = vpop.f32.mrf.mxu0
  %v1122 = vadd.f32 %v942, %v1121
  %1123 = vmatmul.bf16.gmra.mxu0 %v913
  %v1124 = vpop.f32.mrf.mxu0
  %v1125 = vadd.f32 %v942, %v1124
  %v1126 = vpop.f32.mrf.mxu0
  %v1127 = vadd.f32 %v942, %v1126
  %1128 = vdwg.mxu0
  %1129 = vmatpush.bf16.msra.mxu0 0
  %1130 = vmatpush.bf16.msra.mxu0 0
  %1131 = vmatpush.bf16.msra.mxu0 0
  %1132 = vmatpush.bf16.msra.mxu0 0
  %1133 = vmatpush.bf16.msra.mxu0 %v1040
  %1134 = vmatpush.bf16.msra.mxu0 %v1038
  %1135 = vmatpush.bf16.msra.mxu0 %v1036
  %1136 = vmatpush.bf16.msra.mxu0 %v1034
  %1137 = vmatmul.bf16.gmra.mxu0 %v1067
  %v1138 = vpop.f32.mrf.mxu0
  %v1139 = vadd.f32 %v1120, %v1138
  %v1140 = vpop.f32.mrf.mxu0
  %v1141 = vadd.f32 %v1122, %v1140
  %1142 = vmatmul.bf16.gmra.mxu0 %v1070
  %v1143 = vpop.f32.mrf.mxu0
  %v1144 = vadd.f32 %v1125, %v1143
  %v1145 = vpop.f32.mrf.mxu0
  %v1146 = vadd.f32 %v1127, %v1145
  %1147 = vdwg.mxu0
  %v1148 = vrsqrt.pop %v1101
  %v1149 = vmul.f32 %v1148, %v1101
  %v1150 = vmul.f32 %v1149, %v1148
  %v1151 = vmul.f32 0.5, %v1150
  %v1152 = vsub.f32 1.5, %v1151
  %v1153 = vmul.f32 %v1148, %v1152
  %vm1154 = vweird.f32 %v1101
  %vm1155 = vweird.f32 %v1148
  %vm1156 = vmor %vm1154, %vm1155
  %v1157 = vsel %vm1156, %v1148, %v1153
  %v1158 = vrsqrt.pop %v1139
  %v1159 = vmul.f32 %v1158, %v1139
  %v1160 = vmul.f32 %v1159, %v1158
  %v1161 = vmul.f32 0.5, %v1160
  %v1162 = vsub.f32 1.5, %v1161
  %v1163 = vmul.f32 %v1158, %v1162
  %vm1164 = vweird.f32 %v1139
  %vm1165 = vweird.f32 %v1158
  %vm1166 = vmor %vm1164, %vm1165
  %v1167 = vsel %vm1166, %v1158, %v1163
  %v1168 = vrsqrt.pop %v1103
  %v1169 = vmul.f32 %v1168, %v1103
  %v1170 = vmul.f32 %v1169, %v1168
  %v1171 = vmul.f32 0.5, %v1170
  %v1172 = vsub.f32 1.5, %v1171
  %v1173 = vmul.f32 %v1168, %v1172
  %vm1174 = vweird.f32 %v1103
  %vm1175 = vweird.f32 %v1168
  %vm1176 = vmor %vm1174, %vm1175
  %v1177 = vsel %vm1176, %v1168, %v1173
  %v1178 = vrsqrt.pop %v1141
  %v1179 = vmul.f32 %v1178, %v1141
  %v1180 = vmul.f32 %v1179, %v1178
  %v1181 = vmul.f32 0.5, %v1180
  %v1182 = vsub.f32 1.5, %v1181
  %v1183 = vmul.f32 %v1178, %v1182
  %vm1184 = vweird.f32 %v1141
  %vm1185 = vweird.f32 %v1178
  %vm1186 = vmor %vm1184, %vm1185
  %v1187 = vsel %vm1186, %v1178, %v1183
  %v1188 = vrsqrt.pop %v1106
  %v1189 = vmul.f32 %v1188, %v1106
  %v1190 = vmul.f32 %v1189, %v1188
  %v1191 = vmul.f32 0.5, %v1190
  %v1192 = vsub.f32 1.5, %v1191
  %v1193 = vmul.f32 %v1188, %v1192
  %vm1194 = vweird.f32 %v1106
  %vm1195 = vweird.f32 %v1188
  %vm1196 = vmor %vm1194, %vm1195
  %v1197 = vsel %vm1196, %v1188, %v1193
  %v1198 = vrsqrt.pop %v1144
  %v1199 = vmul.f32 %v1198, %v1144
  %v1200 = vmul.f32 %v1199, %v1198
  %v1201 = vmul.f32 0.5, %v1200
  %v1202 = vsub.f32 1.5, %v1201
  %v1203 = vmul.f32 %v1198, %v1202
  %vm1204 = vweird.f32 %v1144
  %vm1205 = vweird.f32 %v1198
  %vm1206 = vmor %vm1204, %vm1205
  %v1207 = vsel %vm1206, %v1198, %v1203
  %v1208 = vrsqrt.pop %v1108
  %v1209 = vmul.f32 %v1208, %v1108
  %v1210 = vmul.f32 %v1209, %v1208
  %v1211 = vmul.f32 0.5, %v1210
  %v1212 = vsub.f32 1.5, %v1211
  %v1213 = vmul.f32 %v1208, %v1212
  %vm1214 = vweird.f32 %v1108
  %vm1215 = vweird.f32 %v1208
  %vm1216 = vmor %vm1214, %vm1215
  %v1217 = vsel %vm1216, %v1208, %v1213
  %v1218 = vrsqrt.pop %v1146
  %v1219 = vmul.f32 %v1218, %v1146
  %v1220 = vmul.f32 %v1219, %v1218
  %v1221 = vmul.f32 0.5, %v1220
  %v1222 = vsub.f32 1.5, %v1221
  %v1223 = vmul.f32 %v1218, %v1222
  %vm1224 = vweird.f32 %v1146
  %vm1225 = vweird.f32 %v1218
  %vm1226 = vmor %vm1224, %vm1225
  %v1227 = vsel %vm1226, %v1218, %v1223
  %v1228 = vmul.f32 %v780, %v1157
  %v1229 = vmul.f32 %v894, %v1167
  %v1230 = vmul.f32 %v782, %v1177
  %v1231 = vmul.f32 %v896, %v1187
  %v1232 = vmul.f32 %v785, %v1197
  %v1233 = vmul.f32 %v899, %v1207
  %v1234 = vmul.f32 %v787, %v1217
  %v1235 = vmul.f32 %v901, %v1227
  %v1236 = vpack.c.bf16 %v1229, %v1228
  %v1237 = vpack.c.bf16 %v1231, %v1230
  %v1238 = vpack.c.bf16 %v1233, %v1232
  %v1239 = vpack.c.bf16 %v1235, %v1234
  %vm1240 = vcmask 1043456
  %vm1241 = vcmask 523268
  %vm1242 = vmor %vm1241, %vm1240
  %1243 = vst.msk [vmem:[%s5] sm:$0xff] %vm1242, %v1236
  %1244 = vst.msk [vmem:[%s5 + $0x8] sm:$0xff] %vm1242, %v1237
  %1245 = vst.msk [vmem:[%s5 + $0x10] sm:$0xff] %vm1242, %v1238
  %1246 = vst.msk [vmem:[%s5 + $0x18] sm:$0xff] %vm1242, %v1239
  // Predicated region
  $region22: #{forward.8} parent=0 // pred_check
    _
  $region23: #{forward.8} parent=0 // pred_check_branch
    %1248 = sbr.rel (0) target = $region25
  $region24: #{forward.8} parent=0 // pred_region
    _
  $region25: #{forward.8} parent=0 // pred_fallthru
    _
  // Predicated region
  $region26: #{forward.8} parent=0 // pred_check
    _
  $region27: #{forward.8} parent=0 // pred_check_branch
    %1250 = sbr.rel (0) target = $region29
  $region28: #{forward.8} parent=0 // pred_region
    _
  $region29: #{forward.8} parent=0 // pred_fallthru
    _

// kernel: forward.9
$region0: #{forward.9}
  #allocation0 [shape = 'u32[]', space=smem, size = 0x4, offset = 0x4, fixed_abs, tag = 'smem constant byte address 0x4 - core index']
  #allocation1 [shape = 'u32[72,128]{1,0:T(1,128)}', space=vmem, size = 0x9000, scoped, tag = 'internal scratch']
  %s0 = inlined_call_operand.vmem [shape: bf16[8,768], index: 0, kind: input, shape index: {}]
  %s1 = inlined_call_operand.vmem [shape: bf16[768,192], index: 1, kind: input, shape index: {}]
  %s2 = inlined_call_operand.vmem [shape: f32[1,192], index: 2, kind: input, shape index: {}]
  %s3 = inlined_call_operand.vmem [shape: bf16[192,192], index: 3, kind: input, shape index: {}]
  %s4 = inlined_call_operand.vmem [shape: f32[1,192], index: 4, kind: input, shape index: {}]
  %s5 = inlined_call_operand.vmem [shape: bf16[8,192], index: 5, kind: output, shape index: {}]
  %s6 = sld [smem:[#allocation0]]
  $region30: #{forward.9} parent=0
    _
  %s8 = ssub.s32 1, %s6
  %s9 = scalar_select 0, %s8, %s6
  // Predicated region
  $region2: #{forward.9} parent=0 // pred_check
    _
  $region3: #{forward.9} parent=0 // pred_check_branch
    %11 = sbr.rel (0) target = $region5
  $region4: #{forward.9} parent=0 // pred_region
    _
  $region5: #{forward.9} parent=0 // pred_fallthru
    _
  // Predicated region
  $region6: #{forward.9} parent=0 // pred_check
    _
  $region7: #{forward.9} parent=0 // pred_check_branch
    %13 = sbr.rel (0) target = $region9
  $region8: #{forward.9} parent=0 // pred_region
    _
  $region9: #{forward.9} parent=0 // pred_fallthru
    _
  // Predicated region
  $region10: #{forward.9} parent=0 // pred_check
    _
  $region11: #{forward.9} parent=0 // pred_check_branch
    %15 = sbr.rel (0) target = $region13
  $region12: #{forward.9} parent=0 // pred_region
    _
  $region13: #{forward.9} parent=0 // pred_fallthru
    _
  // Predicated region
  $region14: #{forward.9} parent=0 // pred_check
    _
  $region15: #{forward.9} parent=0 // pred_check_branch
    %17 = sbr.rel (0) target = $region17
  $region16: #{forward.9} parent=0 // pred_region
    _
  $region17: #{forward.9} parent=0 // pred_fallthru
    _
  // Predicated region
  $region18: #{forward.9} parent=0 // pred_check
    _
  $region19: #{forward.9} parent=0 // pred_check_branch
    %19 = sbr.rel (0) target = $region21
  $region20: #{forward.9} parent=0 // pred_region
    _
  $region21: #{forward.9} parent=0 // pred_fallthru
    _
  %v21 = vld [vmem:[%s0] sm:$0xff]
  %v22 = vld [vmem:[%s0 + $0x8] sm:$0xff]
  %v23 = vld [vmem:[%s0 + $0x10] sm:$0xff]
  %v24 = vld [vmem:[%s1] sm:$0xff]
  %v25 = vld [vmem:[%s1 + $0x8] sm:$0xff]
  %v26 = vld [vmem:[%s1 + $0x10] sm:$0xff]
  %v27 = vld [vmem:[%s1 + $0x18] sm:$0xff]
  %v28 = vld [vmem:[%s1 + $0x20] sm:$0xff]
  %v29 = vld [vmem:[%s1 + $0x28] sm:$0xff]
  %v30 = vld [vmem:[%s1 + $0x30] sm:$0xff]
  %v31 = vld [vmem:[%s1 + $0x38] sm:$0xff]
  %v32 = vld [vmem:[%s1 + $0x40] sm:$0xff]
  %v33 = vld [vmem:[%s1 + $0x48] sm:$0xff]
  %v34 = vld [vmem:[%s1 + $0x50] sm:$0xff]
  %v35 = vld [vmem:[%s1 + $0x58] sm:$0xff]
  %v36 = vld [vmem:[%s1 + $0x60] sm:$0xff]
  %v37 = vld [vmem:[%s1 + $0x68] sm:$0xff]
  %v38 = vld [vmem:[%s1 + $0x70] sm:$0xff]
  %v39 = vld [vmem:[%s1 + $0x78] sm:$0xff]
  %v40 = vld [vmem:[%s1 + $0x80] sm:$0xff]
  %v41 = vld [vmem:[%s1 + $0x88] sm:$0xff]
  %v42 = vld [vmem:[%s1 + $0x90] sm:$0xff]
  %v43 = vld [vmem:[%s1 + $0x98] sm:$0xff]
  %v44 = vld [vmem:[%s1 + $0xa0] sm:$0xff]
  %v45 = vld [vmem:[%s1 + $0xa8] sm:$0xff]
  %v46 = vld [vmem:[%s1 + $0xb0] sm:$0xff]
  %v47 = vld [vmem:[%s1 + $0xb8] sm:$0xff]
  %v48 = vld [vmem:[%s1 + $0xc0] sm:$0xff]
  %v49 = vld [vmem:[%s1 + $0xc8] sm:$0xff]
  %v50 = vld [vmem:[%s1 + $0xd0] sm:$0xff]
  %v51 = vld [vmem:[%s1 + $0xd8] sm:$0xff]
  %v52 = vld [vmem:[%s1 + $0xe0] sm:$0xff]
  %v53 = vld [vmem:[%s1 + $0xe8] sm:$0xff]
  %v54 = vld [vmem:[%s1 + $0xf0] sm:$0xff]
  %v55 = vld [vmem:[%s1 + $0xf8] sm:$0xff]
  %v56 = vld [vmem:[%s1 + $0x100] sm:$0xff]
  %v57 = vld [vmem:[%s1 + $0x108] sm:$0xff]
  %v58 = vld [vmem:[%s1 + $0x110] sm:$0xff]
  %v59 = vld [vmem:[%s1 + $0x118] sm:$0xff]
  %v60 = vld [vmem:[%s1 + $0x120] sm:$0xff]
  %v61 = vld [vmem:[%s1 + $0x128] sm:$0xff]
  %v62 = vld [vmem:[%s1 + $0x130] sm:$0xff]
  %v63 = vld [vmem:[%s1 + $0x138] sm:$0xff]
  %v64 = vld [vmem:[%s1 + $0x140] sm:$0xff]
  %v65 = vld [vmem:[%s1 + $0x148] sm:$0xff]
  %v66 = vld [vmem:[%s1 + $0x150] sm:$0xff]
  %v67 = vld [vmem:[%s1 + $0x158] sm:$0xff]
  %v68 = vld [vmem:[%s1 + $0x160] sm:$0xff]
  %v69 = vld [vmem:[%s1 + $0x168] sm:$0xff]
  %v70 = vld [vmem:[%s1 + $0x170] sm:$0xff]
  %v71 = vld [vmem:[%s1 + $0x178] sm:$0xff]
  %v72 = vld [vmem:[%s1 + $0x180] sm:$0xff]
  %v73 = vld [vmem:[%s1 + $0x188] sm:$0xff]
  %v74 = vld [vmem:[%s1 + $0x190] sm:$0xff]
  %v75 = vld [vmem:[%s1 + $0x198] sm:$0xff]
  %v76 = vld [vmem:[%s1 + $0x1a0] sm:$0xff]
  %v77 = vld [vmem:[%s1 + $0x1a8] sm:$0xff]
  %v78 = vld [vmem:[%s1 + $0x1b0] sm:$0xff]
  %v79 = vld [vmem:[%s1 + $0x1b8] sm:$0xff]
  %v80 = vld [vmem:[%s1 + $0x1c0] sm:$0xff]
  %v81 = vld [vmem:[%s1 + $0x1c8] sm:$0xff]
  %v82 = vld [vmem:[%s1 + $0x1d0] sm:$0xff]
  %v83 = vld [vmem:[%s1 + $0x1d8] sm:$0xff]
  %v84 = vld [vmem:[%s1 + $0x1e0] sm:$0xff]
  %v85 = vld [vmem:[%s1 + $0x1e8] sm:$0xff]
  %v86 = vld [vmem:[%s1 + $0x1f0] sm:$0xff]
  %v87 = vld [vmem:[%s1 + $0x1f8] sm:$0xff]
  %v88 = vld [vmem:[%s1 + $0x200] sm:$0xff]
  %v89 = vld [vmem:[%s1 + $0x208] sm:$0xff]
  %v90 = vld [vmem:[%s1 + $0x210] sm:$0xff]
  %v91 = vld [vmem:[%s1 + $0x218] sm:$0xff]
  %v92 = vld [vmem:[%s1 + $0x220] sm:$0xff]
  %v93 = vld [vmem:[%s1 + $0x228] sm:$0xff]
  %v94 = vld [vmem:[%s1 + $0x230] sm:$0xff]
  %v95 = vld [vmem:[%s1 + $0x238] sm:$0xff]
  %v96 = vld [vmem:[%s1 + $0x240] sm:$0xff]
  %v97 = vld [vmem:[%s1 + $0x248] sm:$0xff]
  %v98 = vld [vmem:[%s1 + $0x250] sm:$0xff]
  %v99 = vld [vmem:[%s1 + $0x258] sm:$0xff]
  %v100 = vld [vmem:[%s1 + $0x260] sm:$0xff]
  %v101 = vld [vmem:[%s1 + $0x268] sm:$0xff]
  %v102 = vld [vmem:[%s1 + $0x270] sm:$0xff]
  %v103 = vld [vmem:[%s1 + $0x278] sm:$0xff]
  %v104 = vld [vmem:[%s1 + $0x280] sm:$0xff]
  %v105 = vld [vmem:[%s1 + $0x288] sm:$0xff]
  %v106 = vld [vmem:[%s1 + $0x290] sm:$0xff]
  %v107 = vld [vmem:[%s1 + $0x298] sm:$0xff]
  %v108 = vld [vmem:[%s1 + $0x2a0] sm:$0xff]
  %v109 = vld [vmem:[%s1 + $0x2a8] sm:$0xff]
  %v110 = vld [vmem:[%s1 + $0x2b0] sm:$0xff]
  %v111 = vld [vmem:[%s1 + $0x2b8] sm:$0xff]
  %v112 = vld [vmem:[%s1 + $0x2c0] sm:$0xff]
  %v113 = vld [vmem:[%s1 + $0x2c8] sm:$0xff]
  %v114 = vld [vmem:[%s1 + $0x2d0] sm:$0xff]
  %v115 = vld [vmem:[%s1 + $0x2d8] sm:$0xff]
  %v116 = vld [vmem:[%s1 + $0x2e0] sm:$0xff]
  %v117 = vld [vmem:[%s1 + $0x2e8] sm:$0xff]
  %v118 = vld [vmem:[%s1 + $0x2f0] sm:$0xff]
  %v119 = vld [vmem:[%s1 + $0x2f8] sm:$0xff]
  %v120 = vld [vmem:[%s2] sm:$0x3]
  %v122 = vperm.slane %v120, 0
  %v123 = vperm.slane %v120, 1
  %v129 = vunpack.c.l.b16 %v21
  %v130 = vunpack.c.h.b16 %v21
  %v131 = vunpack.c.l.b16 %v22
  %v132 = vunpack.c.h.b16 %v22
  %v133 = vunpack.c.l.b16 %v23
  %v134 = vunpack.c.h.b16 %v23
  %v135 = vpack.c.b16 %v129, %v129
  %v136 = vpack.c.b16 %v130, %v130
  %v137 = vpack.c.b16 %v131, %v131
  %v138 = vpack.c.b16 %v132, %v132
  %v139 = vpack.c.b16 %v133, %v133
  %v140 = vpack.c.b16 %v134, %v134
  %v243 = vunpack.c.l.b16 %v24
  %v244 = vunpack.c.h.b16 %v24
  %v245 = vunpack.c.l.b16 %v25
  %v246 = vunpack.c.h.b16 %v25
  %v247 = vunpack.c.l.b16 %v26
  %v248 = vunpack.c.h.b16 %v26
  %v249 = vunpack.c.l.b16 %v27
  %v250 = vunpack.c.h.b16 %v27
  %v251 = vunpack.c.l.b16 %v28
  %v252 = vunpack.c.h.b16 %v28
  %v253 = vunpack.c.l.b16 %v29
  %v254 = vunpack.c.h.b16 %v29
  %v255 = vunpack.c.l.b16 %v30
  %v256 = vunpack.c.h.b16 %v30
  %v257 = vunpack.c.l.b16 %v31
  %v258 = vunpack.c.h.b16 %v31
  %v259 = vunpack.c.l.b16 %v32
  %v260 = vunpack.c.h.b16 %v32
  %v261 = vunpack.c.l.b16 %v33
  %v262 = vunpack.c.h.b16 %v33
  %v263 = vunpack.c.l.b16 %v34
  %v264 = vunpack.c.h.b16 %v34
  %v265 = vunpack.c.l.b16 %v35
  %v266 = vunpack.c.h.b16 %v35
  %v267 = vunpack.c.l.b16 %v36
  %v268 = vunpack.c.h.b16 %v36
  %v269 = vunpack.c.l.b16 %v37
  %v270 = vunpack.c.h.b16 %v37
  %v271 = vunpack.c.l.b16 %v38
  %v272 = vunpack.c.h.b16 %v38
  %v273 = vunpack.c.l.b16 %v39
  %v274 = vunpack.c.h.b16 %v39
  %v275 = vunpack.c.l.b16 %v40
  %v276 = vunpack.c.h.b16 %v40
  %v277 = vunpack.c.l.b16 %v41
  %v278 = vunpack.c.h.b16 %v41
  %v279 = vunpack.c.l.b16 %v42
  %v280 = vunpack.c.h.b16 %v42
  %v281 = vunpack.c.l.b16 %v43
  %v282 = vunpack.c.h.b16 %v43
  %v283 = vunpack.c.l.b16 %v44
  %v284 = vunpack.c.h.b16 %v44
  %v285 = vunpack.c.l.b16 %v45
  %v286 = vunpack.c.h.b16 %v45
  %v287 = vunpack.c.l.b16 %v46
  %v288 = vunpack.c.h.b16 %v46
  %v289 = vunpack.c.l.b16 %v47
  %v290 = vunpack.c.h.b16 %v47
  %v291 = vunpack.c.l.b16 %v48
  %v292 = vunpack.c.h.b16 %v48
  %v293 = vunpack.c.l.b16 %v49
  %v294 = vunpack.c.h.b16 %v49
  %v295 = vunpack.c.l.b16 %v50
  %v296 = vunpack.c.h.b16 %v50
  %v297 = vunpack.c.l.b16 %v51
  %v298 = vunpack.c.h.b16 %v51
  %v299 = vunpack.c.l.b16 %v52
  %v300 = vunpack.c.h.b16 %v52
  %v301 = vunpack.c.l.b16 %v53
  %v302 = vunpack.c.h.b16 %v53
  %v303 = vunpack.c.l.b16 %v54
  %v304 = vunpack.c.h.b16 %v54
  %v305 = vunpack.c.l.b16 %v55
  %v306 = vunpack.c.h.b16 %v55
  %v307 = vunpack.c.l.b16 %v56
  %v308 = vunpack.c.h.b16 %v56
  %v309 = vunpack.c.l.b16 %v57
  %v310 = vunpack.c.h.b16 %v57
  %v311 = vunpack.c.l.b16 %v58
  %v312 = vunpack.c.h.b16 %v58
  %v313 = vunpack.c.l.b16 %v59
  %v314 = vunpack.c.h.b16 %v59
  %v315 = vunpack.c.l.b16 %v60
  %v316 = vunpack.c.h.b16 %v60
  %v317 = vunpack.c.l.b16 %v61
  %v318 = vunpack.c.h.b16 %v61
  %v319 = vunpack.c.l.b16 %v62
  %v320 = vunpack.c.h.b16 %v62
  %v321 = vunpack.c.l.b16 %v63
  %v322 = vunpack.c.h.b16 %v63
  %v323 = vunpack.c.l.b16 %v64
  %v324 = vunpack.c.h.b16 %v64
  %v325 = vunpack.c.l.b16 %v65
  %v326 = vunpack.c.h.b16 %v65
  %v327 = vunpack.c.l.b16 %v66
  %v328 = vunpack.c.h.b16 %v66
  %v329 = vunpack.c.l.b16 %v67
  %v330 = vunpack.c.h.b16 %v67
  %v331 = vunpack.c.l.b16 %v68
  %v332 = vunpack.c.h.b16 %v68
  %v333 = vunpack.c.l.b16 %v69
  %v334 = vunpack.c.h.b16 %v69
  %v335 = vunpack.c.l.b16 %v70
  %v336 = vunpack.c.h.b16 %v70
  %v337 = vunpack.c.l.b16 %v71
  %v338 = vunpack.c.h.b16 %v71
  %v339 = vunpack.c.l.b16 %v72
  %v340 = vunpack.c.h.b16 %v72
  %v341 = vunpack.c.l.b16 %v73
  %v342 = vunpack.c.h.b16 %v73
  %v343 = vunpack.c.l.b16 %v74
  %v344 = vunpack.c.h.b16 %v74
  %v345 = vunpack.c.l.b16 %v75
  %v346 = vunpack.c.h.b16 %v75
  %v347 = vunpack.c.l.b16 %v76
  %v348 = vunpack.c.h.b16 %v76
  %v349 = vunpack.c.l.b16 %v77
  %v350 = vunpack.c.h.b16 %v77
  %v351 = vunpack.c.l.b16 %v78
  %v352 = vunpack.c.h.b16 %v78
  %v353 = vunpack.c.l.b16 %v79
  %v354 = vunpack.c.h.b16 %v79
  %v355 = vunpack.c.l.b16 %v80
  %v356 = vunpack.c.h.b16 %v80
  %v357 = vunpack.c.l.b16 %v81
  %v358 = vunpack.c.h.b16 %v81
  %v359 = vunpack.c.l.b16 %v82
  %v360 = vunpack.c.h.b16 %v82
  %v361 = vunpack.c.l.b16 %v83
  %v362 = vunpack.c.h.b16 %v83
  %v363 = vunpack.c.l.b16 %v84
  %v364 = vunpack.c.h.b16 %v84
  %v365 = vunpack.c.l.b16 %v85
  %v366 = vunpack.c.h.b16 %v85
  %v367 = vunpack.c.l.b16 %v86
  %v368 = vunpack.c.h.b16 %v86
  %v369 = vunpack.c.l.b16 %v87
  %v370 = vunpack.c.h.b16 %v87
  %v371 = vunpack.c.l.b16 %v88
  %v372 = vunpack.c.h.b16 %v88
  %v373 = vunpack.c.l.b16 %v89
  %v374 = vunpack.c.h.b16 %v89
  %v375 = vunpack.c.l.b16 %v90
  %v376 = vunpack.c.h.b16 %v90
  %v377 = vunpack.c.l.b16 %v91
  %v378 = vunpack.c.h.b16 %v91
  %v379 = vunpack.c.l.b16 %v92
  %v380 = vunpack.c.h.b16 %v92
  %v381 = vunpack.c.l.b16 %v93
  %v382 = vunpack.c.h.b16 %v93
  %v383 = vunpack.c.l.b16 %v94
  %v384 = vunpack.c.h.b16 %v94
  %v385 = vunpack.c.l.b16 %v95
  %v386 = vunpack.c.h.b16 %v95
  %v387 = vunpack.c.l.b16 %v96
  %v388 = vunpack.c.h.b16 %v96
  %v389 = vunpack.c.l.b16 %v97
  %v390 = vunpack.c.h.b16 %v97
  %v391 = vunpack.c.l.b16 %v98
  %v392 = vunpack.c.h.b16 %v98
  %v393 = vunpack.c.l.b16 %v99
  %v394 = vunpack.c.h.b16 %v99
  %v395 = vunpack.c.l.b16 %v100
  %v396 = vunpack.c.h.b16 %v100
  %v397 = vunpack.c.l.b16 %v101
  %v398 = vunpack.c.h.b16 %v101
  %v399 = vunpack.c.l.b16 %v102
  %v400 = vunpack.c.h.b16 %v102
  %v401 = vunpack.c.l.b16 %v103
  %v402 = vunpack.c.h.b16 %v103
  %v403 = vunpack.c.l.b16 %v104
  %v404 = vunpack.c.h.b16 %v104
  %v405 = vunpack.c.l.b16 %v105
  %v406 = vunpack.c.h.b16 %v105
  %v407 = vunpack.c.l.b16 %v106
  %v408 = vunpack.c.h.b16 %v106
  %v409 = vunpack.c.l.b16 %v107
  %v410 = vunpack.c.h.b16 %v107
  %v411 = vunpack.c.l.b16 %v108
  %v412 = vunpack.c.h.b16 %v108
  %v413 = vunpack.c.l.b16 %v109
  %v414 = vunpack.c.h.b16 %v109
  %v415 = vunpack.c.l.b16 %v110
  %v416 = vunpack.c.h.b16 %v110
  %v417 = vunpack.c.l.b16 %v111
  %v418 = vunpack.c.h.b16 %v111
  %v419 = vunpack.c.l.b16 %v112
  %v420 = vunpack.c.h.b16 %v112
  %v421 = vunpack.c.l.b16 %v113
  %v422 = vunpack.c.h.b16 %v113
  %v423 = vunpack.c.l.b16 %v114
  %v424 = vunpack.c.h.b16 %v114
  %v425 = vunpack.c.l.b16 %v115
  %v426 = vunpack.c.h.b16 %v115
  %v427 = vunpack.c.l.b16 %v116
  %v428 = vunpack.c.h.b16 %v116
  %v429 = vunpack.c.l.b16 %v117
  %v430 = vunpack.c.h.b16 %v117
  %v431 = vunpack.c.l.b16 %v118
  %v432 = vunpack.c.h.b16 %v118
  %v433 = vunpack.c.l.b16 %v119
  %v434 = vunpack.c.h.b16 %v119
  %v435 = vpack.c.b16 %v245, %v243
  %v436 = vpack.c.b16 %v246, %v244
  %v437 = vpack.c.b16 %v249, %v247
  %v438 = vpack.c.b16 %v250, %v248
  %v439 = vpack.c.b16 %v253, %v251
  %v440 = vpack.c.b16 %v254, %v252
  %v441 = vpack.c.b16 %v257, %v255
  %v442 = vpack.c.b16 %v258, %v256
  %v443 = vpack.c.b16 %v261, %v259
  %v444 = vpack.c.b16 %v262, %v260
  %v445 = vpack.c.b16 %v265, %v263
  %v446 = vpack.c.b16 %v266, %v264
  %v447 = vpack.c.b16 %v269, %v267
  %v448 = vpack.c.b16 %v270, %v268
  %v449 = vpack.c.b16 %v273, %v271
  %v450 = vpack.c.b16 %v274, %v272
  %v451 = vpack.c.b16 %v277, %v275
  %v452 = vpack.c.b16 %v278, %v276
  %v453 = vpack.c.b16 %v281, %v279
  %v454 = vpack.c.b16 %v282, %v280
  %v455 = vpack.c.b16 %v285, %v283
  %v456 = vpack.c.b16 %v286, %v284
  %v457 = vpack.c.b16 %v289, %v287
  %v458 = vpack.c.b16 %v290, %v288
  %v459 = vpack.c.b16 %v293, %v291
  %v460 = vpack.c.b16 %v294, %v292
  %v461 = vpack.c.b16 %v297, %v295
  %v462 = vpack.c.b16 %v298, %v296
  %v463 = vpack.c.b16 %v301, %v299
  %v464 = vpack.c.b16 %v302, %v300
  %v465 = vpack.c.b16 %v305, %v303
  %v466 = vpack.c.b16 %v306, %v304
  %v467 = vpack.c.b16 %v309, %v307
  %v468 = vpack.c.b16 %v310, %v308
  %v469 = vpack.c.b16 %v313, %v311
  %v470 = vpack.c.b16 %v314, %v312
  %v471 = vpack.c.b16 %v317, %v315
  %v472 = vpack.c.b16 %v318, %v316
  %v473 = vpack.c.b16 %v321, %v319
  %v474 = vpack.c.b16 %v322, %v320
  %v475 = vpack.c.b16 %v325, %v323
  %v476 = vpack.c.b16 %v326, %v324
  %v477 = vpack.c.b16 %v329, %v327
  %v478 = vpack.c.b16 %v330, %v328
  %v479 = vpack.c.b16 %v333, %v331
  %v480 = vpack.c.b16 %v334, %v332
  %v481 = vpack.c.b16 %v337, %v335
  %v482 = vpack.c.b16 %v338, %v336
  %v483 = vpack.c.b16 %v341, %v339
  %v484 = vpack.c.b16 %v342, %v340
  %v485 = vpack.c.b16 %v345, %v343
  %v486 = vpack.c.b16 %v346, %v344
  %v487 = vpack.c.b16 %v349, %v347
  %v488 = vpack.c.b16 %v350, %v348
  %v489 = vpack.c.b16 %v353, %v351
  %v490 = vpack.c.b16 %v354, %v352
  %v491 = vpack.c.b16 %v357, %v355
  %v492 = vpack.c.b16 %v358, %v356
  %v493 = vpack.c.b16 %v361, %v359
  %v494 = vpack.c.b16 %v362, %v360
  %v495 = vpack.c.b16 %v365, %v363
  %v496 = vpack.c.b16 %v366, %v364
  %v497 = vpack.c.b16 %v369, %v367
  %v498 = vpack.c.b16 %v370, %v368
  %v499 = vpack.c.b16 %v373, %v371
  %v500 = vpack.c.b16 %v374, %v372
  %v501 = vpack.c.b16 %v377, %v375
  %v502 = vpack.c.b16 %v378, %v376
  %v503 = vpack.c.b16 %v381, %v379
  %v504 = vpack.c.b16 %v382, %v380
  %v505 = vpack.c.b16 %v385, %v383
  %v506 = vpack.c.b16 %v386, %v384
  %v507 = vpack.c.b16 %v389, %v387
  %v508 = vpack.c.b16 %v390, %v388
  %v509 = vpack.c.b16 %v393, %v391
  %v510 = vpack.c.b16 %v394, %v392
  %v511 = vpack.c.b16 %v397, %v395
  %v512 = vpack.c.b16 %v398, %v396
  %v513 = vpack.c.b16 %v401, %v399
  %v514 = vpack.c.b16 %v402, %v400
  %v515 = vpack.c.b16 %v405, %v403
  %v516 = vpack.c.b16 %v406, %v404
  %v517 = vpack.c.b16 %v409, %v407
  %v518 = vpack.c.b16 %v410, %v408
  %v519 = vpack.c.b16 %v413, %v411
  %v520 = vpack.c.b16 %v414, %v412
  %v521 = vpack.c.b16 %v417, %v415
  %v522 = vpack.c.b16 %v418, %v416
  %v523 = vpack.c.b16 %v421, %v419
  %v524 = vpack.c.b16 %v422, %v420
  %v525 = vpack.c.b16 %v425, %v423
  %v526 = vpack.c.b16 %v426, %v424
  %v527 = vpack.c.b16 %v429, %v427
  %v528 = vpack.c.b16 %v430, %v428
  %v529 = vpack.c.b16 %v433, %v431
  %v530 = vpack.c.b16 %v434, %v432
  %627 = vmatpush.bf16.msra.mxu0 %v449
  %628 = vmatpush.bf16.msra.mxu0 %v447
  %629 = vmatpush.bf16.msra.mxu0 %v445
  %630 = vmatpush.bf16.msra.mxu0 %v443
  %631 = vmatpush.bf16.msra.mxu0 %v441
  %632 = vmatpush.bf16.msra.mxu0 %v439
  %633 = vmatpush.bf16.msra.mxu0 %v437
  %634 = vmatpush.bf16.msra.mxu0 %v435
  %635 = vmatmul.bf16.gmra.mxu0 %v135
  %v636 = vpop.f32.mrf.mxu0
  %v637 = vadd.f32 %v122, %v636
  %v638 = vpop.f32.mrf.mxu0
  %639 = vdwg.mxu0
  %640 = vmatpush.bf16.msra.mxu0 %v465
  %641 = vmatpush.bf16.msra.mxu0 %v463
  %642 = vmatpush.bf16.msra.mxu0 %v461
  %643 = vmatpush.bf16.msra.mxu0 %v459
  %644 = vmatpush.bf16.msra.mxu0 %v457
  %645 = vmatpush.bf16.msra.mxu0 %v455
  %646 = vmatpush.bf16.msra.mxu0 %v453
  %647 = vmatpush.bf16.msra.mxu0 %v451
  %648 = vmatmul.bf16.gmra.mxu0 %v136
  %v649 = vpop.f32.mrf.mxu0
  %v650 = vadd.f32 %v637, %v649
  %v651 = vpop.f32.mrf.mxu0
  %652 = vdwg.mxu0
  %653 = vmatpush.bf16.msra.mxu0 %v481
  %654 = vmatpush.bf16.msra.mxu0 %v479
  %655 = vmatpush.bf16.msra.mxu0 %v477
  %656 = vmatpush.bf16.msra.mxu0 %v475
  %657 = vmatpush.bf16.msra.mxu0 %v473
  %658 = vmatpush.bf16.msra.mxu0 %v471
  %659 = vmatpush.bf16.msra.mxu0 %v469
  %660 = vmatpush.bf16.msra.mxu0 %v467
  %661 = vmatmul.bf16.gmra.mxu0 %v137
  %v662 = vpop.f32.mrf.mxu0
  %v663 = vadd.f32 %v650, %v662
  %v664 = vpop.f32.mrf.mxu0
  %665 = vdwg.mxu0
  %666 = vmatpush.bf16.msra.mxu0 %v497
  %667 = vmatpush.bf16.msra.mxu0 %v495
  %668 = vmatpush.bf16.msra.mxu0 %v493
  %669 = vmatpush.bf16.msra.mxu0 %v491
  %670 = vmatpush.bf16.msra.mxu0 %v489
  %671 = vmatpush.bf16.msra.mxu0 %v487
  %672 = vmatpush.bf16.msra.mxu0 %v485
  %673 = vmatpush.bf16.msra.mxu0 %v483
  %674 = vmatmul.bf16.gmra.mxu0 %v138
  %v675 = vpop.f32.mrf.mxu0
  %v676 = vadd.f32 %v663, %v675
  %v677 = vpop.f32.mrf.mxu0
  %678 = vdwg.mxu0
  %679 = vmatpush.bf16.msra.mxu0 %v513
  %680 = vmatpush.bf16.msra.mxu0 %v511
  %681 = vmatpush.bf16.msra.mxu0 %v509
  %682 = vmatpush.bf16.msra.mxu0 %v507
  %683 = vmatpush.bf16.msra.mxu0 %v505
  %684 = vmatpush.bf16.msra.mxu0 %v503
  %685 = vmatpush.bf16.msra.mxu0 %v501
  %686 = vmatpush.bf16.msra.mxu0 %v499
  %687 = vmatmul.bf16.gmra.mxu0 %v139
  %v688 = vpop.f32.mrf.mxu0
  %v689 = vadd.f32 %v676, %v688
  %v690 = vpop.f32.mrf.mxu0
  %691 = vdwg.mxu0
  %692 = vmatpush.bf16.msra.mxu0 %v529
  %693 = vmatpush.bf16.msra.mxu0 %v527
  %694 = vmatpush.bf16.msra.mxu0 %v525
  %695 = vmatpush.bf16.msra.mxu0 %v523
  %696 = vmatpush.bf16.msra.mxu0 %v521
  %697 = vmatpush.bf16.msra.mxu0 %v519
  %698 = vmatpush.bf16.msra.mxu0 %v517
  %699 = vmatpush.bf16.msra.mxu0 %v515
  %700 = vmatmul.bf16.gmra.mxu0 %v140
  %v701 = vpop.f32.mrf.mxu0
  %v702 = vadd.f32 %v689, %v701
  %v703 = vpop.f32.mrf.mxu0
  %704 = vdwg.mxu0
  %705 = vmatpush.bf16.msra.mxu0 %v450
  %706 = vmatpush.bf16.msra.mxu0 %v448
  %707 = vmatpush.bf16.msra.mxu0 %v446
  %708 = vmatpush.bf16.msra.mxu0 %v444
  %709 = vmatpush.bf16.msra.mxu0 %v442
  %710 = vmatpush.bf16.msra.mxu0 %v440
  %711 = vmatpush.bf16.msra.mxu0 %v438
  %712 = vmatpush.bf16.msra.mxu0 %v436
  %713 = vmatmul.bf16.gmra.mxu0 %v135
  %v714 = vpop.f32.mrf.mxu0
  %v715 = vadd.f32 %v123, %v714
  %v716 = vpop.f32.mrf.mxu0
  %717 = vdwg.mxu0
  %718 = vmatpush.bf16.msra.mxu0 %v466
  %719 = vmatpush.bf16.msra.mxu0 %v464
  %720 = vmatpush.bf16.msra.mxu0 %v462
  %721 = vmatpush.bf16.msra.mxu0 %v460
  %722 = vmatpush.bf16.msra.mxu0 %v458
  %723 = vmatpush.bf16.msra.mxu0 %v456
  %724 = vmatpush.bf16.msra.mxu0 %v454
  %725 = vmatpush.bf16.msra.mxu0 %v452
  %726 = vmatmul.bf16.gmra.mxu0 %v136
  %v727 = vpop.f32.mrf.mxu0
  %v728 = vadd.f32 %v715, %v727
  %v729 = vpop.f32.mrf.mxu0
  %730 = vdwg.mxu0
  %731 = vmatpush.bf16.msra.mxu0 %v482
  %732 = vmatpush.bf16.msra.mxu0 %v480
  %733 = vmatpush.bf16.msra.mxu0 %v478
  %734 = vmatpush.bf16.msra.mxu0 %v476
  %735 = vmatpush.bf16.msra.mxu0 %v474
  %736 = vmatpush.bf16.msra.mxu0 %v472
  %737 = vmatpush.bf16.msra.mxu0 %v470
  %738 = vmatpush.bf16.msra.mxu0 %v468
  %739 = vmatmul.bf16.gmra.mxu0 %v137
  %v740 = vpop.f32.mrf.mxu0
  %v741 = vadd.f32 %v728, %v740
  %v742 = vpop.f32.mrf.mxu0
  %743 = vdwg.mxu0
  %744 = vmatpush.bf16.msra.mxu0 %v498
  %745 = vmatpush.bf16.msra.mxu0 %v496
  %746 = vmatpush.bf16.msra.mxu0 %v494
  %747 = vmatpush.bf16.msra.mxu0 %v492
  %748 = vmatpush.bf16.msra.mxu0 %v490
  %749 = vmatpush.bf16.msra.mxu0 %v488
  %750 = vmatpush.bf16.msra.mxu0 %v486
  %751 = vmatpush.bf16.msra.mxu0 %v484
  %752 = vmatmul.bf16.gmra.mxu0 %v138
  %v753 = vpop.f32.mrf.mxu0
  %v754 = vadd.f32 %v741, %v753
  %v755 = vpop.f32.mrf.mxu0
  %756 = vdwg.mxu0
  %757 = vmatpush.bf16.msra.mxu0 %v514
  %758 = vmatpush.bf16.msra.mxu0 %v512
  %759 = vmatpush.bf16.msra.mxu0 %v510
  %760 = vmatpush.bf16.msra.mxu0 %v508
  %761 = vmatpush.bf16.msra.mxu0 %v506
  %762 = vmatpush.bf16.msra.mxu0 %v504
  %763 = vmatpush.bf16.msra.mxu0 %v502
  %764 = vmatpush.bf16.msra.mxu0 %v500
  %765 = vmatmul.bf16.gmra.mxu0 %v139
  %v766 = vpop.f32.mrf.mxu0
  %v767 = vadd.f32 %v754, %v766
  %v768 = vpop.f32.mrf.mxu0
  %769 = vdwg.mxu0
  %770 = vmatpush.bf16.msra.mxu0 %v530
  %771 = vmatpush.bf16.msra.mxu0 %v528
  %772 = vmatpush.bf16.msra.mxu0 %v526
  %773 = vmatpush.bf16.msra.mxu0 %v524
  %774 = vmatpush.bf16.msra.mxu0 %v522
  %775 = vmatpush.bf16.msra.mxu0 %v520
  %776 = vmatpush.bf16.msra.mxu0 %v518
  %777 = vmatpush.bf16.msra.mxu0 %v516
  %778 = vmatmul.bf16.gmra.mxu0 %v140
  %v779 = vpop.f32.mrf.mxu0
  %v780 = vadd.f32 %v767, %v779
  %v781 = vpop.f32.mrf.mxu0
  %782 = vdwg.mxu0
  %v783 = vmul.f32 %v702, %v702
  %v784 = vmul.f32 %v780, %v780
  %v785 = vpack.c.bf16 %v783, %v783
  %v786 = vpack.c.bf16 %v784, %v784
  %v787 = vld [vmem:[%s3] sm:$0xff]
  %v788 = vld [vmem:[%s3 + $0x8] sm:$0xff]
  %v789 = vld [vmem:[%s3 + $0x10] sm:$0xff]
  %v790 = vld [vmem:[%s3 + $0x18] sm:$0xff]
  %v791 = vld [vmem:[%s3 + $0x20] sm:$0xff]
  %v792 = vld [vmem:[%s3 + $0x28] sm:$0xff]
  %v793 = vld [vmem:[%s3 + $0x30] sm:$0xff]
  %v794 = vld [vmem:[%s3 + $0x38] sm:$0xff]
  %v795 = vld [vmem:[%s3 + $0x40] sm:$0xff]
  %v796 = vld [vmem:[%s3 + $0x48] sm:$0xff]
  %v797 = vld [vmem:[%s3 + $0x50] sm:$0xff]
  %v798 = vld [vmem:[%s3 + $0x58] sm:$0xff]
  %v799 = vld [vmem:[%s3 + $0x60] sm:$0xff]
  %v800 = vld [vmem:[%s3 + $0x68] sm:$0xff]
  %v801 = vld [vmem:[%s3 + $0x70] sm:$0xff]
  %v802 = vld [vmem:[%s3 + $0x78] sm:$0xff]
  %v803 = vld [vmem:[%s3 + $0x80] sm:$0xff]
  %v804 = vld [vmem:[%s3 + $0x88] sm:$0xff]
  %v805 = vld [vmem:[%s3 + $0x90] sm:$0xff]
  %v806 = vld [vmem:[%s3 + $0x98] sm:$0xff]
  %v807 = vld [vmem:[%s3 + $0xa0] sm:$0xff]
  %v808 = vld [vmem:[%s3 + $0xa8] sm:$0xff]
  %v809 = vld [vmem:[%s3 + $0xb0] sm:$0xff]
  %v810 = vld [vmem:[%s3 + $0xb8] sm:$0xff]
  %v811 = vld [vmem:[%s4] sm:$0x3]
  %v813 = vperm.slane %v811, 0
  %v814 = vperm.slane %v811, 1
  %v841 = vunpack.c.l.b16 %v787
  %v842 = vunpack.c.h.b16 %v787
  %v843 = vunpack.c.l.b16 %v788
  %v844 = vunpack.c.h.b16 %v788
  %v845 = vunpack.c.l.b16 %v789
  %v846 = vunpack.c.h.b16 %v789
  %v847 = vunpack.c.l.b16 %v790
  %v848 = vunpack.c.h.b16 %v790
  %v849 = vunpack.c.l.b16 %v791
  %v850 = vunpack.c.h.b16 %v791
  %v851 = vunpack.c.l.b16 %v792
  %v852 = vunpack.c.h.b16 %v792
  %v853 = vunpack.c.l.b16 %v793
  %v854 = vunpack.c.h.b16 %v793
  %v855 = vunpack.c.l.b16 %v794
  %v856 = vunpack.c.h.b16 %v794
  %v857 = vunpack.c.l.b16 %v795
  %v858 = vunpack.c.h.b16 %v795
  %v859 = vunpack.c.l.b16 %v796
  %v860 = vunpack.c.h.b16 %v796
  %v861 = vunpack.c.l.b16 %v797
  %v862 = vunpack.c.h.b16 %v797
  %v863 = vunpack.c.l.b16 %v798
  %v864 = vunpack.c.h.b16 %v798
  %v865 = vunpack.c.l.b16 %v799
  %v866 = vunpack.c.h.b16 %v799
  %v867 = vunpack.c.l.b16 %v800
  %v868 = vunpack.c.h.b16 %v800
  %v869 = vunpack.c.l.b16 %v801
  %v870 = vunpack.c.h.b16 %v801
  %v871 = vunpack.c.l.b16 %v802
  %v872 = vunpack.c.h.b16 %v802
  %v873 = vunpack.c.l.b16 %v803
  %v874 = vunpack.c.h.b16 %v803
  %v875 = vunpack.c.l.b16 %v804
  %v876 = vunpack.c.h.b16 %v804
  %v877 = vunpack.c.l.b16 %v805
  %v878 = vunpack.c.h.b16 %v805
  %v879 = vunpack.c.l.b16 %v806
  %v880 = vunpack.c.h.b16 %v806
  %v881 = vunpack.c.l.b16 %v807
  %v882 = vunpack.c.h.b16 %v807
  %v883 = vunpack.c.l.b16 %v808
  %v884 = vunpack.c.h.b16 %v808
  %v885 = vunpack.c.l.b16 %v809
  %v886 = vunpack.c.h.b16 %v809
  %v887 = vunpack.c.l.b16 %v810
  %v888 = vunpack.c.h.b16 %v810
  %v889 = vpack.c.b16 %v843, %v841
  %v890 = vpack.c.b16 %v844, %v842
  %v891 = vpack.c.b16 %v847, %v845
  %v892 = vpack.c.b16 %v848, %v846
  %v893 = vpack.c.b16 %v851, %v849
  %v894 = vpack.c.b16 %v852, %v850
  %v895 = vpack.c.b16 %v855, %v853
  %v896 = vpack.c.b16 %v856, %v854
  %v897 = vpack.c.b16 %v859, %v857
  %v898 = vpack.c.b16 %v860, %v858
  %v899 = vpack.c.b16 %v863, %v861
  %v900 = vpack.c.b16 %v864, %v862
  %v901 = vpack.c.b16 %v867, %v865
  %v902 = vpack.c.b16 %v868, %v866
  %v903 = vpack.c.b16 %v871, %v869
  %v904 = vpack.c.b16 %v872, %v870
  %v905 = vpack.c.b16 %v875, %v873
  %v906 = vpack.c.b16 %v876, %v874
  %v907 = vpack.c.b16 %v879, %v877
  %v908 = vpack.c.b16 %v880, %v878
  %v909 = vpack.c.b16 %v883, %v881
  %v910 = vpack.c.b16 %v884, %v882
  %v911 = vpack.c.b16 %v887, %v885
  %v912 = vpack.c.b16 %v888, %v886
  %vm937 = vcmask 523264
  %v939 = vsel %vm937, %v786, 0
  %941 = vmatpush.bf16.msra.mxu0 %v903
  %942 = vmatpush.bf16.msra.mxu0 %v901
  %943 = vmatpush.bf16.msra.mxu0 %v899
  %944 = vmatpush.bf16.msra.mxu0 %v897
  %945 = vmatpush.bf16.msra.mxu0 %v895
  %946 = vmatpush.bf16.msra.mxu0 %v893
  %947 = vmatpush.bf16.msra.mxu0 %v891
  %948 = vmatpush.bf16.msra.mxu0 %v889
  %949 = vmatmul.bf16.gmra.mxu0 %v785
  %v950 = vpop.f32.mrf.mxu0
  %v951 = vadd.f32 %v813, %v950
  %v952 = vpop.f32.mrf.mxu0
  %953 = vdwg.mxu0
  %954 = vmatpush.bf16.msra.mxu0 0
  %955 = vmatpush.bf16.msra.mxu0 0
  %956 = vmatpush.bf16.msra.mxu0 0
  %957 = vmatpush.bf16.msra.mxu0 0
  %958 = vmatpush.bf16.msra.mxu0 %v911
  %959 = vmatpush.bf16.msra.mxu0 %v909
  %960 = vmatpush.bf16.msra.mxu0 %v907
  %961 = vmatpush.bf16.msra.mxu0 %v905
  %962 = vmatmul.bf16.gmra.mxu0 %v939
  %v963 = vpop.f32.mrf.mxu0
  %v964 = vadd.f32 %v951, %v963
  %v965 = vpop.f32.mrf.mxu0
  %966 = vdwg.mxu0
  %967 = vmatpush.bf16.msra.mxu0 %v904
  %968 = vmatpush.bf16.msra.mxu0 %v902
  %969 = vmatpush.bf16.msra.mxu0 %v900
  %970 = vmatpush.bf16.msra.mxu0 %v898
  %971 = vmatpush.bf16.msra.mxu0 %v896
  %972 = vmatpush.bf16.msra.mxu0 %v894
  %973 = vmatpush.bf16.msra.mxu0 %v892
  %974 = vmatpush.bf16.msra.mxu0 %v890
  %975 = vmatmul.bf16.gmra.mxu0 %v785
  %v976 = vpop.f32.mrf.mxu0
  %v977 = vadd.f32 %v814, %v976
  %v978 = vpop.f32.mrf.mxu0
  %979 = vdwg.mxu0
  %980 = vmatpush.bf16.msra.mxu0 0
  %981 = vmatpush.bf16.msra.mxu0 0
  %982 = vmatpush.bf16.msra.mxu0 0
  %983 = vmatpush.bf16.msra.mxu0 0
  %984 = vmatpush.bf16.msra.mxu0 %v912
  %985 = vmatpush.bf16.msra.mxu0 %v910
  %986 = vmatpush.bf16.msra.mxu0 %v908
  %987 = vmatpush.bf16.msra.mxu0 %v906
  %988 = vmatmul.bf16.gmra.mxu0 %v939
  %v989 = vpop.f32.mrf.mxu0
  %v990 = vadd.f32 %v977, %v989
  %v991 = vpop.f32.mrf.mxu0
  %992 = vdwg.mxu0
  %v993 = vrsqrt.pop %v964
  %v994 = vmul.f32 %v993, %v964
  %v995 = vmul.f32 %v994, %v993
  %v996 = vmul.f32 0.5, %v995
  %v997 = vsub.f32 1.5, %v996
  %v998 = vmul.f32 %v993, %v997
  %vm999 = vweird.f32 %v964
  %vm1000 = vweird.f32 %v993
  %vm1001 = vmor %vm999, %vm1000
  %v1002 = vsel %vm1001, %v993, %v998
  %v1003 = vrsqrt.pop %v990
  %v1004 = vmul.f32 %v1003, %v990
  %v1005 = vmul.f32 %v1004, %v1003
  %v1006 = vmul.f32 0.5, %v1005
  %v1007 = vsub.f32 1.5, %v1006
  %v1008 = vmul.f32 %v1003, %v1007
  %vm1009 = vweird.f32 %v990
  %vm1010 = vweird.f32 %v1003
  %vm1011 = vmor %vm1009, %vm1010
  %v1012 = vsel %vm1011, %v1003, %v1008
  %v1013 = vmul.f32 %v702, %v1002
  %v1014 = vmul.f32 %v780, %v1012
  %v1015 = vpack.c.bf16 %v1014, %v1013
  %vm1016 = vcmask 1043456
  %vm1017 = vcmask 523268
  %vm1018 = vmor %vm1017, %vm1016
  %1019 = vst.msk [vmem:[%s5] sm:$0xff] %vm1018, %v1015
  // Predicated region
  $region22: #{forward.9} parent=0 // pred_check
    _
  $region23: #{forward.9} parent=0 // pred_check_branch
    %1021 = sbr.rel (0) target = $region25
  $region24: #{forward.9} parent=0 // pred_region
    _
  $region25: #{forward.9} parent=0 // pred_fallthru
    _
  // Predicated region
  $region26: #{forward.9} parent=0 // pred_check
    _
  $region27: #{forward.9} parent=0 // pred_check_branch
    %1023 = sbr.rel (0) target = $region29
  $region28: #{forward.9} parent=0 // pred_region
    _
  $region29: #{forward.9} parent=0 // pred_fallthru
    _

// kernel: forward.11
$region0: #{forward.11}
  #allocation0 [shape = 'u32[]', space=smem, size = 0x4, offset = 0x4, fixed_abs, tag = 'smem constant byte address 0x4 - core index']
  #allocation1 [shape = 'u32[72,128]{1,0:T(1,128)}', space=vmem, size = 0x9000, scoped, tag = 'internal scratch']
  %s0 = inlined_call_operand.vmem [shape: bf16[8,192], index: 0, kind: input, shape index: {}]
  %s1 = inlined_call_operand.vmem [shape: bf16[192,192], index: 1, kind: input, shape index: {}]
  %s2 = inlined_call_operand.vmem [shape: f32[1,192], index: 2, kind: input, shape index: {}]
  %s3 = inlined_call_operand.vmem [shape: bf16[192,768], index: 3, kind: input, shape index: {}]
  %s4 = inlined_call_operand.vmem [shape: f32[1,768], index: 4, kind: input, shape index: {}]
  %s5 = inlined_call_operand.vmem [shape: bf16[8,768], index: 5, kind: output, shape index: {}]
  %s6 = sld [smem:[#allocation0]]
  $region30: #{forward.11} parent=0
    _
  %s8 = ssub.s32 1, %s6
  %s9 = scalar_select 0, %s8, %s6
  // Predicated region
  $region2: #{forward.11} parent=0 // pred_check
    _
  $region3: #{forward.11} parent=0 // pred_check_branch
    %11 = sbr.rel (0) target = $region5
  $region4: #{forward.11} parent=0 // pred_region
    _
  $region5: #{forward.11} parent=0 // pred_fallthru
    _
  // Predicated region
  $region6: #{forward.11} parent=0 // pred_check
    _
  $region7: #{forward.11} parent=0 // pred_check_branch
    %13 = sbr.rel (0) target = $region9
  $region8: #{forward.11} parent=0 // pred_region
    _
  $region9: #{forward.11} parent=0 // pred_fallthru
    _
  // Predicated region
  $region10: #{forward.11} parent=0 // pred_check
    _
  $region11: #{forward.11} parent=0 // pred_check_branch
    %15 = sbr.rel (0) target = $region13
  $region12: #{forward.11} parent=0 // pred_region
    _
  $region13: #{forward.11} parent=0 // pred_fallthru
    _
  // Predicated region
  $region14: #{forward.11} parent=0 // pred_check
    _
  $region15: #{forward.11} parent=0 // pred_check_branch
    %17 = sbr.rel (0) target = $region17
  $region16: #{forward.11} parent=0 // pred_region
    _
  $region17: #{forward.11} parent=0 // pred_fallthru
    _
  // Predicated region
  $region18: #{forward.11} parent=0 // pred_check
    _
  $region19: #{forward.11} parent=0 // pred_check_branch
    %19 = sbr.rel (0) target = $region21
  $region20: #{forward.11} parent=0 // pred_region
    _
  $region21: #{forward.11} parent=0 // pred_fallthru
    _
  %v21 = vld [vmem:[%s0] sm:$0xff]
  %v22 = vunpack.c.l.bf16 %v21
  %v23 = vunpack.c.h.bf16 %v21
  %v24 = vmul.f32 %v22, %v22
  %v25 = vmul.f32 %v23, %v23
  %v26 = vpack.c.bf16 %v24, %v24
  %v27 = vpack.c.bf16 %v25, %v25
  %v28 = vld [vmem:[%s1] sm:$0xff]
  %v29 = vld [vmem:[%s1 + $0x8] sm:$0xff]
  %v30 = vld [vmem:[%s1 + $0x10] sm:$0xff]
  %v31 = vld [vmem:[%s1 + $0x18] sm:$0xff]
  %v32 = vld [vmem:[%s1 + $0x20] sm:$0xff]
  %v33 = vld [vmem:[%s1 + $0x28] sm:$0xff]
  %v34 = vld [vmem:[%s1 + $0x30] sm:$0xff]
  %v35 = vld [vmem:[%s1 + $0x38] sm:$0xff]
  %v36 = vld [vmem:[%s1 + $0x40] sm:$0xff]
  %v37 = vld [vmem:[%s1 + $0x48] sm:$0xff]
  %v38 = vld [vmem:[%s1 + $0x50] sm:$0xff]
  %v39 = vld [vmem:[%s1 + $0x58] sm:$0xff]
  %v40 = vld [vmem:[%s1 + $0x60] sm:$0xff]
  %v41 = vld [vmem:[%s1 + $0x68] sm:$0xff]
  %v42 = vld [vmem:[%s1 + $0x70] sm:$0xff]
  %v43 = vld [vmem:[%s1 + $0x78] sm:$0xff]
  %v44 = vld [vmem:[%s1 + $0x80] sm:$0xff]
  %v45 = vld [vmem:[%s1 + $0x88] sm:$0xff]
  %v46 = vld [vmem:[%s1 + $0x90] sm:$0xff]
  %v47 = vld [vmem:[%s1 + $0x98] sm:$0xff]
  %v48 = vld [vmem:[%s1 + $0xa0] sm:$0xff]
  %v49 = vld [vmem:[%s1 + $0xa8] sm:$0xff]
  %v50 = vld [vmem:[%s1 + $0xb0] sm:$0xff]
  %v51 = vld [vmem:[%s1 + $0xb8] sm:$0xff]
  %v52 = vld [vmem:[%s2] sm:$0x3]
  %v54 = vperm.slane %v52, 0
  %v55 = vperm.slane %v52, 1
  %v82 = vunpack.c.l.b16 %v28
  %v83 = vunpack.c.h.b16 %v28
  %v84 = vunpack.c.l.b16 %v29
  %v85 = vunpack.c.h.b16 %v29
  %v86 = vunpack.c.l.b16 %v30
  %v87 = vunpack.c.h.b16 %v30
  %v88 = vunpack.c.l.b16 %v31
  %v89 = vunpack.c.h.b16 %v31
  %v90 = vunpack.c.l.b16 %v32
  %v91 = vunpack.c.h.b16 %v32
  %v92 = vunpack.c.l.b16 %v33
  %v93 = vunpack.c.h.b16 %v33
  %v94 = vunpack.c.l.b16 %v34
  %v95 = vunpack.c.h.b16 %v34
  %v96 = vunpack.c.l.b16 %v35
  %v97 = vunpack.c.h.b16 %v35
  %v98 = vunpack.c.l.b16 %v36
  %v99 = vunpack.c.h.b16 %v36
  %v100 = vunpack.c.l.b16 %v37
  %v101 = vunpack.c.h.b16 %v37
  %v102 = vunpack.c.l.b16 %v38
  %v103 = vunpack.c.h.b16 %v38
  %v104 = vunpack.c.l.b16 %v39
  %v105 = vunpack.c.h.b16 %v39
  %v106 = vunpack.c.l.b16 %v40
  %v107 = vunpack.c.h.b16 %v40
  %v108 = vunpack.c.l.b16 %v41
  %v109 = vunpack.c.h.b16 %v41
  %v110 = vunpack.c.l.b16 %v42
  %v111 = vunpack.c.h.b16 %v42
  %v112 = vunpack.c.l.b16 %v43
  %v113 = vunpack.c.h.b16 %v43
  %v114 = vunpack.c.l.b16 %v44
  %v115 = vunpack.c.h.b16 %v44
  %v116 = vunpack.c.l.b16 %v45
  %v117 = vunpack.c.h.b16 %v45
  %v118 = vunpack.c.l.b16 %v46
  %v119 = vunpack.c.h.b16 %v46
  %v120 = vunpack.c.l.b16 %v47
  %v121 = vunpack.c.h.b16 %v47
  %v122 = vunpack.c.l.b16 %v48
  %v123 = vunpack.c.h.b16 %v48
  %v124 = vunpack.c.l.b16 %v49
  %v125 = vunpack.c.h.b16 %v49
  %v126 = vunpack.c.l.b16 %v50
  %v127 = vunpack.c.h.b16 %v50
  %v128 = vunpack.c.l.b16 %v51
  %v129 = vunpack.c.h.b16 %v51
  %v130 = vpack.c.b16 %v84, %v82
  %v131 = vpack.c.b16 %v85, %v83
  %v132 = vpack.c.b16 %v88, %v86
  %v133 = vpack.c.b16 %v89, %v87
  %v134 = vpack.c.b16 %v92, %v90
  %v135 = vpack.c.b16 %v93, %v91
  %v136 = vpack.c.b16 %v96, %v94
  %v137 = vpack.c.b16 %v97, %v95
  %v138 = vpack.c.b16 %v100, %v98
  %v139 = vpack.c.b16 %v101, %v99
  %v140 = vpack.c.b16 %v104, %v102
  %v141 = vpack.c.b16 %v105, %v103
  %v142 = vpack.c.b16 %v108, %v106
  %v143 = vpack.c.b16 %v109, %v107
  %v144 = vpack.c.b16 %v112, %v110
  %v145 = vpack.c.b16 %v113, %v111
  %v146 = vpack.c.b16 %v116, %v114
  %v147 = vpack.c.b16 %v117, %v115
  %v148 = vpack.c.b16 %v120, %v118
  %v149 = vpack.c.b16 %v121, %v119
  %v150 = vpack.c.b16 %v124, %v122
  %v151 = vpack.c.b16 %v125, %v123
  %v152 = vpack.c.b16 %v128, %v126
  %v153 = vpack.c.b16 %v129, %v127
  %vm178 = vcmask 523264
  %v180 = vsel %vm178, %v27, 0
  %182 = vmatpush.bf16.msra.mxu0 %v144
  %183 = vmatpush.bf16.msra.mxu0 %v142
  %184 = vmatpush.bf16.msra.mxu0 %v140
  %185 = vmatpush.bf16.msra.mxu0 %v138
  %186 = vmatpush.bf16.msra.mxu0 %v136
  %187 = vmatpush.bf16.msra.mxu0 %v134
  %188 = vmatpush.bf16.msra.mxu0 %v132
  %189 = vmatpush.bf16.msra.mxu0 %v130
  %190 = vmatmul.bf16.gmra.mxu0 %v26
  %v191 = vpop.f32.mrf.mxu0
  %v192 = vadd.f32 %v54, %v191
  %v193 = vpop.f32.mrf.mxu0
  %194 = vdwg.mxu0
  %195 = vmatpush.bf16.msra.mxu0 0
  %196 = vmatpush.bf16.msra.mxu0 0
  %197 = vmatpush.bf16.msra.mxu0 0
  %198 = vmatpush.bf16.msra.mxu0 0
  %199 = vmatpush.bf16.msra.mxu0 %v152
  %200 = vmatpush.bf16.msra.mxu0 %v150
  %201 = vmatpush.bf16.msra.mxu0 %v148
  %202 = vmatpush.bf16.msra.mxu0 %v146
  %203 = vmatmul.bf16.gmra.mxu0 %v180
  %v204 = vpop.f32.mrf.mxu0
  %v205 = vadd.f32 %v192, %v204
  %v206 = vpop.f32.mrf.mxu0
  %207 = vdwg.mxu0
  %208 = vmatpush.bf16.msra.mxu0 %v145
  %209 = vmatpush.bf16.msra.mxu0 %v143
  %210 = vmatpush.bf16.msra.mxu0 %v141
  %211 = vmatpush.bf16.msra.mxu0 %v139
  %212 = vmatpush.bf16.msra.mxu0 %v137
  %213 = vmatpush.bf16.msra.mxu0 %v135
  %214 = vmatpush.bf16.msra.mxu0 %v133
  %215 = vmatpush.bf16.msra.mxu0 %v131
  %216 = vmatmul.bf16.gmra.mxu0 %v26
  %v217 = vpop.f32.mrf.mxu0
  %v218 = vadd.f32 %v55, %v217
  %v219 = vpop.f32.mrf.mxu0
  %220 = vdwg.mxu0
  %221 = vmatpush.bf16.msra.mxu0 0
  %222 = vmatpush.bf16.msra.mxu0 0
  %223 = vmatpush.bf16.msra.mxu0 0
  %224 = vmatpush.bf16.msra.mxu0 0
  %225 = vmatpush.bf16.msra.mxu0 %v153
  %226 = vmatpush.bf16.msra.mxu0 %v151
  %227 = vmatpush.bf16.msra.mxu0 %v149
  %228 = vmatpush.bf16.msra.mxu0 %v147
  %229 = vmatmul.bf16.gmra.mxu0 %v180
  %v230 = vpop.f32.mrf.mxu0
  %v231 = vadd.f32 %v218, %v230
  %v232 = vpop.f32.mrf.mxu0
  %233 = vdwg.mxu0
  %v234 = vrsqrt.pop %v205
  %v235 = vmul.f32 %v234, %v205
  %v236 = vmul.f32 %v235, %v234
  %v237 = vmul.f32 0.5, %v236
  %v238 = vsub.f32 1.5, %v237
  %v239 = vmul.f32 %v234, %v238
  %v240 = vmul.f32 %v205, %v239
  %vm241 = vcmp.eq.f32.partialorder %v205, inf
  %v242 = vsel %vm241, %v205, %v240
  %vm243 = vcmp.eq.f32.partialorder %v205, 0.0
  %v244 = vand.u32 %v205, 2147483648
  %v245 = vsel %vm243, %v244, %v242
  %v246 = vrsqrt.pop %v231
  %v247 = vmul.f32 %v246, %v231
  %v248 = vmul.f32 %v247, %v246
  %v249 = vmul.f32 0.5, %v248
  %v250 = vsub.f32 1.5, %v249
  %v251 = vmul.f32 %v246, %v250
  %v252 = vmul.f32 %v231, %v251
  %vm253 = vcmp.eq.f32.partialorder %v231, inf
  %v254 = vsel %vm253, %v231, %v252
  %vm255 = vcmp.eq.f32.partialorder %v231, 0.0
  %v256 = vand.u32 %v231, 2147483648
  %v257 = vsel %vm255, %v256, %v254
  %v258 = vmul.f32 %v22, %v245
  %v259 = vmul.f32 %v23, %v257
  %v260 = vpack.c.bf16 %v258, %v258
  %v261 = vpack.c.bf16 %v259, %v259
  %v262 = vld [vmem:[%s3] sm:$0xff]
  %v263 = vld [vmem:[%s3 + $0x8] sm:$0xff]
  %v264 = vld [vmem:[%s3 + $0x10] sm:$0xff]
  %v265 = vld [vmem:[%s3 + $0x18] sm:$0xff]
  %v266 = vld [vmem:[%s3 + $0x20] sm:$0xff]
  %v267 = vld [vmem:[%s3 + $0x28] sm:$0xff]
  %v268 = vld [vmem:[%s3 + $0x30] sm:$0xff]
  %v269 = vld [vmem:[%s3 + $0x38] sm:$0xff]
  %v270 = vld [vmem:[%s3 + $0x40] sm:$0xff]
  %v271 = vld [vmem:[%s3 + $0x48] sm:$0xff]
  %v272 = vld [vmem:[%s3 + $0x50] sm:$0xff]
  %v273 = vld [vmem:[%s3 + $0x58] sm:$0xff]
  %v274 = vld [vmem:[%s3 + $0x60] sm:$0xff]
  %v275 = vld [vmem:[%s3 + $0x68] sm:$0xff]
  %v276 = vld [vmem:[%s3 + $0x70] sm:$0xff]
  %v277 = vld [vmem:[%s3 + $0x78] sm:$0xff]
  %v278 = vld [vmem:[%s3 + $0x80] sm:$0xff]
  %v279 = vld [vmem:[%s3 + $0x88] sm:$0xff]
  %v280 = vld [vmem:[%s3 + $0x90] sm:$0xff]
  %v281 = vld [vmem:[%s3 + $0x98] sm:$0xff]
  %v282 = vld [vmem:[%s3 + $0xa0] sm:$0xff]
  %v283 = vld [vmem:[%s3 + $0xa8] sm:$0xff]
  %v284 = vld [vmem:[%s3 + $0xb0] sm:$0xff]
  %v285 = vld [vmem:[%s3 + $0xb8] sm:$0xff]
  %v286 = vld [vmem:[%s3 + $0xc0] sm:$0xff]
  %v287 = vld [vmem:[%s3 + $0xc8] sm:$0xff]
  %v288 = vld [vmem:[%s3 + $0xd0] sm:$0xff]
  %v289 = vld [vmem:[%s3 + $0xd8] sm:$0xff]
  %v290 = vld [vmem:[%s3 + $0xe0] sm:$0xff]
  %v291 = vld [vmem:[%s3 + $0xe8] sm:$0xff]
  %v292 = vld [vmem:[%s3 + $0xf0] sm:$0xff]
  %v293 = vld [vmem:[%s3 + $0xf8] sm:$0xff]
  %v294 = vld [vmem:[%s3 + $0x100] sm:$0xff]
  %v295 = vld [vmem:[%s3 + $0x108] sm:$0xff]
  %v296 = vld [vmem:[%s3 + $0x110] sm:$0xff]
  %v297 = vld [vmem:[%s3 + $0x118] sm:$0xff]
  %v298 = vld [vmem:[%s3 + $0x120] sm:$0xff]
  %v299 = vld [vmem:[%s3 + $0x128] sm:$0xff]
  %v300 = vld [vmem:[%s3 + $0x130] sm:$0xff]
  %v301 = vld [vmem:[%s3 + $0x138] sm:$0xff]
  %v302 = vld [vmem:[%s3 + $0x140] sm:$0xff]
  %v303 = vld [vmem:[%s3 + $0x148] sm:$0xff]
  %v304 = vld [vmem:[%s3 + $0x150] sm:$0xff]
  %v305 = vld [vmem:[%s3 + $0x158] sm:$0xff]
  %v306 = vld [vmem:[%s3 + $0x160] sm:$0xff]
  %v307 = vld [vmem:[%s3 + $0x168] sm:$0xff]
  %v308 = vld [vmem:[%s3 + $0x170] sm:$0xff]
  %v309 = vld [vmem:[%s3 + $0x178] sm:$0xff]
  %v310 = vld [vmem:[%s3 + $0x180] sm:$0xff]
  %v311 = vld [vmem:[%s3 + $0x188] sm:$0xff]
  %v312 = vld [vmem:[%s3 + $0x190] sm:$0xff]
  %v313 = vld [vmem:[%s3 + $0x198] sm:$0xff]
  %v314 = vld [vmem:[%s3 + $0x1a0] sm:$0xff]
  %v315 = vld [vmem:[%s3 + $0x1a8] sm:$0xff]
  %v316 = vld [vmem:[%s3 + $0x1b0] sm:$0xff]
  %v317 = vld [vmem:[%s3 + $0x1b8] sm:$0xff]
  %v318 = vld [vmem:[%s3 + $0x1c0] sm:$0xff]
  %v319 = vld [vmem:[%s3 + $0x1c8] sm:$0xff]
  %v320 = vld [vmem:[%s3 + $0x1d0] sm:$0xff]
  %v321 = vld [vmem:[%s3 + $0x1d8] sm:$0xff]
  %v322 = vld [vmem:[%s3 + $0x1e0] sm:$0xff]
  %v323 = vld [vmem:[%s3 + $0x1e8] sm:$0xff]
  %v324 = vld [vmem:[%s3 + $0x1f0] sm:$0xff]
  %v325 = vld [vmem:[%s3 + $0x1f8] sm:$0xff]
  %v326 = vld [vmem:[%s3 + $0x200] sm:$0xff]
  %v327 = vld [vmem:[%s3 + $0x208] sm:$0xff]
  %v328 = vld [vmem:[%s3 + $0x210] sm:$0xff]
  %v329 = vld [vmem:[%s3 + $0x218] sm:$0xff]
  %v330 = vld [vmem:[%s3 + $0x220] sm:$0xff]
  %v331 = vld [vmem:[%s3 + $0x228] sm:$0xff]
  %v332 = vld [vmem:[%s3 + $0x230] sm:$0xff]
  %v333 = vld [vmem:[%s3 + $0x238] sm:$0xff]
  %v334 = vld [vmem:[%s4] sm:$0x3f]
  %v336 = vperm.slane %v334, 0
  %v337 = vperm.slane %v334, 1
  %v338 = vperm.slane %v334, 2
  %v339 = vperm.slane %v334, 3
  %v340 = vperm.slane %v334, 4
  %v341 = vperm.slane %v334, 5
  %v420 = vunpack.c.l.b16 %v262
  %v421 = vunpack.c.h.b16 %v262
  %v422 = vunpack.c.l.b16 %v263
  %v423 = vunpack.c.h.b16 %v263
  %v424 = vunpack.c.l.b16 %v264
  %v425 = vunpack.c.h.b16 %v264
  %v426 = vunpack.c.l.b16 %v265
  %v427 = vunpack.c.h.b16 %v265
  %v428 = vunpack.c.l.b16 %v266
  %v429 = vunpack.c.h.b16 %v266
  %v430 = vunpack.c.l.b16 %v267
  %v431 = vunpack.c.h.b16 %v267
  %v432 = vunpack.c.l.b16 %v268
  %v433 = vunpack.c.h.b16 %v268
  %v434 = vunpack.c.l.b16 %v269
  %v435 = vunpack.c.h.b16 %v269
  %v436 = vunpack.c.l.b16 %v270
  %v437 = vunpack.c.h.b16 %v270
  %v438 = vunpack.c.l.b16 %v271
  %v439 = vunpack.c.h.b16 %v271
  %v440 = vunpack.c.l.b16 %v272
  %v441 = vunpack.c.h.b16 %v272
  %v442 = vunpack.c.l.b16 %v273
  %v443 = vunpack.c.h.b16 %v273
  %v444 = vunpack.c.l.b16 %v274
  %v445 = vunpack.c.h.b16 %v274
  %v446 = vunpack.c.l.b16 %v275
  %v447 = vunpack.c.h.b16 %v275
  %v448 = vunpack.c.l.b16 %v276
  %v449 = vunpack.c.h.b16 %v276
  %v450 = vunpack.c.l.b16 %v277
  %v451 = vunpack.c.h.b16 %v277
  %v452 = vunpack.c.l.b16 %v278
  %v453 = vunpack.c.h.b16 %v278
  %v454 = vunpack.c.l.b16 %v279
  %v455 = vunpack.c.h.b16 %v279
  %v456 = vunpack.c.l.b16 %v280
  %v457 = vunpack.c.h.b16 %v280
  %v458 = vunpack.c.l.b16 %v281
  %v459 = vunpack.c.h.b16 %v281
  %v460 = vunpack.c.l.b16 %v282
  %v461 = vunpack.c.h.b16 %v282
  %v462 = vunpack.c.l.b16 %v283
  %v463 = vunpack.c.h.b16 %v283
  %v464 = vunpack.c.l.b16 %v284
  %v465 = vunpack.c.h.b16 %v284
  %v466 = vunpack.c.l.b16 %v285
  %v467 = vunpack.c.h.b16 %v285
  %v468 = vunpack.c.l.b16 %v286
  %v469 = vunpack.c.h.b16 %v286
  %v470 = vunpack.c.l.b16 %v287
  %v471 = vunpack.c.h.b16 %v287
  %v472 = vunpack.c.l.b16 %v288
  %v473 = vunpack.c.h.b16 %v288
  %v474 = vunpack.c.l.b16 %v289
  %v475 = vunpack.c.h.b16 %v289
  %v476 = vunpack.c.l.b16 %v290
  %v477 = vunpack.c.h.b16 %v290
  %v478 = vunpack.c.l.b16 %v291
  %v479 = vunpack.c.h.b16 %v291
  %v480 = vunpack.c.l.b16 %v292
  %v481 = vunpack.c.h.b16 %v292
  %v482 = vunpack.c.l.b16 %v293
  %v483 = vunpack.c.h.b16 %v293
  %v484 = vunpack.c.l.b16 %v294
  %v485 = vunpack.c.h.b16 %v294
  %v486 = vunpack.c.l.b16 %v295
  %v487 = vunpack.c.h.b16 %v295
  %v488 = vunpack.c.l.b16 %v296
  %v489 = vunpack.c.h.b16 %v296
  %v490 = vunpack.c.l.b16 %v297
  %v491 = vunpack.c.h.b16 %v297
  %v492 = vunpack.c.l.b16 %v298
  %v493 = vunpack.c.h.b16 %v298
  %v494 = vunpack.c.l.b16 %v299
  %v495 = vunpack.c.h.b16 %v299
  %v496 = vunpack.c.l.b16 %v300
  %v497 = vunpack.c.h.b16 %v300
  %v498 = vunpack.c.l.b16 %v301
  %v499 = vunpack.c.h.b16 %v301
  %v500 = vunpack.c.l.b16 %v302
  %v501 = vunpack.c.h.b16 %v302
  %v502 = vunpack.c.l.b16 %v303
  %v503 = vunpack.c.h.b16 %v303
  %v504 = vunpack.c.l.b16 %v304
  %v505 = vunpack.c.h.b16 %v304
  %v506 = vunpack.c.l.b16 %v305
  %v507 = vunpack.c.h.b16 %v305
  %v508 = vunpack.c.l.b16 %v306
  %v509 = vunpack.c.h.b16 %v306
  %v510 = vunpack.c.l.b16 %v307
  %v511 = vunpack.c.h.b16 %v307
  %v512 = vunpack.c.l.b16 %v308
  %v513 = vunpack.c.h.b16 %v308
  %v514 = vunpack.c.l.b16 %v309
  %v515 = vunpack.c.h.b16 %v309
  %v516 = vunpack.c.l.b16 %v310
  %v517 = vunpack.c.h.b16 %v310
  %v518 = vunpack.c.l.b16 %v311
  %v519 = vunpack.c.h.b16 %v311
  %v520 = vunpack.c.l.b16 %v312
  %v521 = vunpack.c.h.b16 %v312
  %v522 = vunpack.c.l.b16 %v313
  %v523 = vunpack.c.h.b16 %v313
  %v524 = vunpack.c.l.b16 %v314
  %v525 = vunpack.c.h.b16 %v314
  %v526 = vunpack.c.l.b16 %v315
  %v527 = vunpack.c.h.b16 %v315
  %v528 = vunpack.c.l.b16 %v316
  %v529 = vunpack.c.h.b16 %v316
  %v530 = vunpack.c.l.b16 %v317
  %v531 = vunpack.c.h.b16 %v317
  %v532 = vunpack.c.l.b16 %v318
  %v533 = vunpack.c.h.b16 %v318
  %v534 = vunpack.c.l.b16 %v319
  %v535 = vunpack.c.h.b16 %v319
  %v536 = vunpack.c.l.b16 %v320
  %v537 = vunpack.c.h.b16 %v320
  %v538 = vunpack.c.l.b16 %v321
  %v539 = vunpack.c.h.b16 %v321
  %v540 = vunpack.c.l.b16 %v322
  %v541 = vunpack.c.h.b16 %v322
  %v542 = vunpack.c.l.b16 %v323
  %v543 = vunpack.c.h.b16 %v323
  %v544 = vunpack.c.l.b16 %v324
  %v545 = vunpack.c.h.b16 %v324
  %v546 = vunpack.c.l.b16 %v325
  %v547 = vunpack.c.h.b16 %v325
  %v548 = vunpack.c.l.b16 %v326
  %v549 = vunpack.c.h.b16 %v326
  %v550 = vunpack.c.l.b16 %v327
  %v551 = vunpack.c.h.b16 %v327
  %v552 = vunpack.c.l.b16 %v328
  %v553 = vunpack.c.h.b16 %v328
  %v554 = vunpack.c.l.b16 %v329
  %v555 = vunpack.c.h.b16 %v329
  %v556 = vunpack.c.l.b16 %v330
  %v557 = vunpack.c.h.b16 %v330
  %v558 = vunpack.c.l.b16 %v331
  %v559 = vunpack.c.h.b16 %v331
  %v560 = vunpack.c.l.b16 %v332
  %v561 = vunpack.c.h.b16 %v332
  %v562 = vunpack.c.l.b16 %v333
  %v563 = vunpack.c.h.b16 %v333
  %v564 = vpack.c.b16 %v426, %v420
  %v565 = vpack.c.b16 %v427, %v421
  %v566 = vpack.c.b16 %v428, %v422
  %v567 = vpack.c.b16 %v429, %v423
  %v568 = vpack.c.b16 %v430, %v424
  %v569 = vpack.c.b16 %v431, %v425
  %v570 = vpack.c.b16 %v438, %v432
  %v571 = vpack.c.b16 %v439, %v433
  %v572 = vpack.c.b16 %v440, %v434
  %v573 = vpack.c.b16 %v441, %v435
  %v574 = vpack.c.b16 %v442, %v436
  %v575 = vpack.c.b16 %v443, %v437
  %v576 = vpack.c.b16 %v450, %v444
  %v577 = vpack.c.b16 %v451, %v445
  %v578 = vpack.c.b16 %v452, %v446
  %v579 = vpack.c.b16 %v453, %v447
  %v580 = vpack.c.b16 %v454, %v448
  %v581 = vpack.c.b16 %v455, %v449
  %v582 = vpack.c.b16 %v462, %v456
  %v583 = vpack.c.b16 %v463, %v457
  %v584 = vpack.c.b16 %v464, %v458
  %v585 = vpack.c.b16 %v465, %v459
  %v586 = vpack.c.b16 %v466, %v460
  %v587 = vpack.c.b16 %v467, %v461
  %v588 = vpack.c.b16 %v474, %v468
  %v589 = vpack.c.b16 %v475, %v469
  %v590 = vpack.c.b16 %v476, %v470
  %v591 = vpack.c.b16 %v477, %v471
  %v592 = vpack.c.b16 %v478, %v472
  %v593 = vpack.c.b16 %v479, %v473
  %v594 = vpack.c.b16 %v486, %v480
  %v595 = vpack.c.b16 %v487, %v481
  %v596 = vpack.c.b16 %v488, %v482
  %v597 = vpack.c.b16 %v489, %v483
  %v598 = vpack.c.b16 %v490, %v484
  %v599 = vpack.c.b16 %v491, %v485
  %v600 = vpack.c.b16 %v498, %v492
  %v601 = vpack.c.b16 %v499, %v493
  %v602 = vpack.c.b16 %v500, %v494
  %v603 = vpack.c.b16 %v501, %v495
  %v604 = vpack.c.b16 %v502, %v496
  %v605 = vpack.c.b16 %v503, %v497
  %v606 = vpack.c.b16 %v510, %v504
  %v607 = vpack.c.b16 %v511, %v505
  %v608 = vpack.c.b16 %v512, %v506
  %v609 = vpack.c.b16 %v513, %v507
  %v610 = vpack.c.b16 %v514, %v508
  %v611 = vpack.c.b16 %v515, %v509
  %v612 = vpack.c.b16 %v522, %v516
  %v613 = vpack.c.b16 %v523, %v517
  %v614 = vpack.c.b16 %v524, %v518
  %v615 = vpack.c.b16 %v525, %v519
  %v616 = vpack.c.b16 %v526, %v520
  %v617 = vpack.c.b16 %v527, %v521
  %v618 = vpack.c.b16 %v534, %v528
  %v619 = vpack.c.b16 %v535, %v529
  %v620 = vpack.c.b16 %v536, %v530
  %v621 = vpack.c.b16 %v537, %v531
  %v622 = vpack.c.b16 %v538, %v532
  %v623 = vpack.c.b16 %v539, %v533
  %v624 = vpack.c.b16 %v546, %v540
  %v625 = vpack.c.b16 %v547, %v541
  %v626 = vpack.c.b16 %v548, %v542
  %v627 = vpack.c.b16 %v549, %v543
  %v628 = vpack.c.b16 %v550, %v544
  %v629 = vpack.c.b16 %v551, %v545
  %v630 = vpack.c.b16 %v558, %v552
  %v631 = vpack.c.b16 %v559, %v553
  %v632 = vpack.c.b16 %v560, %v554
  %v633 = vpack.c.b16 %v561, %v555
  %v634 = vpack.c.b16 %v562, %v556
  %v635 = vpack.c.b16 %v563, %v557
  %v709 = vsel %vm178, %v261, 0
  %711 = vmatpush.bf16.msra.mxu0 %v606
  %712 = vmatpush.bf16.msra.mxu0 %v600
  %713 = vmatpush.bf16.msra.mxu0 %v594
  %714 = vmatpush.bf16.msra.mxu0 %v588
  %715 = vmatpush.bf16.msra.mxu0 %v582
  %716 = vmatpush.bf16.msra.mxu0 %v576
  %717 = vmatpush.bf16.msra.mxu0 %v570
  %718 = vmatpush.bf16.msra.mxu0 %v564
  %719 = vmatmul.bf16.gmra.mxu0 %v260
  %v720 = vpop.f32.mrf.mxu0
  %v721 = vadd.f32 %v336, %v720
  %v722 = vpop.f32.mrf.mxu0
  %723 = vdwg.mxu0
  %724 = vmatpush.bf16.msra.mxu0 0
  %725 = vmatpush.bf16.msra.mxu0 0
  %726 = vmatpush.bf16.msra.mxu0 0
  %727 = vmatpush.bf16.msra.mxu0 0
  %728 = vmatpush.bf16.msra.mxu0 %v630
  %729 = vmatpush.bf16.msra.mxu0 %v624
  %730 = vmatpush.bf16.msra.mxu0 %v618
  %731 = vmatpush.bf16.msra.mxu0 %v612
  %732 = vmatmul.bf16.gmra.mxu0 %v709
  %v733 = vpop.f32.mrf.mxu0
  %v734 = vadd.f32 %v721, %v733
  %v735 = vpop.f32.mrf.mxu0
  %736 = vdwg.mxu0
  %737 = vmatpush.bf16.msra.mxu0 %v607
  %738 = vmatpush.bf16.msra.mxu0 %v601
  %739 = vmatpush.bf16.msra.mxu0 %v595
  %740 = vmatpush.bf16.msra.mxu0 %v589
  %741 = vmatpush.bf16.msra.mxu0 %v583
  %742 = vmatpush.bf16.msra.mxu0 %v577
  %743 = vmatpush.bf16.msra.mxu0 %v571
  %744 = vmatpush.bf16.msra.mxu0 %v565
  %745 = vmatmul.bf16.gmra.mxu0 %v260
  %v746 = vpop.f32.mrf.mxu0
  %v747 = vadd.f32 %v337, %v746
  %v748 = vpop.f32.mrf.mxu0
  %749 = vdwg.mxu0
  %750 = vmatpush.bf16.msra.mxu0 0
  %751 = vmatpush.bf16.msra.mxu0 0
  %752 = vmatpush.bf16.msra.mxu0 0
  %753 = vmatpush.bf16.msra.mxu0 0
  %754 = vmatpush.bf16.msra.mxu0 %v631
  %755 = vmatpush.bf16.msra.mxu0 %v625
  %756 = vmatpush.bf16.msra.mxu0 %v619
  %757 = vmatpush.bf16.msra.mxu0 %v613
  %758 = vmatmul.bf16.gmra.mxu0 %v709
  %v759 = vpop.f32.mrf.mxu0
  %v760 = vadd.f32 %v747, %v759
  %v761 = vpop.f32.mrf.mxu0
  %762 = vdwg.mxu0
  %763 = vmatpush.bf16.msra.mxu0 %v608
  %764 = vmatpush.bf16.msra.mxu0 %v602
  %765 = vmatpush.bf16.msra.mxu0 %v596
  %766 = vmatpush.bf16.msra.mxu0 %v590
  %767 = vmatpush.bf16.msra.mxu0 %v584
  %768 = vmatpush.bf16.msra.mxu0 %v578
  %769 = vmatpush.bf16.msra.mxu0 %v572
  %770 = vmatpush.bf16.msra.mxu0 %v566
  %771 = vmatmul.bf16.gmra.mxu0 %v260
  %v772 = vpop.f32.mrf.mxu0
  %v773 = vadd.f32 %v338, %v772
  %v774 = vpop.f32.mrf.mxu0
  %775 = vdwg.mxu0
  %776 = vmatpush.bf16.msra.mxu0 0
  %777 = vmatpush.bf16.msra.mxu0 0
  %778 = vmatpush.bf16.msra.mxu0 0
  %779 = vmatpush.bf16.msra.mxu0 0
  %780 = vmatpush.bf16.msra.mxu0 %v632
  %781 = vmatpush.bf16.msra.mxu0 %v626
  %782 = vmatpush.bf16.msra.mxu0 %v620
  %783 = vmatpush.bf16.msra.mxu0 %v614
  %784 = vmatmul.bf16.gmra.mxu0 %v709
  %v785 = vpop.f32.mrf.mxu0
  %v786 = vadd.f32 %v773, %v785
  %v787 = vpop.f32.mrf.mxu0
  %788 = vdwg.mxu0
  %789 = vmatpush.bf16.msra.mxu0 %v609
  %790 = vmatpush.bf16.msra.mxu0 %v603
  %791 = vmatpush.bf16.msra.mxu0 %v597
  %792 = vmatpush.bf16.msra.mxu0 %v591
  %793 = vmatpush.bf16.msra.mxu0 %v585
  %794 = vmatpush.bf16.msra.mxu0 %v579
  %795 = vmatpush.bf16.msra.mxu0 %v573
  %796 = vmatpush.bf16.msra.mxu0 %v567
  %797 = vmatmul.bf16.gmra.mxu0 %v260
  %v798 = vpop.f32.mrf.mxu0
  %v799 = vadd.f32 %v339, %v798
  %v800 = vpop.f32.mrf.mxu0
  %801 = vdwg.mxu0
  %802 = vmatpush.bf16.msra.mxu0 0
  %803 = vmatpush.bf16.msra.mxu0 0
  %804 = vmatpush.bf16.msra.mxu0 0
  %805 = vmatpush.bf16.msra.mxu0 0
  %806 = vmatpush.bf16.msra.mxu0 %v633
  %807 = vmatpush.bf16.msra.mxu0 %v627
  %808 = vmatpush.bf16.msra.mxu0 %v621
  %809 = vmatpush.bf16.msra.mxu0 %v615
  %810 = vmatmul.bf16.gmra.mxu0 %v709
  %v811 = vpop.f32.mrf.mxu0
  %v812 = vadd.f32 %v799, %v811
  %v813 = vpop.f32.mrf.mxu0
  %814 = vdwg.mxu0
  %815 = vmatpush.bf16.msra.mxu0 %v610
  %816 = vmatpush.bf16.msra.mxu0 %v604
  %817 = vmatpush.bf16.msra.mxu0 %v598
  %818 = vmatpush.bf16.msra.mxu0 %v592
  %819 = vmatpush.bf16.msra.mxu0 %v586
  %820 = vmatpush.bf16.msra.mxu0 %v580
  %821 = vmatpush.bf16.msra.mxu0 %v574
  %822 = vmatpush.bf16.msra.mxu0 %v568
  %823 = vmatmul.bf16.gmra.mxu0 %v260
  %v824 = vpop.f32.mrf.mxu0
  %v825 = vadd.f32 %v340, %v824
  %v826 = vpop.f32.mrf.mxu0
  %827 = vdwg.mxu0
  %828 = vmatpush.bf16.msra.mxu0 0
  %829 = vmatpush.bf16.msra.mxu0 0
  %830 = vmatpush.bf16.msra.mxu0 0
  %831 = vmatpush.bf16.msra.mxu0 0
  %832 = vmatpush.bf16.msra.mxu0 %v634
  %833 = vmatpush.bf16.msra.mxu0 %v628
  %834 = vmatpush.bf16.msra.mxu0 %v622
  %835 = vmatpush.bf16.msra.mxu0 %v616
  %836 = vmatmul.bf16.gmra.mxu0 %v709
  %v837 = vpop.f32.mrf.mxu0
  %v838 = vadd.f32 %v825, %v837
  %v839 = vpop.f32.mrf.mxu0
  %840 = vdwg.mxu0
  %841 = vmatpush.bf16.msra.mxu0 %v611
  %842 = vmatpush.bf16.msra.mxu0 %v605
  %843 = vmatpush.bf16.msra.mxu0 %v599
  %844 = vmatpush.bf16.msra.mxu0 %v593
  %845 = vmatpush.bf16.msra.mxu0 %v587
  %846 = vmatpush.bf16.msra.mxu0 %v581
  %847 = vmatpush.bf16.msra.mxu0 %v575
  %848 = vmatpush.bf16.msra.mxu0 %v569
  %849 = vmatmul.bf16.gmra.mxu0 %v260
  %v850 = vpop.f32.mrf.mxu0
  %v851 = vadd.f32 %v341, %v850
  %v852 = vpop.f32.mrf.mxu0
  %853 = vdwg.mxu0
  %854 = vmatpush.bf16.msra.mxu0 0
  %855 = vmatpush.bf16.msra.mxu0 0
  %856 = vmatpush.bf16.msra.mxu0 0
  %857 = vmatpush.bf16.msra.mxu0 0
  %858 = vmatpush.bf16.msra.mxu0 %v635
  %859 = vmatpush.bf16.msra.mxu0 %v629
  %860 = vmatpush.bf16.msra.mxu0 %v623
  %861 = vmatpush.bf16.msra.mxu0 %v617
  %862 = vmatmul.bf16.gmra.mxu0 %v709
  %v863 = vpop.f32.mrf.mxu0
  %v864 = vadd.f32 %v851, %v863
  %v865 = vpop.f32.mrf.mxu0
  %866 = vdwg.mxu0
  %v867 = vpack.c.bf16 %v760, %v734
  %v868 = vpack.c.bf16 %v812, %v786
  %v869 = vpack.c.bf16 %v864, %v838
  %870 = vst [vmem:[%s5] sm:$0xff] %v867
  %871 = vst [vmem:[%s5 + $0x8] sm:$0xff] %v868
  %872 = vst [vmem:[%s5 + $0x10] sm:$0xff] %v869
  // Predicated region
  $region22: #{forward.11} parent=0 // pred_check
    _
  $region23: #{forward.11} parent=0 // pred_check_branch
    %874 = sbr.rel (0) target = $region25
  $region24: #{forward.11} parent=0 // pred_region
    _
  $region25: #{forward.11} parent=0 // pred_fallthru
    _
  // Predicated region
  $region26: #{forward.11} parent=0 // pred_check
    _
  $region27: #{forward.11} parent=0 // pred_check_branch
    %876 = sbr.rel (0) target = $region29
  $region28: #{forward.11} parent=0 // pred_region
    _
  $region29: #{forward.11} parent=0 // pred_fallthru
    _

// kernel: forward.10
$region0: #{forward.10}
  #allocation0 [shape = 'u32[]', space=smem, size = 0x4, offset = 0x4, fixed_abs, tag = 'smem constant byte address 0x4 - core index']
  #allocation1 [shape = 'u32[72,128]{1,0:T(1,128)}', space=vmem, size = 0x9000, scoped, tag = 'internal scratch']
  %s0 = inlined_call_operand.vmem [shape: bf16[2,768], index: 0, kind: input, shape index: {}]
  %s1 = inlined_call_operand.vmem [shape: f32[2,192], index: 1, kind: input, shape index: {}]
  %s2 = inlined_call_operand.vmem [shape: bf16[768,192], index: 2, kind: input, shape index: {}]
  %s3 = inlined_call_operand.vmem [shape: f32[1,192], index: 3, kind: input, shape index: {}]
  %s4 = inlined_call_operand.vmem [shape: bf16[192,768], index: 4, kind: input, shape index: {}]
  %s5 = inlined_call_operand.vmem [shape: f32[1,768], index: 5, kind: input, shape index: {}]
  %s6 = inlined_call_operand.vmem [shape: f32[5,192], index: 6, kind: input, shape index: {}]
  %s7 = inlined_call_operand.vmem [shape: f32[5,192], index: 7, kind: input, shape index: {}]
  %s8 = inlined_call_operand.vmem [shape: f32[4,192], index: 8, kind: input, shape index: {}]
  %s9 = inlined_call_operand.hbm [shape: f32[1,1], index: 9, kind: output, shape index: {0}]
  %s10 = inlined_call_operand.vmem [shape: bf16[2,768], index: 10, kind: output, shape index: {1}]
  %11 = xla_tuple %s9, %s10
  %s12 = sld [smem:[#allocation0]]
  $region54: #{forward.10} parent=0
    _
  %s14 = ssub.s32 1, %s12
  %s15 = scalar_select 0, %s14, %s12
  $region1: #{forward.10} parent=0
    #allocation2 [shape = 'u8[512]{0}', space=vmem, size = 0x400, scoped, tag = 'output window, operand 0, single buffered']
    #allocation3 [shape = 's32[1]{0}', space=sflag, size = 0x4, scoped, tag = 'scoped memory for forward.10']
    %16 = vsyncpa [#allocation3], 0
    // Predicated region
    $region2: #{forward.10} parent=1 // pred_check
      _
    $region3: #{forward.10} parent=1 // pred_check_branch
      %18 = sbr.rel (0) target = $region5
    $region4: #{forward.10} parent=1 // pred_region
      _
    $region5: #{forward.10} parent=1 // pred_fallthru
      _
    // Predicated region
    $region6: #{forward.10} parent=1 // pred_check
      _
    $region7: #{forward.10} parent=1 // pred_check_branch
      %20 = sbr.rel (0) target = $region9
    $region8: #{forward.10} parent=1 // pred_region
      _
    $region9: #{forward.10} parent=1 // pred_fallthru
      _
    // Predicated region
    $region10: #{forward.10} parent=1 // pred_check
      _
    $region11: #{forward.10} parent=1 // pred_check_branch
      %22 = sbr.rel (0) target = $region13
    $region12: #{forward.10} parent=1 // pred_region
      _
    $region13: #{forward.10} parent=1 // pred_fallthru
      _
    // Predicated region
    $region14: #{forward.10} parent=1 // pred_check
      _
    $region15: #{forward.10} parent=1 // pred_check_branch
      %24 = sbr.rel (0) target = $region17
    $region16: #{forward.10} parent=1 // pred_region
      _
    $region17: #{forward.10} parent=1 // pred_fallthru
      _
    // Predicated region
    $region18: #{forward.10} parent=1 // pred_check
      _
    $region19: #{forward.10} parent=1 // pred_check_branch
      %26 = sbr.rel (0) target = $region21
    $region20: #{forward.10} parent=1 // pred_region
      _
    $region21: #{forward.10} parent=1 // pred_fallthru
      _
    // Predicated region
    $region22: #{forward.10} parent=1 // pred_check
      _
    $region23: #{forward.10} parent=1 // pred_check_branch
      %28 = sbr.rel (0) target = $region25
    $region24: #{forward.10} parent=1 // pred_region
      _
    $region25: #{forward.10} parent=1 // pred_fallthru
      _
    // Predicated region
    $region26: #{forward.10} parent=1 // pred_check
      _
    $region27: #{forward.10} parent=1 // pred_check_branch
      %30 = sbr.rel (0) target = $region29
    $region28: #{forward.10} parent=1 // pred_region
      _
    $region29: #{forward.10} parent=1 // pred_fallthru
      _
    // Predicated region
    $region30: #{forward.10} parent=1 // pred_check
      _
    $region31: #{forward.10} parent=1 // pred_check_branch
      %32 = sbr.rel (0) target = $region33
    $region32: #{forward.10} parent=1 // pred_region
      _
    $region33: #{forward.10} parent=1 // pred_fallthru
      _
    // Predicated region
    $region34: #{forward.10} parent=1 // pred_check
      _
    $region35: #{forward.10} parent=1 // pred_check_branch
      %34 = sbr.rel (0) target = $region37
    $region36: #{forward.10} parent=1 // pred_region
      _
    $region37: #{forward.10} parent=1 // pred_fallthru
      _
    %v36 = vld [vmem:[%s0] sm:$0x3f]
    %v37 = vld [vmem:[%s2] sm:$0xff]
    %v38 = vld [vmem:[%s2 + $0x8] sm:$0xff]
    %v39 = vld [vmem:[%s2 + $0x10] sm:$0xff]
    %v40 = vld [vmem:[%s2 + $0x18] sm:$0xff]
    %v41 = vld [vmem:[%s2 + $0x20] sm:$0xff]
    %v42 = vld [vmem:[%s2 + $0x28] sm:$0xff]
    %v43 = vld [vmem:[%s2 + $0x30] sm:$0xff]
    %v44 = vld [vmem:[%s2 + $0x38] sm:$0xff]
    %v45 = vld [vmem:[%s2 + $0x40] sm:$0xff]
    %v46 = vld [vmem:[%s2 + $0x48] sm:$0xff]
    %v47 = vld [vmem:[%s2 + $0x50] sm:$0xff]
    %v48 = vld [vmem:[%s2 + $0x58] sm:$0xff]
    %v49 = vld [vmem:[%s2 + $0x60] sm:$0xff]
    %v50 = vld [vmem:[%s2 + $0x68] sm:$0xff]
    %v51 = vld [vmem:[%s2 + $0x70] sm:$0xff]
    %v52 = vld [vmem:[%s2 + $0x78] sm:$0xff]
    %v53 = vld [vmem:[%s2 + $0x80] sm:$0xff]
    %v54 = vld [vmem:[%s2 + $0x88] sm:$0xff]
    %v55 = vld [vmem:[%s2 + $0x90] sm:$0xff]
    %v56 = vld [vmem:[%s2 + $0x98] sm:$0xff]
    %v57 = vld [vmem:[%s2 + $0xa0] sm:$0xff]
    %v58 = vld [vmem:[%s2 + $0xa8] sm:$0xff]
    %v59 = vld [vmem:[%s2 + $0xb0] sm:$0xff]
    %v60 = vld [vmem:[%s2 + $0xb8] sm:$0xff]
    %v61 = vld [vmem:[%s2 + $0xc0] sm:$0xff]
    %v62 = vld [vmem:[%s2 + $0xc8] sm:$0xff]
    %v63 = vld [vmem:[%s2 + $0xd0] sm:$0xff]
    %v64 = vld [vmem:[%s2 + $0xd8] sm:$0xff]
    %v65 = vld [vmem:[%s2 + $0xe0] sm:$0xff]
    %v66 = vld [vmem:[%s2 + $0xe8] sm:$0xff]
    %v67 = vld [vmem:[%s2 + $0xf0] sm:$0xff]
    %v68 = vld [vmem:[%s2 + $0xf8] sm:$0xff]
    %v69 = vld [vmem:[%s2 + $0x100] sm:$0xff]
    %v70 = vld [vmem:[%s2 + $0x108] sm:$0xff]
    %v71 = vld [vmem:[%s2 + $0x110] sm:$0xff]
    %v72 = vld [vmem:[%s2 + $0x118] sm:$0xff]
    %v73 = vld [vmem:[%s2 + $0x120] sm:$0xff]
    %v74 = vld [vmem:[%s2 + $0x128] sm:$0xff]
    %v75 = vld [vmem:[%s2 + $0x130] sm:$0xff]
    %v76 = vld [vmem:[%s2 + $0x138] sm:$0xff]
    %v77 = vld [vmem:[%s2 + $0x140] sm:$0xff]
    %v78 = vld [vmem:[%s2 + $0x148] sm:$0xff]
    %v79 = vld [vmem:[%s2 + $0x150] sm:$0xff]
    %v80 = vld [vmem:[%s2 + $0x158] sm:$0xff]
    %v81 = vld [vmem:[%s2 + $0x160] sm:$0xff]
    %v82 = vld [vmem:[%s2 + $0x168] sm:$0xff]
    %v83 = vld [vmem:[%s2 + $0x170] sm:$0xff]
    %v84 = vld [vmem:[%s2 + $0x178] sm:$0xff]
    %v85 = vld [vmem:[%s2 + $0x180] sm:$0xff]
    %v86 = vld [vmem:[%s2 + $0x188] sm:$0xff]
    %v87 = vld [vmem:[%s2 + $0x190] sm:$0xff]
    %v88 = vld [vmem:[%s2 + $0x198] sm:$0xff]
    %v89 = vld [vmem:[%s2 + $0x1a0] sm:$0xff]
    %v90 = vld [vmem:[%s2 + $0x1a8] sm:$0xff]
    %v91 = vld [vmem:[%s2 + $0x1b0] sm:$0xff]
    %v92 = vld [vmem:[%s2 + $0x1b8] sm:$0xff]
    %v93 = vld [vmem:[%s2 + $0x1c0] sm:$0xff]
    %v94 = vld [vmem:[%s2 + $0x1c8] sm:$0xff]
    %v95 = vld [vmem:[%s2 + $0x1d0] sm:$0xff]
    %v96 = vld [vmem:[%s2 + $0x1d8] sm:$0xff]
    %v97 = vld [vmem:[%s2 + $0x1e0] sm:$0xff]
    %v98 = vld [vmem:[%s2 + $0x1e8] sm:$0xff]
    %v99 = vld [vmem:[%s2 + $0x1f0] sm:$0xff]
    %v100 = vld [vmem:[%s2 + $0x1f8] sm:$0xff]
    %v101 = vld [vmem:[%s2 + $0x200] sm:$0xff]
    %v102 = vld [vmem:[%s2 + $0x208] sm:$0xff]
    %v103 = vld [vmem:[%s2 + $0x210] sm:$0xff]
    %v104 = vld [vmem:[%s2 + $0x218] sm:$0xff]
    %v105 = vld [vmem:[%s2 + $0x220] sm:$0xff]
    %v106 = vld [vmem:[%s2 + $0x228] sm:$0xff]
    %v107 = vld [vmem:[%s2 + $0x230] sm:$0xff]
    %v108 = vld [vmem:[%s2 + $0x238] sm:$0xff]
    %v109 = vld [vmem:[%s2 + $0x240] sm:$0xff]
    %v110 = vld [vmem:[%s2 + $0x248] sm:$0xff]
    %v111 = vld [vmem:[%s2 + $0x250] sm:$0xff]
    %v112 = vld [vmem:[%s2 + $0x258] sm:$0xff]
    %v113 = vld [vmem:[%s2 + $0x260] sm:$0xff]
    %v114 = vld [vmem:[%s2 + $0x268] sm:$0xff]
    %v115 = vld [vmem:[%s2 + $0x270] sm:$0xff]
    %v116 = vld [vmem:[%s2 + $0x278] sm:$0xff]
    %v117 = vld [vmem:[%s2 + $0x280] sm:$0xff]
    %v118 = vld [vmem:[%s2 + $0x288] sm:$0xff]
    %v119 = vld [vmem:[%s2 + $0x290] sm:$0xff]
    %v120 = vld [vmem:[%s2 + $0x298] sm:$0xff]
    %v121 = vld [vmem:[%s2 + $0x2a0] sm:$0xff]
    %v122 = vld [vmem:[%s2 + $0x2a8] sm:$0xff]
    %v123 = vld [vmem:[%s2 + $0x2b0] sm:$0xff]
    %v124 = vld [vmem:[%s2 + $0x2b8] sm:$0xff]
    %v125 = vld [vmem:[%s2 + $0x2c0] sm:$0xff]
    %v126 = vld [vmem:[%s2 + $0x2c8] sm:$0xff]
    %v127 = vld [vmem:[%s2 + $0x2d0] sm:$0xff]
    %v128 = vld [vmem:[%s2 + $0x2d8] sm:$0xff]
    %v129 = vld [vmem:[%s2 + $0x2e0] sm:$0xff]
    %v130 = vld [vmem:[%s2 + $0x2e8] sm:$0xff]
    %v131 = vld [vmem:[%s2 + $0x2f0] sm:$0xff]
    %v132 = vld [vmem:[%s2 + $0x2f8] sm:$0xff]
    %v133 = vld [vmem:[%s3] sm:$0x3]
    %v135 = vperm.slane %v133, 0
    %v136 = vperm.slane %v133, 1
    %140 = vst [vmem:[#allocation1] ss:$9 sm:$0xff] %v36
    %v141 = vld [vmem:[#allocation1] sm:$0xff]
    %v142 = vld [vmem:[#allocation1 + $0x9] sm:$0xff]
    %v143 = vld [vmem:[#allocation1 + $0x12] sm:$0xff]
    %v144 = vld [vmem:[#allocation1 + $0x1b] sm:$0xff]
    %v145 = vld [vmem:[#allocation1 + $0x24] sm:$0xff]
    %v146 = vld [vmem:[#allocation1 + $0x2d] sm:$0xff]
    %v249 = vunpack.c.l.b16 %v37
    %v250 = vunpack.c.h.b16 %v37
    %v251 = vunpack.c.l.b16 %v38
    %v252 = vunpack.c.h.b16 %v38
    %v253 = vunpack.c.l.b16 %v39
    %v254 = vunpack.c.h.b16 %v39
    %v255 = vunpack.c.l.b16 %v40
    %v256 = vunpack.c.h.b16 %v40
    %v257 = vunpack.c.l.b16 %v41
    %v258 = vunpack.c.h.b16 %v41
    %v259 = vunpack.c.l.b16 %v42
    %v260 = vunpack.c.h.b16 %v42
    %v261 = vunpack.c.l.b16 %v43
    %v262 = vunpack.c.h.b16 %v43
    %v263 = vunpack.c.l.b16 %v44
    %v264 = vunpack.c.h.b16 %v44
    %v265 = vunpack.c.l.b16 %v45
    %v266 = vunpack.c.h.b16 %v45
    %v267 = vunpack.c.l.b16 %v46
    %v268 = vunpack.c.h.b16 %v46
    %v269 = vunpack.c.l.b16 %v47
    %v270 = vunpack.c.h.b16 %v47
    %v271 = vunpack.c.l.b16 %v48
    %v272 = vunpack.c.h.b16 %v48
    %v273 = vunpack.c.l.b16 %v49
    %v274 = vunpack.c.h.b16 %v49
    %v275 = vunpack.c.l.b16 %v50
    %v276 = vunpack.c.h.b16 %v50
    %v277 = vunpack.c.l.b16 %v51
    %v278 = vunpack.c.h.b16 %v51
    %v279 = vunpack.c.l.b16 %v52
    %v280 = vunpack.c.h.b16 %v52
    %v281 = vunpack.c.l.b16 %v53
    %v282 = vunpack.c.h.b16 %v53
    %v283 = vunpack.c.l.b16 %v54
    %v284 = vunpack.c.h.b16 %v54
    %v285 = vunpack.c.l.b16 %v55
    %v286 = vunpack.c.h.b16 %v55
    %v287 = vunpack.c.l.b16 %v56
    %v288 = vunpack.c.h.b16 %v56
    %v289 = vunpack.c.l.b16 %v57
    %v290 = vunpack.c.h.b16 %v57
    %v291 = vunpack.c.l.b16 %v58
    %v292 = vunpack.c.h.b16 %v58
    %v293 = vunpack.c.l.b16 %v59
    %v294 = vunpack.c.h.b16 %v59
    %v295 = vunpack.c.l.b16 %v60
    %v296 = vunpack.c.h.b16 %v60
    %v297 = vunpack.c.l.b16 %v61
    %v298 = vunpack.c.h.b16 %v61
    %v299 = vunpack.c.l.b16 %v62
    %v300 = vunpack.c.h.b16 %v62
    %v301 = vunpack.c.l.b16 %v63
    %v302 = vunpack.c.h.b16 %v63
    %v303 = vunpack.c.l.b16 %v64
    %v304 = vunpack.c.h.b16 %v64
    %v305 = vunpack.c.l.b16 %v65
    %v306 = vunpack.c.h.b16 %v65
    %v307 = vunpack.c.l.b16 %v66
    %v308 = vunpack.c.h.b16 %v66
    %v309 = vunpack.c.l.b16 %v67
    %v310 = vunpack.c.h.b16 %v67
    %v311 = vunpack.c.l.b16 %v68
    %v312 = vunpack.c.h.b16 %v68
    %v313 = vunpack.c.l.b16 %v69
    %v314 = vunpack.c.h.b16 %v69
    %v315 = vunpack.c.l.b16 %v70
    %v316 = vunpack.c.h.b16 %v70
    %v317 = vunpack.c.l.b16 %v71
    %v318 = vunpack.c.h.b16 %v71
    %v319 = vunpack.c.l.b16 %v72
    %v320 = vunpack.c.h.b16 %v72
    %v321 = vunpack.c.l.b16 %v73
    %v322 = vunpack.c.h.b16 %v73
    %v323 = vunpack.c.l.b16 %v74
    %v324 = vunpack.c.h.b16 %v74
    %v325 = vunpack.c.l.b16 %v75
    %v326 = vunpack.c.h.b16 %v75
    %v327 = vunpack.c.l.b16 %v76
    %v328 = vunpack.c.h.b16 %v76
    %v329 = vunpack.c.l.b16 %v77
    %v330 = vunpack.c.h.b16 %v77
    %v331 = vunpack.c.l.b16 %v78
    %v332 = vunpack.c.h.b16 %v78
    %v333 = vunpack.c.l.b16 %v79
    %v334 = vunpack.c.h.b16 %v79
    %v335 = vunpack.c.l.b16 %v80
    %v336 = vunpack.c.h.b16 %v80
    %v337 = vunpack.c.l.b16 %v81
    %v338 = vunpack.c.h.b16 %v81
    %v339 = vunpack.c.l.b16 %v82
    %v340 = vunpack.c.h.b16 %v82
    %v341 = vunpack.c.l.b16 %v83
    %v342 = vunpack.c.h.b16 %v83
    %v343 = vunpack.c.l.b16 %v84
    %v344 = vunpack.c.h.b16 %v84
    %v345 = vunpack.c.l.b16 %v85
    %v346 = vunpack.c.h.b16 %v85
    %v347 = vunpack.c.l.b16 %v86
    %v348 = vunpack.c.h.b16 %v86
    %v349 = vunpack.c.l.b16 %v87
    %v350 = vunpack.c.h.b16 %v87
    %v351 = vunpack.c.l.b16 %v88
    %v352 = vunpack.c.h.b16 %v88
    %v353 = vunpack.c.l.b16 %v89
    %v354 = vunpack.c.h.b16 %v89
    %v355 = vunpack.c.l.b16 %v90
    %v356 = vunpack.c.h.b16 %v90
    %v357 = vunpack.c.l.b16 %v91
    %v358 = vunpack.c.h.b16 %v91
    %v359 = vunpack.c.l.b16 %v92
    %v360 = vunpack.c.h.b16 %v92
    %v361 = vunpack.c.l.b16 %v93
    %v362 = vunpack.c.h.b16 %v93
    %v363 = vunpack.c.l.b16 %v94
    %v364 = vunpack.c.h.b16 %v94
    %v365 = vunpack.c.l.b16 %v95
    %v366 = vunpack.c.h.b16 %v95
    %v367 = vunpack.c.l.b16 %v96
    %v368 = vunpack.c.h.b16 %v96
    %v369 = vunpack.c.l.b16 %v97
    %v370 = vunpack.c.h.b16 %v97
    %v371 = vunpack.c.l.b16 %v98
    %v372 = vunpack.c.h.b16 %v98
    %v373 = vunpack.c.l.b16 %v99
    %v374 = vunpack.c.h.b16 %v99
    %v375 = vunpack.c.l.b16 %v100
    %v376 = vunpack.c.h.b16 %v100
    %v377 = vunpack.c.l.b16 %v101
    %v378 = vunpack.c.h.b16 %v101
    %v379 = vunpack.c.l.b16 %v102
    %v380 = vunpack.c.h.b16 %v102
    %v381 = vunpack.c.l.b16 %v103
    %v382 = vunpack.c.h.b16 %v103
    %v383 = vunpack.c.l.b16 %v104
    %v384 = vunpack.c.h.b16 %v104
    %v385 = vunpack.c.l.b16 %v105
    %v386 = vunpack.c.h.b16 %v105
    %v387 = vunpack.c.l.b16 %v106
    %v388 = vunpack.c.h.b16 %v106
    %v389 = vunpack.c.l.b16 %v107
    %v390 = vunpack.c.h.b16 %v107
    %v391 = vunpack.c.l.b16 %v108
    %v392 = vunpack.c.h.b16 %v108
    %v393 = vunpack.c.l.b16 %v109
    %v394 = vunpack.c.h.b16 %v109
    %v395 = vunpack.c.l.b16 %v110
    %v396 = vunpack.c.h.b16 %v110
    %v397 = vunpack.c.l.b16 %v111
    %v398 = vunpack.c.h.b16 %v111
    %v399 = vunpack.c.l.b16 %v112
    %v400 = vunpack.c.h.b16 %v112
    %v401 = vunpack.c.l.b16 %v113
    %v402 = vunpack.c.h.b16 %v113
    %v403 = vunpack.c.l.b16 %v114
    %v404 = vunpack.c.h.b16 %v114
    %v405 = vunpack.c.l.b16 %v115
    %v406 = vunpack.c.h.b16 %v115
    %v407 = vunpack.c.l.b16 %v116
    %v408 = vunpack.c.h.b16 %v116
    %v409 = vunpack.c.l.b16 %v117
    %v410 = vunpack.c.h.b16 %v117
    %v411 = vunpack.c.l.b16 %v118
    %v412 = vunpack.c.h.b16 %v118
    %v413 = vunpack.c.l.b16 %v119
    %v414 = vunpack.c.h.b16 %v119
    %v415 = vunpack.c.l.b16 %v120
    %v416 = vunpack.c.h.b16 %v120
    %v417 = vunpack.c.l.b16 %v121
    %v418 = vunpack.c.h.b16 %v121
    %v419 = vunpack.c.l.b16 %v122
    %v420 = vunpack.c.h.b16 %v122
    %v421 = vunpack.c.l.b16 %v123
    %v422 = vunpack.c.h.b16 %v123
    %v423 = vunpack.c.l.b16 %v124
    %v424 = vunpack.c.h.b16 %v124
    %v425 = vunpack.c.l.b16 %v125
    %v426 = vunpack.c.h.b16 %v125
    %v427 = vunpack.c.l.b16 %v126
    %v428 = vunpack.c.h.b16 %v126
    %v429 = vunpack.c.l.b16 %v127
    %v430 = vunpack.c.h.b16 %v127
    %v431 = vunpack.c.l.b16 %v128
    %v432 = vunpack.c.h.b16 %v128
    %v433 = vunpack.c.l.b16 %v129
    %v434 = vunpack.c.h.b16 %v129
    %v435 = vunpack.c.l.b16 %v130
    %v436 = vunpack.c.h.b16 %v130
    %v437 = vunpack.c.l.b16 %v131
    %v438 = vunpack.c.h.b16 %v131
    %v439 = vunpack.c.l.b16 %v132
    %v440 = vunpack.c.h.b16 %v132
    %v441 = vpack.c.b16 %v251, %v249
    %v442 = vpack.c.b16 %v252, %v250
    %v443 = vpack.c.b16 %v255, %v253
    %v444 = vpack.c.b16 %v256, %v254
    %v445 = vpack.c.b16 %v259, %v257
    %v446 = vpack.c.b16 %v260, %v258
    %v447 = vpack.c.b16 %v263, %v261
    %v448 = vpack.c.b16 %v264, %v262
    %v449 = vpack.c.b16 %v267, %v265
    %v450 = vpack.c.b16 %v268, %v266
    %v451 = vpack.c.b16 %v271, %v269
    %v452 = vpack.c.b16 %v272, %v270
    %v453 = vpack.c.b16 %v275, %v273
    %v454 = vpack.c.b16 %v276, %v274
    %v455 = vpack.c.b16 %v279, %v277
    %v456 = vpack.c.b16 %v280, %v278
    %v457 = vpack.c.b16 %v283, %v281
    %v458 = vpack.c.b16 %v284, %v282
    %v459 = vpack.c.b16 %v287, %v285
    %v460 = vpack.c.b16 %v288, %v286
    %v461 = vpack.c.b16 %v291, %v289
    %v462 = vpack.c.b16 %v292, %v290
    %v463 = vpack.c.b16 %v295, %v293
    %v464 = vpack.c.b16 %v296, %v294
    %v465 = vpack.c.b16 %v299, %v297
    %v466 = vpack.c.b16 %v300, %v298
    %v467 = vpack.c.b16 %v303, %v301
    %v468 = vpack.c.b16 %v304, %v302
    %v469 = vpack.c.b16 %v307, %v305
    %v470 = vpack.c.b16 %v308, %v306
    %v471 = vpack.c.b16 %v311, %v309
    %v472 = vpack.c.b16 %v312, %v310
    %v473 = vpack.c.b16 %v315, %v313
    %v474 = vpack.c.b16 %v316, %v314
    %v475 = vpack.c.b16 %v319, %v317
    %v476 = vpack.c.b16 %v320, %v318
    %v477 = vpack.c.b16 %v323, %v321
    %v478 = vpack.c.b16 %v324, %v322
    %v479 = vpack.c.b16 %v327, %v325
    %v480 = vpack.c.b16 %v328, %v326
    %v481 = vpack.c.b16 %v331, %v329
    %v482 = vpack.c.b16 %v332, %v330
    %v483 = vpack.c.b16 %v335, %v333
    %v484 = vpack.c.b16 %v336, %v334
    %v485 = vpack.c.b16 %v339, %v337
    %v486 = vpack.c.b16 %v340, %v338
    %v487 = vpack.c.b16 %v343, %v341
    %v488 = vpack.c.b16 %v344, %v342
    %v489 = vpack.c.b16 %v347, %v345
    %v490 = vpack.c.b16 %v348, %v346
    %v491 = vpack.c.b16 %v351, %v349
    %v492 = vpack.c.b16 %v352, %v350
    %v493 = vpack.c.b16 %v355, %v353
    %v494 = vpack.c.b16 %v356, %v354
    %v495 = vpack.c.b16 %v359, %v357
    %v496 = vpack.c.b16 %v360, %v358
    %v497 = vpack.c.b16 %v363, %v361
    %v498 = vpack.c.b16 %v364, %v362
    %v499 = vpack.c.b16 %v367, %v365
    %v500 = vpack.c.b16 %v368, %v366
    %v501 = vpack.c.b16 %v371, %v369
    %v502 = vpack.c.b16 %v372, %v370
    %v503 = vpack.c.b16 %v375, %v373
    %v504 = vpack.c.b16 %v376, %v374
    %v505 = vpack.c.b16 %v379, %v377
    %v506 = vpack.c.b16 %v380, %v378
    %v507 = vpack.c.b16 %v383, %v381
    %v508 = vpack.c.b16 %v384, %v382
    %v509 = vpack.c.b16 %v387, %v385
    %v510 = vpack.c.b16 %v388, %v386
    %v511 = vpack.c.b16 %v391, %v389
    %v512 = vpack.c.b16 %v392, %v390
    %v513 = vpack.c.b16 %v395, %v393
    %v514 = vpack.c.b16 %v396, %v394
    %v515 = vpack.c.b16 %v399, %v397
    %v516 = vpack.c.b16 %v400, %v398
    %v517 = vpack.c.b16 %v403, %v401
    %v518 = vpack.c.b16 %v404, %v402
    %v519 = vpack.c.b16 %v407, %v405
    %v520 = vpack.c.b16 %v408, %v406
    %v521 = vpack.c.b16 %v411, %v409
    %v522 = vpack.c.b16 %v412, %v410
    %v523 = vpack.c.b16 %v415, %v413
    %v524 = vpack.c.b16 %v416, %v414
    %v525 = vpack.c.b16 %v419, %v417
    %v526 = vpack.c.b16 %v420, %v418
    %v527 = vpack.c.b16 %v423, %v421
    %v528 = vpack.c.b16 %v424, %v422
    %v529 = vpack.c.b16 %v427, %v425
    %v530 = vpack.c.b16 %v428, %v426
    %v531 = vpack.c.b16 %v431, %v429
    %v532 = vpack.c.b16 %v432, %v430
    %v533 = vpack.c.b16 %v435, %v433
    %v534 = vpack.c.b16 %v436, %v434
    %v535 = vpack.c.b16 %v439, %v437
    %v536 = vpack.c.b16 %v440, %v438
    %633 = vmatpush.bf16.msra.mxu0 %v455
    %634 = vmatpush.bf16.msra.mxu0 %v453
    %635 = vmatpush.bf16.msra.mxu0 %v451
    %636 = vmatpush.bf16.msra.mxu0 %v449
    %637 = vmatpush.bf16.msra.mxu0 %v447
    %638 = vmatpush.bf16.msra.mxu0 %v445
    %639 = vmatpush.bf16.msra.mxu0 %v443
    %640 = vmatpush.bf16.msra.mxu0 %v441
    %641 = vmatmul.bf16.gmra.mxu0 %v141
    %v642 = vpop.f32.mrf.mxu0
    %v643 = vadd.f32 %v135, %v642
    %v644 = vpop.f32.mrf.mxu0
    %645 = vdwg.mxu0
    %646 = vmatpush.bf16.msra.mxu0 %v471
    %647 = vmatpush.bf16.msra.mxu0 %v469
    %648 = vmatpush.bf16.msra.mxu0 %v467
    %649 = vmatpush.bf16.msra.mxu0 %v465
    %650 = vmatpush.bf16.msra.mxu0 %v463
    %651 = vmatpush.bf16.msra.mxu0 %v461
    %652 = vmatpush.bf16.msra.mxu0 %v459
    %653 = vmatpush.bf16.msra.mxu0 %v457
    %654 = vmatmul.bf16.gmra.mxu0 %v142
    %v655 = vpop.f32.mrf.mxu0
    %v656 = vadd.f32 %v643, %v655
    %v657 = vpop.f32.mrf.mxu0
    %658 = vdwg.mxu0
    %659 = vmatpush.bf16.msra.mxu0 %v487
    %660 = vmatpush.bf16.msra.mxu0 %v485
    %661 = vmatpush.bf16.msra.mxu0 %v483
    %662 = vmatpush.bf16.msra.mxu0 %v481
    %663 = vmatpush.bf16.msra.mxu0 %v479
    %664 = vmatpush.bf16.msra.mxu0 %v477
    %665 = vmatpush.bf16.msra.mxu0 %v475
    %666 = vmatpush.bf16.msra.mxu0 %v473
    %667 = vmatmul.bf16.gmra.mxu0 %v143
    %v668 = vpop.f32.mrf.mxu0
    %v669 = vadd.f32 %v656, %v668
    %v670 = vpop.f32.mrf.mxu0
    %671 = vdwg.mxu0
    %672 = vmatpush.bf16.msra.mxu0 %v503
    %673 = vmatpush.bf16.msra.mxu0 %v501
    %674 = vmatpush.bf16.msra.mxu0 %v499
    %675 = vmatpush.bf16.msra.mxu0 %v497
    %676 = vmatpush.bf16.msra.mxu0 %v495
    %677 = vmatpush.bf16.msra.mxu0 %v493
    %678 = vmatpush.bf16.msra.mxu0 %v491
    %679 = vmatpush.bf16.msra.mxu0 %v489
    %680 = vmatmul.bf16.gmra.mxu0 %v144
    %v681 = vpop.f32.mrf.mxu0
    %v682 = vadd.f32 %v669, %v681
    %v683 = vpop.f32.mrf.mxu0
    %684 = vdwg.mxu0
    %685 = vmatpush.bf16.msra.mxu0 %v519
    %686 = vmatpush.bf16.msra.mxu0 %v517
    %687 = vmatpush.bf16.msra.mxu0 %v515
    %688 = vmatpush.bf16.msra.mxu0 %v513
    %689 = vmatpush.bf16.msra.mxu0 %v511
    %690 = vmatpush.bf16.msra.mxu0 %v509
    %691 = vmatpush.bf16.msra.mxu0 %v507
    %692 = vmatpush.bf16.msra.mxu0 %v505
    %693 = vmatmul.bf16.gmra.mxu0 %v145
    %v694 = vpop.f32.mrf.mxu0
    %v695 = vadd.f32 %v682, %v694
    %v696 = vpop.f32.mrf.mxu0
    %697 = vdwg.mxu0
    %698 = vmatpush.bf16.msra.mxu0 %v535
    %699 = vmatpush.bf16.msra.mxu0 %v533
    %700 = vmatpush.bf16.msra.mxu0 %v531
    %701 = vmatpush.bf16.msra.mxu0 %v529
    %702 = vmatpush.bf16.msra.mxu0 %v527
    %703 = vmatpush.bf16.msra.mxu0 %v525
    %704 = vmatpush.bf16.msra.mxu0 %v523
    %705 = vmatpush.bf16.msra.mxu0 %v521
    %706 = vmatmul.bf16.gmra.mxu0 %v146
    %v707 = vpop.f32.mrf.mxu0
    %v708 = vadd.f32 %v695, %v707
    %v709 = vpop.f32.mrf.mxu0
    %710 = vdwg.mxu0
    %711 = vmatpush.bf16.msra.mxu0 %v456
    %712 = vmatpush.bf16.msra.mxu0 %v454
    %713 = vmatpush.bf16.msra.mxu0 %v452
    %714 = vmatpush.bf16.msra.mxu0 %v450
    %715 = vmatpush.bf16.msra.mxu0 %v448
    %716 = vmatpush.bf16.msra.mxu0 %v446
    %717 = vmatpush.bf16.msra.mxu0 %v444
    %718 = vmatpush.bf16.msra.mxu0 %v442
    %719 = vmatmul.bf16.gmra.mxu0 %v141
    %v720 = vpop.f32.mrf.mxu0
    %v721 = vadd.f32 %v136, %v720
    %v722 = vpop.f32.mrf.mxu0
    %723 = vdwg.mxu0
    %724 = vmatpush.bf16.msra.mxu0 %v472
    %725 = vmatpush.bf16.msra.mxu0 %v470
    %726 = vmatpush.bf16.msra.mxu0 %v468
    %727 = vmatpush.bf16.msra.mxu0 %v466
    %728 = vmatpush.bf16.msra.mxu0 %v464
    %729 = vmatpush.bf16.msra.mxu0 %v462
    %730 = vmatpush.bf16.msra.mxu0 %v460
    %731 = vmatpush.bf16.msra.mxu0 %v458
    %732 = vmatmul.bf16.gmra.mxu0 %v142
    %v733 = vpop.f32.mrf.mxu0
    %v734 = vadd.f32 %v721, %v733
    %v735 = vpop.f32.mrf.mxu0
    %736 = vdwg.mxu0
    %737 = vmatpush.bf16.msra.mxu0 %v488
    %738 = vmatpush.bf16.msra.mxu0 %v486
    %739 = vmatpush.bf16.msra.mxu0 %v484
    %740 = vmatpush.bf16.msra.mxu0 %v482
    %741 = vmatpush.bf16.msra.mxu0 %v480
    %742 = vmatpush.bf16.msra.mxu0 %v478
    %743 = vmatpush.bf16.msra.mxu0 %v476
    %744 = vmatpush.bf16.msra.mxu0 %v474
    %745 = vmatmul.bf16.gmra.mxu0 %v143
    %v746 = vpop.f32.mrf.mxu0
    %v747 = vadd.f32 %v734, %v746
    %v748 = vpop.f32.mrf.mxu0
    %749 = vdwg.mxu0
    %750 = vmatpush.bf16.msra.mxu0 %v504
    %751 = vmatpush.bf16.msra.mxu0 %v502
    %752 = vmatpush.bf16.msra.mxu0 %v500
    %753 = vmatpush.bf16.msra.mxu0 %v498
    %754 = vmatpush.bf16.msra.mxu0 %v496
    %755 = vmatpush.bf16.msra.mxu0 %v494
    %756 = vmatpush.bf16.msra.mxu0 %v492
    %757 = vmatpush.bf16.msra.mxu0 %v490
    %758 = vmatmul.bf16.gmra.mxu0 %v144
    %v759 = vpop.f32.mrf.mxu0
    %v760 = vadd.f32 %v747, %v759
    %v761 = vpop.f32.mrf.mxu0
    %762 = vdwg.mxu0
    %763 = vmatpush.bf16.msra.mxu0 %v520
    %764 = vmatpush.bf16.msra.mxu0 %v518
    %765 = vmatpush.bf16.msra.mxu0 %v516
    %766 = vmatpush.bf16.msra.mxu0 %v514
    %767 = vmatpush.bf16.msra.mxu0 %v512
    %768 = vmatpush.bf16.msra.mxu0 %v510
    %769 = vmatpush.bf16.msra.mxu0 %v508
    %770 = vmatpush.bf16.msra.mxu0 %v506
    %771 = vmatmul.bf16.gmra.mxu0 %v145
    %v772 = vpop.f32.mrf.mxu0
    %v773 = vadd.f32 %v760, %v772
    %v774 = vpop.f32.mrf.mxu0
    %775 = vdwg.mxu0
    %776 = vmatpush.bf16.msra.mxu0 %v536
    %777 = vmatpush.bf16.msra.mxu0 %v534
    %778 = vmatpush.bf16.msra.mxu0 %v532
    %779 = vmatpush.bf16.msra.mxu0 %v530
    %780 = vmatpush.bf16.msra.mxu0 %v528
    %781 = vmatpush.bf16.msra.mxu0 %v526
    %782 = vmatpush.bf16.msra.mxu0 %v524
    %783 = vmatpush.bf16.msra.mxu0 %v522
    %784 = vmatmul.bf16.gmra.mxu0 %v146
    %v785 = vpop.f32.mrf.mxu0
    %v786 = vadd.f32 %v773, %v785
    %v787 = vpop.f32.mrf.mxu0
    %788 = vdwg.mxu0
    %v789 = vld [vmem:[%s1] sm:$0xf]
    %791 = vst [vmem:[#allocation1] ss:$4 sm:$0xff] %v789
    %v792 = vld.sshfl [vmem:[#allocation1] sm:$0xff pattern:$0x73625140]
    %v793 = vld.sshfl [vmem:[#allocation1 + $0x8] sm:$0xff pattern:$0x73625140]
    %v796 = vadd.f32 %v708, %v792
    %v797 = vadd.f32 %v786, %v793
    %v798 = vld [vmem:[%s6] sm:$0x1f]
    %v799 = vld [vmem:[%s6 + $0x8] sm:$0x1f]
    %v800 = vld [vmem:[%s7] sm:$0x1f]
    %v801 = vld [vmem:[%s7 + $0x8] sm:$0x1f]
    %v802 = vld [vmem:[%s8] sm:$0xff]
    %v803 = vadd.f32 %v796, 0.5
    %v804 = vadd.f32 %v797, 0.5
    %v805 = vperm.slane %v798, 0
    %v806 = vperm.slane %v799, 0
    %v807 = vmul.f32 %v803, %v805
    %v808 = vmul.f32 %v804, %v806
    %v809 = vperm.slane %v800, 0
    %v810 = vperm.slane %v801, 0
    %v811 = vadd.f32 %v807, %v809
    %v812 = vadd.f32 %v808, %v810
    %v813 = vtanh.pop %v811
    %v814 = vtanh.pop %v812
    %v816 = vperm.slane %v802, 0
    %v817 = vperm.slane %v802, 4
    %v820 = vperm.slane %v816, 0
    %v821 = vperm.slane %v817, 0
    %v822 = vmul.f32 %v820, %v813
    %v823 = vmul.f32 %v821, %v814
    %v824 = vadd.f32 %v811, %v822
    %v825 = vadd.f32 %v812, %v823
    %v826 = vperm.slane %v798, 1
    %v827 = vperm.slane %v799, 1
    %v828 = vmul.f32 %v824, %v826
    %v829 = vmul.f32 %v825, %v827
    %v830 = vperm.slane %v800, 1
    %v831 = vperm.slane %v801, 1
    %v832 = vadd.f32 %v828, %v830
    %v833 = vadd.f32 %v829, %v831
    %v834 = vtanh.pop %v832
    %v835 = vtanh.pop %v833
    %v836 = vperm.slane %v802, 1
    %v837 = vperm.slane %v802, 5
    %v840 = vperm.slane %v836, 1
    %v841 = vperm.slane %v837, 1
    %v842 = vmul.f32 %v840, %v834
    %v843 = vmul.f32 %v841, %v835
    %v844 = vadd.f32 %v832, %v842
    %v845 = vadd.f32 %v833, %v843
    %v846 = vperm.slane %v798, 2
    %v847 = vperm.slane %v799, 2
    %v848 = vmul.f32 %v844, %v846
    %v849 = vmul.f32 %v845, %v847
    %v850 = vperm.slane %v800, 2
    %v851 = vperm.slane %v801, 2
    %v852 = vadd.f32 %v848, %v850
    %v853 = vadd.f32 %v849, %v851
    %v854 = vtanh.pop %v852
    %v855 = vtanh.pop %v853
    %v856 = vperm.slane %v802, 2
    %v857 = vperm.slane %v802, 6
    %v860 = vperm.slane %v856, 2
    %v861 = vperm.slane %v857, 2
    %v862 = vmul.f32 %v860, %v854
    %v863 = vmul.f32 %v861, %v855
    %v864 = vadd.f32 %v852, %v862
    %v865 = vadd.f32 %v853, %v863
    %v866 = vperm.slane %v798, 3
    %v867 = vperm.slane %v799, 3
    %v868 = vmul.f32 %v864, %v866
    %v869 = vmul.f32 %v865, %v867
    %v870 = vperm.slane %v800, 3
    %v871 = vperm.slane %v801, 3
    %v872 = vadd.f32 %v868, %v870
    %v873 = vadd.f32 %v869, %v871
    %v874 = vtanh.pop %v872
    %v875 = vtanh.pop %v873
    %v876 = vperm.slane %v802, 3
    %v877 = vperm.slane %v802, 7
    %v880 = vperm.slane %v876, 3
    %v881 = vperm.slane %v877, 3
    %v882 = vmul.f32 %v880, %v874
    %v883 = vmul.f32 %v881, %v875
    %v884 = vadd.f32 %v872, %v882
    %v885 = vadd.f32 %v873, %v883
    %v886 = vperm.slane %v798, 4
    %v887 = vperm.slane %v799, 4
    %v888 = vmul.f32 %v884, %v886
    %v889 = vmul.f32 %v885, %v887
    %v890 = vperm.slane %v800, 4
    %v891 = vperm.slane %v801, 4
    %v892 = vadd.f32 %v888, %v890
    %v893 = vadd.f32 %v889, %v891
    %v894 = vxor.u32 %v892, 2147483648
    %v895 = vxor.u32 %v893, 2147483648
    %v896 = vmul.f32 %v894, 1.442695
    %v897 = vpow.pop %v896
    %v898 = vmul.f32 %v895, 1.442695
    %v899 = vpow.pop %v898
    %v900 = vadd.f32 %v897, 1.0
    %v901 = vadd.f32 %v899, 1.0
    %v902 = vrcp.pop %v900
    %v903 = vmul.f32 %v900, %v902
    %v904 = vsub.f32 1.0, %v903
    %v905 = vmul.f32 %v902, %v904
    %v906 = vadd.f32 %v902, %v905
    %vm907 = vweird.f32 %v900
    %vm908 = vweird.f32 %v902
    %vm909 = vmor %vm907, %vm908
    %v910 = vsel %vm909, %v902, %v906
    %v911 = vand.u32 2147483647, %v900
    %vm912 = vcmp.eq.f32.partialorder %v911, 8.507059e+37
    %v913 = vand.u32 %v900, 2147483648
    %v914 = vor.u32 1.1754944e-38, %v913
    %v915 = vsel %vm912, %v914, %v910
    %v916 = vmul.f32 1.0, %v915
    %v917 = vrcp.pop %v901
    %v918 = vmul.f32 %v901, %v917
    %v919 = vsub.f32 1.0, %v918
    %v920 = vmul.f32 %v917, %v919
    %v921 = vadd.f32 %v917, %v920
    %vm922 = vweird.f32 %v901
    %vm923 = vweird.f32 %v917
    %vm924 = vmor %vm922, %vm923
    %v925 = vsel %vm924, %v917, %v921
    %v926 = vand.u32 2147483647, %v901
    %vm927 = vcmp.eq.f32.partialorder %v926, 8.507059e+37
    %v928 = vand.u32 %v901, 2147483648
    %v929 = vor.u32 1.1754944e-38, %v928
    %v930 = vsel %vm927, %v929, %v925
    %v931 = vmul.f32 1.0, %v930
    %v932 = vsub.f32 %v796, 0.5
    %v933 = vsub.f32 %v797, 0.5
    %v934 = vmul.f32 %v932, %v805
    %v935 = vmul.f32 %v933, %v806
    %v936 = vadd.f32 %v934, %v809
    %v937 = vadd.f32 %v935, %v810
    %v938 = vtanh.pop %v936
    %v939 = vtanh.pop %v937
    %v940 = vmul.f32 %v820, %v938
    %v941 = vmul.f32 %v821, %v939
    %v942 = vadd.f32 %v936, %v940
    %v943 = vadd.f32 %v937, %v941
    %v944 = vmul.f32 %v942, %v826
    %v945 = vmul.f32 %v943, %v827
    %v946 = vadd.f32 %v944, %v830
    %v947 = vadd.f32 %v945, %v831
    %v948 = vtanh.pop %v946
    %v949 = vtanh.pop %v947
    %v950 = vmul.f32 %v840, %v948
    %v951 = vmul.f32 %v841, %v949
    %v952 = vadd.f32 %v946, %v950
    %v953 = vadd.f32 %v947, %v951
    %v954 = vmul.f32 %v952, %v846
    %v955 = vmul.f32 %v953, %v847
    %v956 = vadd.f32 %v954, %v850
    %v957 = vadd.f32 %v955, %v851
    %v958 = vtanh.pop %v956
    %v959 = vtanh.pop %v957
    %v960 = vmul.f32 %v860, %v958
    %v961 = vmul.f32 %v861, %v959
    %v962 = vadd.f32 %v956, %v960
    %v963 = vadd.f32 %v957, %v961
    %v964 = vmul.f32 %v962, %v866
    %v965 = vmul.f32 %v963, %v867
    %v966 = vadd.f32 %v964, %v870
    %v967 = vadd.f32 %v965, %v871
    %v968 = vtanh.pop %v966
    %v969 = vtanh.pop %v967
    %v970 = vmul.f32 %v880, %v968
    %v971 = vmul.f32 %v881, %v969
    %v972 = vadd.f32 %v966, %v970
    %v973 = vadd.f32 %v967, %v971
    %v974 = vmul.f32 %v972, %v886
    %v975 = vmul.f32 %v973, %v887
    %v976 = vadd.f32 %v974, %v890
    %v977 = vadd.f32 %v975, %v891
    %v978 = vxor.u32 %v976, 2147483648
    %v979 = vxor.u32 %v977, 2147483648
    %v980 = vmul.f32 %v978, 1.442695
    %v981 = vpow.pop %v980
    %v982 = vmul.f32 %v979, 1.442695
    %v983 = vpow.pop %v982
    %v984 = vadd.f32 %v981, 1.0
    %v985 = vadd.f32 %v983, 1.0
    %v986 = vrcp.pop %v984
    %v987 = vmul.f32 %v984, %v986
    %v988 = vsub.f32 1.0, %v987
    %v989 = vmul.f32 %v986, %v988
    %v990 = vadd.f32 %v986, %v989
    %vm991 = vweird.f32 %v984
    %vm992 = vweird.f32 %v986
    %vm993 = vmor %vm991, %vm992
    %v994 = vsel %vm993, %v986, %v990
    %v995 = vand.u32 2147483647, %v984
    %vm996 = vcmp.eq.f32.partialorder %v995, 8.507059e+37
    %v997 = vand.u32 %v984, 2147483648
    %v998 = vor.u32 1.1754944e-38, %v997
    %v999 = vsel %vm996, %v998, %v994
    %v1000 = vmul.f32 1.0, %v999
    %v1001 = vrcp.pop %v985
    %v1002 = vmul.f32 %v985, %v1001
    %v1003 = vsub.f32 1.0, %v1002
    %v1004 = vmul.f32 %v1001, %v1003
    %v1005 = vadd.f32 %v1001, %v1004
    %vm1006 = vweird.f32 %v985
    %vm1007 = vweird.f32 %v1001
    %vm1008 = vmor %vm1006, %vm1007
    %v1009 = vsel %vm1008, %v1001, %v1005
    %v1010 = vand.u32 2147483647, %v985
    %vm1011 = vcmp.eq.f32.partialorder %v1010, 8.507059e+37
    %v1012 = vand.u32 %v985, 2147483648
    %v1013 = vor.u32 1.1754944e-38, %v1012
    %v1014 = vsel %vm1011, %v1013, %v1009
    %v1015 = vmul.f32 1.0, %v1014
    %v1016 = vsub.f32 %v916, %v1000
    %v1017 = vsub.f32 %v931, %v1015
    %v1018 = vmax.f32 %v1016, 1e-10
    %v1019 = vmax.f32 %v1017, 1e-10
    %v1020 = vmin.f32 %v1018, 1.0
    %v1021 = vmin.f32 %v1019, 1.0
    %v1022 = vlog2.pop %v1020
    %v1023 = vmul.f32 %v1022, 0.6931472
    %v1024 = vlog2.pop %v1021
    %v1025 = vmul.f32 %v1024, 0.6931472
    %v1026 = vsub.f32 0.0, %v1023
    %v1027 = vsub.f32 0.0, %v1025
    %v1028 = vmul.f32 %v1026, 1.442695
    %v1029 = vmul.f32 %v1027, 1.442695
    %vm1030 = vcmask 1041408
    %v1031 = vsel %vm1030, %v1028, 0.0
    %vm1032 = vcmask 517120
    %v1033 = vsel %vm1032, %v1029, 0.0
    %v1034 = vadd.f32 %v1031, %v1033
    %1035 = vadd.xlane.f32.xlu0 %v1034
    %v1036 = vpop.xlane.xlu0 %1035
    %v1037 = vrot.slane %v1036, 4
    %v1038 = vadd.f32 %v1036, %v1037
    %v1039 = vrot.slane %v1038, 2
    %v1040 = vadd.f32 %v1038, %v1039
    %v1041 = vrot.slane %v1040, 1
    %v1042 = vadd.f32 %v1040, %v1041
    %s1043 = vtos %v1042
    %v1044 = vstv %s1043
    %vm1045 = vcmask 0
    %1046 = vst.msk [vmem:[#allocation2] sm:$0x1] %vm1045, %v1044
    %v1047 = vpack.c.bf16 %v796, %v796
    %v1048 = vpack.c.bf16 %v797, %v797
    %v1049 = vld [vmem:[%s4] sm:$0xff]
    %v1050 = vld [vmem:[%s4 + $0x8] sm:$0xff]
    %v1051 = vld [vmem:[%s4 + $0x10] sm:$0xff]
    %v1052 = vld [vmem:[%s4 + $0x18] sm:$0xff]
    %v1053 = vld [vmem:[%s4 + $0x20] sm:$0xff]
    %v1054 = vld [vmem:[%s4 + $0x28] sm:$0xff]
    %v1055 = vld [vmem:[%s4 + $0x30] sm:$0xff]
    %v1056 = vld [vmem:[%s4 + $0x38] sm:$0xff]
    %v1057 = vld [vmem:[%s4 + $0x40] sm:$0xff]
    %v1058 = vld [vmem:[%s4 + $0x48] sm:$0xff]
    %v1059 = vld [vmem:[%s4 + $0x50] sm:$0xff]
    %v1060 = vld [vmem:[%s4 + $0x58] sm:$0xff]
    %v1061 = vld [vmem:[%s4 + $0x60] sm:$0xff]
    %v1062 = vld [vmem:[%s4 + $0x68] sm:$0xff]
    %v1063 = vld [vmem:[%s4 + $0x70] sm:$0xff]
    %v1064 = vld [vmem:[%s4 + $0x78] sm:$0xff]
    %v1065 = vld [vmem:[%s4 + $0x80] sm:$0xff]
    %v1066 = vld [vmem:[%s4 + $0x88] sm:$0xff]
    %v1067 = vld [vmem:[%s4 + $0x90] sm:$0xff]
    %v1068 = vld [vmem:[%s4 + $0x98] sm:$0xff]
    %v1069 = vld [vmem:[%s4 + $0xa0] sm:$0xff]
    %v1070 = vld [vmem:[%s4 + $0xa8] sm:$0xff]
    %v1071 = vld [vmem:[%s4 + $0xb0] sm:$0xff]
    %v1072 = vld [vmem:[%s4 + $0xb8] sm:$0xff]
    %v1073 = vld [vmem:[%s4 + $0xc0] sm:$0xff]
    %v1074 = vld [vmem:[%s4 + $0xc8] sm:$0xff]
    %v1075 = vld [vmem:[%s4 + $0xd0] sm:$0xff]
    %v1076 = vld [vmem:[%s4 + $0xd8] sm:$0xff]
    %v1077 = vld [vmem:[%s4 + $0xe0] sm:$0xff]
    %v1078 = vld [vmem:[%s4 + $0xe8] sm:$0xff]
    %v1079 = vld [vmem:[%s4 + $0xf0] sm:$0xff]
    %v1080 = vld [vmem:[%s4 + $0xf8] sm:$0xff]
    %v1081 = vld [vmem:[%s4 + $0x100] sm:$0xff]
    %v1082 = vld [vmem:[%s4 + $0x108] sm:$0xff]
    %v1083 = vld [vmem:[%s4 + $0x110] sm:$0xff]
    %v1084 = vld [vmem:[%s4 + $0x118] sm:$0xff]
    %v1085 = vld [vmem:[%s4 + $0x120] sm:$0xff]
    %v1086 = vld [vmem:[%s4 + $0x128] sm:$0xff]
    %v1087 = vld [vmem:[%s4 + $0x130] sm:$0xff]
    %v1088 = vld [vmem:[%s4 + $0x138] sm:$0xff]
    %v1089 = vld [vmem:[%s4 + $0x140] sm:$0xff]
    %v1090 = vld [vmem:[%s4 + $0x148] sm:$0xff]
    %v1091 = vld [vmem:[%s4 + $0x150] sm:$0xff]
    %v1092 = vld [vmem:[%s4 + $0x158] sm:$0xff]
    %v1093 = vld [vmem:[%s4 + $0x160] sm:$0xff]
    %v1094 = vld [vmem:[%s4 + $0x168] sm:$0xff]
    %v1095 = vld [vmem:[%s4 + $0x170] sm:$0xff]
    %v1096 = vld [vmem:[%s4 + $0x178] sm:$0xff]
    %v1097 = vld [vmem:[%s4 + $0x180] sm:$0xff]
    %v1098 = vld [vmem:[%s4 + $0x188] sm:$0xff]
    %v1099 = vld [vmem:[%s4 + $0x190] sm:$0xff]
    %v1100 = vld [vmem:[%s4 + $0x198] sm:$0xff]
    %v1101 = vld [vmem:[%s4 + $0x1a0] sm:$0xff]
    %v1102 = vld [vmem:[%s4 + $0x1a8] sm:$0xff]
    %v1103 = vld [vmem:[%s4 + $0x1b0] sm:$0xff]
    %v1104 = vld [vmem:[%s4 + $0x1b8] sm:$0xff]
    %v1105 = vld [vmem:[%s4 + $0x1c0] sm:$0xff]
    %v1106 = vld [vmem:[%s4 + $0x1c8] sm:$0xff]
    %v1107 = vld [vmem:[%s4 + $0x1d0] sm:$0xff]
    %v1108 = vld [vmem:[%s4 + $0x1d8] sm:$0xff]
    %v1109 = vld [vmem:[%s4 + $0x1e0] sm:$0xff]
    %v1110 = vld [vmem:[%s4 + $0x1e8] sm:$0xff]
    %v1111 = vld [vmem:[%s4 + $0x1f0] sm:$0xff]
    %v1112 = vld [vmem:[%s4 + $0x1f8] sm:$0xff]
    %v1113 = vld [vmem:[%s4 + $0x200] sm:$0xff]
    %v1114 = vld [vmem:[%s4 + $0x208] sm:$0xff]
    %v1115 = vld [vmem:[%s4 + $0x210] sm:$0xff]
    %v1116 = vld [vmem:[%s4 + $0x218] sm:$0xff]
    %v1117 = vld [vmem:[%s4 + $0x220] sm:$0xff]
    %v1118 = vld [vmem:[%s4 + $0x228] sm:$0xff]
    %v1119 = vld [vmem:[%s4 + $0x230] sm:$0xff]
    %v1120 = vld [vmem:[%s4 + $0x238] sm:$0xff]
    %v1121 = vld [vmem:[%s5] sm:$0x3f]
    %v1123 = vperm.slane %v1121, 0
    %v1124 = vperm.slane %v1121, 1
    %v1125 = vperm.slane %v1121, 2
    %v1126 = vperm.slane %v1121, 3
    %v1127 = vperm.slane %v1121, 4
    %v1128 = vperm.slane %v1121, 5
    %v1207 = vunpack.c.l.b16 %v1049
    %v1208 = vunpack.c.h.b16 %v1049
    %v1209 = vunpack.c.l.b16 %v1050
    %v1210 = vunpack.c.h.b16 %v1050
    %v1211 = vunpack.c.l.b16 %v1051
    %v1212 = vunpack.c.h.b16 %v1051
    %v1213 = vunpack.c.l.b16 %v1052
    %v1214 = vunpack.c.h.b16 %v1052
    %v1215 = vunpack.c.l.b16 %v1053
    %v1216 = vunpack.c.h.b16 %v1053
    %v1217 = vunpack.c.l.b16 %v1054
    %v1218 = vunpack.c.h.b16 %v1054
    %v1219 = vunpack.c.l.b16 %v1055
    %v1220 = vunpack.c.h.b16 %v1055
    %v1221 = vunpack.c.l.b16 %v1056
    %v1222 = vunpack.c.h.b16 %v1056
    %v1223 = vunpack.c.l.b16 %v1057
    %v1224 = vunpack.c.h.b16 %v1057
    %v1225 = vunpack.c.l.b16 %v1058
    %v1226 = vunpack.c.h.b16 %v1058
    %v1227 = vunpack.c.l.b16 %v1059
    %v1228 = vunpack.c.h.b16 %v1059
    %v1229 = vunpack.c.l.b16 %v1060
    %v1230 = vunpack.c.h.b16 %v1060
    %v1231 = vunpack.c.l.b16 %v1061
    %v1232 = vunpack.c.h.b16 %v1061
    %v1233 = vunpack.c.l.b16 %v1062
    %v1234 = vunpack.c.h.b16 %v1062
    %v1235 = vunpack.c.l.b16 %v1063
    %v1236 = vunpack.c.h.b16 %v1063
    %v1237 = vunpack.c.l.b16 %v1064
    %v1238 = vunpack.c.h.b16 %v1064
    %v1239 = vunpack.c.l.b16 %v1065
    %v1240 = vunpack.c.h.b16 %v1065
    %v1241 = vunpack.c.l.b16 %v1066
    %v1242 = vunpack.c.h.b16 %v1066
    %v1243 = vunpack.c.l.b16 %v1067
    %v1244 = vunpack.c.h.b16 %v1067
    %v1245 = vunpack.c.l.b16 %v1068
    %v1246 = vunpack.c.h.b16 %v1068
    %v1247 = vunpack.c.l.b16 %v1069
    %v1248 = vunpack.c.h.b16 %v1069
    %v1249 = vunpack.c.l.b16 %v1070
    %v1250 = vunpack.c.h.b16 %v1070
    %v1251 = vunpack.c.l.b16 %v1071
    %v1252 = vunpack.c.h.b16 %v1071
    %v1253 = vunpack.c.l.b16 %v1072
    %v1254 = vunpack.c.h.b16 %v1072
    %v1255 = vunpack.c.l.b16 %v1073
    %v1256 = vunpack.c.h.b16 %v1073
    %v1257 = vunpack.c.l.b16 %v1074
    %v1258 = vunpack.c.h.b16 %v1074
    %v1259 = vunpack.c.l.b16 %v1075
    %v1260 = vunpack.c.h.b16 %v1075
    %v1261 = vunpack.c.l.b16 %v1076
    %v1262 = vunpack.c.h.b16 %v1076
    %v1263 = vunpack.c.l.b16 %v1077
    %v1264 = vunpack.c.h.b16 %v1077
    %v1265 = vunpack.c.l.b16 %v1078
    %v1266 = vunpack.c.h.b16 %v1078
    %v1267 = vunpack.c.l.b16 %v1079
    %v1268 = vunpack.c.h.b16 %v1079
    %v1269 = vunpack.c.l.b16 %v1080
    %v1270 = vunpack.c.h.b16 %v1080
    %v1271 = vunpack.c.l.b16 %v1081
    %v1272 = vunpack.c.h.b16 %v1081
    %v1273 = vunpack.c.l.b16 %v1082
    %v1274 = vunpack.c.h.b16 %v1082
    %v1275 = vunpack.c.l.b16 %v1083
    %v1276 = vunpack.c.h.b16 %v1083
    %v1277 = vunpack.c.l.b16 %v1084
    %v1278 = vunpack.c.h.b16 %v1084
    %v1279 = vunpack.c.l.b16 %v1085
    %v1280 = vunpack.c.h.b16 %v1085
    %v1281 = vunpack.c.l.b16 %v1086
    %v1282 = vunpack.c.h.b16 %v1086
    %v1283 = vunpack.c.l.b16 %v1087
    %v1284 = vunpack.c.h.b16 %v1087
    %v1285 = vunpack.c.l.b16 %v1088
    %v1286 = vunpack.c.h.b16 %v1088
    %v1287 = vunpack.c.l.b16 %v1089
    %v1288 = vunpack.c.h.b16 %v1089
    %v1289 = vunpack.c.l.b16 %v1090
    %v1290 = vunpack.c.h.b16 %v1090
    %v1291 = vunpack.c.l.b16 %v1091
    %v1292 = vunpack.c.h.b16 %v1091
    %v1293 = vunpack.c.l.b16 %v1092
    %v1294 = vunpack.c.h.b16 %v1092
    %v1295 = vunpack.c.l.b16 %v1093
    %v1296 = vunpack.c.h.b16 %v1093
    %v1297 = vunpack.c.l.b16 %v1094
    %v1298 = vunpack.c.h.b16 %v1094
    %v1299 = vunpack.c.l.b16 %v1095
    %v1300 = vunpack.c.h.b16 %v1095
    %v1301 = vunpack.c.l.b16 %v1096
    %v1302 = vunpack.c.h.b16 %v1096
    %v1303 = vunpack.c.l.b16 %v1097
    %v1304 = vunpack.c.h.b16 %v1097
    %v1305 = vunpack.c.l.b16 %v1098
    %v1306 = vunpack.c.h.b16 %v1098
    %v1307 = vunpack.c.l.b16 %v1099
    %v1308 = vunpack.c.h.b16 %v1099
    %v1309 = vunpack.c.l.b16 %v1100
    %v1310 = vunpack.c.h.b16 %v1100
    %v1311 = vunpack.c.l.b16 %v1101
    %v1312 = vunpack.c.h.b16 %v1101
    %v1313 = vunpack.c.l.b16 %v1102
    %v1314 = vunpack.c.h.b16 %v1102
    %v1315 = vunpack.c.l.b16 %v1103
    %v1316 = vunpack.c.h.b16 %v1103
    %v1317 = vunpack.c.l.b16 %v1104
    %v1318 = vunpack.c.h.b16 %v1104
    %v1319 = vunpack.c.l.b16 %v1105
    %v1320 = vunpack.c.h.b16 %v1105
    %v1321 = vunpack.c.l.b16 %v1106
    %v1322 = vunpack.c.h.b16 %v1106
    %v1323 = vunpack.c.l.b16 %v1107
    %v1324 = vunpack.c.h.b16 %v1107
    %v1325 = vunpack.c.l.b16 %v1108
    %v1326 = vunpack.c.h.b16 %v1108
    %v1327 = vunpack.c.l.b16 %v1109
    %v1328 = vunpack.c.h.b16 %v1109
    %v1329 = vunpack.c.l.b16 %v1110
    %v1330 = vunpack.c.h.b16 %v1110
    %v1331 = vunpack.c.l.b16 %v1111
    %v1332 = vunpack.c.h.b16 %v1111
    %v1333 = vunpack.c.l.b16 %v1112
    %v1334 = vunpack.c.h.b16 %v1112
    %v1335 = vunpack.c.l.b16 %v1113
    %v1336 = vunpack.c.h.b16 %v1113
    %v1337 = vunpack.c.l.b16 %v1114
    %v1338 = vunpack.c.h.b16 %v1114
    %v1339 = vunpack.c.l.b16 %v1115
    %v1340 = vunpack.c.h.b16 %v1115
    %v1341 = vunpack.c.l.b16 %v1116
    %v1342 = vunpack.c.h.b16 %v1116
    %v1343 = vunpack.c.l.b16 %v1117
    %v1344 = vunpack.c.h.b16 %v1117
    %v1345 = vunpack.c.l.b16 %v1118
    %v1346 = vunpack.c.h.b16 %v1118
    %v1347 = vunpack.c.l.b16 %v1119
    %v1348 = vunpack.c.h.b16 %v1119
    %v1349 = vunpack.c.l.b16 %v1120
    %v1350 = vunpack.c.h.b16 %v1120
    %v1351 = vpack.c.b16 %v1213, %v1207
    %v1352 = vpack.c.b16 %v1214, %v1208
    %v1353 = vpack.c.b16 %v1215, %v1209
    %v1354 = vpack.c.b16 %v1216, %v1210
    %v1355 = vpack.c.b16 %v1217, %v1211
    %v1356 = vpack.c.b16 %v1218, %v1212
    %v1357 = vpack.c.b16 %v1225, %v1219
    %v1358 = vpack.c.b16 %v1226, %v1220
    %v1359 = vpack.c.b16 %v1227, %v1221
    %v1360 = vpack.c.b16 %v1228, %v1222
    %v1361 = vpack.c.b16 %v1229, %v1223
    %v1362 = vpack.c.b16 %v1230, %v1224
    %v1363 = vpack.c.b16 %v1237, %v1231
    %v1364 = vpack.c.b16 %v1238, %v1232
    %v1365 = vpack.c.b16 %v1239, %v1233
    %v1366 = vpack.c.b16 %v1240, %v1234
    %v1367 = vpack.c.b16 %v1241, %v1235
    %v1368 = vpack.c.b16 %v1242, %v1236
    %v1369 = vpack.c.b16 %v1249, %v1243
    %v1370 = vpack.c.b16 %v1250, %v1244
    %v1371 = vpack.c.b16 %v1251, %v1245
    %v1372 = vpack.c.b16 %v1252, %v1246
    %v1373 = vpack.c.b16 %v1253, %v1247
    %v1374 = vpack.c.b16 %v1254, %v1248
    %v1375 = vpack.c.b16 %v1261, %v1255
    %v1376 = vpack.c.b16 %v1262, %v1256
    %v1377 = vpack.c.b16 %v1263, %v1257
    %v1378 = vpack.c.b16 %v1264, %v1258
    %v1379 = vpack.c.b16 %v1265, %v1259
    %v1380 = vpack.c.b16 %v1266, %v1260
    %v1381 = vpack.c.b16 %v1273, %v1267
    %v1382 = vpack.c.b16 %v1274, %v1268
    %v1383 = vpack.c.b16 %v1275, %v1269
    %v1384 = vpack.c.b16 %v1276, %v1270
    %v1385 = vpack.c.b16 %v1277, %v1271
    %v1386 = vpack.c.b16 %v1278, %v1272
    %v1387 = vpack.c.b16 %v1285, %v1279
    %v1388 = vpack.c.b16 %v1286, %v1280
    %v1389 = vpack.c.b16 %v1287, %v1281
    %v1390 = vpack.c.b16 %v1288, %v1282
    %v1391 = vpack.c.b16 %v1289, %v1283
    %v1392 = vpack.c.b16 %v1290, %v1284
    %v1393 = vpack.c.b16 %v1297, %v1291
    %v1394 = vpack.c.b16 %v1298, %v1292
    %v1395 = vpack.c.b16 %v1299, %v1293
    %v1396 = vpack.c.b16 %v1300, %v1294
    %v1397 = vpack.c.b16 %v1301, %v1295
    %v1398 = vpack.c.b16 %v1302, %v1296
    %v1399 = vpack.c.b16 %v1309, %v1303
    %v1400 = vpack.c.b16 %v1310, %v1304
    %v1401 = vpack.c.b16 %v1311, %v1305
    %v1402 = vpack.c.b16 %v1312, %v1306
    %v1403 = vpack.c.b16 %v1313, %v1307
    %v1404 = vpack.c.b16 %v1314, %v1308
    %v1405 = vpack.c.b16 %v1321, %v1315
    %v1406 = vpack.c.b16 %v1322, %v1316
    %v1407 = vpack.c.b16 %v1323, %v1317
    %v1408 = vpack.c.b16 %v1324, %v1318
    %v1409 = vpack.c.b16 %v1325, %v1319
    %v1410 = vpack.c.b16 %v1326, %v1320
    %v1411 = vpack.c.b16 %v1333, %v1327
    %v1412 = vpack.c.b16 %v1334, %v1328
    %v1413 = vpack.c.b16 %v1335, %v1329
    %v1414 = vpack.c.b16 %v1336, %v1330
    %v1415 = vpack.c.b16 %v1337, %v1331
    %v1416 = vpack.c.b16 %v1338, %v1332
    %v1417 = vpack.c.b16 %v1345, %v1339
    %v1418 = vpack.c.b16 %v1346, %v1340
    %v1419 = vpack.c.b16 %v1347, %v1341
    %v1420 = vpack.c.b16 %v1348, %v1342
    %v1421 = vpack.c.b16 %v1349, %v1343
    %v1422 = vpack.c.b16 %v1350, %v1344
    %vm1495 = vcmask 523264
    %v1497 = vsel %vm1495, %v1048, 0
    %1499 = vmatpush.bf16.msra.mxu0 %v1393
    %1500 = vmatpush.bf16.msra.mxu0 %v1387
    %1501 = vmatpush.bf16.msra.mxu0 %v1381
    %1502 = vmatpush.bf16.msra.mxu0 %v1375
    %1503 = vmatpush.bf16.msra.mxu0 %v1369
    %1504 = vmatpush.bf16.msra.mxu0 %v1363
    %1505 = vmatpush.bf16.msra.mxu0 %v1357
    %1506 = vmatpush.bf16.msra.mxu0 %v1351
    %1507 = vmatmul.bf16.gmra.mxu0 %v1047
    %v1508 = vpop.f32.mrf.mxu0
    %v1509 = vadd.f32 %v1123, %v1508
    %v1510 = vpop.f32.mrf.mxu0
    %1511 = vdwg.mxu0
    %1512 = vmatpush.bf16.msra.mxu0 0
    %1513 = vmatpush.bf16.msra.mxu0 0
    %1514 = vmatpush.bf16.msra.mxu0 0
    %1515 = vmatpush.bf16.msra.mxu0 0
    %1516 = vmatpush.bf16.msra.mxu0 %v1417
    %1517 = vmatpush.bf16.msra.mxu0 %v1411
    %1518 = vmatpush.bf16.msra.mxu0 %v1405
    %1519 = vmatpush.bf16.msra.mxu0 %v1399
    %1520 = vmatmul.bf16.gmra.mxu0 %v1497
    %v1521 = vpop.f32.mrf.mxu0
    %v1522 = vadd.f32 %v1509, %v1521
    %v1523 = vpop.f32.mrf.mxu0
    %1524 = vdwg.mxu0
    %1525 = vmatpush.bf16.msra.mxu0 %v1394
    %1526 = vmatpush.bf16.msra.mxu0 %v1388
    %1527 = vmatpush.bf16.msra.mxu0 %v1382
    %1528 = vmatpush.bf16.msra.mxu0 %v1376
    %1529 = vmatpush.bf16.msra.mxu0 %v1370
    %1530 = vmatpush.bf16.msra.mxu0 %v1364
    %1531 = vmatpush.bf16.msra.mxu0 %v1358
    %1532 = vmatpush.bf16.msra.mxu0 %v1352
    %1533 = vmatmul.bf16.gmra.mxu0 %v1047
    %v1534 = vpop.f32.mrf.mxu0
    %v1535 = vadd.f32 %v1124, %v1534
    %v1536 = vpop.f32.mrf.mxu0
    %1537 = vdwg.mxu0
    %1538 = vmatpush.bf16.msra.mxu0 0
    %1539 = vmatpush.bf16.msra.mxu0 0
    %1540 = vmatpush.bf16.msra.mxu0 0
    %1541 = vmatpush.bf16.msra.mxu0 0
    %1542 = vmatpush.bf16.msra.mxu0 %v1418
    %1543 = vmatpush.bf16.msra.mxu0 %v1412
    %1544 = vmatpush.bf16.msra.mxu0 %v1406
    %1545 = vmatpush.bf16.msra.mxu0 %v1400
    %1546 = vmatmul.bf16.gmra.mxu0 %v1497
    %v1547 = vpop.f32.mrf.mxu0
    %v1548 = vadd.f32 %v1535, %v1547
    %v1549 = vpop.f32.mrf.mxu0
    %1550 = vdwg.mxu0
    %1551 = vmatpush.bf16.msra.mxu0 %v1395
    %1552 = vmatpush.bf16.msra.mxu0 %v1389
    %1553 = vmatpush.bf16.msra.mxu0 %v1383
    %1554 = vmatpush.bf16.msra.mxu0 %v1377
    %1555 = vmatpush.bf16.msra.mxu0 %v1371
    %1556 = vmatpush.bf16.msra.mxu0 %v1365
    %1557 = vmatpush.bf16.msra.mxu0 %v1359
    %1558 = vmatpush.bf16.msra.mxu0 %v1353
    %1559 = vmatmul.bf16.gmra.mxu0 %v1047
    %v1560 = vpop.f32.mrf.mxu0
    %v1561 = vadd.f32 %v1125, %v1560
    %v1562 = vpop.f32.mrf.mxu0
    %1563 = vdwg.mxu0
    %1564 = vmatpush.bf16.msra.mxu0 0
    %1565 = vmatpush.bf16.msra.mxu0 0
    %1566 = vmatpush.bf16.msra.mxu0 0
    %1567 = vmatpush.bf16.msra.mxu0 0
    %1568 = vmatpush.bf16.msra.mxu0 %v1419
    %1569 = vmatpush.bf16.msra.mxu0 %v1413
    %1570 = vmatpush.bf16.msra.mxu0 %v1407
    %1571 = vmatpush.bf16.msra.mxu0 %v1401
    %1572 = vmatmul.bf16.gmra.mxu0 %v1497
    %v1573 = vpop.f32.mrf.mxu0
    %v1574 = vadd.f32 %v1561, %v1573
    %v1575 = vpop.f32.mrf.mxu0
    %1576 = vdwg.mxu0
    %1577 = vmatpush.bf16.msra.mxu0 %v1396
    %1578 = vmatpush.bf16.msra.mxu0 %v1390
    %1579 = vmatpush.bf16.msra.mxu0 %v1384
    %1580 = vmatpush.bf16.msra.mxu0 %v1378
    %1581 = vmatpush.bf16.msra.mxu0 %v1372
    %1582 = vmatpush.bf16.msra.mxu0 %v1366
    %1583 = vmatpush.bf16.msra.mxu0 %v1360
    %1584 = vmatpush.bf16.msra.mxu0 %v1354
    %1585 = vmatmul.bf16.gmra.mxu0 %v1047
    %v1586 = vpop.f32.mrf.mxu0
    %v1587 = vadd.f32 %v1126, %v1586
    %v1588 = vpop.f32.mrf.mxu0
    %1589 = vdwg.mxu0
    %1590 = vmatpush.bf16.msra.mxu0 0
    %1591 = vmatpush.bf16.msra.mxu0 0
    %1592 = vmatpush.bf16.msra.mxu0 0
    %1593 = vmatpush.bf16.msra.mxu0 0
    %1594 = vmatpush.bf16.msra.mxu0 %v1420
    %1595 = vmatpush.bf16.msra.mxu0 %v1414
    %1596 = vmatpush.bf16.msra.mxu0 %v1408
    %1597 = vmatpush.bf16.msra.mxu0 %v1402
    %1598 = vmatmul.bf16.gmra.mxu0 %v1497
    %v1599 = vpop.f32.mrf.mxu0
    %v1600 = vadd.f32 %v1587, %v1599
    %v1601 = vpop.f32.mrf.mxu0
    %1602 = vdwg.mxu0
    %1603 = vmatpush.bf16.msra.mxu0 %v1397
    %1604 = vmatpush.bf16.msra.mxu0 %v1391
    %1605 = vmatpush.bf16.msra.mxu0 %v1385
    %1606 = vmatpush.bf16.msra.mxu0 %v1379
    %1607 = vmatpush.bf16.msra.mxu0 %v1373
    %1608 = vmatpush.bf16.msra.mxu0 %v1367
    %1609 = vmatpush.bf16.msra.mxu0 %v1361
    %1610 = vmatpush.bf16.msra.mxu0 %v1355
    %1611 = vmatmul.bf16.gmra.mxu0 %v1047
    %v1612 = vpop.f32.mrf.mxu0
    %v1613 = vadd.f32 %v1127, %v1612
    %v1614 = vpop.f32.mrf.mxu0
    %1615 = vdwg.mxu0
    %1616 = vmatpush.bf16.msra.mxu0 0
    %1617 = vmatpush.bf16.msra.mxu0 0
    %1618 = vmatpush.bf16.msra.mxu0 0
    %1619 = vmatpush.bf16.msra.mxu0 0
    %1620 = vmatpush.bf16.msra.mxu0 %v1421
    %1621 = vmatpush.bf16.msra.mxu0 %v1415
    %1622 = vmatpush.bf16.msra.mxu0 %v1409
    %1623 = vmatpush.bf16.msra.mxu0 %v1403
    %1624 = vmatmul.bf16.gmra.mxu0 %v1497
    %v1625 = vpop.f32.mrf.mxu0
    %v1626 = vadd.f32 %v1613, %v1625
    %v1627 = vpop.f32.mrf.mxu0
    %1628 = vdwg.mxu0
    %1629 = vmatpush.bf16.msra.mxu0 %v1398
    %1630 = vmatpush.bf16.msra.mxu0 %v1392
    %1631 = vmatpush.bf16.msra.mxu0 %v1386
    %1632 = vmatpush.bf16.msra.mxu0 %v1380
    %1633 = vmatpush.bf16.msra.mxu0 %v1374
    %1634 = vmatpush.bf16.msra.mxu0 %v1368
    %1635 = vmatpush.bf16.msra.mxu0 %v1362
    %1636 = vmatpush.bf16.msra.mxu0 %v1356
    %1637 = vmatmul.bf16.gmra.mxu0 %v1047
    %v1638 = vpop.f32.mrf.mxu0
    %v1639 = vadd.f32 %v1128, %v1638
    %v1640 = vpop.f32.mrf.mxu0
    %1641 = vdwg.mxu0
    %1642 = vmatpush.bf16.msra.mxu0 0
    %1643 = vmatpush.bf16.msra.mxu0 0
    %1644 = vmatpush.bf16.msra.mxu0 0
    %1645 = vmatpush.bf16.msra.mxu0 0
    %1646 = vmatpush.bf16.msra.mxu0 %v1422
    %1647 = vmatpush.bf16.msra.mxu0 %v1416
    %1648 = vmatpush.bf16.msra.mxu0 %v1410
    %1649 = vmatpush.bf16.msra.mxu0 %v1404
    %1650 = vmatmul.bf16.gmra.mxu0 %v1497
    %v1651 = vpop.f32.mrf.mxu0
    %v1652 = vadd.f32 %v1639, %v1651
    %v1653 = vpop.f32.mrf.mxu0
    %1654 = vdwg.mxu0
    %v1655 = vpack.c.bf16 %v1548, %v1522
    %v1656 = vpack.c.bf16 %v1600, %v1574
    %v1657 = vpack.c.bf16 %v1652, %v1626
    %v1661 = vrot.slane %v1655, 3
    %v1662 = vrot.slane %v1656, 6
    %v1663 = vrot.slane %v1656, 1
    %v1664 = vrot.slane %v1657, 4
    %v1665 = vrot.slane %v1657, 7
    %vm1666 = vcmask 1040384
    %v1669 = vsel %vm1666, %v1655, %v1661
    %v1671 = vsel %vm1030, %v1669, %v1662
    %vm1672 = vcmask 1043459
    %v1675 = vsel %vm1672, %v1663, %v1664
    %vm1676 = vcmask 1044483
    %v1678 = vsel %vm1676, %v1675, %v1665
    %vm1679 = vcmask 1042432
    %v1680 = vsel %vm1679, %v1671, %v1678
    %1682 = vst [vmem:[%s10] sm:$0x3f] %v1680
    // Predicated region
    $region38: #{forward.10} parent=1 // pred_check
      _
    $region39: #{forward.10} parent=1 // pred_check_branch
      %1684 = sbr.rel (0) target = $region41
    $region40: #{forward.10} parent=1 // pred_region
      %1686 = vsyncadd [#allocation3], 0
      %s1688 = sshll.u32 [#allocation2], 4
      %s1689 = int_to_ptr.vmem [resolvable:$true] %s1688
      %s1690 = sshll.u32 %s9, 4
      %s1691 = int_to_ptr.hbm [resolvable:$true] %s1690
      %1693 = dma.vmem_to_hbm [thread:$0]  %s1689, 16, %s1691, [#allocation3]
    $region41: #{forward.10} parent=1 // pred_fallthru
      _
    // Predicated region
    $region42: #{forward.10} parent=1 // pred_check
      _
    $region43: #{forward.10} parent=1 // pred_check_branch
      %1695 = sbr.rel (0) target = $region45
    $region44: #{forward.10} parent=1 // pred_region
      _
    $region45: #{forward.10} parent=1 // pred_fallthru
      _
    // Predicated region
    $region46: #{forward.10} parent=1 // pred_check
      _
    $region47: #{forward.10} parent=1 // pred_check_branch
      %1697 = sbr.rel (0) target = $region49
    $region48: #{forward.10} parent=1 // pred_region
      %1699 = dma.done [#allocation3], 16
    $region49: #{forward.10} parent=1 // pred_fallthru
      _
    // Predicated region
    $region50: #{forward.10} parent=1 // pred_check
      _
    $region51: #{forward.10} parent=1 // pred_check_branch
      %1701 = sbr.rel (0) target = $region53
    $region52: #{forward.10} parent=1 // pred_region
      _
    $region53: #{forward.10} parent=1 // pred_fallthru
      _
    %1702 = vsyncpa [#allocation3], 1

// kernel: forward.12
$region0: #{forward.12}
  #allocation0 [shape = 'u32[]', space=smem, size = 0x4, offset = 0x4, fixed_abs, tag = 'smem constant byte address 0x4 - core index']
  #allocation1 [shape = 'u32[72,128]{1,0:T(1,128)}', space=vmem, size = 0x9000, scoped, tag = 'internal scratch']
  %s0 = inlined_call_operand.vmem [shape: bf16[32,192], index: 0, kind: input, shape index: {}]
  %s1 = inlined_call_operand.vmem [shape: bf16[192,192], index: 1, kind: input, shape index: {}]
  %s2 = inlined_call_operand.vmem [shape: f32[1,192], index: 2, kind: input, shape index: {}]
  %s3 = inlined_call_operand.vmem [shape: bf16[192,768], index: 3, kind: input, shape index: {}]
  %s4 = inlined_call_operand.vmem [shape: f32[1,768], index: 4, kind: input, shape index: {}]
  %s5 = inlined_call_operand.vmem [shape: bf16[32,768], index: 5, kind: output, shape index: {}]
  %s6 = sld [smem:[#allocation0]]
  $region30: #{forward.12} parent=0
    _
  %s8 = ssub.s32 1, %s6
  %s9 = scalar_select 0, %s8, %s6
  // Predicated region
  $region2: #{forward.12} parent=0 // pred_check
    _
  $region3: #{forward.12} parent=0 // pred_check_branch
    %11 = sbr.rel (0) target = $region5
  $region4: #{forward.12} parent=0 // pred_region
    _
  $region5: #{forward.12} parent=0 // pred_fallthru
    _
  // Predicated region
  $region6: #{forward.12} parent=0 // pred_check
    _
  $region7: #{forward.12} parent=0 // pred_check_branch
    %13 = sbr.rel (0) target = $region9
  $region8: #{forward.12} parent=0 // pred_region
    _
  $region9: #{forward.12} parent=0 // pred_fallthru
    _
  // Predicated region
  $region10: #{forward.12} parent=0 // pred_check
    _
  $region11: #{forward.12} parent=0 // pred_check_branch
    %15 = sbr.rel (0) target = $region13
  $region12: #{forward.12} parent=0 // pred_region
    _
  $region13: #{forward.12} parent=0 // pred_fallthru
    _
  // Predicated region
  $region14: #{forward.12} parent=0 // pred_check
    _
  $region15: #{forward.12} parent=0 // pred_check_branch
    %17 = sbr.rel (0) target = $region17
  $region16: #{forward.12} parent=0 // pred_region
    _
  $region17: #{forward.12} parent=0 // pred_fallthru
    _
  // Predicated region
  $region18: #{forward.12} parent=0 // pred_check
    _
  $region19: #{forward.12} parent=0 // pred_check_branch
    %19 = sbr.rel (0) target = $region21
  $region20: #{forward.12} parent=0 // pred_region
    _
  $region21: #{forward.12} parent=0 // pred_fallthru
    _
  %v21 = vld [vmem:[%s0] sm:$0xff]
  %v22 = vld [vmem:[%s0 + $0x8] sm:$0xff]
  %v23 = vld [vmem:[%s0 + $0x10] sm:$0xff]
  %v24 = vld [vmem:[%s0 + $0x18] sm:$0xff]
  %v25 = vunpack.c.l.bf16 %v21
  %v26 = vunpack.c.h.bf16 %v21
  %v27 = vunpack.c.l.bf16 %v22
  %v28 = vunpack.c.h.bf16 %v22
  %v29 = vunpack.c.l.bf16 %v23
  %v30 = vunpack.c.h.bf16 %v23
  %v31 = vunpack.c.l.bf16 %v24
  %v32 = vunpack.c.h.bf16 %v24
  %v33 = vmul.f32 %v25, %v25
  %v34 = vmul.f32 %v26, %v26
  %v35 = vmul.f32 %v27, %v27
  %v36 = vmul.f32 %v28, %v28
  %v37 = vmul.f32 %v29, %v29
  %v38 = vmul.f32 %v30, %v30
  %v39 = vmul.f32 %v31, %v31
  %v40 = vmul.f32 %v32, %v32
  %v41 = vpack.c.bf16 %v35, %v33
  %v42 = vpack.c.bf16 %v36, %v34
  %v43 = vpack.c.bf16 %v39, %v37
  %v44 = vpack.c.bf16 %v40, %v38
  %v45 = vld [vmem:[%s1] sm:$0xff]
  %v46 = vld [vmem:[%s1 + $0x8] sm:$0xff]
  %v47 = vld [vmem:[%s1 + $0x10] sm:$0xff]
  %v48 = vld [vmem:[%s1 + $0x18] sm:$0xff]
  %v49 = vld [vmem:[%s1 + $0x20] sm:$0xff]
  %v50 = vld [vmem:[%s1 + $0x28] sm:$0xff]
  %v51 = vld [vmem:[%s1 + $0x30] sm:$0xff]
  %v52 = vld [vmem:[%s1 + $0x38] sm:$0xff]
  %v53 = vld [vmem:[%s1 + $0x40] sm:$0xff]
  %v54 = vld [vmem:[%s1 + $0x48] sm:$0xff]
  %v55 = vld [vmem:[%s1 + $0x50] sm:$0xff]
  %v56 = vld [vmem:[%s1 + $0x58] sm:$0xff]
  %v57 = vld [vmem:[%s1 + $0x60] sm:$0xff]
  %v58 = vld [vmem:[%s1 + $0x68] sm:$0xff]
  %v59 = vld [vmem:[%s1 + $0x70] sm:$0xff]
  %v60 = vld [vmem:[%s1 + $0x78] sm:$0xff]
  %v61 = vld [vmem:[%s1 + $0x80] sm:$0xff]
  %v62 = vld [vmem:[%s1 + $0x88] sm:$0xff]
  %v63 = vld [vmem:[%s1 + $0x90] sm:$0xff]
  %v64 = vld [vmem:[%s1 + $0x98] sm:$0xff]
  %v65 = vld [vmem:[%s1 + $0xa0] sm:$0xff]
  %v66 = vld [vmem:[%s1 + $0xa8] sm:$0xff]
  %v67 = vld [vmem:[%s1 + $0xb0] sm:$0xff]
  %v68 = vld [vmem:[%s1 + $0xb8] sm:$0xff]
  %v69 = vld [vmem:[%s2] sm:$0x3]
  %v71 = vperm.slane %v69, 0
  %v72 = vperm.slane %v69, 1
  %v99 = vunpack.c.l.b16 %v45
  %v100 = vunpack.c.h.b16 %v45
  %v101 = vunpack.c.l.b16 %v46
  %v102 = vunpack.c.h.b16 %v46
  %v103 = vunpack.c.l.b16 %v47
  %v104 = vunpack.c.h.b16 %v47
  %v105 = vunpack.c.l.b16 %v48
  %v106 = vunpack.c.h.b16 %v48
  %v107 = vunpack.c.l.b16 %v49
  %v108 = vunpack.c.h.b16 %v49
  %v109 = vunpack.c.l.b16 %v50
  %v110 = vunpack.c.h.b16 %v50
  %v111 = vunpack.c.l.b16 %v51
  %v112 = vunpack.c.h.b16 %v51
  %v113 = vunpack.c.l.b16 %v52
  %v114 = vunpack.c.h.b16 %v52
  %v115 = vunpack.c.l.b16 %v53
  %v116 = vunpack.c.h.b16 %v53
  %v117 = vunpack.c.l.b16 %v54
  %v118 = vunpack.c.h.b16 %v54
  %v119 = vunpack.c.l.b16 %v55
  %v120 = vunpack.c.h.b16 %v55
  %v121 = vunpack.c.l.b16 %v56
  %v122 = vunpack.c.h.b16 %v56
  %v123 = vunpack.c.l.b16 %v57
  %v124 = vunpack.c.h.b16 %v57
  %v125 = vunpack.c.l.b16 %v58
  %v126 = vunpack.c.h.b16 %v58
  %v127 = vunpack.c.l.b16 %v59
  %v128 = vunpack.c.h.b16 %v59
  %v129 = vunpack.c.l.b16 %v60
  %v130 = vunpack.c.h.b16 %v60
  %v131 = vunpack.c.l.b16 %v61
  %v132 = vunpack.c.h.b16 %v61
  %v133 = vunpack.c.l.b16 %v62
  %v134 = vunpack.c.h.b16 %v62
  %v135 = vunpack.c.l.b16 %v63
  %v136 = vunpack.c.h.b16 %v63
  %v137 = vunpack.c.l.b16 %v64
  %v138 = vunpack.c.h.b16 %v64
  %v139 = vunpack.c.l.b16 %v65
  %v140 = vunpack.c.h.b16 %v65
  %v141 = vunpack.c.l.b16 %v66
  %v142 = vunpack.c.h.b16 %v66
  %v143 = vunpack.c.l.b16 %v67
  %v144 = vunpack.c.h.b16 %v67
  %v145 = vunpack.c.l.b16 %v68
  %v146 = vunpack.c.h.b16 %v68
  %v147 = vpack.c.b16 %v101, %v99
  %v148 = vpack.c.b16 %v102, %v100
  %v149 = vpack.c.b16 %v105, %v103
  %v150 = vpack.c.b16 %v106, %v104
  %v151 = vpack.c.b16 %v109, %v107
  %v152 = vpack.c.b16 %v110, %v108
  %v153 = vpack.c.b16 %v113, %v111
  %v154 = vpack.c.b16 %v114, %v112
  %v155 = vpack.c.b16 %v117, %v115
  %v156 = vpack.c.b16 %v118, %v116
  %v157 = vpack.c.b16 %v121, %v119
  %v158 = vpack.c.b16 %v122, %v120
  %v159 = vpack.c.b16 %v125, %v123
  %v160 = vpack.c.b16 %v126, %v124
  %v161 = vpack.c.b16 %v129, %v127
  %v162 = vpack.c.b16 %v130, %v128
  %v163 = vpack.c.b16 %v133, %v131
  %v164 = vpack.c.b16 %v134, %v132
  %v165 = vpack.c.b16 %v137, %v135
  %v166 = vpack.c.b16 %v138, %v136
  %v167 = vpack.c.b16 %v141, %v139
  %v168 = vpack.c.b16 %v142, %v140
  %v169 = vpack.c.b16 %v145, %v143
  %v170 = vpack.c.b16 %v146, %v144
  %vm195 = vcmask 523264
  %v197 = vsel %vm195, %v42, 0
  %v200 = vsel %vm195, %v44, 0
  %202 = vmatpush.bf16.msra.mxu0 %v161
  %203 = vmatpush.bf16.msra.mxu0 %v159
  %204 = vmatpush.bf16.msra.mxu0 %v157
  %205 = vmatpush.bf16.msra.mxu0 %v155
  %206 = vmatpush.bf16.msra.mxu0 %v153
  %207 = vmatpush.bf16.msra.mxu0 %v151
  %208 = vmatpush.bf16.msra.mxu0 %v149
  %209 = vmatpush.bf16.msra.mxu0 %v147
  %210 = vmatmul.bf16.gmra.mxu0 %v41
  %v211 = vpop.f32.mrf.mxu0
  %v212 = vadd.f32 %v71, %v211
  %v213 = vpop.f32.mrf.mxu0
  %v214 = vadd.f32 %v71, %v213
  %215 = vmatmul.bf16.gmra.mxu0 %v43
  %v216 = vpop.f32.mrf.mxu0
  %v217 = vadd.f32 %v71, %v216
  %v218 = vpop.f32.mrf.mxu0
  %v219 = vadd.f32 %v71, %v218
  %220 = vdwg.mxu0
  %221 = vmatpush.bf16.msra.mxu0 0
  %222 = vmatpush.bf16.msra.mxu0 0
  %223 = vmatpush.bf16.msra.mxu0 0
  %224 = vmatpush.bf16.msra.mxu0 0
  %225 = vmatpush.bf16.msra.mxu0 %v169
  %226 = vmatpush.bf16.msra.mxu0 %v167
  %227 = vmatpush.bf16.msra.mxu0 %v165
  %228 = vmatpush.bf16.msra.mxu0 %v163
  %229 = vmatmul.bf16.gmra.mxu0 %v197
  %v230 = vpop.f32.mrf.mxu0
  %v231 = vadd.f32 %v212, %v230
  %v232 = vpop.f32.mrf.mxu0
  %v233 = vadd.f32 %v214, %v232
  %234 = vmatmul.bf16.gmra.mxu0 %v200
  %v235 = vpop.f32.mrf.mxu0
  %v236 = vadd.f32 %v217, %v235
  %v237 = vpop.f32.mrf.mxu0
  %v238 = vadd.f32 %v219, %v237
  %239 = vdwg.mxu0
  %240 = vmatpush.bf16.msra.mxu0 %v162
  %241 = vmatpush.bf16.msra.mxu0 %v160
  %242 = vmatpush.bf16.msra.mxu0 %v158
  %243 = vmatpush.bf16.msra.mxu0 %v156
  %244 = vmatpush.bf16.msra.mxu0 %v154
  %245 = vmatpush.bf16.msra.mxu0 %v152
  %246 = vmatpush.bf16.msra.mxu0 %v150
  %247 = vmatpush.bf16.msra.mxu0 %v148
  %248 = vmatmul.bf16.gmra.mxu0 %v41
  %v249 = vpop.f32.mrf.mxu0
  %v250 = vadd.f32 %v72, %v249
  %v251 = vpop.f32.mrf.mxu0
  %v252 = vadd.f32 %v72, %v251
  %253 = vmatmul.bf16.gmra.mxu0 %v43
  %v254 = vpop.f32.mrf.mxu0
  %v255 = vadd.f32 %v72, %v254
  %v256 = vpop.f32.mrf.mxu0
  %v257 = vadd.f32 %v72, %v256
  %258 = vdwg.mxu0
  %259 = vmatpush.bf16.msra.mxu0 0
  %260 = vmatpush.bf16.msra.mxu0 0
  %261 = vmatpush.bf16.msra.mxu0 0
  %262 = vmatpush.bf16.msra.mxu0 0
  %263 = vmatpush.bf16.msra.mxu0 %v170
  %264 = vmatpush.bf16.msra.mxu0 %v168
  %265 = vmatpush.bf16.msra.mxu0 %v166
  %266 = vmatpush.bf16.msra.mxu0 %v164
  %267 = vmatmul.bf16.gmra.mxu0 %v197
  %v268 = vpop.f32.mrf.mxu0
  %v269 = vadd.f32 %v250, %v268
  %v270 = vpop.f32.mrf.mxu0
  %v271 = vadd.f32 %v252, %v270
  %272 = vmatmul.bf16.gmra.mxu0 %v200
  %v273 = vpop.f32.mrf.mxu0
  %v274 = vadd.f32 %v255, %v273
  %v275 = vpop.f32.mrf.mxu0
  %v276 = vadd.f32 %v257, %v275
  %277 = vdwg.mxu0
  %v278 = vrsqrt.pop %v231
  %v279 = vmul.f32 %v278, %v231
  %v280 = vmul.f32 %v279, %v278
  %v281 = vmul.f32 0.5, %v280
  %v282 = vsub.f32 1.5, %v281
  %v283 = vmul.f32 %v278, %v282
  %v284 = vmul.f32 %v231, %v283
  %vm285 = vcmp.eq.f32.partialorder %v231, inf
  %v286 = vsel %vm285, %v231, %v284
  %vm287 = vcmp.eq.f32.partialorder %v231, 0.0
  %v288 = vand.u32 %v231, 2147483648
  %v289 = vsel %vm287, %v288, %v286
  %v290 = vrsqrt.pop %v269
  %v291 = vmul.f32 %v290, %v269
  %v292 = vmul.f32 %v291, %v290
  %v293 = vmul.f32 0.5, %v292
  %v294 = vsub.f32 1.5, %v293
  %v295 = vmul.f32 %v290, %v294
  %v296 = vmul.f32 %v269, %v295
  %vm297 = vcmp.eq.f32.partialorder %v269, inf
  %v298 = vsel %vm297, %v269, %v296
  %vm299 = vcmp.eq.f32.partialorder %v269, 0.0
  %v300 = vand.u32 %v269, 2147483648
  %v301 = vsel %vm299, %v300, %v298
  %v302 = vrsqrt.pop %v233
  %v303 = vmul.f32 %v302, %v233
  %v304 = vmul.f32 %v303, %v302
  %v305 = vmul.f32 0.5, %v304
  %v306 = vsub.f32 1.5, %v305
  %v307 = vmul.f32 %v302, %v306
  %v308 = vmul.f32 %v233, %v307
  %vm309 = vcmp.eq.f32.partialorder %v233, inf
  %v310 = vsel %vm309, %v233, %v308
  %vm311 = vcmp.eq.f32.partialorder %v233, 0.0
  %v312 = vand.u32 %v233, 2147483648
  %v313 = vsel %vm311, %v312, %v310
  %v314 = vrsqrt.pop %v271
  %v315 = vmul.f32 %v314, %v271
  %v316 = vmul.f32 %v315, %v314
  %v317 = vmul.f32 0.5, %v316
  %v318 = vsub.f32 1.5, %v317
  %v319 = vmul.f32 %v314, %v318
  %v320 = vmul.f32 %v271, %v319
  %vm321 = vcmp.eq.f32.partialorder %v271, inf
  %v322 = vsel %vm321, %v271, %v320
  %vm323 = vcmp.eq.f32.partialorder %v271, 0.0
  %v324 = vand.u32 %v271, 2147483648
  %v325 = vsel %vm323, %v324, %v322
  %v326 = vrsqrt.pop %v236
  %v327 = vmul.f32 %v326, %v236
  %v328 = vmul.f32 %v327, %v326
  %v329 = vmul.f32 0.5, %v328
  %v330 = vsub.f32 1.5, %v329
  %v331 = vmul.f32 %v326, %v330
  %v332 = vmul.f32 %v236, %v331
  %vm333 = vcmp.eq.f32.partialorder %v236, inf
  %v334 = vsel %vm333, %v236, %v332
  %vm335 = vcmp.eq.f32.partialorder %v236, 0.0
  %v336 = vand.u32 %v236, 2147483648
  %v337 = vsel %vm335, %v336, %v334
  %v338 = vrsqrt.pop %v274
  %v339 = vmul.f32 %v338, %v274
  %v340 = vmul.f32 %v339, %v338
  %v341 = vmul.f32 0.5, %v340
  %v342 = vsub.f32 1.5, %v341
  %v343 = vmul.f32 %v338, %v342
  %v344 = vmul.f32 %v274, %v343
  %vm345 = vcmp.eq.f32.partialorder %v274, inf
  %v346 = vsel %vm345, %v274, %v344
  %vm347 = vcmp.eq.f32.partialorder %v274, 0.0
  %v348 = vand.u32 %v274, 2147483648
  %v349 = vsel %vm347, %v348, %v346
  %v350 = vrsqrt.pop %v238
  %v351 = vmul.f32 %v350, %v238
  %v352 = vmul.f32 %v351, %v350
  %v353 = vmul.f32 0.5, %v352
  %v354 = vsub.f32 1.5, %v353
  %v355 = vmul.f32 %v350, %v354
  %v356 = vmul.f32 %v238, %v355
  %vm357 = vcmp.eq.f32.partialorder %v238, inf
  %v358 = vsel %vm357, %v238, %v356
  %vm359 = vcmp.eq.f32.partialorder %v238, 0.0
  %v360 = vand.u32 %v238, 2147483648
  %v361 = vsel %vm359, %v360, %v358
  %v362 = vrsqrt.pop %v276
  %v363 = vmul.f32 %v362, %v276
  %v364 = vmul.f32 %v363, %v362
  %v365 = vmul.f32 0.5, %v364
  %v366 = vsub.f32 1.5, %v365
  %v367 = vmul.f32 %v362, %v366
  %v368 = vmul.f32 %v276, %v367
  %vm369 = vcmp.eq.f32.partialorder %v276, inf
  %v370 = vsel %vm369, %v276, %v368
  %vm371 = vcmp.eq.f32.partialorder %v276, 0.0
  %v372 = vand.u32 %v276, 2147483648
  %v373 = vsel %vm371, %v372, %v370
  %v374 = vmul.f32 %v25, %v289
  %v375 = vmul.f32 %v26, %v301
  %v376 = vmul.f32 %v27, %v313
  %v377 = vmul.f32 %v28, %v325
  %v378 = vmul.f32 %v29, %v337
  %v379 = vmul.f32 %v30, %v349
  %v380 = vmul.f32 %v31, %v361
  %v381 = vmul.f32 %v32, %v373
  %v382 = vpack.c.bf16 %v376, %v374
  %v383 = vpack.c.bf16 %v377, %v375
  %v384 = vpack.c.bf16 %v380, %v378
  %v385 = vpack.c.bf16 %v381, %v379
  %v386 = vld [vmem:[%s3] sm:$0xff]
  %v387 = vld [vmem:[%s3 + $0x8] sm:$0xff]
  %v388 = vld [vmem:[%s3 + $0x10] sm:$0xff]
  %v389 = vld [vmem:[%s3 + $0x18] sm:$0xff]
  %v390 = vld [vmem:[%s3 + $0x20] sm:$0xff]
  %v391 = vld [vmem:[%s3 + $0x28] sm:$0xff]
  %v392 = vld [vmem:[%s3 + $0x30] sm:$0xff]
  %v393 = vld [vmem:[%s3 + $0x38] sm:$0xff]
  %v394 = vld [vmem:[%s3 + $0x40] sm:$0xff]
  %v395 = vld [vmem:[%s3 + $0x48] sm:$0xff]
  %v396 = vld [vmem:[%s3 + $0x50] sm:$0xff]
  %v397 = vld [vmem:[%s3 + $0x58] sm:$0xff]
  %v398 = vld [vmem:[%s3 + $0x60] sm:$0xff]
  %v399 = vld [vmem:[%s3 + $0x68] sm:$0xff]
  %v400 = vld [vmem:[%s3 + $0x70] sm:$0xff]
  %v401 = vld [vmem:[%s3 + $0x78] sm:$0xff]
  %v402 = vld [vmem:[%s3 + $0x80] sm:$0xff]
  %v403 = vld [vmem:[%s3 + $0x88] sm:$0xff]
  %v404 = vld [vmem:[%s3 + $0x90] sm:$0xff]
  %v405 = vld [vmem:[%s3 + $0x98] sm:$0xff]
  %v406 = vld [vmem:[%s3 + $0xa0] sm:$0xff]
  %v407 = vld [vmem:[%s3 + $0xa8] sm:$0xff]
  %v408 = vld [vmem:[%s3 + $0xb0] sm:$0xff]
  %v409 = vld [vmem:[%s3 + $0xb8] sm:$0xff]
  %v410 = vld [vmem:[%s3 + $0xc0] sm:$0xff]
  %v411 = vld [vmem:[%s3 + $0xc8] sm:$0xff]
  %v412 = vld [vmem:[%s3 + $0xd0] sm:$0xff]
  %v413 = vld [vmem:[%s3 + $0xd8] sm:$0xff]
  %v414 = vld [vmem:[%s3 + $0xe0] sm:$0xff]
  %v415 = vld [vmem:[%s3 + $0xe8] sm:$0xff]
  %v416 = vld [vmem:[%s3 + $0xf0] sm:$0xff]
  %v417 = vld [vmem:[%s3 + $0xf8] sm:$0xff]
  %v418 = vld [vmem:[%s3 + $0x100] sm:$0xff]
  %v419 = vld [vmem:[%s3 + $0x108] sm:$0xff]
  %v420 = vld [vmem:[%s3 + $0x110] sm:$0xff]
  %v421 = vld [vmem:[%s3 + $0x118] sm:$0xff]
  %v422 = vld [vmem:[%s3 + $0x120] sm:$0xff]
  %v423 = vld [vmem:[%s3 + $0x128] sm:$0xff]
  %v424 = vld [vmem:[%s3 + $0x130] sm:$0xff]
  %v425 = vld [vmem:[%s3 + $0x138] sm:$0xff]
  %v426 = vld [vmem:[%s3 + $0x140] sm:$0xff]
  %v427 = vld [vmem:[%s3 + $0x148] sm:$0xff]
  %v428 = vld [vmem:[%s3 + $0x150] sm:$0xff]
  %v429 = vld [vmem:[%s3 + $0x158] sm:$0xff]
  %v430 = vld [vmem:[%s3 + $0x160] sm:$0xff]
  %v431 = vld [vmem:[%s3 + $0x168] sm:$0xff]
  %v432 = vld [vmem:[%s3 + $0x170] sm:$0xff]
  %v433 = vld [vmem:[%s3 + $0x178] sm:$0xff]
  %v434 = vld [vmem:[%s3 + $0x180] sm:$0xff]
  %v435 = vld [vmem:[%s3 + $0x188] sm:$0xff]
  %v436 = vld [vmem:[%s3 + $0x190] sm:$0xff]
  %v437 = vld [vmem:[%s3 + $0x198] sm:$0xff]
  %v438 = vld [vmem:[%s3 + $0x1a0] sm:$0xff]
  %v439 = vld [vmem:[%s3 + $0x1a8] sm:$0xff]
  %v440 = vld [vmem:[%s3 + $0x1b0] sm:$0xff]
  %v441 = vld [vmem:[%s3 + $0x1b8] sm:$0xff]
  %v442 = vld [vmem:[%s3 + $0x1c0] sm:$0xff]
  %v443 = vld [vmem:[%s3 + $0x1c8] sm:$0xff]
  %v444 = vld [vmem:[%s3 + $0x1d0] sm:$0xff]
  %v445 = vld [vmem:[%s3 + $0x1d8] sm:$0xff]
  %v446 = vld [vmem:[%s3 + $0x1e0] sm:$0xff]
  %v447 = vld [vmem:[%s3 + $0x1e8] sm:$0xff]
  %v448 = vld [vmem:[%s3 + $0x1f0] sm:$0xff]
  %v449 = vld [vmem:[%s3 + $0x1f8] sm:$0xff]
  %v450 = vld [vmem:[%s3 + $0x200] sm:$0xff]
  %v451 = vld [vmem:[%s3 + $0x208] sm:$0xff]
  %v452 = vld [vmem:[%s3 + $0x210] sm:$0xff]
  %v453 = vld [vmem:[%s3 + $0x218] sm:$0xff]
  %v454 = vld [vmem:[%s3 + $0x220] sm:$0xff]
  %v455 = vld [vmem:[%s3 + $0x228] sm:$0xff]
  %v456 = vld [vmem:[%s3 + $0x230] sm:$0xff]
  %v457 = vld [vmem:[%s3 + $0x238] sm:$0xff]
  %v458 = vld [vmem:[%s4] sm:$0x3f]
  %v460 = vperm.slane %v458, 0
  %v461 = vperm.slane %v458, 1
  %v462 = vperm.slane %v458, 2
  %v463 = vperm.slane %v458, 3
  %v464 = vperm.slane %v458, 4
  %v465 = vperm.slane %v458, 5
  %v544 = vunpack.c.l.b16 %v386
  %v545 = vunpack.c.h.b16 %v386
  %v546 = vunpack.c.l.b16 %v387
  %v547 = vunpack.c.h.b16 %v387
  %v548 = vunpack.c.l.b16 %v388
  %v549 = vunpack.c.h.b16 %v388
  %v550 = vunpack.c.l.b16 %v389
  %v551 = vunpack.c.h.b16 %v389
  %v552 = vunpack.c.l.b16 %v390
  %v553 = vunpack.c.h.b16 %v390
  %v554 = vunpack.c.l.b16 %v391
  %v555 = vunpack.c.h.b16 %v391
  %v556 = vunpack.c.l.b16 %v392
  %v557 = vunpack.c.h.b16 %v392
  %v558 = vunpack.c.l.b16 %v393
  %v559 = vunpack.c.h.b16 %v393
  %v560 = vunpack.c.l.b16 %v394
  %v561 = vunpack.c.h.b16 %v394
  %v562 = vunpack.c.l.b16 %v395
  %v563 = vunpack.c.h.b16 %v395
  %v564 = vunpack.c.l.b16 %v396
  %v565 = vunpack.c.h.b16 %v396
  %v566 = vunpack.c.l.b16 %v397
  %v567 = vunpack.c.h.b16 %v397
  %v568 = vunpack.c.l.b16 %v398
  %v569 = vunpack.c.h.b16 %v398
  %v570 = vunpack.c.l.b16 %v399
  %v571 = vunpack.c.h.b16 %v399
  %v572 = vunpack.c.l.b16 %v400
  %v573 = vunpack.c.h.b16 %v400
  %v574 = vunpack.c.l.b16 %v401
  %v575 = vunpack.c.h.b16 %v401
  %v576 = vunpack.c.l.b16 %v402
  %v577 = vunpack.c.h.b16 %v402
  %v578 = vunpack.c.l.b16 %v403
  %v579 = vunpack.c.h.b16 %v403
  %v580 = vunpack.c.l.b16 %v404
  %v581 = vunpack.c.h.b16 %v404
  %v582 = vunpack.c.l.b16 %v405
  %v583 = vunpack.c.h.b16 %v405
  %v584 = vunpack.c.l.b16 %v406
  %v585 = vunpack.c.h.b16 %v406
  %v586 = vunpack.c.l.b16 %v407
  %v587 = vunpack.c.h.b16 %v407
  %v588 = vunpack.c.l.b16 %v408
  %v589 = vunpack.c.h.b16 %v408
  %v590 = vunpack.c.l.b16 %v409
  %v591 = vunpack.c.h.b16 %v409
  %v592 = vunpack.c.l.b16 %v410
  %v593 = vunpack.c.h.b16 %v410
  %v594 = vunpack.c.l.b16 %v411
  %v595 = vunpack.c.h.b16 %v411
  %v596 = vunpack.c.l.b16 %v412
  %v597 = vunpack.c.h.b16 %v412
  %v598 = vunpack.c.l.b16 %v413
  %v599 = vunpack.c.h.b16 %v413
  %v600 = vunpack.c.l.b16 %v414
  %v601 = vunpack.c.h.b16 %v414
  %v602 = vunpack.c.l.b16 %v415
  %v603 = vunpack.c.h.b16 %v415
  %v604 = vunpack.c.l.b16 %v416
  %v605 = vunpack.c.h.b16 %v416
  %v606 = vunpack.c.l.b16 %v417
  %v607 = vunpack.c.h.b16 %v417
  %v608 = vunpack.c.l.b16 %v418
  %v609 = vunpack.c.h.b16 %v418
  %v610 = vunpack.c.l.b16 %v419
  %v611 = vunpack.c.h.b16 %v419
  %v612 = vunpack.c.l.b16 %v420
  %v613 = vunpack.c.h.b16 %v420
  %v614 = vunpack.c.l.b16 %v421
  %v615 = vunpack.c.h.b16 %v421
  %v616 = vunpack.c.l.b16 %v422
  %v617 = vunpack.c.h.b16 %v422
  %v618 = vunpack.c.l.b16 %v423
  %v619 = vunpack.c.h.b16 %v423
  %v620 = vunpack.c.l.b16 %v424
  %v621 = vunpack.c.h.b16 %v424
  %v622 = vunpack.c.l.b16 %v425
  %v623 = vunpack.c.h.b16 %v425
  %v624 = vunpack.c.l.b16 %v426
  %v625 = vunpack.c.h.b16 %v426
  %v626 = vunpack.c.l.b16 %v427
  %v627 = vunpack.c.h.b16 %v427
  %v628 = vunpack.c.l.b16 %v428
  %v629 = vunpack.c.h.b16 %v428
  %v630 = vunpack.c.l.b16 %v429
  %v631 = vunpack.c.h.b16 %v429
  %v632 = vunpack.c.l.b16 %v430
  %v633 = vunpack.c.h.b16 %v430
  %v634 = vunpack.c.l.b16 %v431
  %v635 = vunpack.c.h.b16 %v431
  %v636 = vunpack.c.l.b16 %v432
  %v637 = vunpack.c.h.b16 %v432
  %v638 = vunpack.c.l.b16 %v433
  %v639 = vunpack.c.h.b16 %v433
  %v640 = vunpack.c.l.b16 %v434
  %v641 = vunpack.c.h.b16 %v434
  %v642 = vunpack.c.l.b16 %v435
  %v643 = vunpack.c.h.b16 %v435
  %v644 = vunpack.c.l.b16 %v436
  %v645 = vunpack.c.h.b16 %v436
  %v646 = vunpack.c.l.b16 %v437
  %v647 = vunpack.c.h.b16 %v437
  %v648 = vunpack.c.l.b16 %v438
  %v649 = vunpack.c.h.b16 %v438
  %v650 = vunpack.c.l.b16 %v439
  %v651 = vunpack.c.h.b16 %v439
  %v652 = vunpack.c.l.b16 %v440
  %v653 = vunpack.c.h.b16 %v440
  %v654 = vunpack.c.l.b16 %v441
  %v655 = vunpack.c.h.b16 %v441
  %v656 = vunpack.c.l.b16 %v442
  %v657 = vunpack.c.h.b16 %v442
  %v658 = vunpack.c.l.b16 %v443
  %v659 = vunpack.c.h.b16 %v443
  %v660 = vunpack.c.l.b16 %v444
  %v661 = vunpack.c.h.b16 %v444
  %v662 = vunpack.c.l.b16 %v445
  %v663 = vunpack.c.h.b16 %v445
  %v664 = vunpack.c.l.b16 %v446
  %v665 = vunpack.c.h.b16 %v446
  %v666 = vunpack.c.l.b16 %v447
  %v667 = vunpack.c.h.b16 %v447
  %v668 = vunpack.c.l.b16 %v448
  %v669 = vunpack.c.h.b16 %v448
  %v670 = vunpack.c.l.b16 %v449
  %v671 = vunpack.c.h.b16 %v449
  %v672 = vunpack.c.l.b16 %v450
  %v673 = vunpack.c.h.b16 %v450
  %v674 = vunpack.c.l.b16 %v451
  %v675 = vunpack.c.h.b16 %v451
  %v676 = vunpack.c.l.b16 %v452
  %v677 = vunpack.c.h.b16 %v452
  %v678 = vunpack.c.l.b16 %v453
  %v679 = vunpack.c.h.b16 %v453
  %v680 = vunpack.c.l.b16 %v454
  %v681 = vunpack.c.h.b16 %v454
  %v682 = vunpack.c.l.b16 %v455
  %v683 = vunpack.c.h.b16 %v455
  %v684 = vunpack.c.l.b16 %v456
  %v685 = vunpack.c.h.b16 %v456
  %v686 = vunpack.c.l.b16 %v457
  %v687 = vunpack.c.h.b16 %v457
  %v688 = vpack.c.b16 %v550, %v544
  %v689 = vpack.c.b16 %v551, %v545
  %v690 = vpack.c.b16 %v552, %v546
  %v691 = vpack.c.b16 %v553, %v547
  %v692 = vpack.c.b16 %v554, %v548
  %v693 = vpack.c.b16 %v555, %v549
  %v694 = vpack.c.b16 %v562, %v556
  %v695 = vpack.c.b16 %v563, %v557
  %v696 = vpack.c.b16 %v564, %v558
  %v697 = vpack.c.b16 %v565, %v559
  %v698 = vpack.c.b16 %v566, %v560
  %v699 = vpack.c.b16 %v567, %v561
  %v700 = vpack.c.b16 %v574, %v568
  %v701 = vpack.c.b16 %v575, %v569
  %v702 = vpack.c.b16 %v576, %v570
  %v703 = vpack.c.b16 %v577, %v571
  %v704 = vpack.c.b16 %v578, %v572
  %v705 = vpack.c.b16 %v579, %v573
  %v706 = vpack.c.b16 %v586, %v580
  %v707 = vpack.c.b16 %v587, %v581
  %v708 = vpack.c.b16 %v588, %v582
  %v709 = vpack.c.b16 %v589, %v583
  %v710 = vpack.c.b16 %v590, %v584
  %v711 = vpack.c.b16 %v591, %v585
  %v712 = vpack.c.b16 %v598, %v592
  %v713 = vpack.c.b16 %v599, %v593
  %v714 = vpack.c.b16 %v600, %v594
  %v715 = vpack.c.b16 %v601, %v595
  %v716 = vpack.c.b16 %v602, %v596
  %v717 = vpack.c.b16 %v603, %v597
  %v718 = vpack.c.b16 %v610, %v604
  %v719 = vpack.c.b16 %v611, %v605
  %v720 = vpack.c.b16 %v612, %v606
  %v721 = vpack.c.b16 %v613, %v607
  %v722 = vpack.c.b16 %v614, %v608
  %v723 = vpack.c.b16 %v615, %v609
  %v724 = vpack.c.b16 %v622, %v616
  %v725 = vpack.c.b16 %v623, %v617
  %v726 = vpack.c.b16 %v624, %v618
  %v727 = vpack.c.b16 %v625, %v619
  %v728 = vpack.c.b16 %v626, %v620
  %v729 = vpack.c.b16 %v627, %v621
  %v730 = vpack.c.b16 %v634, %v628
  %v731 = vpack.c.b16 %v635, %v629
  %v732 = vpack.c.b16 %v636, %v630
  %v733 = vpack.c.b16 %v637, %v631
  %v734 = vpack.c.b16 %v638, %v632
  %v735 = vpack.c.b16 %v639, %v633
  %v736 = vpack.c.b16 %v646, %v640
  %v737 = vpack.c.b16 %v647, %v641
  %v738 = vpack.c.b16 %v648, %v642
  %v739 = vpack.c.b16 %v649, %v643
  %v740 = vpack.c.b16 %v650, %v644
  %v741 = vpack.c.b16 %v651, %v645
  %v742 = vpack.c.b16 %v658, %v652
  %v743 = vpack.c.b16 %v659, %v653
  %v744 = vpack.c.b16 %v660, %v654
  %v745 = vpack.c.b16 %v661, %v655
  %v746 = vpack.c.b16 %v662, %v656
  %v747 = vpack.c.b16 %v663, %v657
  %v748 = vpack.c.b16 %v670, %v664
  %v749 = vpack.c.b16 %v671, %v665
  %v750 = vpack.c.b16 %v672, %v666
  %v751 = vpack.c.b16 %v673, %v667
  %v752 = vpack.c.b16 %v674, %v668
  %v753 = vpack.c.b16 %v675, %v669
  %v754 = vpack.c.b16 %v682, %v676
  %v755 = vpack.c.b16 %v683, %v677
  %v756 = vpack.c.b16 %v684, %v678
  %v757 = vpack.c.b16 %v685, %v679
  %v758 = vpack.c.b16 %v686, %v680
  %v759 = vpack.c.b16 %v687, %v681
  %v833 = vsel %vm195, %v383, 0
  %v836 = vsel %vm195, %v385, 0
  %838 = vmatpush.bf16.msra.mxu0 %v730
  %839 = vmatpush.bf16.msra.mxu0 %v724
  %840 = vmatpush.bf16.msra.mxu0 %v718
  %841 = vmatpush.bf16.msra.mxu0 %v712
  %842 = vmatpush.bf16.msra.mxu0 %v706
  %843 = vmatpush.bf16.msra.mxu0 %v700
  %844 = vmatpush.bf16.msra.mxu0 %v694
  %845 = vmatpush.bf16.msra.mxu0 %v688
  %846 = vmatmul.bf16.gmra.mxu0 %v382
  %v847 = vpop.f32.mrf.mxu0
  %v848 = vadd.f32 %v460, %v847
  %v849 = vpop.f32.mrf.mxu0
  %v850 = vadd.f32 %v460, %v849
  %851 = vmatmul.bf16.gmra.mxu0 %v384
  %v852 = vpop.f32.mrf.mxu0
  %v853 = vadd.f32 %v460, %v852
  %v854 = vpop.f32.mrf.mxu0
  %v855 = vadd.f32 %v460, %v854
  %856 = vdwg.mxu0
  %857 = vmatpush.bf16.msra.mxu0 0
  %858 = vmatpush.bf16.msra.mxu0 0
  %859 = vmatpush.bf16.msra.mxu0 0
  %860 = vmatpush.bf16.msra.mxu0 0
  %861 = vmatpush.bf16.msra.mxu0 %v754
  %862 = vmatpush.bf16.msra.mxu0 %v748
  %863 = vmatpush.bf16.msra.mxu0 %v742
  %864 = vmatpush.bf16.msra.mxu0 %v736
  %865 = vmatmul.bf16.gmra.mxu0 %v833
  %v866 = vpop.f32.mrf.mxu0
  %v867 = vadd.f32 %v848, %v866
  %v868 = vpop.f32.mrf.mxu0
  %v869 = vadd.f32 %v850, %v868
  %870 = vmatmul.bf16.gmra.mxu0 %v836
  %v871 = vpop.f32.mrf.mxu0
  %v872 = vadd.f32 %v853, %v871
  %v873 = vpop.f32.mrf.mxu0
  %v874 = vadd.f32 %v855, %v873
  %875 = vdwg.mxu0
  %876 = vmatpush.bf16.msra.mxu0 %v731
  %877 = vmatpush.bf16.msra.mxu0 %v725
  %878 = vmatpush.bf16.msra.mxu0 %v719
  %879 = vmatpush.bf16.msra.mxu0 %v713
  %880 = vmatpush.bf16.msra.mxu0 %v707
  %881 = vmatpush.bf16.msra.mxu0 %v701
  %882 = vmatpush.bf16.msra.mxu0 %v695
  %883 = vmatpush.bf16.msra.mxu0 %v689
  %884 = vmatmul.bf16.gmra.mxu0 %v382
  %v885 = vpop.f32.mrf.mxu0
  %v886 = vadd.f32 %v461, %v885
  %v887 = vpop.f32.mrf.mxu0
  %v888 = vadd.f32 %v461, %v887
  %889 = vmatmul.bf16.gmra.mxu0 %v384
  %v890 = vpop.f32.mrf.mxu0
  %v891 = vadd.f32 %v461, %v890
  %v892 = vpop.f32.mrf.mxu0
  %v893 = vadd.f32 %v461, %v892
  %894 = vdwg.mxu0
  %895 = vmatpush.bf16.msra.mxu0 0
  %896 = vmatpush.bf16.msra.mxu0 0
  %897 = vmatpush.bf16.msra.mxu0 0
  %898 = vmatpush.bf16.msra.mxu0 0
  %899 = vmatpush.bf16.msra.mxu0 %v755
  %900 = vmatpush.bf16.msra.mxu0 %v749
  %901 = vmatpush.bf16.msra.mxu0 %v743
  %902 = vmatpush.bf16.msra.mxu0 %v737
  %903 = vmatmul.bf16.gmra.mxu0 %v833
  %v904 = vpop.f32.mrf.mxu0
  %v905 = vadd.f32 %v886, %v904
  %v906 = vpop.f32.mrf.mxu0
  %v907 = vadd.f32 %v888, %v906
  %908 = vmatmul.bf16.gmra.mxu0 %v836
  %v909 = vpop.f32.mrf.mxu0
  %v910 = vadd.f32 %v891, %v909
  %v911 = vpop.f32.mrf.mxu0
  %v912 = vadd.f32 %v893, %v911
  %913 = vdwg.mxu0
  %914 = vmatpush.bf16.msra.mxu0 %v732
  %915 = vmatpush.bf16.msra.mxu0 %v726
  %916 = vmatpush.bf16.msra.mxu0 %v720
  %917 = vmatpush.bf16.msra.mxu0 %v714
  %918 = vmatpush.bf16.msra.mxu0 %v708
  %919 = vmatpush.bf16.msra.mxu0 %v702
  %920 = vmatpush.bf16.msra.mxu0 %v696
  %921 = vmatpush.bf16.msra.mxu0 %v690
  %922 = vmatmul.bf16.gmra.mxu0 %v382
  %v923 = vpop.f32.mrf.mxu0
  %v924 = vadd.f32 %v462, %v923
  %v925 = vpop.f32.mrf.mxu0
  %v926 = vadd.f32 %v462, %v925
  %927 = vmatmul.bf16.gmra.mxu0 %v384
  %v928 = vpop.f32.mrf.mxu0
  %v929 = vadd.f32 %v462, %v928
  %v930 = vpop.f32.mrf.mxu0
  %v931 = vadd.f32 %v462, %v930
  %932 = vdwg.mxu0
  %933 = vmatpush.bf16.msra.mxu0 0
  %934 = vmatpush.bf16.msra.mxu0 0
  %935 = vmatpush.bf16.msra.mxu0 0
  %936 = vmatpush.bf16.msra.mxu0 0
  %937 = vmatpush.bf16.msra.mxu0 %v756
  %938 = vmatpush.bf16.msra.mxu0 %v750
  %939 = vmatpush.bf16.msra.mxu0 %v744
  %940 = vmatpush.bf16.msra.mxu0 %v738
  %941 = vmatmul.bf16.gmra.mxu0 %v833
  %v942 = vpop.f32.mrf.mxu0
  %v943 = vadd.f32 %v924, %v942
  %v944 = vpop.f32.mrf.mxu0
  %v945 = vadd.f32 %v926, %v944
  %946 = vmatmul.bf16.gmra.mxu0 %v836
  %v947 = vpop.f32.mrf.mxu0
  %v948 = vadd.f32 %v929, %v947
  %v949 = vpop.f32.mrf.mxu0
  %v950 = vadd.f32 %v931, %v949
  %951 = vdwg.mxu0
  %952 = vmatpush.bf16.msra.mxu0 %v733
  %953 = vmatpush.bf16.msra.mxu0 %v727
  %954 = vmatpush.bf16.msra.mxu0 %v721
  %955 = vmatpush.bf16.msra.mxu0 %v715
  %956 = vmatpush.bf16.msra.mxu0 %v709
  %957 = vmatpush.bf16.msra.mxu0 %v703
  %958 = vmatpush.bf16.msra.mxu0 %v697
  %959 = vmatpush.bf16.msra.mxu0 %v691
  %960 = vmatmul.bf16.gmra.mxu0 %v382
  %v961 = vpop.f32.mrf.mxu0
  %v962 = vadd.f32 %v463, %v961
  %v963 = vpop.f32.mrf.mxu0
  %v964 = vadd.f32 %v463, %v963
  %965 = vmatmul.bf16.gmra.mxu0 %v384
  %v966 = vpop.f32.mrf.mxu0
  %v967 = vadd.f32 %v463, %v966
  %v968 = vpop.f32.mrf.mxu0
  %v969 = vadd.f32 %v463, %v968
  %970 = vdwg.mxu0
  %971 = vmatpush.bf16.msra.mxu0 0
  %972 = vmatpush.bf16.msra.mxu0 0
  %973 = vmatpush.bf16.msra.mxu0 0
  %974 = vmatpush.bf16.msra.mxu0 0
  %975 = vmatpush.bf16.msra.mxu0 %v757
  %976 = vmatpush.bf16.msra.mxu0 %v751
  %977 = vmatpush.bf16.msra.mxu0 %v745
  %978 = vmatpush.bf16.msra.mxu0 %v739
  %979 = vmatmul.bf16.gmra.mxu0 %v833
  %v980 = vpop.f32.mrf.mxu0
  %v981 = vadd.f32 %v962, %v980
  %v982 = vpop.f32.mrf.mxu0
  %v983 = vadd.f32 %v964, %v982
  %984 = vmatmul.bf16.gmra.mxu0 %v836
  %v985 = vpop.f32.mrf.mxu0
  %v986 = vadd.f32 %v967, %v985
  %v987 = vpop.f32.mrf.mxu0
  %v988 = vadd.f32 %v969, %v987
  %989 = vdwg.mxu0
  %990 = vmatpush.bf16.msra.mxu0 %v734
  %991 = vmatpush.bf16.msra.mxu0 %v728
  %992 = vmatpush.bf16.msra.mxu0 %v722
  %993 = vmatpush.bf16.msra.mxu0 %v716
  %994 = vmatpush.bf16.msra.mxu0 %v710
  %995 = vmatpush.bf16.msra.mxu0 %v704
  %996 = vmatpush.bf16.msra.mxu0 %v698
  %997 = vmatpush.bf16.msra.mxu0 %v692
  %998 = vmatmul.bf16.gmra.mxu0 %v382
  %v999 = vpop.f32.mrf.mxu0
  %v1000 = vadd.f32 %v464, %v999
  %v1001 = vpop.f32.mrf.mxu0
  %v1002 = vadd.f32 %v464, %v1001
  %1003 = vmatmul.bf16.gmra.mxu0 %v384
  %v1004 = vpop.f32.mrf.mxu0
  %v1005 = vadd.f32 %v464, %v1004
  %v1006 = vpop.f32.mrf.mxu0
  %v1007 = vadd.f32 %v464, %v1006
  %1008 = vdwg.mxu0
  %1009 = vmatpush.bf16.msra.mxu0 0
  %1010 = vmatpush.bf16.msra.mxu0 0
  %1011 = vmatpush.bf16.msra.mxu0 0
  %1012 = vmatpush.bf16.msra.mxu0 0
  %1013 = vmatpush.bf16.msra.mxu0 %v758
  %1014 = vmatpush.bf16.msra.mxu0 %v752
  %1015 = vmatpush.bf16.msra.mxu0 %v746
  %1016 = vmatpush.bf16.msra.mxu0 %v740
  %1017 = vmatmul.bf16.gmra.mxu0 %v833
  %v1018 = vpop.f32.mrf.mxu0
  %v1019 = vadd.f32 %v1000, %v1018
  %v1020 = vpop.f32.mrf.mxu0
  %v1021 = vadd.f32 %v1002, %v1020
  %1022 = vmatmul.bf16.gmra.mxu0 %v836
  %v1023 = vpop.f32.mrf.mxu0
  %v1024 = vadd.f32 %v1005, %v1023
  %v1025 = vpop.f32.mrf.mxu0
  %v1026 = vadd.f32 %v1007, %v1025
  %1027 = vdwg.mxu0
  %1028 = vmatpush.bf16.msra.mxu0 %v735
  %1029 = vmatpush.bf16.msra.mxu0 %v729
  %1030 = vmatpush.bf16.msra.mxu0 %v723
  %1031 = vmatpush.bf16.msra.mxu0 %v717
  %1032 = vmatpush.bf16.msra.mxu0 %v711
  %1033 = vmatpush.bf16.msra.mxu0 %v705
  %1034 = vmatpush.bf16.msra.mxu0 %v699
  %1035 = vmatpush.bf16.msra.mxu0 %v693
  %1036 = vmatmul.bf16.gmra.mxu0 %v382
  %v1037 = vpop.f32.mrf.mxu0
  %v1038 = vadd.f32 %v465, %v1037
  %v1039 = vpop.f32.mrf.mxu0
  %v1040 = vadd.f32 %v465, %v1039
  %1041 = vmatmul.bf16.gmra.mxu0 %v384
  %v1042 = vpop.f32.mrf.mxu0
  %v1043 = vadd.f32 %v465, %v1042
  %v1044 = vpop.f32.mrf.mxu0
  %v1045 = vadd.f32 %v465, %v1044
  %1046 = vdwg.mxu0
  %1047 = vmatpush.bf16.msra.mxu0 0
  %1048 = vmatpush.bf16.msra.mxu0 0
  %1049 = vmatpush.bf16.msra.mxu0 0
  %1050 = vmatpush.bf16.msra.mxu0 0
  %1051 = vmatpush.bf16.msra.mxu0 %v759
  %1052 = vmatpush.bf16.msra.mxu0 %v753
  %1053 = vmatpush.bf16.msra.mxu0 %v747
  %1054 = vmatpush.bf16.msra.mxu0 %v741
  %1055 = vmatmul.bf16.gmra.mxu0 %v833
  %v1056 = vpop.f32.mrf.mxu0
  %v1057 = vadd.f32 %v1038, %v1056
  %v1058 = vpop.f32.mrf.mxu0
  %v1059 = vadd.f32 %v1040, %v1058
  %1060 = vmatmul.bf16.gmra.mxu0 %v836
  %v1061 = vpop.f32.mrf.mxu0
  %v1062 = vadd.f32 %v1043, %v1061
  %v1063 = vpop.f32.mrf.mxu0
  %v1064 = vadd.f32 %v1045, %v1063
  %1065 = vdwg.mxu0
  %v1066 = vpack.c.bf16 %v905, %v867
  %v1067 = vpack.c.bf16 %v981, %v943
  %v1068 = vpack.c.bf16 %v1057, %v1019
  %v1069 = vpack.c.bf16 %v907, %v869
  %v1070 = vpack.c.bf16 %v983, %v945
  %v1071 = vpack.c.bf16 %v1059, %v1021
  %v1072 = vpack.c.bf16 %v910, %v872
  %v1073 = vpack.c.bf16 %v986, %v948
  %v1074 = vpack.c.bf16 %v1062, %v1024
  %v1075 = vpack.c.bf16 %v912, %v874
  %v1076 = vpack.c.bf16 %v988, %v950
  %v1077 = vpack.c.bf16 %v1064, %v1026
  %1078 = vst [vmem:[%s5] sm:$0xff] %v1066
  %1079 = vst [vmem:[%s5 + $0x8] sm:$0xff] %v1067
  %1080 = vst [vmem:[%s5 + $0x10] sm:$0xff] %v1068
  %1081 = vst [vmem:[%s5 + $0x18] sm:$0xff] %v1069
  %1082 = vst [vmem:[%s5 + $0x20] sm:$0xff] %v1070
  %1083 = vst [vmem:[%s5 + $0x28] sm:$0xff] %v1071
  %1084 = vst [vmem:[%s5 + $0x30] sm:$0xff] %v1072
  %1085 = vst [vmem:[%s5 + $0x38] sm:$0xff] %v1073
  %1086 = vst [vmem:[%s5 + $0x40] sm:$0xff] %v1074
  %1087 = vst [vmem:[%s5 + $0x48] sm:$0xff] %v1075
  %1088 = vst [vmem:[%s5 + $0x50] sm:$0xff] %v1076
  %1089 = vst [vmem:[%s5 + $0x58] sm:$0xff] %v1077
  // Predicated region
  $region22: #{forward.12} parent=0 // pred_check
    _
  $region23: #{forward.12} parent=0 // pred_check_branch
    %1091 = sbr.rel (0) target = $region25
  $region24: #{forward.12} parent=0 // pred_region
    _
  $region25: #{forward.12} parent=0 // pred_fallthru
    _
  // Predicated region
  $region26: #{forward.12} parent=0 // pred_check
    _
  $region27: #{forward.12} parent=0 // pred_check_branch
    %1093 = sbr.rel (0) target = $region29
  $region28: #{forward.12} parent=0 // pred_region
    _
  $region29: #{forward.12} parent=0 // pred_fallthru
    _

// kernel: forward.13
$region0: #{forward.13}
  #allocation0 [shape = 'u32[]', space=smem, size = 0x4, offset = 0x4, fixed_abs, tag = 'smem constant byte address 0x4 - core index']
  #allocation1 [shape = 'u32[72,128]{1,0:T(1,128)}', space=vmem, size = 0x9000, scoped, tag = 'internal scratch']
  %s0 = inlined_call_operand.vmem [shape: f32[128,12], index: 0, kind: input, shape index: {}]
  %s1 = inlined_call_operand.vmem [shape: bf16[128,192], index: 1, kind: input, shape index: {}]
  %s2 = inlined_call_operand.vmem [shape: bf16[192,192], index: 2, kind: input, shape index: {}]
  %s3 = inlined_call_operand.vmem [shape: f32[1,192], index: 3, kind: input, shape index: {}]
  %s4 = inlined_call_operand.vmem [shape: bf16[192,12], index: 4, kind: input, shape index: {}]
  %s5 = inlined_call_operand.vmem [shape: f32[1,12], index: 5, kind: input, shape index: {}]
  %s6 = inlined_call_operand.vmem [shape: f32[12,12], index: 6, kind: input, shape index: {}]
  %s7 = inlined_call_operand.vmem [shape: f32[12,12], index: 7, kind: input, shape index: {}]
  %s8 = inlined_call_operand.vmem [shape: f32[128,12], index: 8, kind: output, shape index: {0}]
  %s9 = inlined_call_operand.vmem [shape: f32[2,12], index: 9, kind: output, shape index: {1}]
  %10 = xla_tuple %s8, %s9
  %s11 = sld [smem:[#allocation0]]
  $region54: #{forward.13} parent=0
    _
  %s13 = ssub.s32 1, %s11
  %s14 = scalar_select 0, %s13, %s11
  // Predicated region
  $region2: #{forward.13} parent=0 // pred_check
    _
  $region3: #{forward.13} parent=0 // pred_check_branch
    %16 = sbr.rel (0) target = $region5
  $region4: #{forward.13} parent=0 // pred_region
    _
  $region5: #{forward.13} parent=0 // pred_fallthru
    _
  // Predicated region
  $region6: #{forward.13} parent=0 // pred_check
    _
  $region7: #{forward.13} parent=0 // pred_check_branch
    %18 = sbr.rel (0) target = $region9
  $region8: #{forward.13} parent=0 // pred_region
    _
  $region9: #{forward.13} parent=0 // pred_fallthru
    _
  // Predicated region
  $region10: #{forward.13} parent=0 // pred_check
    _
  $region11: #{forward.13} parent=0 // pred_check_branch
    %20 = sbr.rel (0) target = $region13
  $region12: #{forward.13} parent=0 // pred_region
    _
  $region13: #{forward.13} parent=0 // pred_fallthru
    _
  // Predicated region
  $region14: #{forward.13} parent=0 // pred_check
    _
  $region15: #{forward.13} parent=0 // pred_check_branch
    %22 = sbr.rel (0) target = $region17
  $region16: #{forward.13} parent=0 // pred_region
    _
  $region17: #{forward.13} parent=0 // pred_fallthru
    _
  // Predicated region
  $region18: #{forward.13} parent=0 // pred_check
    _
  $region19: #{forward.13} parent=0 // pred_check_branch
    %24 = sbr.rel (0) target = $region21
  $region20: #{forward.13} parent=0 // pred_region
    _
  $region21: #{forward.13} parent=0 // pred_fallthru
    _
  // Predicated region
  $region22: #{forward.13} parent=0 // pred_check
    _
  $region23: #{forward.13} parent=0 // pred_check_branch
    %26 = sbr.rel (0) target = $region25
  $region24: #{forward.13} parent=0 // pred_region
    _
  $region25: #{forward.13} parent=0 // pred_fallthru
    _
  // Predicated region
  $region26: #{forward.13} parent=0 // pred_check
    _
  $region27: #{forward.13} parent=0 // pred_check_branch
    %28 = sbr.rel (0) target = $region29
  $region28: #{forward.13} parent=0 // pred_region
    _
  $region29: #{forward.13} parent=0 // pred_fallthru
    _
  // Predicated region
  $region30: #{forward.13} parent=0 // pred_check
    _
  $region31: #{forward.13} parent=0 // pred_check_branch
    %30 = sbr.rel (0) target = $region33
  $region32: #{forward.13} parent=0 // pred_region
    _
  $region33: #{forward.13} parent=0 // pred_fallthru
    _
  %p32 = scmp.eq.s32.totalorder 0, 0
  // Predicated region
  $region34: #{forward.13} parent=0 // pred_check
    %p33 = pneg %p32
  $region35: #{forward.13} parent=0 // pred_check_branch
    %35 = sbr.rel (%p33) target = $region37
  $region36: #{forward.13} parent=0 // pred_region
    %vm36 = vcmask 91136
    %37 = vst.msk [vmem:[%s9] sm:$0x3] %vm36, 0.0
  $region37: #{forward.13} parent=0 // pred_fallthru
    _
  %v38 = vld [vmem:[%s1] sm:$0xff]
  %v39 = vld [vmem:[%s1 + $0x8] sm:$0xff]
  %v40 = vld [vmem:[%s1 + $0x10] sm:$0xff]
  %v41 = vld [vmem:[%s1 + $0x18] sm:$0xff]
  %v42 = vld [vmem:[%s1 + $0x20] sm:$0xff]
  %v43 = vld [vmem:[%s1 + $0x28] sm:$0xff]
  %v44 = vld [vmem:[%s1 + $0x30] sm:$0xff]
  %v45 = vld [vmem:[%s1 + $0x38] sm:$0xff]
  %v46 = vld [vmem:[%s1 + $0x40] sm:$0xff]
  %v47 = vld [vmem:[%s1 + $0x48] sm:$0xff]
  %v48 = vld [vmem:[%s1 + $0x50] sm:$0xff]
  %v49 = vld [vmem:[%s1 + $0x58] sm:$0xff]
  %v50 = vld [vmem:[%s1 + $0x60] sm:$0xff]
  %v51 = vld [vmem:[%s1 + $0x68] sm:$0xff]
  %v52 = vld [vmem:[%s1 + $0x70] sm:$0xff]
  %v53 = vld [vmem:[%s1 + $0x78] sm:$0xff]
  %v54 = vunpack.c.l.bf16 %v38
  %v55 = vunpack.c.h.bf16 %v38
  %v56 = vunpack.c.l.bf16 %v39
  %v57 = vunpack.c.h.bf16 %v39
  %v58 = vunpack.c.l.bf16 %v40
  %v59 = vunpack.c.h.bf16 %v40
  %v60 = vunpack.c.l.bf16 %v41
  %v61 = vunpack.c.h.bf16 %v41
  %v62 = vunpack.c.l.bf16 %v42
  %v63 = vunpack.c.h.bf16 %v42
  %v64 = vunpack.c.l.bf16 %v43
  %v65 = vunpack.c.h.bf16 %v43
  %v66 = vunpack.c.l.bf16 %v44
  %v67 = vunpack.c.h.bf16 %v44
  %v68 = vunpack.c.l.bf16 %v45
  %v69 = vunpack.c.h.bf16 %v45
  %v70 = vunpack.c.l.bf16 %v46
  %v71 = vunpack.c.h.bf16 %v46
  %v72 = vunpack.c.l.bf16 %v47
  %v73 = vunpack.c.h.bf16 %v47
  %v74 = vunpack.c.l.bf16 %v48
  %v75 = vunpack.c.h.bf16 %v48
  %v76 = vunpack.c.l.bf16 %v49
  %v77 = vunpack.c.h.bf16 %v49
  %v78 = vunpack.c.l.bf16 %v50
  %v79 = vunpack.c.h.bf16 %v50
  %v80 = vunpack.c.l.bf16 %v51
  %v81 = vunpack.c.h.bf16 %v51
  %v82 = vunpack.c.l.bf16 %v52
  %v83 = vunpack.c.h.bf16 %v52
  %v84 = vunpack.c.l.bf16 %v53
  %v85 = vunpack.c.h.bf16 %v53
  %v86 = vmul.f32 %v54, %v54
  %v87 = vmul.f32 %v55, %v55
  %v88 = vmul.f32 %v56, %v56
  %v89 = vmul.f32 %v57, %v57
  %v90 = vmul.f32 %v58, %v58
  %v91 = vmul.f32 %v59, %v59
  %v92 = vmul.f32 %v60, %v60
  %v93 = vmul.f32 %v61, %v61
  %v94 = vmul.f32 %v62, %v62
  %v95 = vmul.f32 %v63, %v63
  %v96 = vmul.f32 %v64, %v64
  %v97 = vmul.f32 %v65, %v65
  %v98 = vmul.f32 %v66, %v66
  %v99 = vmul.f32 %v67, %v67
  %v100 = vmul.f32 %v68, %v68
  %v101 = vmul.f32 %v69, %v69
  %v102 = vmul.f32 %v70, %v70
  %v103 = vmul.f32 %v71, %v71
  %v104 = vmul.f32 %v72, %v72
  %v105 = vmul.f32 %v73, %v73
  %v106 = vmul.f32 %v74, %v74
  %v107 = vmul.f32 %v75, %v75
  %v108 = vmul.f32 %v76, %v76
  %v109 = vmul.f32 %v77, %v77
  %v110 = vmul.f32 %v78, %v78
  %v111 = vmul.f32 %v79, %v79
  %v112 = vmul.f32 %v80, %v80
  %v113 = vmul.f32 %v81, %v81
  %v114 = vmul.f32 %v82, %v82
  %v115 = vmul.f32 %v83, %v83
  %v116 = vmul.f32 %v84, %v84
  %v117 = vmul.f32 %v85, %v85
  %v118 = vpack.c.bf16 %v88, %v86
  %v119 = vpack.c.bf16 %v89, %v87
  %v120 = vpack.c.bf16 %v92, %v90
  %v121 = vpack.c.bf16 %v93, %v91
  %v122 = vpack.c.bf16 %v96, %v94
  %v123 = vpack.c.bf16 %v97, %v95
  %v124 = vpack.c.bf16 %v100, %v98
  %v125 = vpack.c.bf16 %v101, %v99
  %v126 = vpack.c.bf16 %v104, %v102
  %v127 = vpack.c.bf16 %v105, %v103
  %v128 = vpack.c.bf16 %v108, %v106
  %v129 = vpack.c.bf16 %v109, %v107
  %v130 = vpack.c.bf16 %v112, %v110
  %v131 = vpack.c.bf16 %v113, %v111
  %v132 = vpack.c.bf16 %v116, %v114
  %v133 = vpack.c.bf16 %v117, %v115
  %v134 = vld [vmem:[%s2] sm:$0xff]
  %v135 = vld [vmem:[%s2 + $0x8] sm:$0xff]
  %v136 = vld [vmem:[%s2 + $0x10] sm:$0xff]
  %v137 = vld [vmem:[%s2 + $0x18] sm:$0xff]
  %v138 = vld [vmem:[%s2 + $0x20] sm:$0xff]
  %v139 = vld [vmem:[%s2 + $0x28] sm:$0xff]
  %v140 = vld [vmem:[%s2 + $0x30] sm:$0xff]
  %v141 = vld [vmem:[%s2 + $0x38] sm:$0xff]
  %v142 = vld [vmem:[%s2 + $0x40] sm:$0xff]
  %v143 = vld [vmem:[%s2 + $0x48] sm:$0xff]
  %v144 = vld [vmem:[%s2 + $0x50] sm:$0xff]
  %v145 = vld [vmem:[%s2 + $0x58] sm:$0xff]
  %v146 = vld [vmem:[%s2 + $0x60] sm:$0xff]
  %v147 = vld [vmem:[%s2 + $0x68] sm:$0xff]
  %v148 = vld [vmem:[%s2 + $0x70] sm:$0xff]
  %v149 = vld [vmem:[%s2 + $0x78] sm:$0xff]
  %v150 = vld [vmem:[%s2 + $0x80] sm:$0xff]
  %v151 = vld [vmem:[%s2 + $0x88] sm:$0xff]
  %v152 = vld [vmem:[%s2 + $0x90] sm:$0xff]
  %v153 = vld [vmem:[%s2 + $0x98] sm:$0xff]
  %v154 = vld [vmem:[%s2 + $0xa0] sm:$0xff]
  %v155 = vld [vmem:[%s2 + $0xa8] sm:$0xff]
  %v156 = vld [vmem:[%s2 + $0xb0] sm:$0xff]
  %v157 = vld [vmem:[%s2 + $0xb8] sm:$0xff]
  %v158 = vld [vmem:[%s3] sm:$0x3]
  %v160 = vperm.slane %v158, 0
  %v161 = vperm.slane %v158, 1
  %v188 = vunpack.c.l.b16 %v134
  %v189 = vunpack.c.h.b16 %v134
  %v190 = vunpack.c.l.b16 %v135
  %v191 = vunpack.c.h.b16 %v135
  %v192 = vunpack.c.l.b16 %v136
  %v193 = vunpack.c.h.b16 %v136
  %v194 = vunpack.c.l.b16 %v137
  %v195 = vunpack.c.h.b16 %v137
  %v196 = vunpack.c.l.b16 %v138
  %v197 = vunpack.c.h.b16 %v138
  %v198 = vunpack.c.l.b16 %v139
  %v199 = vunpack.c.h.b16 %v139
  %v200 = vunpack.c.l.b16 %v140
  %v201 = vunpack.c.h.b16 %v140
  %v202 = vunpack.c.l.b16 %v141
  %v203 = vunpack.c.h.b16 %v141
  %v204 = vunpack.c.l.b16 %v142
  %v205 = vunpack.c.h.b16 %v142
  %v206 = vunpack.c.l.b16 %v143
  %v207 = vunpack.c.h.b16 %v143
  %v208 = vunpack.c.l.b16 %v144
  %v209 = vunpack.c.h.b16 %v144
  %v210 = vunpack.c.l.b16 %v145
  %v211 = vunpack.c.h.b16 %v145
  %v212 = vunpack.c.l.b16 %v146
  %v213 = vunpack.c.h.b16 %v146
  %v214 = vunpack.c.l.b16 %v147
  %v215 = vunpack.c.h.b16 %v147
  %v216 = vunpack.c.l.b16 %v148
  %v217 = vunpack.c.h.b16 %v148
  %v218 = vunpack.c.l.b16 %v149
  %v219 = vunpack.c.h.b16 %v149
  %v220 = vunpack.c.l.b16 %v150
  %v221 = vunpack.c.h.b16 %v150
  %v222 = vunpack.c.l.b16 %v151
  %v223 = vunpack.c.h.b16 %v151
  %v224 = vunpack.c.l.b16 %v152
  %v225 = vunpack.c.h.b16 %v152
  %v226 = vunpack.c.l.b16 %v153
  %v227 = vunpack.c.h.b16 %v153
  %v228 = vunpack.c.l.b16 %v154
  %v229 = vunpack.c.h.b16 %v154
  %v230 = vunpack.c.l.b16 %v155
  %v231 = vunpack.c.h.b16 %v155
  %v232 = vunpack.c.l.b16 %v156
  %v233 = vunpack.c.h.b16 %v156
  %v234 = vunpack.c.l.b16 %v157
  %v235 = vunpack.c.h.b16 %v157
  %v236 = vpack.c.b16 %v190, %v188
  %v237 = vpack.c.b16 %v191, %v189
  %v238 = vpack.c.b16 %v194, %v192
  %v239 = vpack.c.b16 %v195, %v193
  %v240 = vpack.c.b16 %v198, %v196
  %v241 = vpack.c.b16 %v199, %v197
  %v242 = vpack.c.b16 %v202, %v200
  %v243 = vpack.c.b16 %v203, %v201
  %v244 = vpack.c.b16 %v206, %v204
  %v245 = vpack.c.b16 %v207, %v205
  %v246 = vpack.c.b16 %v210, %v208
  %v247 = vpack.c.b16 %v211, %v209
  %v248 = vpack.c.b16 %v214, %v212
  %v249 = vpack.c.b16 %v215, %v213
  %v250 = vpack.c.b16 %v218, %v216
  %v251 = vpack.c.b16 %v219, %v217
  %v252 = vpack.c.b16 %v222, %v220
  %v253 = vpack.c.b16 %v223, %v221
  %v254 = vpack.c.b16 %v226, %v224
  %v255 = vpack.c.b16 %v227, %v225
  %v256 = vpack.c.b16 %v230, %v228
  %v257 = vpack.c.b16 %v231, %v229
  %v258 = vpack.c.b16 %v234, %v232
  %v259 = vpack.c.b16 %v235, %v233
  %vm284 = vcmask 523264
  %v286 = vsel %vm284, %v119, 0
  %v289 = vsel %vm284, %v121, 0
  %v292 = vsel %vm284, %v123, 0
  %v295 = vsel %vm284, %v125, 0
  %v298 = vsel %vm284, %v127, 0
  %v301 = vsel %vm284, %v129, 0
  %v304 = vsel %vm284, %v131, 0
  %v307 = vsel %vm284, %v133, 0
  %309 = vmatpush.bf16.msra.mxu0 %v250
  %310 = vmatpush.bf16.msra.mxu0 %v248
  %311 = vmatpush.bf16.msra.mxu0 %v246
  %312 = vmatpush.bf16.msra.mxu0 %v244
  %313 = vmatpush.bf16.msra.mxu0 %v242
  %314 = vmatpush.bf16.msra.mxu0 %v240
  %315 = vmatpush.bf16.msra.mxu0 %v238
  %316 = vmatpush.bf16.msra.mxu0 %v236
  %317 = vmatmul.bf16.gmra.mxu0 %v118
  %v318 = vpop.f32.mrf.mxu0
  %v319 = vadd.f32 %v160, %v318
  %v320 = vpop.f32.mrf.mxu0
  %v321 = vadd.f32 %v160, %v320
  %322 = vmatmul.bf16.gmra.mxu0 %v120
  %v323 = vpop.f32.mrf.mxu0
  %v324 = vadd.f32 %v160, %v323
  %v325 = vpop.f32.mrf.mxu0
  %v326 = vadd.f32 %v160, %v325
  %327 = vmatmul.bf16.gmra.mxu0 %v122
  %v328 = vpop.f32.mrf.mxu0
  %v329 = vadd.f32 %v160, %v328
  %v330 = vpop.f32.mrf.mxu0
  %v331 = vadd.f32 %v160, %v330
  %332 = vmatmul.bf16.gmra.mxu0 %v124
  %v333 = vpop.f32.mrf.mxu0
  %v334 = vadd.f32 %v160, %v333
  %v335 = vpop.f32.mrf.mxu0
  %v336 = vadd.f32 %v160, %v335
  %337 = vmatmul.bf16.gmra.mxu0 %v126
  %v338 = vpop.f32.mrf.mxu0
  %v339 = vadd.f32 %v160, %v338
  %v340 = vpop.f32.mrf.mxu0
  %v341 = vadd.f32 %v160, %v340
  %342 = vmatmul.bf16.gmra.mxu0 %v128
  %v343 = vpop.f32.mrf.mxu0
  %v344 = vadd.f32 %v160, %v343
  %v345 = vpop.f32.mrf.mxu0
  %v346 = vadd.f32 %v160, %v345
  %347 = vmatmul.bf16.gmra.mxu0 %v130
  %v348 = vpop.f32.mrf.mxu0
  %v349 = vadd.f32 %v160, %v348
  %v350 = vpop.f32.mrf.mxu0
  %v351 = vadd.f32 %v160, %v350
  %352 = vmatmul.bf16.gmra.mxu0 %v132
  %v353 = vpop.f32.mrf.mxu0
  %v354 = vadd.f32 %v160, %v353
  %v355 = vpop.f32.mrf.mxu0
  %v356 = vadd.f32 %v160, %v355
  %357 = vdwg.mxu0
  %358 = vmatpush.bf16.msra.mxu0 0
  %359 = vmatpush.bf16.msra.mxu0 0
  %360 = vmatpush.bf16.msra.mxu0 0
  %361 = vmatpush.bf16.msra.mxu0 0
  %362 = vmatpush.bf16.msra.mxu0 %v258
  %363 = vmatpush.bf16.msra.mxu0 %v256
  %364 = vmatpush.bf16.msra.mxu0 %v254
  %365 = vmatpush.bf16.msra.mxu0 %v252
  %366 = vmatmul.bf16.gmra.mxu0 %v286
  %v367 = vpop.f32.mrf.mxu0
  %v368 = vadd.f32 %v319, %v367
  %v369 = vpop.f32.mrf.mxu0
  %v370 = vadd.f32 %v321, %v369
  %371 = vmatmul.bf16.gmra.mxu0 %v289
  %v372 = vpop.f32.mrf.mxu0
  %v373 = vadd.f32 %v324, %v372
  %v374 = vpop.f32.mrf.mxu0
  %v375 = vadd.f32 %v326, %v374
  %376 = vmatmul.bf16.gmra.mxu0 %v292
  %v377 = vpop.f32.mrf.mxu0
  %v378 = vadd.f32 %v329, %v377
  %v379 = vpop.f32.mrf.mxu0
  %v380 = vadd.f32 %v331, %v379
  %381 = vmatmul.bf16.gmra.mxu0 %v295
  %v382 = vpop.f32.mrf.mxu0
  %v383 = vadd.f32 %v334, %v382
  %v384 = vpop.f32.mrf.mxu0
  %v385 = vadd.f32 %v336, %v384
  %386 = vmatmul.bf16.gmra.mxu0 %v298
  %v387 = vpop.f32.mrf.mxu0
  %v388 = vadd.f32 %v339, %v387
  %v389 = vpop.f32.mrf.mxu0
  %v390 = vadd.f32 %v341, %v389
  %391 = vmatmul.bf16.gmra.mxu0 %v301
  %v392 = vpop.f32.mrf.mxu0
  %v393 = vadd.f32 %v344, %v392
  %v394 = vpop.f32.mrf.mxu0
  %v395 = vadd.f32 %v346, %v394
  %396 = vmatmul.bf16.gmra.mxu0 %v304
  %v397 = vpop.f32.mrf.mxu0
  %v398 = vadd.f32 %v349, %v397
  %v399 = vpop.f32.mrf.mxu0
  %v400 = vadd.f32 %v351, %v399
  %401 = vmatmul.bf16.gmra.mxu0 %v307
  %v402 = vpop.f32.mrf.mxu0
  %v403 = vadd.f32 %v354, %v402
  %v404 = vpop.f32.mrf.mxu0
  %v405 = vadd.f32 %v356, %v404
  %406 = vdwg.mxu0
  %407 = vmatpush.bf16.msra.mxu0 %v251
  %408 = vmatpush.bf16.msra.mxu0 %v249
  %409 = vmatpush.bf16.msra.mxu0 %v247
  %410 = vmatpush.bf16.msra.mxu0 %v245
  %411 = vmatpush.bf16.msra.mxu0 %v243
  %412 = vmatpush.bf16.msra.mxu0 %v241
  %413 = vmatpush.bf16.msra.mxu0 %v239
  %414 = vmatpush.bf16.msra.mxu0 %v237
  %415 = vmatmul.bf16.gmra.mxu0 %v118
  %v416 = vpop.f32.mrf.mxu0
  %v417 = vadd.f32 %v161, %v416
  %v418 = vpop.f32.mrf.mxu0
  %v419 = vadd.f32 %v161, %v418
  %420 = vmatmul.bf16.gmra.mxu0 %v120
  %v421 = vpop.f32.mrf.mxu0
  %v422 = vadd.f32 %v161, %v421
  %v423 = vpop.f32.mrf.mxu0
  %v424 = vadd.f32 %v161, %v423
  %425 = vmatmul.bf16.gmra.mxu0 %v122
  %v426 = vpop.f32.mrf.mxu0
  %v427 = vadd.f32 %v161, %v426
  %v428 = vpop.f32.mrf.mxu0
  %v429 = vadd.f32 %v161, %v428
  %430 = vmatmul.bf16.gmra.mxu0 %v124
  %v431 = vpop.f32.mrf.mxu0
  %v432 = vadd.f32 %v161, %v431
  %v433 = vpop.f32.mrf.mxu0
  %v434 = vadd.f32 %v161, %v433
  %435 = vmatmul.bf16.gmra.mxu0 %v126
  %v436 = vpop.f32.mrf.mxu0
  %v437 = vadd.f32 %v161, %v436
  %v438 = vpop.f32.mrf.mxu0
  %v439 = vadd.f32 %v161, %v438
  %440 = vmatmul.bf16.gmra.mxu0 %v128
  %v441 = vpop.f32.mrf.mxu0
  %v442 = vadd.f32 %v161, %v441
  %v443 = vpop.f32.mrf.mxu0
  %v444 = vadd.f32 %v161, %v443
  %445 = vmatmul.bf16.gmra.mxu0 %v130
  %v446 = vpop.f32.mrf.mxu0
  %v447 = vadd.f32 %v161, %v446
  %v448 = vpop.f32.mrf.mxu0
  %v449 = vadd.f32 %v161, %v448
  %450 = vmatmul.bf16.gmra.mxu0 %v132
  %v451 = vpop.f32.mrf.mxu0
  %v452 = vadd.f32 %v161, %v451
  %v453 = vpop.f32.mrf.mxu0
  %v454 = vadd.f32 %v161, %v453
  %455 = vdwg.mxu0
  %456 = vmatpush.bf16.msra.mxu0 0
  %457 = vmatpush.bf16.msra.mxu0 0
  %458 = vmatpush.bf16.msra.mxu0 0
  %459 = vmatpush.bf16.msra.mxu0 0
  %460 = vmatpush.bf16.msra.mxu0 %v259
  %461 = vmatpush.bf16.msra.mxu0 %v257
  %462 = vmatpush.bf16.msra.mxu0 %v255
  %463 = vmatpush.bf16.msra.mxu0 %v253
  %464 = vmatmul.bf16.gmra.mxu0 %v286
  %v465 = vpop.f32.mrf.mxu0
  %v466 = vadd.f32 %v417, %v465
  %v467 = vpop.f32.mrf.mxu0
  %v468 = vadd.f32 %v419, %v467
  %469 = vmatmul.bf16.gmra.mxu0 %v289
  %v470 = vpop.f32.mrf.mxu0
  %v471 = vadd.f32 %v422, %v470
  %v472 = vpop.f32.mrf.mxu0
  %v473 = vadd.f32 %v424, %v472
  %474 = vmatmul.bf16.gmra.mxu0 %v292
  %v475 = vpop.f32.mrf.mxu0
  %v476 = vadd.f32 %v427, %v475
  %v477 = vpop.f32.mrf.mxu0
  %v478 = vadd.f32 %v429, %v477
  %479 = vmatmul.bf16.gmra.mxu0 %v295
  %v480 = vpop.f32.mrf.mxu0
  %v481 = vadd.f32 %v432, %v480
  %v482 = vpop.f32.mrf.mxu0
  %v483 = vadd.f32 %v434, %v482
  %484 = vmatmul.bf16.gmra.mxu0 %v298
  %v485 = vpop.f32.mrf.mxu0
  %v486 = vadd.f32 %v437, %v485
  %v487 = vpop.f32.mrf.mxu0
  %v488 = vadd.f32 %v439, %v487
  %489 = vmatmul.bf16.gmra.mxu0 %v301
  %v490 = vpop.f32.mrf.mxu0
  %v491 = vadd.f32 %v442, %v490
  %v492 = vpop.f32.mrf.mxu0
  %v493 = vadd.f32 %v444, %v492
  %494 = vmatmul.bf16.gmra.mxu0 %v304
  %v495 = vpop.f32.mrf.mxu0
  %v496 = vadd.f32 %v447, %v495
  %v497 = vpop.f32.mrf.mxu0
  %v498 = vadd.f32 %v449, %v497
  %499 = vmatmul.bf16.gmra.mxu0 %v307
  %v500 = vpop.f32.mrf.mxu0
  %v501 = vadd.f32 %v452, %v500
  %v502 = vpop.f32.mrf.mxu0
  %v503 = vadd.f32 %v454, %v502
  %504 = vdwg.mxu0
  %v505 = vrsqrt.pop %v368
  %v506 = vmul.f32 %v505, %v368
  %v507 = vmul.f32 %v506, %v505
  %v508 = vmul.f32 0.5, %v507
  %v509 = vsub.f32 1.5, %v508
  %v510 = vmul.f32 %v505, %v509
  %v511 = vmul.f32 %v368, %v510
  %vm512 = vcmp.eq.f32.partialorder %v368, inf
  %v513 = vsel %vm512, %v368, %v511
  %vm514 = vcmp.eq.f32.partialorder %v368, 0.0
  %v515 = vand.u32 %v368, 2147483648
  %v516 = vsel %vm514, %v515, %v513
  %v517 = vrsqrt.pop %v466
  %v518 = vmul.f32 %v517, %v466
  %v519 = vmul.f32 %v518, %v517
  %v520 = vmul.f32 0.5, %v519
  %v521 = vsub.f32 1.5, %v520
  %v522 = vmul.f32 %v517, %v521
  %v523 = vmul.f32 %v466, %v522
  %vm524 = vcmp.eq.f32.partialorder %v466, inf
  %v525 = vsel %vm524, %v466, %v523
  %vm526 = vcmp.eq.f32.partialorder %v466, 0.0
  %v527 = vand.u32 %v466, 2147483648
  %v528 = vsel %vm526, %v527, %v525
  %v529 = vrsqrt.pop %v370
  %v530 = vmul.f32 %v529, %v370
  %v531 = vmul.f32 %v530, %v529
  %v532 = vmul.f32 0.5, %v531
  %v533 = vsub.f32 1.5, %v532
  %v534 = vmul.f32 %v529, %v533
  %v535 = vmul.f32 %v370, %v534
  %vm536 = vcmp.eq.f32.partialorder %v370, inf
  %v537 = vsel %vm536, %v370, %v535
  %vm538 = vcmp.eq.f32.partialorder %v370, 0.0
  %v539 = vand.u32 %v370, 2147483648
  %v540 = vsel %vm538, %v539, %v537
  %v541 = vrsqrt.pop %v468
  %v542 = vmul.f32 %v541, %v468
  %v543 = vmul.f32 %v542, %v541
  %v544 = vmul.f32 0.5, %v543
  %v545 = vsub.f32 1.5, %v544
  %v546 = vmul.f32 %v541, %v545
  %v547 = vmul.f32 %v468, %v546
  %vm548 = vcmp.eq.f32.partialorder %v468, inf
  %v549 = vsel %vm548, %v468, %v547
  %vm550 = vcmp.eq.f32.partialorder %v468, 0.0
  %v551 = vand.u32 %v468, 2147483648
  %v552 = vsel %vm550, %v551, %v549
  %v553 = vrsqrt.pop %v373
  %v554 = vmul.f32 %v553, %v373
  %v555 = vmul.f32 %v554, %v553
  %v556 = vmul.f32 0.5, %v555
  %v557 = vsub.f32 1.5, %v556
  %v558 = vmul.f32 %v553, %v557
  %v559 = vmul.f32 %v373, %v558
  %vm560 = vcmp.eq.f32.partialorder %v373, inf
  %v561 = vsel %vm560, %v373, %v559
  %vm562 = vcmp.eq.f32.partialorder %v373, 0.0
  %v563 = vand.u32 %v373, 2147483648
  %v564 = vsel %vm562, %v563, %v561
  %v565 = vrsqrt.pop %v471
  %v566 = vmul.f32 %v565, %v471
  %v567 = vmul.f32 %v566, %v565
  %v568 = vmul.f32 0.5, %v567
  %v569 = vsub.f32 1.5, %v568
  %v570 = vmul.f32 %v565, %v569
  %v571 = vmul.f32 %v471, %v570
  %vm572 = vcmp.eq.f32.partialorder %v471, inf
  %v573 = vsel %vm572, %v471, %v571
  %vm574 = vcmp.eq.f32.partialorder %v471, 0.0
  %v575 = vand.u32 %v471, 2147483648
  %v576 = vsel %vm574, %v575, %v573
  %v577 = vrsqrt.pop %v375
  %v578 = vmul.f32 %v577, %v375
  %v579 = vmul.f32 %v578, %v577
  %v580 = vmul.f32 0.5, %v579
  %v581 = vsub.f32 1.5, %v580
  %v582 = vmul.f32 %v577, %v581
  %v583 = vmul.f32 %v375, %v582
  %vm584 = vcmp.eq.f32.partialorder %v375, inf
  %v585 = vsel %vm584, %v375, %v583
  %vm586 = vcmp.eq.f32.partialorder %v375, 0.0
  %v587 = vand.u32 %v375, 2147483648
  %v588 = vsel %vm586, %v587, %v585
  %v589 = vrsqrt.pop %v473
  %v590 = vmul.f32 %v589, %v473
  %v591 = vmul.f32 %v590, %v589
  %v592 = vmul.f32 0.5, %v591
  %v593 = vsub.f32 1.5, %v592
  %v594 = vmul.f32 %v589, %v593
  %v595 = vmul.f32 %v473, %v594
  %vm596 = vcmp.eq.f32.partialorder %v473, inf
  %v597 = vsel %vm596, %v473, %v595
  %vm598 = vcmp.eq.f32.partialorder %v473, 0.0
  %v599 = vand.u32 %v473, 2147483648
  %v600 = vsel %vm598, %v599, %v597
  %v601 = vrsqrt.pop %v378
  %v602 = vmul.f32 %v601, %v378
  %v603 = vmul.f32 %v602, %v601
  %v604 = vmul.f32 0.5, %v603
  %v605 = vsub.f32 1.5, %v604
  %v606 = vmul.f32 %v601, %v605
  %v607 = vmul.f32 %v378, %v606
  %vm608 = vcmp.eq.f32.partialorder %v378, inf
  %v609 = vsel %vm608, %v378, %v607
  %vm610 = vcmp.eq.f32.partialorder %v378, 0.0
  %v611 = vand.u32 %v378, 2147483648
  %v612 = vsel %vm610, %v611, %v609
  %v613 = vrsqrt.pop %v476
  %v614 = vmul.f32 %v613, %v476
  %v615 = vmul.f32 %v614, %v613
  %v616 = vmul.f32 0.5, %v615
  %v617 = vsub.f32 1.5, %v616
  %v618 = vmul.f32 %v613, %v617
  %v619 = vmul.f32 %v476, %v618
  %vm620 = vcmp.eq.f32.partialorder %v476, inf
  %v621 = vsel %vm620, %v476, %v619
  %vm622 = vcmp.eq.f32.partialorder %v476, 0.0
  %v623 = vand.u32 %v476, 2147483648
  %v624 = vsel %vm622, %v623, %v621
  %v625 = vrsqrt.pop %v380
  %v626 = vmul.f32 %v625, %v380
  %v627 = vmul.f32 %v626, %v625
  %v628 = vmul.f32 0.5, %v627
  %v629 = vsub.f32 1.5, %v628
  %v630 = vmul.f32 %v625, %v629
  %v631 = vmul.f32 %v380, %v630
  %vm632 = vcmp.eq.f32.partialorder %v380, inf
  %v633 = vsel %vm632, %v380, %v631
  %vm634 = vcmp.eq.f32.partialorder %v380, 0.0
  %v635 = vand.u32 %v380, 2147483648
  %v636 = vsel %vm634, %v635, %v633
  %v637 = vrsqrt.pop %v478
  %v638 = vmul.f32 %v637, %v478
  %v639 = vmul.f32 %v638, %v637
  %v640 = vmul.f32 0.5, %v639
  %v641 = vsub.f32 1.5, %v640
  %v642 = vmul.f32 %v637, %v641
  %v643 = vmul.f32 %v478, %v642
  %vm644 = vcmp.eq.f32.partialorder %v478, inf
  %v645 = vsel %vm644, %v478, %v643
  %vm646 = vcmp.eq.f32.partialorder %v478, 0.0
  %v647 = vand.u32 %v478, 2147483648
  %v648 = vsel %vm646, %v647, %v645
  %v649 = vrsqrt.pop %v383
  %v650 = vmul.f32 %v649, %v383
  %v651 = vmul.f32 %v650, %v649
  %v652 = vmul.f32 0.5, %v651
  %v653 = vsub.f32 1.5, %v652
  %v654 = vmul.f32 %v649, %v653
  %v655 = vmul.f32 %v383, %v654
  %vm656 = vcmp.eq.f32.partialorder %v383, inf
  %v657 = vsel %vm656, %v383, %v655
  %vm658 = vcmp.eq.f32.partialorder %v383, 0.0
  %v659 = vand.u32 %v383, 2147483648
  %v660 = vsel %vm658, %v659, %v657
  %v661 = vrsqrt.pop %v481
  %v662 = vmul.f32 %v661, %v481
  %v663 = vmul.f32 %v662, %v661
  %v664 = vmul.f32 0.5, %v663
  %v665 = vsub.f32 1.5, %v664
  %v666 = vmul.f32 %v661, %v665
  %v667 = vmul.f32 %v481, %v666
  %vm668 = vcmp.eq.f32.partialorder %v481, inf
  %v669 = vsel %vm668, %v481, %v667
  %vm670 = vcmp.eq.f32.partialorder %v481, 0.0
  %v671 = vand.u32 %v481, 2147483648
  %v672 = vsel %vm670, %v671, %v669
  %v673 = vrsqrt.pop %v385
  %v674 = vmul.f32 %v673, %v385
  %v675 = vmul.f32 %v674, %v673
  %v676 = vmul.f32 0.5, %v675
  %v677 = vsub.f32 1.5, %v676
  %v678 = vmul.f32 %v673, %v677
  %v679 = vmul.f32 %v385, %v678
  %vm680 = vcmp.eq.f32.partialorder %v385, inf
  %v681 = vsel %vm680, %v385, %v679
  %vm682 = vcmp.eq.f32.partialorder %v385, 0.0
  %v683 = vand.u32 %v385, 2147483648
  %v684 = vsel %vm682, %v683, %v681
  %v685 = vrsqrt.pop %v483
  %v686 = vmul.f32 %v685, %v483
  %v687 = vmul.f32 %v686, %v685
  %v688 = vmul.f32 0.5, %v687
  %v689 = vsub.f32 1.5, %v688
  %v690 = vmul.f32 %v685, %v689
  %v691 = vmul.f32 %v483, %v690
  %vm692 = vcmp.eq.f32.partialorder %v483, inf
  %v693 = vsel %vm692, %v483, %v691
  %vm694 = vcmp.eq.f32.partialorder %v483, 0.0
  %v695 = vand.u32 %v483, 2147483648
  %v696 = vsel %vm694, %v695, %v693
  %v697 = vrsqrt.pop %v388
  %v698 = vmul.f32 %v697, %v388
  %v699 = vmul.f32 %v698, %v697
  %v700 = vmul.f32 0.5, %v699
  %v701 = vsub.f32 1.5, %v700
  %v702 = vmul.f32 %v697, %v701
  %v703 = vmul.f32 %v388, %v702
  %vm704 = vcmp.eq.f32.partialorder %v388, inf
  %v705 = vsel %vm704, %v388, %v703
  %vm706 = vcmp.eq.f32.partialorder %v388, 0.0
  %v707 = vand.u32 %v388, 2147483648
  %v708 = vsel %vm706, %v707, %v705
  %v709 = vrsqrt.pop %v486
  %v710 = vmul.f32 %v709, %v486
  %v711 = vmul.f32 %v710, %v709
  %v712 = vmul.f32 0.5, %v711
  %v713 = vsub.f32 1.5, %v712
  %v714 = vmul.f32 %v709, %v713
  %v715 = vmul.f32 %v486, %v714
  %vm716 = vcmp.eq.f32.partialorder %v486, inf
  %v717 = vsel %vm716, %v486, %v715
  %vm718 = vcmp.eq.f32.partialorder %v486, 0.0
  %v719 = vand.u32 %v486, 2147483648
  %v720 = vsel %vm718, %v719, %v717
  %v721 = vrsqrt.pop %v390
  %v722 = vmul.f32 %v721, %v390
  %v723 = vmul.f32 %v722, %v721
  %v724 = vmul.f32 0.5, %v723
  %v725 = vsub.f32 1.5, %v724
  %v726 = vmul.f32 %v721, %v725
  %v727 = vmul.f32 %v390, %v726
  %vm728 = vcmp.eq.f32.partialorder %v390, inf
  %v729 = vsel %vm728, %v390, %v727
  %vm730 = vcmp.eq.f32.partialorder %v390, 0.0
  %v731 = vand.u32 %v390, 2147483648
  %v732 = vsel %vm730, %v731, %v729
  %v733 = vrsqrt.pop %v488
  %v734 = vmul.f32 %v733, %v488
  %v735 = vmul.f32 %v734, %v733
  %v736 = vmul.f32 0.5, %v735
  %v737 = vsub.f32 1.5, %v736
  %v738 = vmul.f32 %v733, %v737
  %v739 = vmul.f32 %v488, %v738
  %vm740 = vcmp.eq.f32.partialorder %v488, inf
  %v741 = vsel %vm740, %v488, %v739
  %vm742 = vcmp.eq.f32.partialorder %v488, 0.0
  %v743 = vand.u32 %v488, 2147483648
  %v744 = vsel %vm742, %v743, %v741
  %v745 = vrsqrt.pop %v393
  %v746 = vmul.f32 %v745, %v393
  %v747 = vmul.f32 %v746, %v745
  %v748 = vmul.f32 0.5, %v747
  %v749 = vsub.f32 1.5, %v748
  %v750 = vmul.f32 %v745, %v749
  %v751 = vmul.f32 %v393, %v750
  %vm752 = vcmp.eq.f32.partialorder %v393, inf
  %v753 = vsel %vm752, %v393, %v751
  %vm754 = vcmp.eq.f32.partialorder %v393, 0.0
  %v755 = vand.u32 %v393, 2147483648
  %v756 = vsel %vm754, %v755, %v753
  %v757 = vrsqrt.pop %v491
  %v758 = vmul.f32 %v757, %v491
  %v759 = vmul.f32 %v758, %v757
  %v760 = vmul.f32 0.5, %v759
  %v761 = vsub.f32 1.5, %v760
  %v762 = vmul.f32 %v757, %v761
  %v763 = vmul.f32 %v491, %v762
  %vm764 = vcmp.eq.f32.partialorder %v491, inf
  %v765 = vsel %vm764, %v491, %v763
  %vm766 = vcmp.eq.f32.partialorder %v491, 0.0
  %v767 = vand.u32 %v491, 2147483648
  %v768 = vsel %vm766, %v767, %v765
  %v769 = vrsqrt.pop %v395
  %v770 = vmul.f32 %v769, %v395
  %v771 = vmul.f32 %v770, %v769
  %v772 = vmul.f32 0.5, %v771
  %v773 = vsub.f32 1.5, %v772
  %v774 = vmul.f32 %v769, %v773
  %v775 = vmul.f32 %v395, %v774
  %vm776 = vcmp.eq.f32.partialorder %v395, inf
  %v777 = vsel %vm776, %v395, %v775
  %vm778 = vcmp.eq.f32.partialorder %v395, 0.0
  %v779 = vand.u32 %v395, 2147483648
  %v780 = vsel %vm778, %v779, %v777
  %v781 = vrsqrt.pop %v493
  %v782 = vmul.f32 %v781, %v493
  %v783 = vmul.f32 %v782, %v781
  %v784 = vmul.f32 0.5, %v783
  %v785 = vsub.f32 1.5, %v784
  %v786 = vmul.f32 %v781, %v785
  %v787 = vmul.f32 %v493, %v786
  %vm788 = vcmp.eq.f32.partialorder %v493, inf
  %v789 = vsel %vm788, %v493, %v787
  %vm790 = vcmp.eq.f32.partialorder %v493, 0.0
  %v791 = vand.u32 %v493, 2147483648
  %v792 = vsel %vm790, %v791, %v789
  %v793 = vrsqrt.pop %v398
  %v794 = vmul.f32 %v793, %v398
  %v795 = vmul.f32 %v794, %v793
  %v796 = vmul.f32 0.5, %v795
  %v797 = vsub.f32 1.5, %v796
  %v798 = vmul.f32 %v793, %v797
  %v799 = vmul.f32 %v398, %v798
  %vm800 = vcmp.eq.f32.partialorder %v398, inf
  %v801 = vsel %vm800, %v398, %v799
  %vm802 = vcmp.eq.f32.partialorder %v398, 0.0
  %v803 = vand.u32 %v398, 2147483648
  %v804 = vsel %vm802, %v803, %v801
  %v805 = vrsqrt.pop %v496
  %v806 = vmul.f32 %v805, %v496
  %v807 = vmul.f32 %v806, %v805
  %v808 = vmul.f32 0.5, %v807
  %v809 = vsub.f32 1.5, %v808
  %v810 = vmul.f32 %v805, %v809
  %v811 = vmul.f32 %v496, %v810
  %vm812 = vcmp.eq.f32.partialorder %v496, inf
  %v813 = vsel %vm812, %v496, %v811
  %vm814 = vcmp.eq.f32.partialorder %v496, 0.0
  %v815 = vand.u32 %v496, 2147483648
  %v816 = vsel %vm814, %v815, %v813
  %v817 = vrsqrt.pop %v400
  %v818 = vmul.f32 %v817, %v400
  %v819 = vmul.f32 %v818, %v817
  %v820 = vmul.f32 0.5, %v819
  %v821 = vsub.f32 1.5, %v820
  %v822 = vmul.f32 %v817, %v821
  %v823 = vmul.f32 %v400, %v822
  %vm824 = vcmp.eq.f32.partialorder %v400, inf
  %v825 = vsel %vm824, %v400, %v823
  %vm826 = vcmp.eq.f32.partialorder %v400, 0.0
  %v827 = vand.u32 %v400, 2147483648
  %v828 = vsel %vm826, %v827, %v825
  %v829 = vrsqrt.pop %v498
  %v830 = vmul.f32 %v829, %v498
  %v831 = vmul.f32 %v830, %v829
  %v832 = vmul.f32 0.5, %v831
  %v833 = vsub.f32 1.5, %v832
  %v834 = vmul.f32 %v829, %v833
  %v835 = vmul.f32 %v498, %v834
  %vm836 = vcmp.eq.f32.partialorder %v498, inf
  %v837 = vsel %vm836, %v498, %v835
  %vm838 = vcmp.eq.f32.partialorder %v498, 0.0
  %v839 = vand.u32 %v498, 2147483648
  %v840 = vsel %vm838, %v839, %v837
  %v841 = vrsqrt.pop %v403
  %v842 = vmul.f32 %v841, %v403
  %v843 = vmul.f32 %v842, %v841
  %v844 = vmul.f32 0.5, %v843
  %v845 = vsub.f32 1.5, %v844
  %v846 = vmul.f32 %v841, %v845
  %v847 = vmul.f32 %v403, %v846
  %vm848 = vcmp.eq.f32.partialorder %v403, inf
  %v849 = vsel %vm848, %v403, %v847
  %vm850 = vcmp.eq.f32.partialorder %v403, 0.0
  %v851 = vand.u32 %v403, 2147483648
  %v852 = vsel %vm850, %v851, %v849
  %v853 = vrsqrt.pop %v501
  %v854 = vmul.f32 %v853, %v501
  %v855 = vmul.f32 %v854, %v853
  %v856 = vmul.f32 0.5, %v855
  %v857 = vsub.f32 1.5, %v856
  %v858 = vmul.f32 %v853, %v857
  %v859 = vmul.f32 %v501, %v858
  %vm860 = vcmp.eq.f32.partialorder %v501, inf
  %v861 = vsel %vm860, %v501, %v859
  %vm862 = vcmp.eq.f32.partialorder %v501, 0.0
  %v863 = vand.u32 %v501, 2147483648
  %v864 = vsel %vm862, %v863, %v861
  %v865 = vrsqrt.pop %v405
  %v866 = vmul.f32 %v865, %v405
  %v867 = vmul.f32 %v866, %v865
  %v868 = vmul.f32 0.5, %v867
  %v869 = vsub.f32 1.5, %v868
  %v870 = vmul.f32 %v865, %v869
  %v871 = vmul.f32 %v405, %v870
  %vm872 = vcmp.eq.f32.partialorder %v405, inf
  %v873 = vsel %vm872, %v405, %v871
  %vm874 = vcmp.eq.f32.partialorder %v405, 0.0
  %v875 = vand.u32 %v405, 2147483648
  %v876 = vsel %vm874, %v875, %v873
  %v877 = vrsqrt.pop %v503
  %v878 = vmul.f32 %v877, %v503
  %v879 = vmul.f32 %v878, %v877
  %v880 = vmul.f32 0.5, %v879
  %v881 = vsub.f32 1.5, %v880
  %v882 = vmul.f32 %v877, %v881
  %v883 = vmul.f32 %v503, %v882
  %vm884 = vcmp.eq.f32.partialorder %v503, inf
  %v885 = vsel %vm884, %v503, %v883
  %vm886 = vcmp.eq.f32.partialorder %v503, 0.0
  %v887 = vand.u32 %v503, 2147483648
  %v888 = vsel %vm886, %v887, %v885
  %v889 = vmul.f32 %v54, %v516
  %v890 = vmul.f32 %v55, %v528
  %v891 = vmul.f32 %v56, %v540
  %v892 = vmul.f32 %v57, %v552
  %v893 = vmul.f32 %v58, %v564
  %v894 = vmul.f32 %v59, %v576
  %v895 = vmul.f32 %v60, %v588
  %v896 = vmul.f32 %v61, %v600
  %v897 = vmul.f32 %v62, %v612
  %v898 = vmul.f32 %v63, %v624
  %v899 = vmul.f32 %v64, %v636
  %v900 = vmul.f32 %v65, %v648
  %v901 = vmul.f32 %v66, %v660
  %v902 = vmul.f32 %v67, %v672
  %v903 = vmul.f32 %v68, %v684
  %v904 = vmul.f32 %v69, %v696
  %v905 = vmul.f32 %v70, %v708
  %v906 = vmul.f32 %v71, %v720
  %v907 = vmul.f32 %v72, %v732
  %v908 = vmul.f32 %v73, %v744
  %v909 = vmul.f32 %v74, %v756
  %v910 = vmul.f32 %v75, %v768
  %v911 = vmul.f32 %v76, %v780
  %v912 = vmul.f32 %v77, %v792
  %v913 = vmul.f32 %v78, %v804
  %v914 = vmul.f32 %v79, %v816
  %v915 = vmul.f32 %v80, %v828
  %v916 = vmul.f32 %v81, %v840
  %v917 = vmul.f32 %v82, %v852
  %v918 = vmul.f32 %v83, %v864
  %v919 = vmul.f32 %v84, %v876
  %v920 = vmul.f32 %v85, %v888
  %v921 = vpack.c.bf16 %v891, %v889
  %v922 = vpack.c.bf16 %v892, %v890
  %v923 = vpack.c.bf16 %v895, %v893
  %v924 = vpack.c.bf16 %v896, %v894
  %v925 = vpack.c.bf16 %v899, %v897
  %v926 = vpack.c.bf16 %v900, %v898
  %v927 = vpack.c.bf16 %v903, %v901
  %v928 = vpack.c.bf16 %v904, %v902
  %v929 = vpack.c.bf16 %v907, %v905
  %v930 = vpack.c.bf16 %v908, %v906
  %v931 = vpack.c.bf16 %v911, %v909
  %v932 = vpack.c.bf16 %v912, %v910
  %v933 = vpack.c.bf16 %v915, %v913
  %v934 = vpack.c.bf16 %v916, %v914
  %v935 = vpack.c.bf16 %v919, %v917
  %v936 = vpack.c.bf16 %v920, %v918
  %v937 = vld [vmem:[%s4] sm:$0xf]
  %v938 = vld [vmem:[%s4 + $0x4] sm:$0xf]
  %v939 = vld [vmem:[%s4 + $0x8] sm:$0xf]
  %v940 = vld [vmem:[%s4 + $0xc] sm:$0xf]
  %v941 = vld [vmem:[%s4 + $0x10] sm:$0xf]
  %v942 = vld [vmem:[%s4 + $0x14] sm:$0xf]
  %v943 = vld [vmem:[%s4 + $0x18] sm:$0xf]
  %v944 = vld [vmem:[%s4 + $0x1c] sm:$0xf]
  %v945 = vld [vmem:[%s4 + $0x20] sm:$0xf]
  %v946 = vld [vmem:[%s4 + $0x24] sm:$0xf]
  %v947 = vld [vmem:[%s4 + $0x28] sm:$0xf]
  %v948 = vld [vmem:[%s4 + $0x2c] sm:$0xf]
  %v949 = vld [vmem:[%s4 + $0x30] sm:$0xf]
  %v950 = vld [vmem:[%s4 + $0x34] sm:$0xf]
  %v951 = vld [vmem:[%s4 + $0x38] sm:$0xf]
  %v952 = vld [vmem:[%s4 + $0x3c] sm:$0xf]
  %v953 = vld [vmem:[%s4 + $0x40] sm:$0xf]
  %v954 = vld [vmem:[%s4 + $0x44] sm:$0xf]
  %v955 = vld [vmem:[%s4 + $0x48] sm:$0xf]
  %v956 = vld [vmem:[%s4 + $0x4c] sm:$0xf]
  %v957 = vld [vmem:[%s4 + $0x50] sm:$0xf]
  %v958 = vld [vmem:[%s4 + $0x54] sm:$0xf]
  %v959 = vld [vmem:[%s4 + $0x58] sm:$0xf]
  %v960 = vld [vmem:[%s4 + $0x5c] sm:$0xf]
  %v961 = vld [vmem:[%s5] sm:$0x1]
  %v963 = vperm.slane %v961, 0
  %v989 = vunpack.c.l.b16 %v937
  %v990 = vunpack.c.l.b16 %v938
  %v991 = vunpack.c.l.b16 %v939
  %v992 = vunpack.c.l.b16 %v940
  %v993 = vunpack.c.l.b16 %v941
  %v994 = vunpack.c.l.b16 %v942
  %v995 = vunpack.c.l.b16 %v943
  %v996 = vunpack.c.l.b16 %v944
  %v997 = vunpack.c.l.b16 %v945
  %v998 = vunpack.c.l.b16 %v946
  %v999 = vunpack.c.l.b16 %v947
  %v1000 = vunpack.c.l.b16 %v948
  %v1001 = vunpack.c.l.b16 %v949
  %v1002 = vunpack.c.l.b16 %v950
  %v1003 = vunpack.c.l.b16 %v951
  %v1004 = vunpack.c.l.b16 %v952
  %v1005 = vunpack.c.l.b16 %v953
  %v1006 = vunpack.c.l.b16 %v954
  %v1007 = vunpack.c.l.b16 %v955
  %v1008 = vunpack.c.l.b16 %v956
  %v1009 = vunpack.c.l.b16 %v957
  %v1010 = vunpack.c.l.b16 %v958
  %v1011 = vunpack.c.l.b16 %v959
  %v1012 = vunpack.c.l.b16 %v960
  %v1013 = vpack.c.b16 %v990, %v989
  %v1014 = vpack.c.b16 %v992, %v991
  %v1015 = vpack.c.b16 %v994, %v993
  %v1016 = vpack.c.b16 %v996, %v995
  %v1017 = vpack.c.b16 %v998, %v997
  %v1018 = vpack.c.b16 %v1000, %v999
  %v1019 = vpack.c.b16 %v1002, %v1001
  %v1020 = vpack.c.b16 %v1004, %v1003
  %v1021 = vpack.c.b16 %v1006, %v1005
  %v1022 = vpack.c.b16 %v1008, %v1007
  %v1023 = vpack.c.b16 %v1010, %v1009
  %v1024 = vpack.c.b16 %v1012, %v1011
  %v1038 = vsel %vm284, %v922, 0
  %v1041 = vsel %vm284, %v924, 0
  %v1044 = vsel %vm284, %v926, 0
  %v1047 = vsel %vm284, %v928, 0
  %v1050 = vsel %vm284, %v930, 0
  %v1053 = vsel %vm284, %v932, 0
  %v1056 = vsel %vm284, %v934, 0
  %v1059 = vsel %vm284, %v936, 0
  %1061 = vmatpush.bf16.msra.mxu0 %v1020
  %1062 = vmatpush.bf16.msra.mxu0 %v1019
  %1063 = vmatpush.bf16.msra.mxu0 %v1018
  %1064 = vmatpush.bf16.msra.mxu0 %v1017
  %1065 = vmatpush.bf16.msra.mxu0 %v1016
  %1066 = vmatpush.bf16.msra.mxu0 %v1015
  %1067 = vmatpush.bf16.msra.mxu0 %v1014
  %1068 = vmatpush.bf16.msra.mxu0 %v1013
  %1069 = vmatmul.bf16.gmra.mxu0 %v921
  %v1070 = vpop.f32.mrf.mxu0
  %v1071 = vadd.f32 %v963, %v1070
  %v1072 = vpop.f32.mrf.mxu0
  %v1073 = vadd.f32 %v963, %v1072
  %1074 = vmatmul.bf16.gmra.mxu0 %v923
  %v1075 = vpop.f32.mrf.mxu0
  %v1076 = vadd.f32 %v963, %v1075
  %v1077 = vpop.f32.mrf.mxu0
  %v1078 = vadd.f32 %v963, %v1077
  %1079 = vmatmul.bf16.gmra.mxu0 %v925
  %v1080 = vpop.f32.mrf.mxu0
  %v1081 = vadd.f32 %v963, %v1080
  %v1082 = vpop.f32.mrf.mxu0
  %v1083 = vadd.f32 %v963, %v1082
  %1084 = vmatmul.bf16.gmra.mxu0 %v927
  %v1085 = vpop.f32.mrf.mxu0
  %v1086 = vadd.f32 %v963, %v1085
  %v1087 = vpop.f32.mrf.mxu0
  %v1088 = vadd.f32 %v963, %v1087
  %1089 = vmatmul.bf16.gmra.mxu0 %v929
  %v1090 = vpop.f32.mrf.mxu0
  %v1091 = vadd.f32 %v963, %v1090
  %v1092 = vpop.f32.mrf.mxu0
  %v1093 = vadd.f32 %v963, %v1092
  %1094 = vmatmul.bf16.gmra.mxu0 %v931
  %v1095 = vpop.f32.mrf.mxu0
  %v1096 = vadd.f32 %v963, %v1095
  %v1097 = vpop.f32.mrf.mxu0
  %v1098 = vadd.f32 %v963, %v1097
  %1099 = vmatmul.bf16.gmra.mxu0 %v933
  %v1100 = vpop.f32.mrf.mxu0
  %v1101 = vadd.f32 %v963, %v1100
  %v1102 = vpop.f32.mrf.mxu0
  %v1103 = vadd.f32 %v963, %v1102
  %1104 = vmatmul.bf16.gmra.mxu0 %v935
  %v1105 = vpop.f32.mrf.mxu0
  %v1106 = vadd.f32 %v963, %v1105
  %v1107 = vpop.f32.mrf.mxu0
  %v1108 = vadd.f32 %v963, %v1107
  %1109 = vdwg.mxu0
  %1110 = vmatpush.bf16.msra.mxu0 0
  %1111 = vmatpush.bf16.msra.mxu0 0
  %1112 = vmatpush.bf16.msra.mxu0 0
  %1113 = vmatpush.bf16.msra.mxu0 0
  %1114 = vmatpush.bf16.msra.mxu0 %v1024
  %1115 = vmatpush.bf16.msra.mxu0 %v1023
  %1116 = vmatpush.bf16.msra.mxu0 %v1022
  %1117 = vmatpush.bf16.msra.mxu0 %v1021
  %1118 = vmatmul.bf16.gmra.mxu0 %v1038
  %v1119 = vpop.f32.mrf.mxu0
  %v1120 = vadd.f32 %v1071, %v1119
  %v1121 = vpop.f32.mrf.mxu0
  %v1122 = vadd.f32 %v1073, %v1121
  %1123 = vmatmul.bf16.gmra.mxu0 %v1041
  %v1124 = vpop.f32.mrf.mxu0
  %v1125 = vadd.f32 %v1076, %v1124
  %v1126 = vpop.f32.mrf.mxu0
  %v1127 = vadd.f32 %v1078, %v1126
  %1128 = vmatmul.bf16.gmra.mxu0 %v1044
  %v1129 = vpop.f32.mrf.mxu0
  %v1130 = vadd.f32 %v1081, %v1129
  %v1131 = vpop.f32.mrf.mxu0
  %v1132 = vadd.f32 %v1083, %v1131
  %1133 = vmatmul.bf16.gmra.mxu0 %v1047
  %v1134 = vpop.f32.mrf.mxu0
  %v1135 = vadd.f32 %v1086, %v1134
  %v1136 = vpop.f32.mrf.mxu0
  %v1137 = vadd.f32 %v1088, %v1136
  %1138 = vmatmul.bf16.gmra.mxu0 %v1050
  %v1139 = vpop.f32.mrf.mxu0
  %v1140 = vadd.f32 %v1091, %v1139
  %v1141 = vpop.f32.mrf.mxu0
  %v1142 = vadd.f32 %v1093, %v1141
  %1143 = vmatmul.bf16.gmra.mxu0 %v1053
  %v1144 = vpop.f32.mrf.mxu0
  %v1145 = vadd.f32 %v1096, %v1144
  %v1146 = vpop.f32.mrf.mxu0
  %v1147 = vadd.f32 %v1098, %v1146
  %1148 = vmatmul.bf16.gmra.mxu0 %v1056
  %v1149 = vpop.f32.mrf.mxu0
  %v1150 = vadd.f32 %v1101, %v1149
  %v1151 = vpop.f32.mrf.mxu0
  %v1152 = vadd.f32 %v1103, %v1151
  %1153 = vmatmul.bf16.gmra.mxu0 %v1059
  %v1154 = vpop.f32.mrf.mxu0
  %v1155 = vadd.f32 %v1106, %v1154
  %v1156 = vpop.f32.mrf.mxu0
  %v1157 = vadd.f32 %v1108, %v1156
  %1158 = vdwg.mxu0
  %v1159 = vmax.f32 %v1120, 0.0
  %v1160 = vmax.f32 %v1122, 0.0
  %v1161 = vmax.f32 %v1125, 0.0
  %v1162 = vmax.f32 %v1127, 0.0
  %v1163 = vmax.f32 %v1130, 0.0
  %v1164 = vmax.f32 %v1132, 0.0
  %v1165 = vmax.f32 %v1135, 0.0
  %v1166 = vmax.f32 %v1137, 0.0
  %v1167 = vmax.f32 %v1140, 0.0
  %v1168 = vmax.f32 %v1142, 0.0
  %v1169 = vmax.f32 %v1145, 0.0
  %v1170 = vmax.f32 %v1147, 0.0
  %v1171 = vmax.f32 %v1150, 0.0
  %v1172 = vmax.f32 %v1152, 0.0
  %v1173 = vmax.f32 %v1155, 0.0
  %v1174 = vmax.f32 %v1157, 0.0
  %v1175 = vmin.f32 %v1159, 2.0
  %v1176 = vmin.f32 %v1160, 2.0
  %v1177 = vmin.f32 %v1161, 2.0
  %v1178 = vmin.f32 %v1162, 2.0
  %v1179 = vmin.f32 %v1163, 2.0
  %v1180 = vmin.f32 %v1164, 2.0
  %v1181 = vmin.f32 %v1165, 2.0
  %v1182 = vmin.f32 %v1166, 2.0
  %v1183 = vmin.f32 %v1167, 2.0
  %v1184 = vmin.f32 %v1168, 2.0
  %v1185 = vmin.f32 %v1169, 2.0
  %v1186 = vmin.f32 %v1170, 2.0
  %v1187 = vmin.f32 %v1171, 2.0
  %v1188 = vmin.f32 %v1172, 2.0
  %v1189 = vmin.f32 %v1173, 2.0
  %v1190 = vmin.f32 %v1174, 2.0
  %v1191 = vld [vmem:[%s7] sm:$0xff]
  %v1192 = vld [vmem:[%s7 + $0x8] sm:$0xf]
  %vm1193 = vcmask 97280
  %v1195 = vsel %vm1193, %v1175, 0
  %v1198 = vsel %vm1193, %v1176, 0
  %v1201 = vsel %vm1193, %v1177, 0
  %v1204 = vsel %vm1193, %v1178, 0
  %v1207 = vsel %vm1193, %v1179, 0
  %v1210 = vsel %vm1193, %v1180, 0
  %v1213 = vsel %vm1193, %v1181, 0
  %v1216 = vsel %vm1193, %v1182, 0
  %v1219 = vsel %vm1193, %v1183, 0
  %v1222 = vsel %vm1193, %v1184, 0
  %v1225 = vsel %vm1193, %v1185, 0
  %v1228 = vsel %vm1193, %v1186, 0
  %v1231 = vsel %vm1193, %v1187, 0
  %v1234 = vsel %vm1193, %v1188, 0
  %v1237 = vsel %vm1193, %v1189, 0
  %v1240 = vsel %vm1193, %v1190, 0
  %vm1242 = vcmask 1043456
  %v1244 = vsel %vm1242, %v1192, 0
  %1246 = vmatpush.msra.mxu0 0.0
  %1247 = vmatpush.msra.mxu0 0.0
  %1248 = vmatpush.msra.mxu0 0.0
  %1249 = vmatpush.msra.mxu0 0.0
  %1250 = vmatpush.msra.mxu0 0.0
  %1251 = vmatpush.msra.mxu0 0.0
  %1252 = vmatpush.msra.mxu0 0.0
  %1253 = vmatpush.msra.mxu0 0.0
  %1254 = vmatpush.msra.mxu0 0.0
  %1255 = vmatpush.msra.mxu0 0.0
  %1256 = vmatpush.msra.mxu0 0.0
  %1257 = vmatpush.msra.mxu0 0.0
  %1258 = vmatpush.msra.mxu0 0.0
  %1259 = vmatpush.msra.mxu0 0.0
  %1260 = vmatpush.msra.mxu0 %v1244
  %1261 = vmatpush.msra.mxu0 %v1191
  %1262 = vmatmul.f32.gmra.mxu0 %v1195
  %v1263 = vpop.f32.mrf.mxu0
  %v1264 = vadd.f32 0.0, %v1263
  %1265 = vmatmul.f32.gmra.mxu0 %v1198
  %v1266 = vpop.f32.mrf.mxu0
  %v1267 = vadd.f32 0.0, %v1266
  %1268 = vmatmul.f32.gmra.mxu0 %v1201
  %v1269 = vpop.f32.mrf.mxu0
  %v1270 = vadd.f32 0.0, %v1269
  %1271 = vmatmul.f32.gmra.mxu0 %v1204
  %v1272 = vpop.f32.mrf.mxu0
  %v1273 = vadd.f32 0.0, %v1272
  %1274 = vmatmul.f32.gmra.mxu0 %v1207
  %v1275 = vpop.f32.mrf.mxu0
  %v1276 = vadd.f32 0.0, %v1275
  %1277 = vmatmul.f32.gmra.mxu0 %v1210
  %v1278 = vpop.f32.mrf.mxu0
  %v1279 = vadd.f32 0.0, %v1278
  %1280 = vmatmul.f32.gmra.mxu0 %v1213
  %v1281 = vpop.f32.mrf.mxu0
  %v1282 = vadd.f32 0.0, %v1281
  %1283 = vmatmul.f32.gmra.mxu0 %v1216
  %v1284 = vpop.f32.mrf.mxu0
  %v1285 = vadd.f32 0.0, %v1284
  %1286 = vmatmul.f32.gmra.mxu0 %v1219
  %v1287 = vpop.f32.mrf.mxu0
  %v1288 = vadd.f32 0.0, %v1287
  %1289 = vmatmul.f32.gmra.mxu0 %v1222
  %v1290 = vpop.f32.mrf.mxu0
  %v1291 = vadd.f32 0.0, %v1290
  %1292 = vmatmul.f32.gmra.mxu0 %v1225
  %v1293 = vpop.f32.mrf.mxu0
  %v1294 = vadd.f32 0.0, %v1293
  %1295 = vmatmul.f32.gmra.mxu0 %v1228
  %v1296 = vpop.f32.mrf.mxu0
  %v1297 = vadd.f32 0.0, %v1296
  %1298 = vmatmul.f32.gmra.mxu0 %v1231
  %v1299 = vpop.f32.mrf.mxu0
  %v1300 = vadd.f32 0.0, %v1299
  %1301 = vmatmul.f32.gmra.mxu0 %v1234
  %v1302 = vpop.f32.mrf.mxu0
  %v1303 = vadd.f32 0.0, %v1302
  %1304 = vmatmul.f32.gmra.mxu0 %v1237
  %v1305 = vpop.f32.mrf.mxu0
  %v1306 = vadd.f32 0.0, %v1305
  %1307 = vmatmul.f32.gmra.mxu0 %v1240
  %v1308 = vpop.f32.mrf.mxu0
  %v1309 = vadd.f32 0.0, %v1308
  %1310 = vdwg.mxu0
  %v1311 = vld [vmem:[%s0] sm:$0xff]
  %v1312 = vld [vmem:[%s0 + $0x8] sm:$0xff]
  %v1313 = vld [vmem:[%s0 + $0x10] sm:$0xff]
  %v1314 = vld [vmem:[%s0 + $0x18] sm:$0xff]
  %v1315 = vld [vmem:[%s0 + $0x20] sm:$0xff]
  %v1316 = vld [vmem:[%s0 + $0x28] sm:$0xff]
  %v1317 = vld [vmem:[%s0 + $0x30] sm:$0xff]
  %v1318 = vld [vmem:[%s0 + $0x38] sm:$0xff]
  %v1319 = vld [vmem:[%s0 + $0x40] sm:$0xff]
  %v1320 = vld [vmem:[%s0 + $0x48] sm:$0xff]
  %v1321 = vld [vmem:[%s0 + $0x50] sm:$0xff]
  %v1322 = vld [vmem:[%s0 + $0x58] sm:$0xff]
  %v1323 = vld [vmem:[%s0 + $0x60] sm:$0xff]
  %v1324 = vld [vmem:[%s0 + $0x68] sm:$0xff]
  %v1325 = vld [vmem:[%s0 + $0x70] sm:$0xff]
  %v1326 = vld [vmem:[%s0 + $0x78] sm:$0xff]
  %v1327 = vld [vmem:[%s6] sm:$0xff]
  %v1328 = vld [vmem:[%s6 + $0x8] sm:$0xf]
  %v1330 = vsel %vm1193, %v1311, 0
  %v1333 = vsel %vm1193, %v1312, 0
  %v1336 = vsel %vm1193, %v1313, 0
  %v1339 = vsel %vm1193, %v1314, 0
  %v1342 = vsel %vm1193, %v1315, 0
  %v1345 = vsel %vm1193, %v1316, 0
  %v1348 = vsel %vm1193, %v1317, 0
  %v1351 = vsel %vm1193, %v1318, 0
  %v1354 = vsel %vm1193, %v1319, 0
  %v1357 = vsel %vm1193, %v1320, 0
  %v1360 = vsel %vm1193, %v1321, 0
  %v1363 = vsel %vm1193, %v1322, 0
  %v1366 = vsel %vm1193, %v1323, 0
  %v1369 = vsel %vm1193, %v1324, 0
  %v1372 = vsel %vm1193, %v1325, 0
  %v1375 = vsel %vm1193, %v1326, 0
  %v1378 = vsel %vm1242, %v1328, 0
  %1380 = vmatpush.msra.mxu0 0.0
  %1381 = vmatpush.msra.mxu0 0.0
  %1382 = vmatpush.msra.mxu0 0.0
  %1383 = vmatpush.msra.mxu0 0.0
  %1384 = vmatpush.msra.mxu0 0.0
  %1385 = vmatpush.msra.mxu0 0.0
  %1386 = vmatpush.msra.mxu0 0.0
  %1387 = vmatpush.msra.mxu0 0.0
  %1388 = vmatpush.msra.mxu0 0.0
  %1389 = vmatpush.msra.mxu0 0.0
  %1390 = vmatpush.msra.mxu0 0.0
  %1391 = vmatpush.msra.mxu0 0.0
  %1392 = vmatpush.msra.mxu0 0.0
  %1393 = vmatpush.msra.mxu0 0.0
  %1394 = vmatpush.msra.mxu0 %v1378
  %1395 = vmatpush.msra.mxu0 %v1327
  %1396 = vmatmul.f32.gmra.mxu0 %v1330
  %v1397 = vpop.f32.mrf.mxu0
  %v1398 = vadd.f32 0.0, %v1397
  %1399 = vmatmul.f32.gmra.mxu0 %v1333
  %v1400 = vpop.f32.mrf.mxu0
  %v1401 = vadd.f32 0.0, %v1400
  %1402 = vmatmul.f32.gmra.mxu0 %v1336
  %v1403 = vpop.f32.mrf.mxu0
  %v1404 = vadd.f32 0.0, %v1403
  %1405 = vmatmul.f32.gmra.mxu0 %v1339
  %v1406 = vpop.f32.mrf.mxu0
  %v1407 = vadd.f32 0.0, %v1406
  %1408 = vmatmul.f32.gmra.mxu0 %v1342
  %v1409 = vpop.f32.mrf.mxu0
  %v1410 = vadd.f32 0.0, %v1409
  %1411 = vmatmul.f32.gmra.mxu0 %v1345
  %v1412 = vpop.f32.mrf.mxu0
  %v1413 = vadd.f32 0.0, %v1412
  %1414 = vmatmul.f32.gmra.mxu0 %v1348
  %v1415 = vpop.f32.mrf.mxu0
  %v1416 = vadd.f32 0.0, %v1415
  %1417 = vmatmul.f32.gmra.mxu0 %v1351
  %v1418 = vpop.f32.mrf.mxu0
  %v1419 = vadd.f32 0.0, %v1418
  %1420 = vmatmul.f32.gmra.mxu0 %v1354
  %v1421 = vpop.f32.mrf.mxu0
  %v1422 = vadd.f32 0.0, %v1421
  %1423 = vmatmul.f32.gmra.mxu0 %v1357
  %v1424 = vpop.f32.mrf.mxu0
  %v1425 = vadd.f32 0.0, %v1424
  %1426 = vmatmul.f32.gmra.mxu0 %v1360
  %v1427 = vpop.f32.mrf.mxu0
  %v1428 = vadd.f32 0.0, %v1427
  %1429 = vmatmul.f32.gmra.mxu0 %v1363
  %v1430 = vpop.f32.mrf.mxu0
  %v1431 = vadd.f32 0.0, %v1430
  %1432 = vmatmul.f32.gmra.mxu0 %v1366
  %v1433 = vpop.f32.mrf.mxu0
  %v1434 = vadd.f32 0.0, %v1433
  %1435 = vmatmul.f32.gmra.mxu0 %v1369
  %v1436 = vpop.f32.mrf.mxu0
  %v1437 = vadd.f32 0.0, %v1436
  %1438 = vmatmul.f32.gmra.mxu0 %v1372
  %v1439 = vpop.f32.mrf.mxu0
  %v1440 = vadd.f32 0.0, %v1439
  %1441 = vmatmul.f32.gmra.mxu0 %v1375
  %v1442 = vpop.f32.mrf.mxu0
  %v1443 = vadd.f32 0.0, %v1442
  %1444 = vdwg.mxu0
  %1445 = vst.msk [vmem:[%s8] sm:$0xff] %vm1193, %v1264
  %1446 = vst.msk [vmem:[%s8 + $0x8] sm:$0xff] %vm1193, %v1267
  %1447 = vst.msk [vmem:[%s8 + $0x10] sm:$0xff] %vm1193, %v1270
  %1448 = vst.msk [vmem:[%s8 + $0x18] sm:$0xff] %vm1193, %v1273
  %1449 = vst.msk [vmem:[%s8 + $0x20] sm:$0xff] %vm1193, %v1276
  %1450 = vst.msk [vmem:[%s8 + $0x28] sm:$0xff] %vm1193, %v1279
  %1451 = vst.msk [vmem:[%s8 + $0x30] sm:$0xff] %vm1193, %v1282
  %1452 = vst.msk [vmem:[%s8 + $0x38] sm:$0xff] %vm1193, %v1285
  %1453 = vst.msk [vmem:[%s8 + $0x40] sm:$0xff] %vm1193, %v1288
  %1454 = vst.msk [vmem:[%s8 + $0x48] sm:$0xff] %vm1193, %v1291
  %1455 = vst.msk [vmem:[%s8 + $0x50] sm:$0xff] %vm1193, %v1294
  %1456 = vst.msk [vmem:[%s8 + $0x58] sm:$0xff] %vm1193, %v1297
  %1457 = vst.msk [vmem:[%s8 + $0x60] sm:$0xff] %vm1193, %v1300
  %1458 = vst.msk [vmem:[%s8 + $0x68] sm:$0xff] %vm1193, %v1303
  %1459 = vst.msk [vmem:[%s8 + $0x70] sm:$0xff] %vm1193, %v1306
  %1460 = vst.msk [vmem:[%s8 + $0x78] sm:$0xff] %vm1193, %v1309
  %v1461 = vsub.f32 %v1311, %v1264
  %v1462 = vsub.f32 %v1312, %v1267
  %v1463 = vsub.f32 %v1313, %v1270
  %v1464 = vsub.f32 %v1314, %v1273
  %v1465 = vsub.f32 %v1315, %v1276
  %v1466 = vsub.f32 %v1316, %v1279
  %v1467 = vsub.f32 %v1317, %v1282
  %v1468 = vsub.f32 %v1318, %v1285
  %v1469 = vsub.f32 %v1319, %v1288
  %v1470 = vsub.f32 %v1320, %v1291
  %v1471 = vsub.f32 %v1321, %v1294
  %v1472 = vsub.f32 %v1322, %v1297
  %v1473 = vsub.f32 %v1323, %v1300
  %v1474 = vsub.f32 %v1324, %v1303
  %v1475 = vsub.f32 %v1325, %v1306
  %v1476 = vsub.f32 %v1326, %v1309
  %v1477 = vsub.f32 %v1398, %v1175
  %v1478 = vsub.f32 %v1401, %v1176
  %v1479 = vsub.f32 %v1404, %v1177
  %v1480 = vsub.f32 %v1407, %v1178
  %v1481 = vsub.f32 %v1410, %v1179
  %v1482 = vsub.f32 %v1413, %v1180
  %v1483 = vsub.f32 %v1416, %v1181
  %v1484 = vsub.f32 %v1419, %v1182
  %v1485 = vsub.f32 %v1422, %v1183
  %v1486 = vsub.f32 %v1425, %v1184
  %v1487 = vsub.f32 %v1428, %v1185
  %v1488 = vsub.f32 %v1431, %v1186
  %v1489 = vsub.f32 %v1434, %v1187
  %v1490 = vsub.f32 %v1437, %v1188
  %v1491 = vsub.f32 %v1440, %v1189
  %v1492 = vsub.f32 %v1443, %v1190
  %v1493 = vld [vmem:[%s9] sm:$0x1]
  %v1494 = vmul.f32 %v1461, %v1461
  %v1495 = vmul.f32 %v1462, %v1462
  %v1496 = vmul.f32 %v1463, %v1463
  %v1497 = vmul.f32 %v1464, %v1464
  %v1498 = vmul.f32 %v1465, %v1465
  %v1499 = vmul.f32 %v1466, %v1466
  %v1500 = vmul.f32 %v1467, %v1467
  %v1501 = vmul.f32 %v1468, %v1468
  %v1502 = vmul.f32 %v1469, %v1469
  %v1503 = vmul.f32 %v1470, %v1470
  %v1504 = vmul.f32 %v1471, %v1471
  %v1505 = vmul.f32 %v1472, %v1472
  %v1506 = vmul.f32 %v1473, %v1473
  %v1507 = vmul.f32 %v1474, %v1474
  %v1508 = vmul.f32 %v1475, %v1475
  %v1509 = vmul.f32 %v1476, %v1476
  %v1510 = vsel %vm1193, %v1494, 0.0
  %v1511 = vsel %vm1193, %v1495, 0.0
  %v1512 = vadd.f32 %v1510, %v1511
  %v1513 = vsel %vm1193, %v1496, 0.0
  %v1514 = vadd.f32 %v1512, %v1513
  %v1515 = vsel %vm1193, %v1497, 0.0
  %v1516 = vadd.f32 %v1514, %v1515
  %v1517 = vsel %vm1193, %v1498, 0.0
  %v1518 = vadd.f32 %v1516, %v1517
  %v1519 = vsel %vm1193, %v1499, 0.0
  %v1520 = vadd.f32 %v1518, %v1519
  %v1521 = vsel %vm1193, %v1500, 0.0
  %v1522 = vadd.f32 %v1520, %v1521
  %v1523 = vsel %vm1193, %v1501, 0.0
  %v1524 = vadd.f32 %v1522, %v1523
  %v1525 = vsel %vm1193, %v1502, 0.0
  %v1526 = vadd.f32 %v1524, %v1525
  %v1527 = vsel %vm1193, %v1503, 0.0
  %v1528 = vadd.f32 %v1526, %v1527
  %v1529 = vsel %vm1193, %v1504, 0.0
  %v1530 = vadd.f32 %v1528, %v1529
  %v1531 = vsel %vm1193, %v1505, 0.0
  %v1532 = vadd.f32 %v1530, %v1531
  %v1533 = vsel %vm1193, %v1506, 0.0
  %v1534 = vadd.f32 %v1532, %v1533
  %v1535 = vsel %vm1193, %v1507, 0.0
  %v1536 = vadd.f32 %v1534, %v1535
  %v1537 = vsel %vm1193, %v1508, 0.0
  %v1538 = vadd.f32 %v1536, %v1537
  %v1539 = vsel %vm1193, %v1509, 0.0
  %v1540 = vadd.f32 %v1538, %v1539
  %v1541 = vrot.slane %v1540, 4
  %v1542 = vadd.f32 %v1540, %v1541
  %v1543 = vrot.slane %v1542, 2
  %v1544 = vadd.f32 %v1542, %v1543
  %v1545 = vrot.slane %v1544, 1
  %v1546 = vadd.f32 %v1544, %v1545
  %v1547 = vadd.f32 %v1493, %v1546
  %vm1548 = vcmask 90112
  %1549 = vst.msk [vmem:[%s9] sm:$0x1] %vm1548, %v1547
  %v1550 = vld [vmem:[%s9 + $0x1] sm:$0x1]
  %v1551 = vmul.f32 %v1477, %v1477
  %v1552 = vmul.f32 %v1478, %v1478
  %v1553 = vmul.f32 %v1479, %v1479
  %v1554 = vmul.f32 %v1480, %v1480
  %v1555 = vmul.f32 %v1481, %v1481
  %v1556 = vmul.f32 %v1482, %v1482
  %v1557 = vmul.f32 %v1483, %v1483
  %v1558 = vmul.f32 %v1484, %v1484
  %v1559 = vmul.f32 %v1485, %v1485
  %v1560 = vmul.f32 %v1486, %v1486
  %v1561 = vmul.f32 %v1487, %v1487
  %v1562 = vmul.f32 %v1488, %v1488
  %v1563 = vmul.f32 %v1489, %v1489
  %v1564 = vmul.f32 %v1490, %v1490
  %v1565 = vmul.f32 %v1491, %v1491
  %v1566 = vmul.f32 %v1492, %v1492
  %v1567 = vsel %vm1193, %v1551, 0.0
  %v1568 = vsel %vm1193, %v1552, 0.0
  %v1569 = vadd.f32 %v1567, %v1568
  %v1570 = vsel %vm1193, %v1553, 0.0
  %v1571 = vadd.f32 %v1569, %v1570
  %v1572 = vsel %vm1193, %v1554, 0.0
  %v1573 = vadd.f32 %v1571, %v1572
  %v1574 = vsel %vm1193, %v1555, 0.0
  %v1575 = vadd.f32 %v1573, %v1574
  %v1576 = vsel %vm1193, %v1556, 0.0
  %v1577 = vadd.f32 %v1575, %v1576
  %v1578 = vsel %vm1193, %v1557, 0.0
  %v1579 = vadd.f32 %v1577, %v1578
  %v1580 = vsel %vm1193, %v1558, 0.0
  %v1581 = vadd.f32 %v1579, %v1580
  %v1582 = vsel %vm1193, %v1559, 0.0
  %v1583 = vadd.f32 %v1581, %v1582
  %v1584 = vsel %vm1193, %v1560, 0.0
  %v1585 = vadd.f32 %v1583, %v1584
  %v1586 = vsel %vm1193, %v1561, 0.0
  %v1587 = vadd.f32 %v1585, %v1586
  %v1588 = vsel %vm1193, %v1562, 0.0
  %v1589 = vadd.f32 %v1587, %v1588
  %v1590 = vsel %vm1193, %v1563, 0.0
  %v1591 = vadd.f32 %v1589, %v1590
  %v1592 = vsel %vm1193, %v1564, 0.0
  %v1593 = vadd.f32 %v1591, %v1592
  %v1594 = vsel %vm1193, %v1565, 0.0
  %v1595 = vadd.f32 %v1593, %v1594
  %v1596 = vsel %vm1193, %v1566, 0.0
  %v1597 = vadd.f32 %v1595, %v1596
  %v1598 = vrot.slane %v1597, 4
  %v1599 = vadd.f32 %v1597, %v1598
  %v1600 = vrot.slane %v1599, 2
  %v1601 = vadd.f32 %v1599, %v1600
  %v1602 = vrot.slane %v1601, 1
  %v1603 = vadd.f32 %v1601, %v1602
  %v1604 = vadd.f32 %v1550, %v1603
  %1605 = vst.msk [vmem:[%s9 + $0x1] sm:$0x1] %vm1548, %v1604
  // Predicated region
  $region38: #{forward.13} parent=0 // pred_check
    _
  $region39: #{forward.13} parent=0 // pred_check_branch
    %1607 = sbr.rel (0) target = $region41
  $region40: #{forward.13} parent=0 // pred_region
    _
  $region41: #{forward.13} parent=0 // pred_fallthru
    _
  // Predicated region
  $region42: #{forward.13} parent=0 // pred_check
    _
  $region43: #{forward.13} parent=0 // pred_check_branch
    %1609 = sbr.rel (0) target = $region45
  $region44: #{forward.13} parent=0 // pred_region
    _
  $region45: #{forward.13} parent=0 // pred_fallthru
    _
  // Predicated region
  $region46: #{forward.13} parent=0 // pred_check
    _
  $region47: #{forward.13} parent=0 // pred_check_branch
    %1611 = sbr.rel (0) target = $region49
  $region48: #{forward.13} parent=0 // pred_region
    _
  $region49: #{forward.13} parent=0 // pred_fallthru
    _
  // Predicated region
  $region50: #{forward.13} parent=0 // pred_check
    _
  $region51: #{forward.13} parent=0 // pred_check_branch
    %1613 = sbr.rel (0) target = $region53
  $region52: #{forward.13} parent=0 // pred_region
    _
  $region53: #{forward.13} parent=0 // pred_fallthru
    _

</llo_original>
